<compile_context>
chip_gen: v5e
topology: v5e:2x2
jax: 0.10.0
libtpu: 0.0.40
codegen_flags: <defaults>
</compile_context>

<pallas_src>
import functools
import numpy as np

import jax
import jax.numpy as jnp
from jax.experimental import pallas as pl
from jax.experimental.pallas import tpu as pltpu

_F32 = jnp.float32
_BF16 = jnp.bfloat16
_NEG_BIG = -1e9   # bias for the 118 padded conv6 channels -> exp() underflows to 0


# -----------------------------------------------------------------------------
# Fused forward kernel (B images per grid step, batch folded into matmul M).
# -----------------------------------------------------------------------------
def _fused_cnn_kernel(x_ref, m1_ref, m2e_ref, m2o_ref, m3_ref, m4_ref,
                      m5_ref, m6_ref, b_ref, o_ref):
    B = o_ref.shape[0]                       # images handled by this grid step
    bias_all = b_ref[...]                    # (6, 260) f32

    def band3(x16, m_ref, ho):
        # 3x3 valid conv, batch folded into M: (ho*B, K) @ (K, N) per dy tap.
        acc = jnp.dot(x16[0:ho * B], m_ref[0], preferred_element_type=_F32)
        acc = acc + jnp.dot(x16[B:B + ho * B], m_ref[1],
                            preferred_element_type=_F32)
        acc = acc + jnp.dot(x16[2 * B:2 * B + ho * B], m_ref[2],
                            preferred_element_type=_F32)
        return acc

    def bias(row, width):
        return bias_all[row:row + 1, 0:width]     # (1, width), broadcasts over M

    # conv1 (1->10, 28x28 -> 26x26) + bias + relu             a: (26*B, 260)
    x16 = x_ref[...].reshape(28 * B, 28).astype(_BF16)
    a = jnp.maximum(band3(x16, m1_ref, 26) + bias(0, 260), 0.0)
    a16 = a.astype(_BF16)

    # conv2 (10->10, 26x26 -> 24x24) + relu + 2x2 maxpool     a: (12*B, 120)
    s_e = band3(a16, m2e_ref, 24)            # even output columns  (24*B, 120)
    s_o = band3(a16, m2o_ref, 24)            # odd  output columns  (24*B, 120)
    h = jnp.maximum(s_e, s_o)                # horizontal pool pairs
    h3 = h.reshape(12, 2 * B, 120)           # leading-dim split (layout-free)
    v = jnp.maximum(h3[:, :B, :], h3[:, B:, :])   # vertical pairs  (12, B, 120)
    a = jnp.maximum(v.reshape(12 * B, 120) + bias(1, 120), 0.0)
    a16 = a.astype(_BF16)

    # conv3 (10->10, 12x12 -> 10x10) + relu                   a: (10*B, 100)
    a = jnp.maximum(band3(a16, m3_ref, 10) + bias(2, 100), 0.0)
    a16 = a.astype(_BF16)
    # conv4 (10->16, 10x10 -> 8x8) + relu                     a: (8*B, 128)
    a = jnp.maximum(band3(a16, m4_ref, 8) + bias(3, 128), 0.0)
    a16 = a.astype(_BF16)
    # conv5 (16->8, 8x8 -> 6x6) + relu (feeds conv6)          a: (6*B, 48)
    a = jnp.maximum(band3(a16, m5_ref, 6) + bias(4, 48), 0.0)
    a16 = a.astype(_BF16)

    # conv6 (8->10, 6x6 kernel -> 1x1); out channels padded 10 -> 128 lanes.
    z = jnp.dot(a16[0:B], m6_ref[0], preferred_element_type=_F32)
    for dy in range(1, 6):
        z = z + jnp.dot(a16[dy * B:(dy + 1) * B], m6_ref[dy],
                        preferred_element_type=_F32)
    z = z + bias(5, 128)                     # pad lanes carry -1e9

    # log_softmax (pad lanes: exp(-1e9 - m) == 0, so the 10 real classes are exact)
    m = jnp.max(z, axis=-1, keepdims=True)
    e = jnp.exp(z - m)
    o_ref[...] = (z - m) - jnp.log(jnp.sum(e, axis=-1, keepdims=True))


# -----------------------------------------------------------------------------
# One-time host-side weight preprocessing.
#   Banded matrices: M[dy][(w0+dx)*Cin + ci, j*Cout + co] = W[dy, dx, ci, co].
# -----------------------------------------------------------------------------
def _band_matrices(w_hwio, w_in, out_cols, n_out_pad=None):
    kh, kw, cin, cout = w_hwio.shape
    w_np = np.asarray(w_hwio, dtype=np.float32)
    out_cols = list(out_cols)
    n_out = len(out_cols) * cout if n_out_pad is None else n_out_pad
    m = np.zeros((kh, w_in * cin, n_out), np.float32)
    for dy in range(kh):
        for j, w0 in enumerate(out_cols):
            for dx in range(kw):
                m[dy, (w0 + dx) * cin:(w0 + dx + 1) * cin,
                  j * cout:(j + 1) * cout] = w_np[dy, dx]
    return jnp.asarray(m, dtype=_BF16)       # bf16 MXU operands, f32 accumulation


def _bias_pack(b1, b2, b3, b4, b5, b6):
    rows = np.zeros((6, 260), np.float32)

    def put(r, b, ncols):
        t = np.tile(np.asarray(b, np.float32), ncols)
        rows[r, :t.size] = t

    put(0, b1, 26)      # 260 lanes
    put(1, b2, 12)      # 120
    put(2, b3, 10)      # 100
    put(3, b4, 8)       # 128
    put(4, b5, 6)       # 48
    rows[5, :128] = _NEG_BIG                 # conv6 padded channels never win softmax
    rows[5, :10] = np.asarray(b6, np.float32)
    return jnp.asarray(rows)


def prepare_params(params):
    (w1, b1), (w2, b2), (w3, b3), (w4, b4), (w5, b5), (w6, b6) = params
    return dict(
        m1=_band_matrices(w1, 28, range(26)),
        m2e=_band_matrices(w2, 26, range(0, 24, 2)),
        m2o=_band_matrices(w2, 26, range(1, 24, 2)),
        m3=_band_matrices(w3, 12, range(10)),
        m4=_band_matrices(w4, 10, range(8)),
        m5=_band_matrices(w5, 8, range(6)),
        m6=_band_matrices(w6, 6, [0], n_out_pad=128),
        bias=_bias_pack(b1, b2, b3, b4, b5, b6),
    )


# -----------------------------------------------------------------------------
# Forward pass: a single fused, batched pallas_call.
# -----------------------------------------------------------------------------
def _round_up(a, m):
    return ((a + m - 1) // m) * m


@functools.partial(jax.jit, static_argnames=("block_b",))
def forward(prepped, x_nchw, block_b=128):
    """block_b = images per grid step (rounded to a multiple of 16).
    Sizing guide: ~128 (v5e/v7x) .. 512 (v6e); default 128 fits all generations."""
    assert x_nchw.shape[1:] == (1, 28, 28), x_nchw.shape
    n = x_nchw.shape[0]

    b = min(int(block_b), _round_up(n, 16))
    b = max(16, _round_up(b, 16))
    if -(-n // b) < 2 and n > 16:            # prefer >=2 grid steps (v7x has 2 TCs)
        b = max(16, _round_up(-(-n // 2), 16))
    n_pad = _round_up(n, b)

    x = x_nchw.reshape(n, 28, 28).astype(_F32)      # Cin == 1
    if n_pad != n:
        x = jnp.pad(x, ((0, n_pad - n), (0, 0), (0, 0)))
    xt = jnp.transpose(x, (1, 0, 2))         # (28, N_pad, 28): batch on sublanes

    def whole(arr):
        nd = arr.ndim
        return pl.BlockSpec(arr.shape, lambda i: (0,) * nd)

    p = prepped
    out = pl.pallas_call(
        _fused_cnn_kernel,
        out_shape=jax.ShapeDtypeStruct((n_pad, 128), _F32),
        grid=(n_pad // b,),
        in_specs=[
            pl.BlockSpec((28, b, 28), lambda i: (0, i, 0)),
            whole(p["m1"]), whole(p["m2e"]), whole(p["m2o"]),
            whole(p["m3"]), whole(p["m4"]), whole(p["m5"]), whole(p["m6"]),
            whole(p["bias"]),
        ],
        out_specs=pl.BlockSpec((b, 128), lambda i: (i, 0)),
        compiler_params=pltpu.CompilerParams(
            dimension_semantics=("parallel",),
            vmem_limit_bytes=48 * 1024 * 1024),
    )(xt, p["m1"], p["m2e"], p["m2o"], p["m3"], p["m4"], p["m5"], p["m6"],
      p["bias"])
    return out[:n, :10]


# -----------------------------------------------------------------------------
# Parameter init + pure-JAX reference (exact S7_Model3 forward semantics).
# -----------------------------------------------------------------------------
def init_params(key):
    dims = [(1, 10, 3), (10, 10, 3), (10, 10, 3), (10, 16, 3), (16, 8, 3), (8, 10, 6)]
    keys = jax.random.split(key, len(dims))
    params = []
    for k, (cin, cout, ks) in zip(keys, dims):
        kw_key, kb_key = jax.random.split(k)
        std = (2.0 / (cin * ks * ks)) ** 0.5
        w = std * jax.random.normal(kw_key, (ks, ks, cin, cout), jnp.float32)
        b = 0.05 * jax.random.normal(kb_key, (cout,), jnp.float32)
        params.append((w, b))
    return params


def reference_forward(params, x_nchw):
    (w1, b1), (w2, b2), (w3, b3), (w4, b4), (w5, b5), (w6, b6) = params
    x = jnp.transpose(x_nchw, (0, 2, 3, 1)).astype(jnp.float32)   # NHWC

    def conv(x, w, b):
        y = jax.lax.conv_general_dilated(
            x, w, window_strides=(1, 1), padding="VALID",
            dimension_numbers=("NHWC", "HWIO", "NHWC"))
        return y + b

    x = jax.nn.relu(conv(x, w1, b1))
    x = jax.nn.relu(conv(x, w2, b2))
    n, h, ww, c = x.shape
    x = x.reshape(n, h // 2, 2, ww // 2, 2, c).max(axis=(2, 4))   # maxpool 2x2
    x = jax.nn.relu(conv(x, w3, b3))
    x = jax.nn.relu(conv(x, w4, b4))
    x = jax.nn.relu(conv(x, w5, b5))      # relu(conv5) feeds conv6
    x = conv(x, w6, b6)                   # (N, 1, 1, 10)
    x = x.reshape(-1, 10)
    return jax.nn.log_softmax(x, axis=-1)


if __name__ == "__main__":
    key = jax.random.PRNGKey(0)
    k_x, k_p = jax.random.split(key)
    # Small demo batch (1x28x28 required so conv6's 6x6 kernel lands on 1x1).
    # block_b=16 -> grid of 2, exercising the batched/multi-step path.
    n = 32
    x = jax.random.normal(k_x, (n, 1, 28, 28), jnp.float32)
    params = init_params(k_p)
    prepped = prepare_params(params)

    out = jax.block_until_ready(forward(prepped, x, block_b=16))

    assert out.shape == (n, 10), out.shape
    assert bool(jnp.all(jnp.isfinite(out)))
    # log_softmax rows must exponentiate-sum to 1
    assert bool(jnp.all(jnp.abs(jnp.sum(jnp.exp(out), axis=-1) - 1.0) < 1e-3))
    # match the pure-JAX f32 reference; tolerance covers bf16 MXU operands
    # accumulated across 6 stacked conv layers.
    ref = jax.block_until_ready(jax.jit(reference_forward)(params, x))
    max_err = float(jnp.max(jnp.abs(out - ref)))
    mean_err = float(jnp.mean(jnp.abs(out - ref)))
    assert max_err < 2e-1 and mean_err < 5e-2, (max_err, mean_err)
    print("KERNEL_OK")
</pallas_src>

<mosaic_0001>
module attributes {stable_mosaic.version = 11 : i64} {
  func.func @_fused_cnn_kernel(%arg0: i32, %arg1: memref<28x16x28xf32, #tpu.memory_space<vmem>>, %arg2: memref<3x28x260xbf16, #tpu.memory_space<vmem>>, %arg3: memref<3x260x120xbf16, #tpu.memory_space<vmem>>, %arg4: memref<3x260x120xbf16, #tpu.memory_space<vmem>>, %arg5: memref<3x120x100xbf16, #tpu.memory_space<vmem>>, %arg6: memref<3x100x128xbf16, #tpu.memory_space<vmem>>, %arg7: memref<3x128x48xbf16, #tpu.memory_space<vmem>>, %arg8: memref<6x48x128xbf16, #tpu.memory_space<vmem>>, %arg9: memref<6x260xf32, #tpu.memory_space<vmem>>, %arg10: memref<16x128xf32, #tpu.memory_space<vmem>>) attributes {dimension_semantics = [#tpu.dimension_semantics<parallel>], iteration_bounds = array<i64: 2>, scalar_prefetch = 0 : i64, scratch_operands = 0 : i64, tpu.core_type = #tpu.core_type<tc>, window_params = [{transform_indices = @transform_0, window_bounds = array<i64: 28, 16, 28>}, {pipeline_mode = #tpu.pipeline_mode<synchronous>, transform_indices = @transform_1, window_bounds = array<i64: 3, 28, 260>}, {pipeline_mode = #tpu.pipeline_mode<synchronous>, transform_indices = @transform_2, window_bounds = array<i64: 3, 260, 120>}, {pipeline_mode = #tpu.pipeline_mode<synchronous>, transform_indices = @transform_3, window_bounds = array<i64: 3, 260, 120>}, {pipeline_mode = #tpu.pipeline_mode<synchronous>, transform_indices = @transform_4, window_bounds = array<i64: 3, 120, 100>}, {pipeline_mode = #tpu.pipeline_mode<synchronous>, transform_indices = @transform_5, window_bounds = array<i64: 3, 100, 128>}, {pipeline_mode = #tpu.pipeline_mode<synchronous>, transform_indices = @transform_6, window_bounds = array<i64: 3, 128, 48>}, {pipeline_mode = #tpu.pipeline_mode<synchronous>, transform_indices = @transform_7, window_bounds = array<i64: 6, 48, 128>}, {pipeline_mode = #tpu.pipeline_mode<synchronous>, transform_indices = @transform_8, window_bounds = array<i64: 6, 260>}, {transform_indices = @transform_9, window_bounds = array<i64: 16, 128>}]} {
    %c0 = arith.constant 0 : index
    %c0_0 = arith.constant 0 : index
    %0 = vector.load %arg9[%c0, %c0_0] : memref<6x260xf32, #tpu.memory_space<vmem>>, vector<6x260xf32>
    %c0_1 = arith.constant 0 : index
    %c0_2 = arith.constant 0 : index
    %c0_3 = arith.constant 0 : index
    %1 = vector.load %arg1[%c0_1, %c0_2, %c0_3] : memref<28x16x28xf32, #tpu.memory_space<vmem>>, vector<28x16x28xf32>
    %2 = vector.shape_cast %1 : vector<28x16x28xf32> to vector<448x28xf32>
    %3 = arith.truncf %2 : vector<448x28xf32> to vector<448x28xbf16>
    %4 = vector.extract_strided_slice %3 {offsets = [0, 0], sizes = [416, 28], strides = [1, 1]} : vector<448x28xbf16> to vector<416x28xbf16>
    %c0_4 = arith.constant 0 : index
    %c0_5 = arith.constant 0 : index
    %c0_6 = arith.constant 0 : index
    %5 = vector.load %arg2[%c0_4, %c0_5, %c0_6] : memref<3x28x260xbf16, #tpu.memory_space<vmem>>, vector<1x28x260xbf16>
    %6 = vector.shape_cast %5 : vector<1x28x260xbf16> to vector<28x260xbf16>
    %cst = arith.constant dense<0.000000e+00> : vector<416x260xf32>
    %7 = tpu.matmul %4, %6, %cst {dimension_numbers = #tpu.dot_dimension_numbers<[1], [0], [0], [1], [0, 0, 1, 1], [], []>} : vector<416x28xbf16>, vector<28x260xbf16>, vector<416x260xf32> -> vector<416x260xf32>
    %8 = vector.extract_strided_slice %3 {offsets = [16, 0], sizes = [416, 28], strides = [1, 1]} : vector<448x28xbf16> to vector<416x28xbf16>
    %c1 = arith.constant 1 : index
    %c0_7 = arith.constant 0 : index
    %c0_8 = arith.constant 0 : index
    %9 = vector.load %arg2[%c1, %c0_7, %c0_8] : memref<3x28x260xbf16, #tpu.memory_space<vmem>>, vector<1x28x260xbf16>
    %10 = vector.shape_cast %9 : vector<1x28x260xbf16> to vector<28x260xbf16>
    %cst_9 = arith.constant dense<0.000000e+00> : vector<416x260xf32>
    %11 = tpu.matmul %8, %10, %cst_9 {dimension_numbers = #tpu.dot_dimension_numbers<[1], [0], [0], [1], [0, 0, 1, 1], [], []>} : vector<416x28xbf16>, vector<28x260xbf16>, vector<416x260xf32> -> vector<416x260xf32>
    %12 = arith.addf %7, %11 : vector<416x260xf32>
    %13 = vector.extract_strided_slice %3 {offsets = [32, 0], sizes = [416, 28], strides = [1, 1]} : vector<448x28xbf16> to vector<416x28xbf16>
    %c2 = arith.constant 2 : index
    %c0_10 = arith.constant 0 : index
    %c0_11 = arith.constant 0 : index
    %14 = vector.load %arg2[%c2, %c0_10, %c0_11] : memref<3x28x260xbf16, #tpu.memory_space<vmem>>, vector<1x28x260xbf16>
    %15 = vector.shape_cast %14 : vector<1x28x260xbf16> to vector<28x260xbf16>
    %cst_12 = arith.constant dense<0.000000e+00> : vector<416x260xf32>
    %16 = tpu.matmul %13, %15, %cst_12 {dimension_numbers = #tpu.dot_dimension_numbers<[1], [0], [0], [1], [0, 0, 1, 1], [], []>} : vector<416x28xbf16>, vector<28x260xbf16>, vector<416x260xf32> -> vector<416x260xf32>
    %17 = arith.addf %12, %16 : vector<416x260xf32>
    %18 = vector.extract_strided_slice %0 {offsets = [0, 0], sizes = [1, 260], strides = [1, 1]} : vector<6x260xf32> to vector<1x260xf32>
    %19 = vector.broadcast %18 : vector<1x260xf32> to vector<416x260xf32>
    %20 = arith.addf %17, %19 : vector<416x260xf32>
    %cst_13 = arith.constant 0.000000e+00 : f32
    %21 = vector.broadcast %cst_13 : f32 to vector<416x260xf32>
    %22 = arith.maximumf %20, %21 : vector<416x260xf32>
    %23 = arith.truncf %22 : vector<416x260xf32> to vector<416x260xbf16>
    %24 = vector.extract_strided_slice %23 {offsets = [0, 0], sizes = [384, 260], strides = [1, 1]} : vector<416x260xbf16> to vector<384x260xbf16>
    %c0_14 = arith.constant 0 : index
    %c0_15 = arith.constant 0 : index
    %c0_16 = arith.constant 0 : index
    %25 = vector.load %arg3[%c0_14, %c0_15, %c0_16] : memref<3x260x120xbf16, #tpu.memory_space<vmem>>, vector<1x260x120xbf16>
    %26 = vector.shape_cast %25 : vector<1x260x120xbf16> to vector<260x120xbf16>
    %cst_17 = arith.constant dense<0.000000e+00> : vector<384x120xf32>
    %27 = tpu.matmul %24, %26, %cst_17 {dimension_numbers = #tpu.dot_dimension_numbers<[1], [0], [0], [1], [0, 0, 1, 1], [], []>} : vector<384x260xbf16>, vector<260x120xbf16>, vector<384x120xf32> -> vector<384x120xf32>
    %28 = vector.extract_strided_slice %23 {offsets = [16, 0], sizes = [384, 260], strides = [1, 1]} : vector<416x260xbf16> to vector<384x260xbf16>
    %c1_18 = arith.constant 1 : index
    %c0_19 = arith.constant 0 : index
    %c0_20 = arith.constant 0 : index
    %29 = vector.load %arg3[%c1_18, %c0_19, %c0_20] : memref<3x260x120xbf16, #tpu.memory_space<vmem>>, vector<1x260x120xbf16>
    %30 = vector.shape_cast %29 : vector<1x260x120xbf16> to vector<260x120xbf16>
    %cst_21 = arith.constant dense<0.000000e+00> : vector<384x120xf32>
    %31 = tpu.matmul %28, %30, %cst_21 {dimension_numbers = #tpu.dot_dimension_numbers<[1], [0], [0], [1], [0, 0, 1, 1], [], []>} : vector<384x260xbf16>, vector<260x120xbf16>, vector<384x120xf32> -> vector<384x120xf32>
    %32 = arith.addf %27, %31 : vector<384x120xf32>
    %33 = vector.extract_strided_slice %23 {offsets = [32, 0], sizes = [384, 260], strides = [1, 1]} : vector<416x260xbf16> to vector<384x260xbf16>
    %c2_22 = arith.constant 2 : index
    %c0_23 = arith.constant 0 : index
    %c0_24 = arith.constant 0 : index
    %34 = vector.load %arg3[%c2_22, %c0_23, %c0_24] : memref<3x260x120xbf16, #tpu.memory_space<vmem>>, vector<1x260x120xbf16>
    %35 = vector.shape_cast %34 : vector<1x260x120xbf16> to vector<260x120xbf16>
    %cst_25 = arith.constant dense<0.000000e+00> : vector<384x120xf32>
    %36 = tpu.matmul %33, %35, %cst_25 {dimension_numbers = #tpu.dot_dimension_numbers<[1], [0], [0], [1], [0, 0, 1, 1], [], []>} : vector<384x260xbf16>, vector<260x120xbf16>, vector<384x120xf32> -> vector<384x120xf32>
    %37 = arith.addf %32, %36 : vector<384x120xf32>
    %38 = vector.extract_strided_slice %23 {offsets = [0, 0], sizes = [384, 260], strides = [1, 1]} : vector<416x260xbf16> to vector<384x260xbf16>
    %c0_26 = arith.constant 0 : index
    %c0_27 = arith.constant 0 : index
    %c0_28 = arith.constant 0 : index
    %39 = vector.load %arg4[%c0_26, %c0_27, %c0_28] : memref<3x260x120xbf16, #tpu.memory_space<vmem>>, vector<1x260x120xbf16>
    %40 = vector.shape_cast %39 : vector<1x260x120xbf16> to vector<260x120xbf16>
    %cst_29 = arith.constant dense<0.000000e+00> : vector<384x120xf32>
    %41 = tpu.matmul %38, %40, %cst_29 {dimension_numbers = #tpu.dot_dimension_numbers<[1], [0], [0], [1], [0, 0, 1, 1], [], []>} : vector<384x260xbf16>, vector<260x120xbf16>, vector<384x120xf32> -> vector<384x120xf32>
    %42 = vector.extract_strided_slice %23 {offsets = [16, 0], sizes = [384, 260], strides = [1, 1]} : vector<416x260xbf16> to vector<384x260xbf16>
    %c1_30 = arith.constant 1 : index
    %c0_31 = arith.constant 0 : index
    %c0_32 = arith.constant 0 : index
    %43 = vector.load %arg4[%c1_30, %c0_31, %c0_32] : memref<3x260x120xbf16, #tpu.memory_space<vmem>>, vector<1x260x120xbf16>
    %44 = vector.shape_cast %43 : vector<1x260x120xbf16> to vector<260x120xbf16>
    %cst_33 = arith.constant dense<0.000000e+00> : vector<384x120xf32>
    %45 = tpu.matmul %42, %44, %cst_33 {dimension_numbers = #tpu.dot_dimension_numbers<[1], [0], [0], [1], [0, 0, 1, 1], [], []>} : vector<384x260xbf16>, vector<260x120xbf16>, vector<384x120xf32> -> vector<384x120xf32>
    %46 = arith.addf %41, %45 : vector<384x120xf32>
    %47 = vector.extract_strided_slice %23 {offsets = [32, 0], sizes = [384, 260], strides = [1, 1]} : vector<416x260xbf16> to vector<384x260xbf16>
    %c2_34 = arith.constant 2 : index
    %c0_35 = arith.constant 0 : index
    %c0_36 = arith.constant 0 : index
    %48 = vector.load %arg4[%c2_34, %c0_35, %c0_36] : memref<3x260x120xbf16, #tpu.memory_space<vmem>>, vector<1x260x120xbf16>
    %49 = vector.shape_cast %48 : vector<1x260x120xbf16> to vector<260x120xbf16>
    %cst_37 = arith.constant dense<0.000000e+00> : vector<384x120xf32>
    %50 = tpu.matmul %47, %49, %cst_37 {dimension_numbers = #tpu.dot_dimension_numbers<[1], [0], [0], [1], [0, 0, 1, 1], [], []>} : vector<384x260xbf16>, vector<260x120xbf16>, vector<384x120xf32> -> vector<384x120xf32>
    %51 = arith.addf %46, %50 : vector<384x120xf32>
    %52 = arith.maximumf %37, %51 : vector<384x120xf32>
    %53 = vector.shape_cast %52 : vector<384x120xf32> to vector<12x32x120xf32>
    %54 = vector.extract_strided_slice %53 {offsets = [0, 0, 0], sizes = [12, 16, 120], strides = [1, 1, 1]} : vector<12x32x120xf32> to vector<12x16x120xf32>
    %55 = vector.extract_strided_slice %53 {offsets = [0, 16, 0], sizes = [12, 16, 120], strides = [1, 1, 1]} : vector<12x32x120xf32> to vector<12x16x120xf32>
    %56 = arith.maximumf %54, %55 : vector<12x16x120xf32>
    %57 = vector.shape_cast %56 : vector<12x16x120xf32> to vector<192x120xf32>
    %58 = vector.extract_strided_slice %0 {offsets = [1, 0], sizes = [1, 120], strides = [1, 1]} : vector<6x260xf32> to vector<1x120xf32>
    %59 = vector.broadcast %58 : vector<1x120xf32> to vector<192x120xf32>
    %60 = arith.addf %57, %59 : vector<192x120xf32>
    %cst_38 = arith.constant 0.000000e+00 : f32
    %61 = vector.broadcast %cst_38 : f32 to vector<192x120xf32>
    %62 = arith.maximumf %60, %61 : vector<192x120xf32>
    %63 = arith.truncf %62 : vector<192x120xf32> to vector<192x120xbf16>
    %64 = vector.extract_strided_slice %63 {offsets = [0, 0], sizes = [160, 120], strides = [1, 1]} : vector<192x120xbf16> to vector<160x120xbf16>
    %c0_39 = arith.constant 0 : index
    %c0_40 = arith.constant 0 : index
    %c0_41 = arith.constant 0 : index
    %65 = vector.load %arg5[%c0_39, %c0_40, %c0_41] : memref<3x120x100xbf16, #tpu.memory_space<vmem>>, vector<1x120x100xbf16>
    %66 = vector.shape_cast %65 : vector<1x120x100xbf16> to vector<120x100xbf16>
    %cst_42 = arith.constant dense<0.000000e+00> : vector<160x100xf32>
    %67 = tpu.matmul %64, %66, %cst_42 {dimension_numbers = #tpu.dot_dimension_numbers<[1], [0], [0], [1], [0, 0, 1, 1], [], []>} : vector<160x120xbf16>, vector<120x100xbf16>, vector<160x100xf32> -> vector<160x100xf32>
    %68 = vector.extract_strided_slice %63 {offsets = [16, 0], sizes = [160, 120], strides = [1, 1]} : vector<192x120xbf16> to vector<160x120xbf16>
    %c1_43 = arith.constant 1 : index
    %c0_44 = arith.constant 0 : index
    %c0_45 = arith.constant 0 : index
    %69 = vector.load %arg5[%c1_43, %c0_44, %c0_45] : memref<3x120x100xbf16, #tpu.memory_space<vmem>>, vector<1x120x100xbf16>
    %70 = vector.shape_cast %69 : vector<1x120x100xbf16> to vector<120x100xbf16>
    %cst_46 = arith.constant dense<0.000000e+00> : vector<160x100xf32>
    %71 = tpu.matmul %68, %70, %cst_46 {dimension_numbers = #tpu.dot_dimension_numbers<[1], [0], [0], [1], [0, 0, 1, 1], [], []>} : vector<160x120xbf16>, vector<120x100xbf16>, vector<160x100xf32> -> vector<160x100xf32>
    %72 = arith.addf %67, %71 : vector<160x100xf32>
    %73 = vector.extract_strided_slice %63 {offsets = [32, 0], sizes = [160, 120], strides = [1, 1]} : vector<192x120xbf16> to vector<160x120xbf16>
    %c2_47 = arith.constant 2 : index
    %c0_48 = arith.constant 0 : index
    %c0_49 = arith.constant 0 : index
    %74 = vector.load %arg5[%c2_47, %c0_48, %c0_49] : memref<3x120x100xbf16, #tpu.memory_space<vmem>>, vector<1x120x100xbf16>
    %75 = vector.shape_cast %74 : vector<1x120x100xbf16> to vector<120x100xbf16>
    %cst_50 = arith.constant dense<0.000000e+00> : vector<160x100xf32>
    %76 = tpu.matmul %73, %75, %cst_50 {dimension_numbers = #tpu.dot_dimension_numbers<[1], [0], [0], [1], [0, 0, 1, 1], [], []>} : vector<160x120xbf16>, vector<120x100xbf16>, vector<160x100xf32> -> vector<160x100xf32>
    %77 = arith.addf %72, %76 : vector<160x100xf32>
    %78 = vector.extract_strided_slice %0 {offsets = [2, 0], sizes = [1, 100], strides = [1, 1]} : vector<6x260xf32> to vector<1x100xf32>
    %79 = vector.broadcast %78 : vector<1x100xf32> to vector<160x100xf32>
    %80 = arith.addf %77, %79 : vector<160x100xf32>
    %cst_51 = arith.constant 0.000000e+00 : f32
    %81 = vector.broadcast %cst_51 : f32 to vector<160x100xf32>
    %82 = arith.maximumf %80, %81 : vector<160x100xf32>
    %83 = arith.truncf %82 : vector<160x100xf32> to vector<160x100xbf16>
    %84 = vector.extract_strided_slice %83 {offsets = [0, 0], sizes = [128, 100], strides = [1, 1]} : vector<160x100xbf16> to vector<128x100xbf16>
    %c0_52 = arith.constant 0 : index
    %c0_53 = arith.constant 0 : index
    %c0_54 = arith.constant 0 : index
    %85 = vector.load %arg6[%c0_52, %c0_53, %c0_54] : memref<3x100x128xbf16, #tpu.memory_space<vmem>>, vector<1x100x128xbf16>
    %86 = vector.shape_cast %85 : vector<1x100x128xbf16> to vector<100x128xbf16>
    %cst_55 = arith.constant dense<0.000000e+00> : vector<128x128xf32>
    %87 = tpu.matmul %84, %86, %cst_55 {dimension_numbers = #tpu.dot_dimension_numbers<[1], [0], [0], [1], [0, 0, 1, 1], [], []>} : vector<128x100xbf16>, vector<100x128xbf16>, vector<128x128xf32> -> vector<128x128xf32>
    %88 = vector.extract_strided_slice %83 {offsets = [16, 0], sizes = [128, 100], strides = [1, 1]} : vector<160x100xbf16> to vector<128x100xbf16>
    %c1_56 = arith.constant 1 : index
    %c0_57 = arith.constant 0 : index
    %c0_58 = arith.constant 0 : index
    %89 = vector.load %arg6[%c1_56, %c0_57, %c0_58] : memref<3x100x128xbf16, #tpu.memory_space<vmem>>, vector<1x100x128xbf16>
    %90 = vector.shape_cast %89 : vector<1x100x128xbf16> to vector<100x128xbf16>
    %cst_59 = arith.constant dense<0.000000e+00> : vector<128x128xf32>
    %91 = tpu.matmul %88, %90, %cst_59 {dimension_numbers = #tpu.dot_dimension_numbers<[1], [0], [0], [1], [0, 0, 1, 1], [], []>} : vector<128x100xbf16>, vector<100x128xbf16>, vector<128x128xf32> -> vector<128x128xf32>
    %92 = arith.addf %87, %91 : vector<128x128xf32>
    %93 = vector.extract_strided_slice %83 {offsets = [32, 0], sizes = [128, 100], strides = [1, 1]} : vector<160x100xbf16> to vector<128x100xbf16>
    %c2_60 = arith.constant 2 : index
    %c0_61 = arith.constant 0 : index
    %c0_62 = arith.constant 0 : index
    %94 = vector.load %arg6[%c2_60, %c0_61, %c0_62] : memref<3x100x128xbf16, #tpu.memory_space<vmem>>, vector<1x100x128xbf16>
    %95 = vector.shape_cast %94 : vector<1x100x128xbf16> to vector<100x128xbf16>
    %cst_63 = arith.constant dense<0.000000e+00> : vector<128x128xf32>
    %96 = tpu.matmul %93, %95, %cst_63 {dimension_numbers = #tpu.dot_dimension_numbers<[1], [0], [0], [1], [0, 0, 1, 1], [], []>} : vector<128x100xbf16>, vector<100x128xbf16>, vector<128x128xf32> -> vector<128x128xf32>
    %97 = arith.addf %92, %96 : vector<128x128xf32>
    %98 = vector.extract_strided_slice %0 {offsets = [3, 0], sizes = [1, 128], strides = [1, 1]} : vector<6x260xf32> to vector<1x128xf32>
    %99 = vector.broadcast %98 : vector<1x128xf32> to vector<128x128xf32>
    %100 = arith.addf %97, %99 : vector<128x128xf32>
    %cst_64 = arith.constant 0.000000e+00 : f32
    %101 = vector.broadcast %cst_64 : f32 to vector<128x128xf32>
    %102 = arith.maximumf %100, %101 : vector<128x128xf32>
    %103 = arith.truncf %102 : vector<128x128xf32> to vector<128x128xbf16>
    %104 = vector.extract_strided_slice %103 {offsets = [0, 0], sizes = [96, 128], strides = [1, 1]} : vector<128x128xbf16> to vector<96x128xbf16>
    %c0_65 = arith.constant 0 : index
    %c0_66 = arith.constant 0 : index
    %c0_67 = arith.constant 0 : index
    %105 = vector.load %arg7[%c0_65, %c0_66, %c0_67] : memref<3x128x48xbf16, #tpu.memory_space<vmem>>, vector<1x128x48xbf16>
    %106 = vector.shape_cast %105 : vector<1x128x48xbf16> to vector<128x48xbf16>
    %cst_68 = arith.constant dense<0.000000e+00> : vector<96x48xf32>
    %107 = tpu.matmul %104, %106, %cst_68 {dimension_numbers = #tpu.dot_dimension_numbers<[1], [0], [0], [1], [0, 0, 1, 1], [], []>} : vector<96x128xbf16>, vector<128x48xbf16>, vector<96x48xf32> -> vector<96x48xf32>
    %108 = vector.extract_strided_slice %103 {offsets = [16, 0], sizes = [96, 128], strides = [1, 1]} : vector<128x128xbf16> to vector<96x128xbf16>
    %c1_69 = arith.constant 1 : index
    %c0_70 = arith.constant 0 : index
    %c0_71 = arith.constant 0 : index
    %109 = vector.load %arg7[%c1_69, %c0_70, %c0_71] : memref<3x128x48xbf16, #tpu.memory_space<vmem>>, vector<1x128x48xbf16>
    %110 = vector.shape_cast %109 : vector<1x128x48xbf16> to vector<128x48xbf16>
    %cst_72 = arith.constant dense<0.000000e+00> : vector<96x48xf32>
    %111 = tpu.matmul %108, %110, %cst_72 {dimension_numbers = #tpu.dot_dimension_numbers<[1], [0], [0], [1], [0, 0, 1, 1], [], []>} : vector<96x128xbf16>, vector<128x48xbf16>, vector<96x48xf32> -> vector<96x48xf32>
    %112 = arith.addf %107, %111 : vector<96x48xf32>
    %113 = vector.extract_strided_slice %103 {offsets = [32, 0], sizes = [96, 128], strides = [1, 1]} : vector<128x128xbf16> to vector<96x128xbf16>
    %c2_73 = arith.constant 2 : index
    %c0_74 = arith.constant 0 : index
    %c0_75 = arith.constant 0 : index
    %114 = vector.load %arg7[%c2_73, %c0_74, %c0_75] : memref<3x128x48xbf16, #tpu.memory_space<vmem>>, vector<1x128x48xbf16>
    %115 = vector.shape_cast %114 : vector<1x128x48xbf16> to vector<128x48xbf16>
    %cst_76 = arith.constant dense<0.000000e+00> : vector<96x48xf32>
    %116 = tpu.matmul %113, %115, %cst_76 {dimension_numbers = #tpu.dot_dimension_numbers<[1], [0], [0], [1], [0, 0, 1, 1], [], []>} : vector<96x128xbf16>, vector<128x48xbf16>, vector<96x48xf32> -> vector<96x48xf32>
    %117 = arith.addf %112, %116 : vector<96x48xf32>
    %118 = vector.extract_strided_slice %0 {offsets = [4, 0], sizes = [1, 48], strides = [1, 1]} : vector<6x260xf32> to vector<1x48xf32>
    %119 = vector.broadcast %118 : vector<1x48xf32> to vector<96x48xf32>
    %120 = arith.addf %117, %119 : vector<96x48xf32>
    %cst_77 = arith.constant 0.000000e+00 : f32
    %121 = vector.broadcast %cst_77 : f32 to vector<96x48xf32>
    %122 = arith.maximumf %120, %121 : vector<96x48xf32>
    %123 = arith.truncf %122 : vector<96x48xf32> to vector<96x48xbf16>
    %124 = vector.extract_strided_slice %123 {offsets = [0, 0], sizes = [16, 48], strides = [1, 1]} : vector<96x48xbf16> to vector<16x48xbf16>
    %c0_78 = arith.constant 0 : index
    %c0_79 = arith.constant 0 : index
    %c0_80 = arith.constant 0 : index
    %125 = vector.load %arg8[%c0_78, %c0_79, %c0_80] : memref<6x48x128xbf16, #tpu.memory_space<vmem>>, vector<1x48x128xbf16>
    %126 = vector.shape_cast %125 : vector<1x48x128xbf16> to vector<48x128xbf16>
    %cst_81 = arith.constant dense<0.000000e+00> : vector<16x128xf32>
    %127 = tpu.matmul %124, %126, %cst_81 {dimension_numbers = #tpu.dot_dimension_numbers<[1], [0], [0], [1], [0, 0, 1, 1], [], []>} : vector<16x48xbf16>, vector<48x128xbf16>, vector<16x128xf32> -> vector<16x128xf32>
    %128 = vector.extract_strided_slice %123 {offsets = [16, 0], sizes = [16, 48], strides = [1, 1]} : vector<96x48xbf16> to vector<16x48xbf16>
    %c1_82 = arith.constant 1 : index
    %c0_83 = arith.constant 0 : index
    %c0_84 = arith.constant 0 : index
    %129 = vector.load %arg8[%c1_82, %c0_83, %c0_84] : memref<6x48x128xbf16, #tpu.memory_space<vmem>>, vector<1x48x128xbf16>
    %130 = vector.shape_cast %129 : vector<1x48x128xbf16> to vector<48x128xbf16>
    %cst_85 = arith.constant dense<0.000000e+00> : vector<16x128xf32>
    %131 = tpu.matmul %128, %130, %cst_85 {dimension_numbers = #tpu.dot_dimension_numbers<[1], [0], [0], [1], [0, 0, 1, 1], [], []>} : vector<16x48xbf16>, vector<48x128xbf16>, vector<16x128xf32> -> vector<16x128xf32>
    %132 = arith.addf %127, %131 : vector<16x128xf32>
    %133 = vector.extract_strided_slice %123 {offsets = [32, 0], sizes = [16, 48], strides = [1, 1]} : vector<96x48xbf16> to vector<16x48xbf16>
    %c2_86 = arith.constant 2 : index
    %c0_87 = arith.constant 0 : index
    %c0_88 = arith.constant 0 : index
    %134 = vector.load %arg8[%c2_86, %c0_87, %c0_88] : memref<6x48x128xbf16, #tpu.memory_space<vmem>>, vector<1x48x128xbf16>
    %135 = vector.shape_cast %134 : vector<1x48x128xbf16> to vector<48x128xbf16>
    %cst_89 = arith.constant dense<0.000000e+00> : vector<16x128xf32>
    %136 = tpu.matmul %133, %135, %cst_89 {dimension_numbers = #tpu.dot_dimension_numbers<[1], [0], [0], [1], [0, 0, 1, 1], [], []>} : vector<16x48xbf16>, vector<48x128xbf16>, vector<16x128xf32> -> vector<16x128xf32>
    %137 = arith.addf %132, %136 : vector<16x128xf32>
    %138 = vector.extract_strided_slice %123 {offsets = [48, 0], sizes = [16, 48], strides = [1, 1]} : vector<96x48xbf16> to vector<16x48xbf16>
    %c3 = arith.constant 3 : index
    %c0_90 = arith.constant 0 : index
    %c0_91 = arith.constant 0 : index
    %139 = vector.load %arg8[%c3, %c0_90, %c0_91] : memref<6x48x128xbf16, #tpu.memory_space<vmem>>, vector<1x48x128xbf16>
    %140 = vector.shape_cast %139 : vector<1x48x128xbf16> to vector<48x128xbf16>
    %cst_92 = arith.constant dense<0.000000e+00> : vector<16x128xf32>
    %141 = tpu.matmul %138, %140, %cst_92 {dimension_numbers = #tpu.dot_dimension_numbers<[1], [0], [0], [1], [0, 0, 1, 1], [], []>} : vector<16x48xbf16>, vector<48x128xbf16>, vector<16x128xf32> -> vector<16x128xf32>
    %142 = arith.addf %137, %141 : vector<16x128xf32>
    %143 = vector.extract_strided_slice %123 {offsets = [64, 0], sizes = [16, 48], strides = [1, 1]} : vector<96x48xbf16> to vector<16x48xbf16>
    %c4 = arith.constant 4 : index
    %c0_93 = arith.constant 0 : index
    %c0_94 = arith.constant 0 : index
    %144 = vector.load %arg8[%c4, %c0_93, %c0_94] : memref<6x48x128xbf16, #tpu.memory_space<vmem>>, vector<1x48x128xbf16>
    %145 = vector.shape_cast %144 : vector<1x48x128xbf16> to vector<48x128xbf16>
    %cst_95 = arith.constant dense<0.000000e+00> : vector<16x128xf32>
    %146 = tpu.matmul %143, %145, %cst_95 {dimension_numbers = #tpu.dot_dimension_numbers<[1], [0], [0], [1], [0, 0, 1, 1], [], []>} : vector<16x48xbf16>, vector<48x128xbf16>, vector<16x128xf32> -> vector<16x128xf32>
    %147 = arith.addf %142, %146 : vector<16x128xf32>
    %148 = vector.extract_strided_slice %123 {offsets = [80, 0], sizes = [16, 48], strides = [1, 1]} : vector<96x48xbf16> to vector<16x48xbf16>
    %c5 = arith.constant 5 : index
    %c0_96 = arith.constant 0 : index
    %c0_97 = arith.constant 0 : index
    %149 = vector.load %arg8[%c5, %c0_96, %c0_97] : memref<6x48x128xbf16, #tpu.memory_space<vmem>>, vector<1x48x128xbf16>
    %150 = vector.shape_cast %149 : vector<1x48x128xbf16> to vector<48x128xbf16>
    %cst_98 = arith.constant dense<0.000000e+00> : vector<16x128xf32>
    %151 = tpu.matmul %148, %150, %cst_98 {dimension_numbers = #tpu.dot_dimension_numbers<[1], [0], [0], [1], [0, 0, 1, 1], [], []>} : vector<16x48xbf16>, vector<48x128xbf16>, vector<16x128xf32> -> vector<16x128xf32>
    %152 = arith.addf %147, %151 : vector<16x128xf32>
    %153 = vector.extract_strided_slice %0 {offsets = [5, 0], sizes = [1, 128], strides = [1, 1]} : vector<6x260xf32> to vector<1x128xf32>
    %154 = vector.broadcast %153 : vector<1x128xf32> to vector<16x128xf32>
    %155 = arith.addf %152, %154 : vector<16x128xf32>
    %cst_99 = arith.constant dense<0xFF800000> : vector<16xf32>
    %156 = vector.multi_reduction <maximumf>, %155, %cst_99 [1] : vector<16x128xf32> to vector<16xf32>
    %157 = vector.shape_cast %156 : vector<16xf32> to vector<16x1xf32>
    %158 = vector.broadcast %157 : vector<16x1xf32> to vector<16x128xf32>
    %159 = arith.subf %155, %158 : vector<16x128xf32>
    %160 = math.exp %159 : vector<16x128xf32>
    %161 = vector.broadcast %157 : vector<16x1xf32> to vector<16x128xf32>
    %162 = arith.subf %155, %161 : vector<16x128xf32>
    %cst_100 = arith.constant dense<0.000000e+00> : vector<16xf32>
    %163 = vector.multi_reduction <add>, %160, %cst_100 [1] : vector<16x128xf32> to vector<16xf32>
    %164 = vector.shape_cast %163 : vector<16xf32> to vector<16x1xf32>
    %165 = math.log %164 : vector<16x1xf32>
    %166 = vector.broadcast %165 : vector<16x1xf32> to vector<16x128xf32>
    %167 = arith.subf %162, %166 : vector<16x128xf32>
    %c0_101 = arith.constant 0 : index
    %c0_102 = arith.constant 0 : index
    %168 = vector.load %arg10[%c0_101, %c0_102] : memref<16x128xf32, #tpu.memory_space<vmem>>, vector<16x128xf32>
    tpu.vector_store %arg10[%c0_101, %c0_102], %167 {strides = array<i32>} : memref<16x128xf32, #tpu.memory_space<vmem>>, vector<16x128xf32>,
    return
  }
  func.func @transform_0(%arg0: i32) -> (i32, i32, i32) {
    %c0_i32 = arith.constant 0 : i32
    %c0_i32_0 = arith.constant 0 : i32
    %c0_i32_1 = arith.constant 0 : i32
    return %c0_i32, %arg0, %c0_i32_0 : i32, i32, i32
  }
  func.func @transform_1(%arg0: i32) -> (i32, i32, i32) {
    %c0_i32 = arith.constant 0 : i32
    %c0_i32_0 = arith.constant 0 : i32
    %c0_i32_1 = arith.constant 0 : i32
    %c0_i32_2 = arith.constant 0 : i32
    return %c0_i32, %c0_i32_0, %c0_i32_1 : i32, i32, i32
  }
  func.func @transform_2(%arg0: i32) -> (i32, i32, i32) {
    %c0_i32 = arith.constant 0 : i32
    %c0_i32_0 = arith.constant 0 : i32
    %c0_i32_1 = arith.constant 0 : i32
    %c0_i32_2 = arith.constant 0 : i32
    return %c0_i32, %c0_i32_0, %c0_i32_1 : i32, i32, i32
  }
  func.func @transform_3(%arg0: i32) -> (i32, i32, i32) {
    %c0_i32 = arith.constant 0 : i32
    %c0_i32_0 = arith.constant 0 : i32
    %c0_i32_1 = arith.constant 0 : i32
    %c0_i32_2 = arith.constant 0 : i32
    return %c0_i32, %c0_i32_0, %c0_i32_1 : i32, i32, i32
  }
  func.func @transform_4(%arg0: i32) -> (i32, i32, i32) {
    %c0_i32 = arith.constant 0 : i32
    %c0_i32_0 = arith.constant 0 : i32
    %c0_i32_1 = arith.constant 0 : i32
    %c0_i32_2 = arith.constant 0 : i32
    return %c0_i32, %c0_i32_0, %c0_i32_1 : i32, i32, i32
  }
  func.func @transform_5(%arg0: i32) -> (i32, i32, i32) {
    %c0_i32 = arith.constant 0 : i32
    %c0_i32_0 = arith.constant 0 : i32
    %c0_i32_1 = arith.constant 0 : i32
    %c0_i32_2 = arith.constant 0 : i32
    return %c0_i32, %c0_i32_0, %c0_i32_1 : i32, i32, i32
  }
  func.func @transform_6(%arg0: i32) -> (i32, i32, i32) {
    %c0_i32 = arith.constant 0 : i32
    %c0_i32_0 = arith.constant 0 : i32
    %c0_i32_1 = arith.constant 0 : i32
    %c0_i32_2 = arith.constant 0 : i32
    return %c0_i32, %c0_i32_0, %c0_i32_1 : i32, i32, i32
  }
  func.func @transform_7(%arg0: i32) -> (i32, i32, i32) {
    %c0_i32 = arith.constant 0 : i32
    %c0_i32_0 = arith.constant 0 : i32
    %c0_i32_1 = arith.constant 0 : i32
    %c0_i32_2 = arith.constant 0 : i32
    return %c0_i32, %c0_i32_0, %c0_i32_1 : i32, i32, i32
  }
  func.func @transform_8(%arg0: i32) -> (i32, i32) {
    %c0_i32 = arith.constant 0 : i32
    %c0_i32_0 = arith.constant 0 : i32
    %c0_i32_1 = arith.constant 0 : i32
    return %c0_i32, %c0_i32_0 : i32, i32
  }
  func.func @transform_9(%arg0: i32) -> (i32, i32) {
    %c0_i32 = arith.constant 0 : i32
    %c0_i32_0 = arith.constant 0 : i32
    return %arg0, %c0_i32 : i32, i32
  }
}

</mosaic_0001>

<llo_original>
// kernel: forward.1
$region0: #{forward.1}
  #allocation0 [shape = 'u32[]', space=smem, size = 0x4, offset = 0x4, fixed_abs, tag = 'smem constant byte address 0x4 - core index']
  #allocation1 [shape = 'u32[72,128]{1,0:T(1,128)}', space=vmem, size = 0x9000, scoped, tag = 'internal scratch']
  %s0 = inlined_call_operand.vmem [shape: f32[28,32,28], index: 0, kind: input, shape index: {}]
  %s1 = inlined_call_operand.vmem [shape: bf16[3,28,260], index: 1, kind: input, shape index: {}]
  %s2 = inlined_call_operand.vmem [shape: bf16[3,260,120], index: 2, kind: input, shape index: {}]
  %s3 = inlined_call_operand.vmem [shape: bf16[3,260,120], index: 3, kind: input, shape index: {}]
  %s4 = inlined_call_operand.vmem [shape: bf16[3,120,100], index: 4, kind: input, shape index: {}]
  %s5 = inlined_call_operand.vmem [shape: bf16[3,100,128], index: 5, kind: input, shape index: {}]
  %s6 = inlined_call_operand.vmem [shape: bf16[3,128,48], index: 6, kind: input, shape index: {}]
  %s7 = inlined_call_operand.vmem [shape: bf16[6,48,128], index: 7, kind: input, shape index: {}]
  %s8 = inlined_call_operand.vmem [shape: f32[6,260], index: 8, kind: input, shape index: {}]
  %s9 = inlined_call_operand.vmem [shape: f32[32,128], index: 9, kind: output, shape index: {}]
  %s10 = sld [smem:[#allocation0]]
  $region107: #{forward.1} parent=0
    _
  %s12 = ssub.s32 1, %s10
  %s13 = scalar_select 0, %s12, %s10
  $region1: #{forward.1} parent=0
    #allocation2 [shape = 'u8[458752]{0}', space=vmem, size = 0x70000, scoped, tag = 'input window, operand 0']
    loop: start=0, step=1, limit=4
    $region2: #{forward.1} parent=1 // loop_pre_header
      _
    $region3: #{forward.1} parent=1 // loop_header
      %s15 = sphi 0, %s19
      %p16 = scmp.ge.s32.totalorder %s15, 4
      %s25 = sphi 0, %s27
      %s28 = sphi 0, %s25
      %s29 = sphi 0, %s28
      %s45 = sphi 0, %s29
      %s49 = sphi 0, %s49
      %s51 = sphi 0, %s49
      %s52 = sphi 0, %s51
      %s66 = sphi 0, %s52
      %s70 = sphi 0, %s70
      %s72 = sphi 0, %s70
      %s73 = sphi 0, %s72
      %s87 = sphi 0, %s73
      %s91 = sphi 0, %s91
      %s93 = sphi 0, %s91
      %s94 = sphi 0, %s93
      %s108 = sphi 0, %s94
      %s112 = sphi 0, %s112
      %s114 = sphi 0, %s112
      %s115 = sphi 0, %s114
      %s129 = sphi 0, %s115
      %s133 = sphi 0, %s133
      %s135 = sphi 0, %s133
      %s136 = sphi 0, %s135
      %s150 = sphi 0, %s136
      %s154 = sphi 0, %s154
      %s156 = sphi 0, %s154
      %s157 = sphi 0, %s156
      %s171 = sphi 0, %s157
      %s175 = sphi 0, %s175
      %s177 = sphi 0, %s175
      %s178 = sphi 0, %s177
      %s192 = sphi 0, %s178
      %s196 = sphi 0, %s196
      %s198 = sphi 0, %s196
      %s199 = sphi 0, %s198
      %s213 = sphi 0, %s199
      %s219 = sphi 0, %s221
      %s222 = sphi 0, %s219
      %s223 = sphi 0, %s222
      %s239 = sphi 0, %s223
    $region4: #{forward.1} parent=1 // loop_header_branch
      %18 = sbr.rel (%p16) target = $region8
    $region5: #{forward.1} parent=1 // loop_body
      %s20 = ssub.s32 %s15, 1
      %s21 = ssub.s32 %s15, 2
      %s22 = sadd.s32 %s15, 1
      %s23 = ssub.s32 %s15, %s22
      %p24 = scmp.eq.s32.totalorder %s23, 0
      %s26 = sadd.s32 %s25, 1
      %s27 = scalar_select %p24, %s25, %s26
      %p30 = pneg %p24
      %p31 = scmp.eq.s32.totalorder %s15, 1
      %p32 = por %p30, %p31
      %p33 = scmp.ne.s32.totalorder %s25, %s28
      %p34 = scmp.eq.s32.totalorder %s15, 0
      %p35 = por %p33, %p34
      %p36 = scmp.ne.s32.totalorder %s25, %s28
      %p37 = scmp.eq.s32.totalorder %s20, 1
      %p38 = por %p36, %p37
      %p39 = scmp.ne.s32.totalorder %s28, %s29
      %p40 = scmp.eq.s32.totalorder %s20, 0
      %p41 = por %p39, %p40
      %p42 = scmp.ne.s32.totalorder %s28, %s29
      %p43 = scmp.eq.s32.totalorder %s21, 1
      %p44 = por %p42, %p43
      %p46 = scmp.ne.s32.totalorder %s29, %s45
      %p47 = scmp.eq.s32.totalorder %s21, 0
      %p48 = por %p46, %p47
      %s50 = sadd.s32 %s49, 1
      %p53 = scmp.eq.s32.totalorder %s15, 1
      %p54 = scmp.ne.s32.totalorder %s49, %s51
      %p55 = scmp.eq.s32.totalorder %s15, 0
      %p56 = por %p54, %p55
      %p57 = scmp.ne.s32.totalorder %s49, %s51
      %p58 = scmp.eq.s32.totalorder %s20, 1
      %p59 = por %p57, %p58
      %p60 = scmp.ne.s32.totalorder %s51, %s52
      %p61 = scmp.eq.s32.totalorder %s20, 0
      %p62 = por %p60, %p61
      %p63 = scmp.ne.s32.totalorder %s51, %s52
      %p64 = scmp.eq.s32.totalorder %s21, 1
      %p65 = por %p63, %p64
      %p67 = scmp.ne.s32.totalorder %s52, %s66
      %p68 = scmp.eq.s32.totalorder %s21, 0
      %p69 = por %p67, %p68
      %s71 = sadd.s32 %s70, 1
      %p74 = scmp.eq.s32.totalorder %s15, 1
      %p75 = scmp.ne.s32.totalorder %s70, %s72
      %p76 = scmp.eq.s32.totalorder %s15, 0
      %p77 = por %p75, %p76
      %p78 = scmp.ne.s32.totalorder %s70, %s72
      %p79 = scmp.eq.s32.totalorder %s20, 1
      %p80 = por %p78, %p79
      %p81 = scmp.ne.s32.totalorder %s72, %s73
      %p82 = scmp.eq.s32.totalorder %s20, 0
      %p83 = por %p81, %p82
      %p84 = scmp.ne.s32.totalorder %s72, %s73
      %p85 = scmp.eq.s32.totalorder %s21, 1
      %p86 = por %p84, %p85
      %p88 = scmp.ne.s32.totalorder %s73, %s87
      %p89 = scmp.eq.s32.totalorder %s21, 0
      %p90 = por %p88, %p89
      %s92 = sadd.s32 %s91, 1
      %p95 = scmp.eq.s32.totalorder %s15, 1
      %p96 = scmp.ne.s32.totalorder %s91, %s93
      %p97 = scmp.eq.s32.totalorder %s15, 0
      %p98 = por %p96, %p97
      %p99 = scmp.ne.s32.totalorder %s91, %s93
      %p100 = scmp.eq.s32.totalorder %s20, 1
      %p101 = por %p99, %p100
      %p102 = scmp.ne.s32.totalorder %s93, %s94
      %p103 = scmp.eq.s32.totalorder %s20, 0
      %p104 = por %p102, %p103
      %p105 = scmp.ne.s32.totalorder %s93, %s94
      %p106 = scmp.eq.s32.totalorder %s21, 1
      %p107 = por %p105, %p106
      %p109 = scmp.ne.s32.totalorder %s94, %s108
      %p110 = scmp.eq.s32.totalorder %s21, 0
      %p111 = por %p109, %p110
      %s113 = sadd.s32 %s112, 1
      %p116 = scmp.eq.s32.totalorder %s15, 1
      %p117 = scmp.ne.s32.totalorder %s112, %s114
      %p118 = scmp.eq.s32.totalorder %s15, 0
      %p119 = por %p117, %p118
      %p120 = scmp.ne.s32.totalorder %s112, %s114
      %p121 = scmp.eq.s32.totalorder %s20, 1
      %p122 = por %p120, %p121
      %p123 = scmp.ne.s32.totalorder %s114, %s115
      %p124 = scmp.eq.s32.totalorder %s20, 0
      %p125 = por %p123, %p124
      %p126 = scmp.ne.s32.totalorder %s114, %s115
      %p127 = scmp.eq.s32.totalorder %s21, 1
      %p128 = por %p126, %p127
      %p130 = scmp.ne.s32.totalorder %s115, %s129
      %p131 = scmp.eq.s32.totalorder %s21, 0
      %p132 = por %p130, %p131
      %s134 = sadd.s32 %s133, 1
      %p137 = scmp.eq.s32.totalorder %s15, 1
      %p138 = scmp.ne.s32.totalorder %s133, %s135
      %p139 = scmp.eq.s32.totalorder %s15, 0
      %p140 = por %p138, %p139
      %p141 = scmp.ne.s32.totalorder %s133, %s135
      %p142 = scmp.eq.s32.totalorder %s20, 1
      %p143 = por %p141, %p142
      %p144 = scmp.ne.s32.totalorder %s135, %s136
      %p145 = scmp.eq.s32.totalorder %s20, 0
      %p146 = por %p144, %p145
      %p147 = scmp.ne.s32.totalorder %s135, %s136
      %p148 = scmp.eq.s32.totalorder %s21, 1
      %p149 = por %p147, %p148
      %p151 = scmp.ne.s32.totalorder %s136, %s150
      %p152 = scmp.eq.s32.totalorder %s21, 0
      %p153 = por %p151, %p152
      %s155 = sadd.s32 %s154, 1
      %p158 = scmp.eq.s32.totalorder %s15, 1
      %p159 = scmp.ne.s32.totalorder %s154, %s156
      %p160 = scmp.eq.s32.totalorder %s15, 0
      %p161 = por %p159, %p160
      %p162 = scmp.ne.s32.totalorder %s154, %s156
      %p163 = scmp.eq.s32.totalorder %s20, 1
      %p164 = por %p162, %p163
      %p165 = scmp.ne.s32.totalorder %s156, %s157
      %p166 = scmp.eq.s32.totalorder %s20, 0
      %p167 = por %p165, %p166
      %p168 = scmp.ne.s32.totalorder %s156, %s157
      %p169 = scmp.eq.s32.totalorder %s21, 1
      %p170 = por %p168, %p169
      %p172 = scmp.ne.s32.totalorder %s157, %s171
      %p173 = scmp.eq.s32.totalorder %s21, 0
      %p174 = por %p172, %p173
      %s176 = sadd.s32 %s175, 1
      %p179 = scmp.eq.s32.totalorder %s15, 1
      %p180 = scmp.ne.s32.totalorder %s175, %s177
      %p181 = scmp.eq.s32.totalorder %s15, 0
      %p182 = por %p180, %p181
      %p183 = scmp.ne.s32.totalorder %s175, %s177
      %p184 = scmp.eq.s32.totalorder %s20, 1
      %p185 = por %p183, %p184
      %p186 = scmp.ne.s32.totalorder %s177, %s178
      %p187 = scmp.eq.s32.totalorder %s20, 0
      %p188 = por %p186, %p187
      %p189 = scmp.ne.s32.totalorder %s177, %s178
      %p190 = scmp.eq.s32.totalorder %s21, 1
      %p191 = por %p189, %p190
      %p193 = scmp.ne.s32.totalorder %s178, %s192
      %p194 = scmp.eq.s32.totalorder %s21, 0
      %p195 = por %p193, %p194
      %s197 = sadd.s32 %s196, 1
      %p200 = scmp.eq.s32.totalorder %s15, 1
      %p201 = scmp.ne.s32.totalorder %s196, %s198
      %p202 = scmp.eq.s32.totalorder %s15, 0
      %p203 = por %p201, %p202
      %p204 = scmp.ne.s32.totalorder %s196, %s198
      %p205 = scmp.eq.s32.totalorder %s20, 1
      %p206 = por %p204, %p205
      %p207 = scmp.ne.s32.totalorder %s198, %s199
      %p208 = scmp.eq.s32.totalorder %s20, 0
      %p209 = por %p207, %p208
      %p210 = scmp.ne.s32.totalorder %s198, %s199
      %p211 = scmp.eq.s32.totalorder %s21, 1
      %p212 = por %p210, %p211
      %p214 = scmp.ne.s32.totalorder %s199, %s213
      %p215 = scmp.eq.s32.totalorder %s21, 0
      %p216 = por %p214, %p215
      %s217 = ssub.s32 %s15, %s22
      %p218 = scmp.eq.s32.totalorder %s217, 0
      %s220 = sadd.s32 %s219, 1
      %s221 = scalar_select %p218, %s219, %s220
      %p224 = pneg %p218
      %p225 = scmp.eq.s32.totalorder %s15, 1
      %p226 = por %p224, %p225
      %p227 = scmp.ne.s32.totalorder %s219, %s222
      %p228 = scmp.eq.s32.totalorder %s15, 0
      %p229 = por %p227, %p228
      %p230 = scmp.ne.s32.totalorder %s219, %s222
      %p231 = scmp.eq.s32.totalorder %s20, 1
      %p232 = por %p230, %p231
      %p233 = scmp.ne.s32.totalorder %s222, %s223
      %p234 = scmp.eq.s32.totalorder %s20, 0
      %p235 = por %p233, %p234
      %p236 = scmp.ne.s32.totalorder %s222, %s223
      %p237 = scmp.eq.s32.totalorder %s21, 1
      %p238 = por %p236, %p237
      %p240 = scmp.ne.s32.totalorder %s223, %s239
      %p241 = scmp.eq.s32.totalorder %s21, 0
      %p242 = por %p240, %p241
      %p243 = scmp.le.s32.totalorder 1, %s15
      %p244 = scmp.lt.s32.totalorder %s15, 3
      %p245 = pnand %p243, %p244
      %p246 = pneg %p245
      // Predicated region
      $region9: #{forward.1} parent=5 // pred_check
        _
      $region10: #{forward.1} parent=5 // pred_check_branch
        %248 = sbr.rel (%p245) target = $region12
      $region11: #{forward.1} parent=5 // pred_region
        %s249 = ssub.s32 %s15, 1
        // Predicated region
        $region13: #{forward.1} parent=11 // pred_check
          %p250 = pneg %p62
        $region14: #{forward.1} parent=11 // pred_check_branch
          %252 = sbr.rel (%p250) target = $region16
        $region15: #{forward.1} parent=11 // pred_region
          _
        $region16: #{forward.1} parent=11 // pred_fallthru
          _
        // Predicated region
        $region17: #{forward.1} parent=11 // pred_check
          %p253 = pneg %p83
        $region18: #{forward.1} parent=11 // pred_check_branch
          %255 = sbr.rel (%p253) target = $region20
        $region19: #{forward.1} parent=11 // pred_region
          _
        $region20: #{forward.1} parent=11 // pred_fallthru
          _
        // Predicated region
        $region21: #{forward.1} parent=11 // pred_check
          %p256 = pneg %p104
        $region22: #{forward.1} parent=11 // pred_check_branch
          %258 = sbr.rel (%p256) target = $region24
        $region23: #{forward.1} parent=11 // pred_region
          _
        $region24: #{forward.1} parent=11 // pred_fallthru
          _
        // Predicated region
        $region25: #{forward.1} parent=11 // pred_check
          %p259 = pneg %p125
        $region26: #{forward.1} parent=11 // pred_check_branch
          %261 = sbr.rel (%p259) target = $region28
        $region27: #{forward.1} parent=11 // pred_region
          _
        $region28: #{forward.1} parent=11 // pred_fallthru
          _
        // Predicated region
        $region29: #{forward.1} parent=11 // pred_check
          %p262 = pneg %p146
        $region30: #{forward.1} parent=11 // pred_check_branch
          %264 = sbr.rel (%p262) target = $region32
        $region31: #{forward.1} parent=11 // pred_region
          _
        $region32: #{forward.1} parent=11 // pred_fallthru
          _
        // Predicated region
        $region33: #{forward.1} parent=11 // pred_check
          %p265 = pneg %p167
        $region34: #{forward.1} parent=11 // pred_check_branch
          %267 = sbr.rel (%p265) target = $region36
        $region35: #{forward.1} parent=11 // pred_region
          _
        $region36: #{forward.1} parent=11 // pred_fallthru
          _
        // Predicated region
        $region37: #{forward.1} parent=11 // pred_check
          %p268 = pneg %p188
        $region38: #{forward.1} parent=11 // pred_check_branch
          %270 = sbr.rel (%p268) target = $region40
        $region39: #{forward.1} parent=11 // pred_region
          _
        $region40: #{forward.1} parent=11 // pred_fallthru
          _
        // Predicated region
        $region41: #{forward.1} parent=11 // pred_check
          %p271 = pneg %p209
        $region42: #{forward.1} parent=11 // pred_check_branch
          %273 = sbr.rel (%p271) target = $region44
        $region43: #{forward.1} parent=11 // pred_region
          _
        $region44: #{forward.1} parent=11 // pred_fallthru
          _
      $region12: #{forward.1} parent=5 // pred_fallthru
        _
      %p274 = scmp.lt.s32.totalorder %s15, 2
      // Predicated region
      $region45: #{forward.1} parent=5 // pred_check
        %p275 = pneg %p274
      $region46: #{forward.1} parent=5 // pred_check_branch
        %277 = sbr.rel (%p275) target = $region48
      $region47: #{forward.1} parent=5 // pred_region
        // Predicated region
        $region49: #{forward.1} parent=47 // pred_check
          %p278 = pneg %p35
        $region50: #{forward.1} parent=47 // pred_check_branch
          %280 = sbr.rel (%p278) target = $region52
        $region51: #{forward.1} parent=47 // pred_region
          %s281 = sand.u32 %s25, 1
          %s282 = sand.u32 %s25, 1
          %s283 = smul.addr %s282, 448
          %s284 = scalar_lea.vmem [#allocation2], %s283
          %s285 = smul.u32 2, %s15
          %s286 = smul.addr %s285, 8
          %s287 = scalar_lea.vmem %s0, %s286
          // Predicated region
          $region53: #{forward.1} parent=51 // pred_check
            _
          $region54: #{forward.1} parent=51 // pred_check_branch
            %289 = sbr.rel (0) target = $region56
          $region55: #{forward.1} parent=51 // pred_region
            // Predicated region
            $region57: #{forward.1} parent=55 // pred_check
              _
            $region58: #{forward.1} parent=55 // pred_check_branch
              %291 = sbr.rel (0) target = $region60
            $region59: #{forward.1} parent=55 // pred_region
              // Predicated region
              $region72: #{forward.1} parent=59 // pred_check
                _
              $region73: #{forward.1} parent=59 // pred_check_branch
                %417 = sbr.rel (0) target = $region75
              $region74: #{forward.1} parent=59 // pred_region
                loop: start=0, step=1, limit=1
                $region76: #{forward.1} parent=74 // loop_pre_header
                  _
                $region77: #{forward.1} parent=74 // loop_header
                  %s419 = sphi 0, %s423
                  %p420 = scmp.ge.s32.totalorder %s419, 1
                  %s424 = sphi %s287, %s287
                  %s425 = sphi %s284, %s284
                $region78: #{forward.1} parent=74 // loop_header_branch
                  %422 = sbr.rel (%p420) target = $region82
                $region79: #{forward.1} parent=74 // loop_body
                  %v426 = vld [vmem:[%s424] sm:$0xff]
                  %427 = vst [vmem:[%s425] sm:$0xff] %v426
                  %v428 = vld [vmem:[%s424 + $0x8] sm:$0xff]
                  %429 = vst [vmem:[%s425 + $0x8] sm:$0xff] %v428
                  %v430 = vld [vmem:[%s424 + $0x20] sm:$0xff]
                  %431 = vst [vmem:[%s425 + $0x10] sm:$0xff] %v430
                  %v432 = vld [vmem:[%s424 + $0x28] sm:$0xff]
                  %433 = vst [vmem:[%s425 + $0x18] sm:$0xff] %v432
                  %v434 = vld [vmem:[%s424 + $0x40] sm:$0xff]
                  %435 = vst [vmem:[%s425 + $0x20] sm:$0xff] %v434
                  %v436 = vld [vmem:[%s424 + $0x48] sm:$0xff]
                  %437 = vst [vmem:[%s425 + $0x28] sm:$0xff] %v436
                  %v438 = vld [vmem:[%s424 + $0x60] sm:$0xff]
                  %439 = vst [vmem:[%s425 + $0x30] sm:$0xff] %v438
                  %v440 = vld [vmem:[%s424 + $0x68] sm:$0xff]
                  %441 = vst [vmem:[%s425 + $0x38] sm:$0xff] %v440
                  %v442 = vld [vmem:[%s424 + $0x80] sm:$0xff]
                  %443 = vst [vmem:[%s425 + $0x40] sm:$0xff] %v442
                  %v444 = vld [vmem:[%s424 + $0x88] sm:$0xff]
                  %445 = vst [vmem:[%s425 + $0x48] sm:$0xff] %v444
                  %v446 = vld [vmem:[%s424 + $0xa0] sm:$0xff]
                  %447 = vst [vmem:[%s425 + $0x50] sm:$0xff] %v446
                  %v448 = vld [vmem:[%s424 + $0xa8] sm:$0xff]
                  %449 = vst [vmem:[%s425 + $0x58] sm:$0xff] %v448
                  %v450 = vld [vmem:[%s424 + $0xc0] sm:$0xff]
                  %451 = vst [vmem:[%s425 + $0x60] sm:$0xff] %v450
                  %v452 = vld [vmem:[%s424 + $0xc8] sm:$0xff]
                  %453 = vst [vmem:[%s425 + $0x68] sm:$0xff] %v452
                  %v454 = vld [vmem:[%s424 + $0xe0] sm:$0xff]
                  %455 = vst [vmem:[%s425 + $0x70] sm:$0xff] %v454
                  %v456 = vld [vmem:[%s424 + $0xe8] sm:$0xff]
                  %457 = vst [vmem:[%s425 + $0x78] sm:$0xff] %v456
                  %v458 = vld [vmem:[%s424 + $0x100] sm:$0xff]
                  %459 = vst [vmem:[%s425 + $0x80] sm:$0xff] %v458
                  %v460 = vld [vmem:[%s424 + $0x108] sm:$0xff]
                  %461 = vst [vmem:[%s425 + $0x88] sm:$0xff] %v460
                  %v462 = vld [vmem:[%s424 + $0x120] sm:$0xff]
                  %463 = vst [vmem:[%s425 + $0x90] sm:$0xff] %v462
                  %v464 = vld [vmem:[%s424 + $0x128] sm:$0xff]
                  %465 = vst [vmem:[%s425 + $0x98] sm:$0xff] %v464
                  %v466 = vld [vmem:[%s424 + $0x140] sm:$0xff]
                  %467 = vst [vmem:[%s425 + $0xa0] sm:$0xff] %v466
                  %v468 = vld [vmem:[%s424 + $0x148] sm:$0xff]
                  %469 = vst [vmem:[%s425 + $0xa8] sm:$0xff] %v468
                  %v470 = vld [vmem:[%s424 + $0x160] sm:$0xff]
                  %471 = vst [vmem:[%s425 + $0xb0] sm:$0xff] %v470
                  %v472 = vld [vmem:[%s424 + $0x168] sm:$0xff]
                  %473 = vst [vmem:[%s425 + $0xb8] sm:$0xff] %v472
                  %v474 = vld [vmem:[%s424 + $0x180] sm:$0xff]
                  %475 = vst [vmem:[%s425 + $0xc0] sm:$0xff] %v474
                  %v476 = vld [vmem:[%s424 + $0x188] sm:$0xff]
                  %477 = vst [vmem:[%s425 + $0xc8] sm:$0xff] %v476
                  %v478 = vld [vmem:[%s424 + $0x1a0] sm:$0xff]
                  %479 = vst [vmem:[%s425 + $0xd0] sm:$0xff] %v478
                  %v480 = vld [vmem:[%s424 + $0x1a8] sm:$0xff]
                  %481 = vst [vmem:[%s425 + $0xd8] sm:$0xff] %v480
                  %v482 = vld [vmem:[%s424 + $0x1c0] sm:$0xff]
                  %483 = vst [vmem:[%s425 + $0xe0] sm:$0xff] %v482
                  %v484 = vld [vmem:[%s424 + $0x1c8] sm:$0xff]
                  %485 = vst [vmem:[%s425 + $0xe8] sm:$0xff] %v484
                  %v486 = vld [vmem:[%s424 + $0x1e0] sm:$0xff]
                  %487 = vst [vmem:[%s425 + $0xf0] sm:$0xff] %v486
                  %v488 = vld [vmem:[%s424 + $0x1e8] sm:$0xff]
                  %489 = vst [vmem:[%s425 + $0xf8] sm:$0xff] %v488
                  %v490 = vld [vmem:[%s424 + $0x200] sm:$0xff]
                  %491 = vst [vmem:[%s425 + $0x100] sm:$0xff] %v490
                  %v492 = vld [vmem:[%s424 + $0x208] sm:$0xff]
                  %493 = vst [vmem:[%s425 + $0x108] sm:$0xff] %v492
                  %v494 = vld [vmem:[%s424 + $0x220] sm:$0xff]
                  %495 = vst [vmem:[%s425 + $0x110] sm:$0xff] %v494
                  %v496 = vld [vmem:[%s424 + $0x228] sm:$0xff]
                  %497 = vst [vmem:[%s425 + $0x118] sm:$0xff] %v496
                  %v498 = vld [vmem:[%s424 + $0x240] sm:$0xff]
                  %499 = vst [vmem:[%s425 + $0x120] sm:$0xff] %v498
                  %v500 = vld [vmem:[%s424 + $0x248] sm:$0xff]
                  %501 = vst [vmem:[%s425 + $0x128] sm:$0xff] %v500
                  %v502 = vld [vmem:[%s424 + $0x260] sm:$0xff]
                  %503 = vst [vmem:[%s425 + $0x130] sm:$0xff] %v502
                  %v504 = vld [vmem:[%s424 + $0x268] sm:$0xff]
                  %505 = vst [vmem:[%s425 + $0x138] sm:$0xff] %v504
                  %v506 = vld [vmem:[%s424 + $0x280] sm:$0xff]
                  %507 = vst [vmem:[%s425 + $0x140] sm:$0xff] %v506
                  %v508 = vld [vmem:[%s424 + $0x288] sm:$0xff]
                  %509 = vst [vmem:[%s425 + $0x148] sm:$0xff] %v508
                  %v510 = vld [vmem:[%s424 + $0x2a0] sm:$0xff]
                  %511 = vst [vmem:[%s425 + $0x150] sm:$0xff] %v510
                  %v512 = vld [vmem:[%s424 + $0x2a8] sm:$0xff]
                  %513 = vst [vmem:[%s425 + $0x158] sm:$0xff] %v512
                  %v514 = vld [vmem:[%s424 + $0x2c0] sm:$0xff]
                  %515 = vst [vmem:[%s425 + $0x160] sm:$0xff] %v514
                  %v516 = vld [vmem:[%s424 + $0x2c8] sm:$0xff]
                  %517 = vst [vmem:[%s425 + $0x168] sm:$0xff] %v516
                  %v518 = vld [vmem:[%s424 + $0x2e0] sm:$0xff]
                  %519 = vst [vmem:[%s425 + $0x170] sm:$0xff] %v518
                  %v520 = vld [vmem:[%s424 + $0x2e8] sm:$0xff]
                  %521 = vst [vmem:[%s425 + $0x178] sm:$0xff] %v520
                  %v522 = vld [vmem:[%s424 + $0x300] sm:$0xff]
                  %523 = vst [vmem:[%s425 + $0x180] sm:$0xff] %v522
                  %v524 = vld [vmem:[%s424 + $0x308] sm:$0xff]
                  %525 = vst [vmem:[%s425 + $0x188] sm:$0xff] %v524
                  %v526 = vld [vmem:[%s424 + $0x320] sm:$0xff]
                  %527 = vst [vmem:[%s425 + $0x190] sm:$0xff] %v526
                  %v528 = vld [vmem:[%s424 + $0x328] sm:$0xff]
                  %529 = vst [vmem:[%s425 + $0x198] sm:$0xff] %v528
                  %v530 = vld [vmem:[%s424 + $0x340] sm:$0xff]
                  %531 = vst [vmem:[%s425 + $0x1a0] sm:$0xff] %v530
                  %v532 = vld [vmem:[%s424 + $0x348] sm:$0xff]
                  %533 = vst [vmem:[%s425 + $0x1a8] sm:$0xff] %v532
                  %v534 = vld [vmem:[%s424 + $0x360] sm:$0xff]
                  %535 = vst [vmem:[%s425 + $0x1b0] sm:$0xff] %v534
                  %v536 = vld [vmem:[%s424 + $0x368] sm:$0xff]
                  %537 = vst [vmem:[%s425 + $0x1b8] sm:$0xff] %v536
                $region80: #{forward.1} parent=74 // loop_footer
                  %s423 = sadd.s32 1, %s419
                $region81: #{forward.1} parent=74 // loop_footer_branch
                  %418 = sbr.rel target = $region77
                $region82: #{forward.1} parent=74 // loop_exit
                  _
              $region75: #{forward.1} parent=59 // pred_fallthru
                _
              // Predicated region
              $region83: #{forward.1} parent=59 // pred_check
                _
              $region84: #{forward.1} parent=59 // pred_check_branch
                %539 = sbr.rel target = $region86
              $region85: #{forward.1} parent=59 // pred_region
                _
              $region86: #{forward.1} parent=59 // pred_fallthru
                _
            $region60: #{forward.1} parent=55 // pred_fallthru
              _
            // Predicated region
            $region61: #{forward.1} parent=55 // pred_check
              _
            $region62: #{forward.1} parent=55 // pred_check_branch
              %293 = sbr.rel target = $region64
            $region63: #{forward.1} parent=55 // pred_region
              %s295 = ssub.s32 256, 1
              loop: start=0, step=1, limit=1
              $region65: #{forward.1} parent=63 // loop_pre_header
                _
              $region66: #{forward.1} parent=63 // loop_header
                %s297 = sphi 0, %s301
                %p298 = scmp.ge.s32.totalorder %s297, 1
                %s302 = sphi %s287, %s287
                %s303 = sphi %s284, %s284
              $region67: #{forward.1} parent=63 // loop_header_branch
                %300 = sbr.rel (%p298) target = $region71
              $region68: #{forward.1} parent=63 // loop_body
                %v304 = vld [vmem:[%s302] sm:%s295]
                %305 = vst [vmem:[%s303] sm:%s295] %v304
                %v306 = vld [vmem:[%s302 + $0x8] sm:%s295]
                %307 = vst [vmem:[%s303 + $0x8] sm:%s295] %v306
                %v308 = vld [vmem:[%s302 + $0x20] sm:%s295]
                %309 = vst [vmem:[%s303 + $0x10] sm:%s295] %v308
                %v310 = vld [vmem:[%s302 + $0x28] sm:%s295]
                %311 = vst [vmem:[%s303 + $0x18] sm:%s295] %v310
                %v312 = vld [vmem:[%s302 + $0x40] sm:%s295]
                %313 = vst [vmem:[%s303 + $0x20] sm:%s295] %v312
                %v314 = vld [vmem:[%s302 + $0x48] sm:%s295]
                %315 = vst [vmem:[%s303 + $0x28] sm:%s295] %v314
                %v316 = vld [vmem:[%s302 + $0x60] sm:%s295]
                %317 = vst [vmem:[%s303 + $0x30] sm:%s295] %v316
                %v318 = vld [vmem:[%s302 + $0x68] sm:%s295]
                %319 = vst [vmem:[%s303 + $0x38] sm:%s295] %v318
                %v320 = vld [vmem:[%s302 + $0x80] sm:%s295]
                %321 = vst [vmem:[%s303 + $0x40] sm:%s295] %v320
                %v322 = vld [vmem:[%s302 + $0x88] sm:%s295]
                %323 = vst [vmem:[%s303 + $0x48] sm:%s295] %v322
                %v324 = vld [vmem:[%s302 + $0xa0] sm:%s295]
                %325 = vst [vmem:[%s303 + $0x50] sm:%s295] %v324
                %v326 = vld [vmem:[%s302 + $0xa8] sm:%s295]
                %327 = vst [vmem:[%s303 + $0x58] sm:%s295] %v326
                %v328 = vld [vmem:[%s302 + $0xc0] sm:%s295]
                %329 = vst [vmem:[%s303 + $0x60] sm:%s295] %v328
                %v330 = vld [vmem:[%s302 + $0xc8] sm:%s295]
                %331 = vst [vmem:[%s303 + $0x68] sm:%s295] %v330
                %v332 = vld [vmem:[%s302 + $0xe0] sm:%s295]
                %333 = vst [vmem:[%s303 + $0x70] sm:%s295] %v332
                %v334 = vld [vmem:[%s302 + $0xe8] sm:%s295]
                %335 = vst [vmem:[%s303 + $0x78] sm:%s295] %v334
                %v336 = vld [vmem:[%s302 + $0x100] sm:%s295]
                %337 = vst [vmem:[%s303 + $0x80] sm:%s295] %v336
                %v338 = vld [vmem:[%s302 + $0x108] sm:%s295]
                %339 = vst [vmem:[%s303 + $0x88] sm:%s295] %v338
                %v340 = vld [vmem:[%s302 + $0x120] sm:%s295]
                %341 = vst [vmem:[%s303 + $0x90] sm:%s295] %v340
                %v342 = vld [vmem:[%s302 + $0x128] sm:%s295]
                %343 = vst [vmem:[%s303 + $0x98] sm:%s295] %v342
                %v344 = vld [vmem:[%s302 + $0x140] sm:%s295]
                %345 = vst [vmem:[%s303 + $0xa0] sm:%s295] %v344
                %v346 = vld [vmem:[%s302 + $0x148] sm:%s295]
                %347 = vst [vmem:[%s303 + $0xa8] sm:%s295] %v346
                %v348 = vld [vmem:[%s302 + $0x160] sm:%s295]
                %349 = vst [vmem:[%s303 + $0xb0] sm:%s295] %v348
                %v350 = vld [vmem:[%s302 + $0x168] sm:%s295]
                %351 = vst [vmem:[%s303 + $0xb8] sm:%s295] %v350
                %v352 = vld [vmem:[%s302 + $0x180] sm:%s295]
                %353 = vst [vmem:[%s303 + $0xc0] sm:%s295] %v352
                %v354 = vld [vmem:[%s302 + $0x188] sm:%s295]
                %355 = vst [vmem:[%s303 + $0xc8] sm:%s295] %v354
                %v356 = vld [vmem:[%s302 + $0x1a0] sm:%s295]
                %357 = vst [vmem:[%s303 + $0xd0] sm:%s295] %v356
                %v358 = vld [vmem:[%s302 + $0x1a8] sm:%s295]
                %359 = vst [vmem:[%s303 + $0xd8] sm:%s295] %v358
                %v360 = vld [vmem:[%s302 + $0x1c0] sm:%s295]
                %361 = vst [vmem:[%s303 + $0xe0] sm:%s295] %v360
                %v362 = vld [vmem:[%s302 + $0x1c8] sm:%s295]
                %363 = vst [vmem:[%s303 + $0xe8] sm:%s295] %v362
                %v364 = vld [vmem:[%s302 + $0x1e0] sm:%s295]
                %365 = vst [vmem:[%s303 + $0xf0] sm:%s295] %v364
                %v366 = vld [vmem:[%s302 + $0x1e8] sm:%s295]
                %367 = vst [vmem:[%s303 + $0xf8] sm:%s295] %v366
                %v368 = vld [vmem:[%s302 + $0x200] sm:%s295]
                %369 = vst [vmem:[%s303 + $0x100] sm:%s295] %v368
                %v370 = vld [vmem:[%s302 + $0x208] sm:%s295]
                %371 = vst [vmem:[%s303 + $0x108] sm:%s295] %v370
                %v372 = vld [vmem:[%s302 + $0x220] sm:%s295]
                %373 = vst [vmem:[%s303 + $0x110] sm:%s295] %v372
                %v374 = vld [vmem:[%s302 + $0x228] sm:%s295]
                %375 = vst [vmem:[%s303 + $0x118] sm:%s295] %v374
                %v376 = vld [vmem:[%s302 + $0x240] sm:%s295]
                %377 = vst [vmem:[%s303 + $0x120] sm:%s295] %v376
                %v378 = vld [vmem:[%s302 + $0x248] sm:%s295]
                %379 = vst [vmem:[%s303 + $0x128] sm:%s295] %v378
                %v380 = vld [vmem:[%s302 + $0x260] sm:%s295]
                %381 = vst [vmem:[%s303 + $0x130] sm:%s295] %v380
                %v382 = vld [vmem:[%s302 + $0x268] sm:%s295]
                %383 = vst [vmem:[%s303 + $0x138] sm:%s295] %v382
                %v384 = vld [vmem:[%s302 + $0x280] sm:%s295]
                %385 = vst [vmem:[%s303 + $0x140] sm:%s295] %v384
                %v386 = vld [vmem:[%s302 + $0x288] sm:%s295]
                %387 = vst [vmem:[%s303 + $0x148] sm:%s295] %v386
                %v388 = vld [vmem:[%s302 + $0x2a0] sm:%s295]
                %389 = vst [vmem:[%s303 + $0x150] sm:%s295] %v388
                %v390 = vld [vmem:[%s302 + $0x2a8] sm:%s295]
                %391 = vst [vmem:[%s303 + $0x158] sm:%s295] %v390
                %v392 = vld [vmem:[%s302 + $0x2c0] sm:%s295]
                %393 = vst [vmem:[%s303 + $0x160] sm:%s295] %v392
                %v394 = vld [vmem:[%s302 + $0x2c8] sm:%s295]
                %395 = vst [vmem:[%s303 + $0x168] sm:%s295] %v394
                %v396 = vld [vmem:[%s302 + $0x2e0] sm:%s295]
                %397 = vst [vmem:[%s303 + $0x170] sm:%s295] %v396
                %v398 = vld [vmem:[%s302 + $0x2e8] sm:%s295]
                %399 = vst [vmem:[%s303 + $0x178] sm:%s295] %v398
                %v400 = vld [vmem:[%s302 + $0x300] sm:%s295]
                %401 = vst [vmem:[%s303 + $0x180] sm:%s295] %v400
                %v402 = vld [vmem:[%s302 + $0x308] sm:%s295]
                %403 = vst [vmem:[%s303 + $0x188] sm:%s295] %v402
                %v404 = vld [vmem:[%s302 + $0x320] sm:%s295]
                %405 = vst [vmem:[%s303 + $0x190] sm:%s295] %v404
                %v406 = vld [vmem:[%s302 + $0x328] sm:%s295]
                %407 = vst [vmem:[%s303 + $0x198] sm:%s295] %v406
                %v408 = vld [vmem:[%s302 + $0x340] sm:%s295]
                %409 = vst [vmem:[%s303 + $0x1a0] sm:%s295] %v408
                %v410 = vld [vmem:[%s302 + $0x348] sm:%s295]
                %411 = vst [vmem:[%s303 + $0x1a8] sm:%s295] %v410
                %v412 = vld [vmem:[%s302 + $0x360] sm:%s295]
                %413 = vst [vmem:[%s303 + $0x1b0] sm:%s295] %v412
                %v414 = vld [vmem:[%s302 + $0x368] sm:%s295]
                %415 = vst [vmem:[%s303 + $0x1b8] sm:%s295] %v414
              $region69: #{forward.1} parent=63 // loop_footer
                %s301 = sadd.s32 1, %s297
              $region70: #{forward.1} parent=63 // loop_footer_branch
                %296 = sbr.rel target = $region66
              $region71: #{forward.1} parent=63 // loop_exit
                _
            $region64: #{forward.1} parent=55 // pred_fallthru
              _
          $region56: #{forward.1} parent=51 // pred_fallthru
            _
          %540 = vnop
        $region52: #{forward.1} parent=47 // pred_fallthru
          _
      $region48: #{forward.1} parent=5 // pred_fallthru
        _
      %p541 = scmp.le.s32.totalorder 1, %s15
      %p542 = scmp.lt.s32.totalorder %s15, 3
      %p543 = pnand %p541, %p542
      %p544 = pneg %p543
      // Predicated region
      $region87: #{forward.1} parent=5 // pred_check
        _
      $region88: #{forward.1} parent=5 // pred_check_branch
        %546 = sbr.rel (%p543) target = $region90
      $region89: #{forward.1} parent=5 // pred_region
        %s547 = ssub.s32 %s15, 1
        %s548 = sand.u32 %s28, 1
        %s549 = sand.u32 %s28, 1
        %s550 = smul.addr %s549, 448
        %s551 = scalar_lea.vmem [#allocation2], %s550
        // Predicated region
        $region91: #{forward.1} parent=89 // pred_check
          %p552 = pneg %p41
        $region92: #{forward.1} parent=89 // pred_check_branch
          %554 = sbr.rel (%p552) target = $region94
        $region93: #{forward.1} parent=89 // pred_region
          _
        $region94: #{forward.1} parent=89 // pred_fallthru
          _
        %s555 = sand.u32 %s28, 1
        %s556 = sand.u32 %s28, 1
        %s557 = smul.addr %s556, 448
        %s558 = scalar_lea.vmem [#allocation2], %s557
        %p559 = pneg %p41
        %p560 = pneg %p38
        %p561 = pneg %p62
        %p562 = pneg %p59
        %p563 = pneg %p83
        %p564 = pneg %p80
        %p565 = pneg %p104
        %p566 = pneg %p101
        %p567 = pneg %p125
        %p568 = pneg %p122
        %p569 = pneg %p146
        %p570 = pneg %p143
        %p571 = pneg %p167
        %p572 = pneg %p164
        %p573 = pneg %p188
        %p574 = pneg %p185
        %p575 = pneg %p209
        %p576 = pneg %p206
        %p577 = pneg %p235
        %p578 = pneg %p232
        %s579 = smul.u32 2, %s20
        %p580 = scmp.lt.s32.totalorder %s579, 3
        %s581 = scalar_select %p580, %s579, 3
        %s582 = smul.addr %s581, 8
        %s583 = scalar_lea.vmem %s9, %s582
        %s584 = smul.u32 2, %s20
        %s585 = smul.u32 2, %s20
        %p586 = scmp.lt.s32.totalorder %s585, 3
        %s587 = scalar_select %p586, %s585, 3
        %s588 = smul.addr %s587, 8
        %s589 = scalar_lea.vmem %s9, %s588
        %s590 = smul.u32 2, %s20
        %v592 = vld [vmem:[%s8] sm:$0x3f]
        %v593 = vld [vmem:[%s8 + $0x8] sm:$0x3f]
        %v594 = vld [vmem:[%s8 + $0x10] sm:$0x3f]
        %v595 = vld [vmem:[%s551] sm:$0xff]
        %v596 = vld [vmem:[%s551 + $0x8] sm:$0xff]
        %v597 = vld [vmem:[%s551 + $0x10] sm:$0xff]
        %v598 = vld [vmem:[%s551 + $0x18] sm:$0xff]
        %v599 = vld [vmem:[%s551 + $0x20] sm:$0xff]
        %v600 = vld [vmem:[%s551 + $0x28] sm:$0xff]
        %v601 = vld [vmem:[%s551 + $0x30] sm:$0xff]
        %v602 = vld [vmem:[%s551 + $0x38] sm:$0xff]
        %v603 = vld [vmem:[%s551 + $0x40] sm:$0xff]
        %v604 = vld [vmem:[%s551 + $0x48] sm:$0xff]
        %v605 = vld [vmem:[%s551 + $0x50] sm:$0xff]
        %v606 = vld [vmem:[%s551 + $0x58] sm:$0xff]
        %v607 = vld [vmem:[%s551 + $0x60] sm:$0xff]
        %v608 = vld [vmem:[%s551 + $0x68] sm:$0xff]
        %v609 = vld [vmem:[%s551 + $0x70] sm:$0xff]
        %v610 = vld [vmem:[%s551 + $0x78] sm:$0xff]
        %v611 = vld [vmem:[%s551 + $0x80] sm:$0xff]
        %v612 = vld [vmem:[%s551 + $0x88] sm:$0xff]
        %v613 = vld [vmem:[%s551 + $0x90] sm:$0xff]
        %v614 = vld [vmem:[%s551 + $0x98] sm:$0xff]
        %v615 = vld [vmem:[%s551 + $0xa0] sm:$0xff]
        %v616 = vld [vmem:[%s551 + $0xa8] sm:$0xff]
        %v617 = vld [vmem:[%s551 + $0xb0] sm:$0xff]
        %v618 = vld [vmem:[%s551 + $0xb8] sm:$0xff]
        %v619 = vld [vmem:[%s551 + $0xc0] sm:$0xff]
        %v620 = vld [vmem:[%s551 + $0xc8] sm:$0xff]
        %v621 = vld [vmem:[%s551 + $0xd0] sm:$0xff]
        %v622 = vld [vmem:[%s551 + $0xd8] sm:$0xff]
        %v623 = vld [vmem:[%s551 + $0xe0] sm:$0xff]
        %v624 = vld [vmem:[%s551 + $0xe8] sm:$0xff]
        %v625 = vld [vmem:[%s551 + $0xf0] sm:$0xff]
        %v626 = vld [vmem:[%s551 + $0xf8] sm:$0xff]
        %v627 = vld [vmem:[%s551 + $0x100] sm:$0xff]
        %v628 = vld [vmem:[%s551 + $0x108] sm:$0xff]
        %v629 = vld [vmem:[%s551 + $0x110] sm:$0xff]
        %v630 = vld [vmem:[%s551 + $0x118] sm:$0xff]
        %v631 = vld [vmem:[%s551 + $0x120] sm:$0xff]
        %v632 = vld [vmem:[%s551 + $0x128] sm:$0xff]
        %v633 = vld [vmem:[%s551 + $0x130] sm:$0xff]
        %v634 = vld [vmem:[%s551 + $0x138] sm:$0xff]
        %v635 = vld [vmem:[%s551 + $0x140] sm:$0xff]
        %v636 = vld [vmem:[%s551 + $0x148] sm:$0xff]
        %v637 = vld [vmem:[%s551 + $0x150] sm:$0xff]
        %v638 = vld [vmem:[%s551 + $0x158] sm:$0xff]
        %v639 = vld [vmem:[%s551 + $0x160] sm:$0xff]
        %v640 = vld [vmem:[%s551 + $0x168] sm:$0xff]
        %v641 = vld [vmem:[%s551 + $0x170] sm:$0xff]
        %v642 = vld [vmem:[%s551 + $0x178] sm:$0xff]
        %v643 = vld [vmem:[%s551 + $0x180] sm:$0xff]
        %v644 = vld [vmem:[%s551 + $0x188] sm:$0xff]
        %v645 = vld [vmem:[%s551 + $0x190] sm:$0xff]
        %v646 = vld [vmem:[%s551 + $0x198] sm:$0xff]
        %v647 = vld [vmem:[%s551 + $0x1a0] sm:$0xff]
        %v648 = vld [vmem:[%s551 + $0x1a8] sm:$0xff]
        %v649 = vld [vmem:[%s551 + $0x1b0] sm:$0xff]
        %v650 = vld [vmem:[%s551 + $0x1b8] sm:$0xff]
        %v651 = vpack.c.bf16 %v595, %v595
        %v652 = vpack.c.bf16 %v596, %v596
        %v653 = vpack.c.bf16 %v597, %v597
        %v654 = vpack.c.bf16 %v598, %v598
        %v655 = vpack.c.bf16 %v599, %v599
        %v656 = vpack.c.bf16 %v600, %v600
        %v657 = vpack.c.bf16 %v601, %v601
        %v658 = vpack.c.bf16 %v602, %v602
        %v659 = vpack.c.bf16 %v603, %v603
        %v660 = vpack.c.bf16 %v604, %v604
        %v661 = vpack.c.bf16 %v605, %v605
        %v662 = vpack.c.bf16 %v606, %v606
        %v663 = vpack.c.bf16 %v607, %v607
        %v664 = vpack.c.bf16 %v608, %v608
        %v665 = vpack.c.bf16 %v609, %v609
        %v666 = vpack.c.bf16 %v610, %v610
        %v667 = vpack.c.bf16 %v611, %v611
        %v668 = vpack.c.bf16 %v612, %v612
        %v669 = vpack.c.bf16 %v613, %v613
        %v670 = vpack.c.bf16 %v614, %v614
        %v671 = vpack.c.bf16 %v615, %v615
        %v672 = vpack.c.bf16 %v616, %v616
        %v673 = vpack.c.bf16 %v617, %v617
        %v674 = vpack.c.bf16 %v618, %v618
        %v675 = vpack.c.bf16 %v619, %v619
        %v676 = vpack.c.bf16 %v620, %v620
        %v677 = vpack.c.bf16 %v621, %v621
        %v678 = vpack.c.bf16 %v622, %v622
        %v679 = vpack.c.bf16 %v623, %v623
        %v680 = vpack.c.bf16 %v624, %v624
        %v681 = vpack.c.bf16 %v625, %v625
        %v682 = vpack.c.bf16 %v626, %v626
        %v683 = vpack.c.bf16 %v627, %v627
        %v684 = vpack.c.bf16 %v628, %v628
        %v685 = vpack.c.bf16 %v629, %v629
        %v686 = vpack.c.bf16 %v630, %v630
        %v687 = vpack.c.bf16 %v631, %v631
        %v688 = vpack.c.bf16 %v632, %v632
        %v689 = vpack.c.bf16 %v633, %v633
        %v690 = vpack.c.bf16 %v634, %v634
        %v691 = vpack.c.bf16 %v635, %v635
        %v692 = vpack.c.bf16 %v636, %v636
        %v693 = vpack.c.bf16 %v637, %v637
        %v694 = vpack.c.bf16 %v638, %v638
        %v695 = vpack.c.bf16 %v639, %v639
        %v696 = vpack.c.bf16 %v640, %v640
        %v697 = vpack.c.bf16 %v641, %v641
        %v698 = vpack.c.bf16 %v642, %v642
        %v699 = vpack.c.bf16 %v643, %v643
        %v700 = vpack.c.bf16 %v644, %v644
        %v701 = vpack.c.bf16 %v645, %v645
        %v702 = vpack.c.bf16 %v646, %v646
        %v703 = vpack.c.bf16 %v647, %v647
        %v704 = vpack.c.bf16 %v648, %v648
        %v705 = vpack.c.bf16 %v649, %v649
        %v706 = vpack.c.bf16 %v650, %v650
        %v707 = vld [vmem:[%s1] sm:$0xff]
        %v708 = vld [vmem:[%s1 + $0x8] sm:$0xf]
        %v709 = vld [vmem:[%s1 + $0xc] sm:$0xff]
        %v710 = vld [vmem:[%s1 + $0x14] sm:$0xf]
        %v711 = vld [vmem:[%s1 + $0x18] sm:$0xff]
        %v712 = vld [vmem:[%s1 + $0x20] sm:$0xf]
        %v713 = vld [vmem:[%s1 + $0x24] sm:$0x33]
        %v714 = vld [vmem:[%s1 + $0x2c] sm:$0x3]
        %s715 = scalar_lea.vmem %s1, 48
        %v716 = vld [vmem:[%s715] sm:$0xff]
        %v717 = vld [vmem:[%s715 + $0x8] sm:$0xf]
        %v718 = vld [vmem:[%s715 + $0xc] sm:$0xff]
        %v719 = vld [vmem:[%s715 + $0x14] sm:$0xf]
        %v720 = vld [vmem:[%s715 + $0x18] sm:$0xff]
        %v721 = vld [vmem:[%s715 + $0x20] sm:$0xf]
        %v722 = vld [vmem:[%s715 + $0x24] sm:$0x33]
        %v723 = vld [vmem:[%s715 + $0x2c] sm:$0x3]
        %v776 = vunpack.c.l.b16 %v653
        %v777 = vunpack.c.l.b16 %v654
        %v778 = vunpack.c.l.b16 %v655
        %v779 = vunpack.c.l.b16 %v656
        %v780 = vunpack.c.l.b16 %v657
        %v781 = vunpack.c.l.b16 %v658
        %v782 = vunpack.c.l.b16 %v659
        %v783 = vunpack.c.l.b16 %v660
        %v784 = vunpack.c.l.b16 %v661
        %v785 = vunpack.c.l.b16 %v662
        %v786 = vunpack.c.l.b16 %v663
        %v787 = vunpack.c.l.b16 %v664
        %v788 = vunpack.c.l.b16 %v665
        %v789 = vunpack.c.l.b16 %v666
        %v790 = vunpack.c.l.b16 %v667
        %v791 = vunpack.c.l.b16 %v668
        %v792 = vunpack.c.l.b16 %v669
        %v793 = vunpack.c.l.b16 %v670
        %v794 = vunpack.c.l.b16 %v671
        %v795 = vunpack.c.l.b16 %v672
        %v796 = vunpack.c.l.b16 %v673
        %v797 = vunpack.c.l.b16 %v674
        %v798 = vunpack.c.l.b16 %v675
        %v799 = vunpack.c.l.b16 %v676
        %v800 = vunpack.c.l.b16 %v677
        %v801 = vunpack.c.l.b16 %v678
        %v802 = vunpack.c.l.b16 %v679
        %v803 = vunpack.c.l.b16 %v680
        %v804 = vunpack.c.l.b16 %v681
        %v805 = vunpack.c.l.b16 %v682
        %v806 = vunpack.c.l.b16 %v683
        %v807 = vunpack.c.l.b16 %v684
        %v808 = vunpack.c.l.b16 %v685
        %v809 = vunpack.c.l.b16 %v686
        %v810 = vunpack.c.l.b16 %v687
        %v811 = vunpack.c.l.b16 %v688
        %v812 = vunpack.c.l.b16 %v689
        %v813 = vunpack.c.l.b16 %v690
        %v814 = vunpack.c.l.b16 %v691
        %v815 = vunpack.c.l.b16 %v692
        %v816 = vunpack.c.l.b16 %v693
        %v817 = vunpack.c.l.b16 %v694
        %v818 = vunpack.c.l.b16 %v695
        %v819 = vunpack.c.l.b16 %v696
        %v820 = vunpack.c.l.b16 %v697
        %v821 = vunpack.c.l.b16 %v698
        %v822 = vunpack.c.l.b16 %v699
        %v823 = vunpack.c.l.b16 %v700
        %v824 = vunpack.c.l.b16 %v701
        %v825 = vunpack.c.l.b16 %v702
        %v826 = vunpack.c.l.b16 %v703
        %v827 = vunpack.c.l.b16 %v704
        %v828 = vpack.c.b16 %v777, %v776
        %v829 = vpack.c.b16 %v779, %v778
        %v830 = vpack.c.b16 %v781, %v780
        %v831 = vpack.c.b16 %v783, %v782
        %v832 = vpack.c.b16 %v785, %v784
        %v833 = vpack.c.b16 %v787, %v786
        %v834 = vpack.c.b16 %v789, %v788
        %v835 = vpack.c.b16 %v791, %v790
        %v836 = vpack.c.b16 %v793, %v792
        %v837 = vpack.c.b16 %v795, %v794
        %v838 = vpack.c.b16 %v797, %v796
        %v839 = vpack.c.b16 %v799, %v798
        %v840 = vpack.c.b16 %v801, %v800
        %v841 = vpack.c.b16 %v803, %v802
        %v842 = vpack.c.b16 %v805, %v804
        %v843 = vpack.c.b16 %v807, %v806
        %v844 = vpack.c.b16 %v809, %v808
        %v845 = vpack.c.b16 %v811, %v810
        %v846 = vpack.c.b16 %v813, %v812
        %v847 = vpack.c.b16 %v815, %v814
        %v848 = vpack.c.b16 %v817, %v816
        %v849 = vpack.c.b16 %v819, %v818
        %v850 = vpack.c.b16 %v821, %v820
        %v851 = vpack.c.b16 %v823, %v822
        %v852 = vpack.c.b16 %v825, %v824
        %v853 = vpack.c.b16 %v827, %v826
        %v862 = vunpack.c.l.b16 %v716
        %v863 = vunpack.c.h.b16 %v716
        %v864 = vunpack.c.l.b16 %v717
        %v865 = vunpack.c.l.b16 %v718
        %v866 = vunpack.c.h.b16 %v718
        %v867 = vunpack.c.l.b16 %v719
        %v868 = vunpack.c.l.b16 %v720
        %v869 = vunpack.c.h.b16 %v720
        %v870 = vunpack.c.l.b16 %v721
        %v871 = vunpack.c.l.b16 %v722
        %v872 = vunpack.c.h.b16 %v722
        %v873 = vunpack.c.l.b16 %v723
        %v874 = vpack.c.b16 %v865, %v862
        %v875 = vpack.c.b16 %v866, %v863
        %v876 = vpack.c.b16 %v867, %v864
        %v877 = vpack.c.b16 %v871, %v868
        %v878 = vpack.c.b16 %v872, %v869
        %v879 = vpack.c.b16 %v873, %v870
        %vm883 = vcmask 228352
        %v885 = vsel %vm883, %v828, 0
        %v888 = vsel %vm883, %v829, 0
        %v891 = vsel %vm883, %v830, 0
        %v894 = vsel %vm883, %v831, 0
        %v897 = vsel %vm883, %v832, 0
        %v900 = vsel %vm883, %v833, 0
        %v903 = vsel %vm883, %v834, 0
        %v906 = vsel %vm883, %v835, 0
        %v909 = vsel %vm883, %v836, 0
        %v912 = vsel %vm883, %v837, 0
        %v915 = vsel %vm883, %v838, 0
        %v918 = vsel %vm883, %v839, 0
        %v921 = vsel %vm883, %v840, 0
        %v924 = vsel %vm883, %v841, 0
        %v927 = vsel %vm883, %v842, 0
        %v930 = vsel %vm883, %v843, 0
        %v933 = vsel %vm883, %v844, 0
        %v936 = vsel %vm883, %v845, 0
        %v939 = vsel %vm883, %v846, 0
        %v942 = vsel %vm883, %v847, 0
        %v945 = vsel %vm883, %v848, 0
        %v948 = vsel %vm883, %v849, 0
        %v951 = vsel %vm883, %v850, 0
        %v954 = vsel %vm883, %v851, 0
        %v957 = vsel %vm883, %v852, 0
        %v960 = vsel %vm883, %v853, 0
        %vm962 = vcmask 1045504
        %v964 = vsel %vm962, %v877, 0
        %v967 = vsel %vm962, %v878, 0
        %v970 = vsel %vm962, %v879, 0
        %972 = vmatpush.bf16.msra.mxu0 0
        %973 = vmatpush.bf16.msra.mxu0 0
        %974 = vmatpush.bf16.msra.mxu0 0
        %975 = vmatpush.bf16.msra.mxu0 0
        %976 = vmatpush.bf16.msra.mxu0 0
        %977 = vmatpush.bf16.msra.mxu0 0
        %978 = vmatpush.bf16.msra.mxu0 %v964
        %979 = vmatpush.bf16.msra.mxu0 %v874
        %980 = vmatmul.bf16.gmra.mxu0 %v885
        %v981 = vpop.f32.mrf.mxu0
        %v982 = vadd.f32 0.0, %v981
        %v983 = vpop.f32.mrf.mxu0
        %v984 = vadd.f32 0.0, %v983
        %985 = vmatmul.bf16.gmra.mxu0 %v888
        %v986 = vpop.f32.mrf.mxu0
        %v987 = vadd.f32 0.0, %v986
        %v988 = vpop.f32.mrf.mxu0
        %v989 = vadd.f32 0.0, %v988
        %990 = vmatmul.bf16.gmra.mxu0 %v891
        %v991 = vpop.f32.mrf.mxu0
        %v992 = vadd.f32 0.0, %v991
        %v993 = vpop.f32.mrf.mxu0
        %v994 = vadd.f32 0.0, %v993
        %995 = vmatmul.bf16.gmra.mxu0 %v894
        %v996 = vpop.f32.mrf.mxu0
        %v997 = vadd.f32 0.0, %v996
        %v998 = vpop.f32.mrf.mxu0
        %v999 = vadd.f32 0.0, %v998
        %1000 = vmatmul.bf16.gmra.mxu0 %v897
        %v1001 = vpop.f32.mrf.mxu0
        %v1002 = vadd.f32 0.0, %v1001
        %v1003 = vpop.f32.mrf.mxu0
        %v1004 = vadd.f32 0.0, %v1003
        %1005 = vmatmul.bf16.gmra.mxu0 %v900
        %v1006 = vpop.f32.mrf.mxu0
        %v1007 = vadd.f32 0.0, %v1006
        %v1008 = vpop.f32.mrf.mxu0
        %v1009 = vadd.f32 0.0, %v1008
        %1010 = vmatmul.bf16.gmra.mxu0 %v903
        %v1011 = vpop.f32.mrf.mxu0
        %v1012 = vadd.f32 0.0, %v1011
        %v1013 = vpop.f32.mrf.mxu0
        %v1014 = vadd.f32 0.0, %v1013
        %1015 = vmatmul.bf16.gmra.mxu0 %v906
        %v1016 = vpop.f32.mrf.mxu0
        %v1017 = vadd.f32 0.0, %v1016
        %v1018 = vpop.f32.mrf.mxu0
        %v1019 = vadd.f32 0.0, %v1018
        %1020 = vmatmul.bf16.gmra.mxu0 %v909
        %v1021 = vpop.f32.mrf.mxu0
        %v1022 = vadd.f32 0.0, %v1021
        %v1023 = vpop.f32.mrf.mxu0
        %v1024 = vadd.f32 0.0, %v1023
        %1025 = vmatmul.bf16.gmra.mxu0 %v912
        %v1026 = vpop.f32.mrf.mxu0
        %v1027 = vadd.f32 0.0, %v1026
        %v1028 = vpop.f32.mrf.mxu0
        %v1029 = vadd.f32 0.0, %v1028
        %1030 = vmatmul.bf16.gmra.mxu0 %v915
        %v1031 = vpop.f32.mrf.mxu0
        %v1032 = vadd.f32 0.0, %v1031
        %v1033 = vpop.f32.mrf.mxu0
        %v1034 = vadd.f32 0.0, %v1033
        %1035 = vmatmul.bf16.gmra.mxu0 %v918
        %v1036 = vpop.f32.mrf.mxu0
        %v1037 = vadd.f32 0.0, %v1036
        %v1038 = vpop.f32.mrf.mxu0
        %v1039 = vadd.f32 0.0, %v1038
        %1040 = vmatmul.bf16.gmra.mxu0 %v921
        %v1041 = vpop.f32.mrf.mxu0
        %v1042 = vadd.f32 0.0, %v1041
        %v1043 = vpop.f32.mrf.mxu0
        %v1044 = vadd.f32 0.0, %v1043
        %1045 = vmatmul.bf16.gmra.mxu0 %v924
        %v1046 = vpop.f32.mrf.mxu0
        %v1047 = vadd.f32 0.0, %v1046
        %v1048 = vpop.f32.mrf.mxu0
        %v1049 = vadd.f32 0.0, %v1048
        %1050 = vmatmul.bf16.gmra.mxu0 %v927
        %v1051 = vpop.f32.mrf.mxu0
        %v1052 = vadd.f32 0.0, %v1051
        %v1053 = vpop.f32.mrf.mxu0
        %v1054 = vadd.f32 0.0, %v1053
        %1055 = vmatmul.bf16.gmra.mxu0 %v930
        %v1056 = vpop.f32.mrf.mxu0
        %v1057 = vadd.f32 0.0, %v1056
        %v1058 = vpop.f32.mrf.mxu0
        %v1059 = vadd.f32 0.0, %v1058
        %1060 = vmatmul.bf16.gmra.mxu0 %v933
        %v1061 = vpop.f32.mrf.mxu0
        %v1062 = vadd.f32 0.0, %v1061
        %v1063 = vpop.f32.mrf.mxu0
        %v1064 = vadd.f32 0.0, %v1063
        %1065 = vmatmul.bf16.gmra.mxu0 %v936
        %v1066 = vpop.f32.mrf.mxu0
        %v1067 = vadd.f32 0.0, %v1066
        %v1068 = vpop.f32.mrf.mxu0
        %v1069 = vadd.f32 0.0, %v1068
        %1070 = vmatmul.bf16.gmra.mxu0 %v939
        %v1071 = vpop.f32.mrf.mxu0
        %v1072 = vadd.f32 0.0, %v1071
        %v1073 = vpop.f32.mrf.mxu0
        %v1074 = vadd.f32 0.0, %v1073
        %1075 = vmatmul.bf16.gmra.mxu0 %v942
        %v1076 = vpop.f32.mrf.mxu0
        %v1077 = vadd.f32 0.0, %v1076
        %v1078 = vpop.f32.mrf.mxu0
        %v1079 = vadd.f32 0.0, %v1078
        %1080 = vmatmul.bf16.gmra.mxu0 %v945
        %v1081 = vpop.f32.mrf.mxu0
        %v1082 = vadd.f32 0.0, %v1081
        %v1083 = vpop.f32.mrf.mxu0
        %v1084 = vadd.f32 0.0, %v1083
        %1085 = vmatmul.bf16.gmra.mxu0 %v948
        %v1086 = vpop.f32.mrf.mxu0
        %v1087 = vadd.f32 0.0, %v1086
        %v1088 = vpop.f32.mrf.mxu0
        %v1089 = vadd.f32 0.0, %v1088
        %1090 = vmatmul.bf16.gmra.mxu0 %v951
        %v1091 = vpop.f32.mrf.mxu0
        %v1092 = vadd.f32 0.0, %v1091
        %v1093 = vpop.f32.mrf.mxu0
        %v1094 = vadd.f32 0.0, %v1093
        %1095 = vmatmul.bf16.gmra.mxu0 %v954
        %v1096 = vpop.f32.mrf.mxu0
        %v1097 = vadd.f32 0.0, %v1096
        %v1098 = vpop.f32.mrf.mxu0
        %v1099 = vadd.f32 0.0, %v1098
        %1100 = vmatmul.bf16.gmra.mxu0 %v957
        %v1101 = vpop.f32.mrf.mxu0
        %v1102 = vadd.f32 0.0, %v1101
        %v1103 = vpop.f32.mrf.mxu0
        %v1104 = vadd.f32 0.0, %v1103
        %1105 = vmatmul.bf16.gmra.mxu0 %v960
        %v1106 = vpop.f32.mrf.mxu0
        %v1107 = vadd.f32 0.0, %v1106
        %v1108 = vpop.f32.mrf.mxu0
        %v1109 = vadd.f32 0.0, %v1108
        %1110 = vdwg.mxu0
        %1111 = vmatpush.bf16.msra.mxu0 0
        %1112 = vmatpush.bf16.msra.mxu0 0
        %1113 = vmatpush.bf16.msra.mxu0 0
        %1114 = vmatpush.bf16.msra.mxu0 0
        %1115 = vmatpush.bf16.msra.mxu0 0
        %1116 = vmatpush.bf16.msra.mxu0 0
        %1117 = vmatpush.bf16.msra.mxu0 %v967
        %1118 = vmatpush.bf16.msra.mxu0 %v875
        %1119 = vmatmul.bf16.gmra.mxu0 %v885
        %v1120 = vpop.f32.mrf.mxu0
        %v1121 = vadd.f32 0.0, %v1120
        %v1122 = vpop.f32.mrf.mxu0
        %v1123 = vadd.f32 0.0, %v1122
        %1124 = vmatmul.bf16.gmra.mxu0 %v888
        %v1125 = vpop.f32.mrf.mxu0
        %v1126 = vadd.f32 0.0, %v1125
        %v1127 = vpop.f32.mrf.mxu0
        %v1128 = vadd.f32 0.0, %v1127
        %1129 = vmatmul.bf16.gmra.mxu0 %v891
        %v1130 = vpop.f32.mrf.mxu0
        %v1131 = vadd.f32 0.0, %v1130
        %v1132 = vpop.f32.mrf.mxu0
        %v1133 = vadd.f32 0.0, %v1132
        %1134 = vmatmul.bf16.gmra.mxu0 %v894
        %v1135 = vpop.f32.mrf.mxu0
        %v1136 = vadd.f32 0.0, %v1135
        %v1137 = vpop.f32.mrf.mxu0
        %v1138 = vadd.f32 0.0, %v1137
        %1139 = vmatmul.bf16.gmra.mxu0 %v897
        %v1140 = vpop.f32.mrf.mxu0
        %v1141 = vadd.f32 0.0, %v1140
        %v1142 = vpop.f32.mrf.mxu0
        %v1143 = vadd.f32 0.0, %v1142
        %1144 = vmatmul.bf16.gmra.mxu0 %v900
        %v1145 = vpop.f32.mrf.mxu0
        %v1146 = vadd.f32 0.0, %v1145
        %v1147 = vpop.f32.mrf.mxu0
        %v1148 = vadd.f32 0.0, %v1147
        %1149 = vmatmul.bf16.gmra.mxu0 %v903
        %v1150 = vpop.f32.mrf.mxu0
        %v1151 = vadd.f32 0.0, %v1150
        %v1152 = vpop.f32.mrf.mxu0
        %v1153 = vadd.f32 0.0, %v1152
        %1154 = vmatmul.bf16.gmra.mxu0 %v906
        %v1155 = vpop.f32.mrf.mxu0
        %v1156 = vadd.f32 0.0, %v1155
        %v1157 = vpop.f32.mrf.mxu0
        %v1158 = vadd.f32 0.0, %v1157
        %1159 = vmatmul.bf16.gmra.mxu0 %v909
        %v1160 = vpop.f32.mrf.mxu0
        %v1161 = vadd.f32 0.0, %v1160
        %v1162 = vpop.f32.mrf.mxu0
        %v1163 = vadd.f32 0.0, %v1162
        %1164 = vmatmul.bf16.gmra.mxu0 %v912
        %v1165 = vpop.f32.mrf.mxu0
        %v1166 = vadd.f32 0.0, %v1165
        %v1167 = vpop.f32.mrf.mxu0
        %v1168 = vadd.f32 0.0, %v1167
        %1169 = vmatmul.bf16.gmra.mxu0 %v915
        %v1170 = vpop.f32.mrf.mxu0
        %v1171 = vadd.f32 0.0, %v1170
        %v1172 = vpop.f32.mrf.mxu0
        %v1173 = vadd.f32 0.0, %v1172
        %1174 = vmatmul.bf16.gmra.mxu0 %v918
        %v1175 = vpop.f32.mrf.mxu0
        %v1176 = vadd.f32 0.0, %v1175
        %v1177 = vpop.f32.mrf.mxu0
        %v1178 = vadd.f32 0.0, %v1177
        %1179 = vmatmul.bf16.gmra.mxu0 %v921
        %v1180 = vpop.f32.mrf.mxu0
        %v1181 = vadd.f32 0.0, %v1180
        %v1182 = vpop.f32.mrf.mxu0
        %v1183 = vadd.f32 0.0, %v1182
        %1184 = vmatmul.bf16.gmra.mxu0 %v924
        %v1185 = vpop.f32.mrf.mxu0
        %v1186 = vadd.f32 0.0, %v1185
        %v1187 = vpop.f32.mrf.mxu0
        %v1188 = vadd.f32 0.0, %v1187
        %1189 = vmatmul.bf16.gmra.mxu0 %v927
        %v1190 = vpop.f32.mrf.mxu0
        %v1191 = vadd.f32 0.0, %v1190
        %v1192 = vpop.f32.mrf.mxu0
        %v1193 = vadd.f32 0.0, %v1192
        %1194 = vmatmul.bf16.gmra.mxu0 %v930
        %v1195 = vpop.f32.mrf.mxu0
        %v1196 = vadd.f32 0.0, %v1195
        %v1197 = vpop.f32.mrf.mxu0
        %v1198 = vadd.f32 0.0, %v1197
        %1199 = vmatmul.bf16.gmra.mxu0 %v933
        %v1200 = vpop.f32.mrf.mxu0
        %v1201 = vadd.f32 0.0, %v1200
        %v1202 = vpop.f32.mrf.mxu0
        %v1203 = vadd.f32 0.0, %v1202
        %1204 = vmatmul.bf16.gmra.mxu0 %v936
        %v1205 = vpop.f32.mrf.mxu0
        %v1206 = vadd.f32 0.0, %v1205
        %v1207 = vpop.f32.mrf.mxu0
        %v1208 = vadd.f32 0.0, %v1207
        %1209 = vmatmul.bf16.gmra.mxu0 %v939
        %v1210 = vpop.f32.mrf.mxu0
        %v1211 = vadd.f32 0.0, %v1210
        %v1212 = vpop.f32.mrf.mxu0
        %v1213 = vadd.f32 0.0, %v1212
        %1214 = vmatmul.bf16.gmra.mxu0 %v942
        %v1215 = vpop.f32.mrf.mxu0
        %v1216 = vadd.f32 0.0, %v1215
        %v1217 = vpop.f32.mrf.mxu0
        %v1218 = vadd.f32 0.0, %v1217
        %1219 = vmatmul.bf16.gmra.mxu0 %v945
        %v1220 = vpop.f32.mrf.mxu0
        %v1221 = vadd.f32 0.0, %v1220
        %v1222 = vpop.f32.mrf.mxu0
        %v1223 = vadd.f32 0.0, %v1222
        %1224 = vmatmul.bf16.gmra.mxu0 %v948
        %v1225 = vpop.f32.mrf.mxu0
        %v1226 = vadd.f32 0.0, %v1225
        %v1227 = vpop.f32.mrf.mxu0
        %v1228 = vadd.f32 0.0, %v1227
        %1229 = vmatmul.bf16.gmra.mxu0 %v951
        %v1230 = vpop.f32.mrf.mxu0
        %v1231 = vadd.f32 0.0, %v1230
        %v1232 = vpop.f32.mrf.mxu0
        %v1233 = vadd.f32 0.0, %v1232
        %1234 = vmatmul.bf16.gmra.mxu0 %v954
        %v1235 = vpop.f32.mrf.mxu0
        %v1236 = vadd.f32 0.0, %v1235
        %v1237 = vpop.f32.mrf.mxu0
        %v1238 = vadd.f32 0.0, %v1237
        %1239 = vmatmul.bf16.gmra.mxu0 %v957
        %v1240 = vpop.f32.mrf.mxu0
        %v1241 = vadd.f32 0.0, %v1240
        %v1242 = vpop.f32.mrf.mxu0
        %v1243 = vadd.f32 0.0, %v1242
        %1244 = vmatmul.bf16.gmra.mxu0 %v960
        %v1245 = vpop.f32.mrf.mxu0
        %v1246 = vadd.f32 0.0, %v1245
        %v1247 = vpop.f32.mrf.mxu0
        %v1248 = vadd.f32 0.0, %v1247
        %1249 = vdwg.mxu0
        %1250 = vmatpush.bf16.msra.mxu0 0
        %1251 = vmatpush.bf16.msra.mxu0 0
        %1252 = vmatpush.bf16.msra.mxu0 0
        %1253 = vmatpush.bf16.msra.mxu0 0
        %1254 = vmatpush.bf16.msra.mxu0 0
        %1255 = vmatpush.bf16.msra.mxu0 0
        %1256 = vmatpush.bf16.msra.mxu0 %v970
        %1257 = vmatpush.bf16.msra.mxu0 %v876
        %1258 = vmatmul.bf16.gmra.mxu0 %v885
        %v1259 = vpop.f32.mrf.mxu0
        %v1260 = vadd.f32 0.0, %v1259
        %v1261 = vpop.f32.mrf.mxu0
        %v1262 = vadd.f32 0.0, %v1261
        %1263 = vmatmul.bf16.gmra.mxu0 %v888
        %v1264 = vpop.f32.mrf.mxu0
        %v1265 = vadd.f32 0.0, %v1264
        %v1266 = vpop.f32.mrf.mxu0
        %v1267 = vadd.f32 0.0, %v1266
        %1268 = vmatmul.bf16.gmra.mxu0 %v891
        %v1269 = vpop.f32.mrf.mxu0
        %v1270 = vadd.f32 0.0, %v1269
        %v1271 = vpop.f32.mrf.mxu0
        %v1272 = vadd.f32 0.0, %v1271
        %1273 = vmatmul.bf16.gmra.mxu0 %v894
        %v1274 = vpop.f32.mrf.mxu0
        %v1275 = vadd.f32 0.0, %v1274
        %v1276 = vpop.f32.mrf.mxu0
        %v1277 = vadd.f32 0.0, %v1276
        %1278 = vmatmul.bf16.gmra.mxu0 %v897
        %v1279 = vpop.f32.mrf.mxu0
        %v1280 = vadd.f32 0.0, %v1279
        %v1281 = vpop.f32.mrf.mxu0
        %v1282 = vadd.f32 0.0, %v1281
        %1283 = vmatmul.bf16.gmra.mxu0 %v900
        %v1284 = vpop.f32.mrf.mxu0
        %v1285 = vadd.f32 0.0, %v1284
        %v1286 = vpop.f32.mrf.mxu0
        %v1287 = vadd.f32 0.0, %v1286
        %1288 = vmatmul.bf16.gmra.mxu0 %v903
        %v1289 = vpop.f32.mrf.mxu0
        %v1290 = vadd.f32 0.0, %v1289
        %v1291 = vpop.f32.mrf.mxu0
        %v1292 = vadd.f32 0.0, %v1291
        %1293 = vmatmul.bf16.gmra.mxu0 %v906
        %v1294 = vpop.f32.mrf.mxu0
        %v1295 = vadd.f32 0.0, %v1294
        %v1296 = vpop.f32.mrf.mxu0
        %v1297 = vadd.f32 0.0, %v1296
        %1298 = vmatmul.bf16.gmra.mxu0 %v909
        %v1299 = vpop.f32.mrf.mxu0
        %v1300 = vadd.f32 0.0, %v1299
        %v1301 = vpop.f32.mrf.mxu0
        %v1302 = vadd.f32 0.0, %v1301
        %1303 = vmatmul.bf16.gmra.mxu0 %v912
        %v1304 = vpop.f32.mrf.mxu0
        %v1305 = vadd.f32 0.0, %v1304
        %v1306 = vpop.f32.mrf.mxu0
        %v1307 = vadd.f32 0.0, %v1306
        %1308 = vmatmul.bf16.gmra.mxu0 %v915
        %v1309 = vpop.f32.mrf.mxu0
        %v1310 = vadd.f32 0.0, %v1309
        %v1311 = vpop.f32.mrf.mxu0
        %v1312 = vadd.f32 0.0, %v1311
        %1313 = vmatmul.bf16.gmra.mxu0 %v918
        %v1314 = vpop.f32.mrf.mxu0
        %v1315 = vadd.f32 0.0, %v1314
        %v1316 = vpop.f32.mrf.mxu0
        %v1317 = vadd.f32 0.0, %v1316
        %1318 = vmatmul.bf16.gmra.mxu0 %v921
        %v1319 = vpop.f32.mrf.mxu0
        %v1320 = vadd.f32 0.0, %v1319
        %v1321 = vpop.f32.mrf.mxu0
        %v1322 = vadd.f32 0.0, %v1321
        %1323 = vmatmul.bf16.gmra.mxu0 %v924
        %v1324 = vpop.f32.mrf.mxu0
        %v1325 = vadd.f32 0.0, %v1324
        %v1326 = vpop.f32.mrf.mxu0
        %v1327 = vadd.f32 0.0, %v1326
        %1328 = vmatmul.bf16.gmra.mxu0 %v927
        %v1329 = vpop.f32.mrf.mxu0
        %v1330 = vadd.f32 0.0, %v1329
        %v1331 = vpop.f32.mrf.mxu0
        %v1332 = vadd.f32 0.0, %v1331
        %1333 = vmatmul.bf16.gmra.mxu0 %v930
        %v1334 = vpop.f32.mrf.mxu0
        %v1335 = vadd.f32 0.0, %v1334
        %v1336 = vpop.f32.mrf.mxu0
        %v1337 = vadd.f32 0.0, %v1336
        %1338 = vmatmul.bf16.gmra.mxu0 %v933
        %v1339 = vpop.f32.mrf.mxu0
        %v1340 = vadd.f32 0.0, %v1339
        %v1341 = vpop.f32.mrf.mxu0
        %v1342 = vadd.f32 0.0, %v1341
        %1343 = vmatmul.bf16.gmra.mxu0 %v936
        %v1344 = vpop.f32.mrf.mxu0
        %v1345 = vadd.f32 0.0, %v1344
        %v1346 = vpop.f32.mrf.mxu0
        %v1347 = vadd.f32 0.0, %v1346
        %1348 = vmatmul.bf16.gmra.mxu0 %v939
        %v1349 = vpop.f32.mrf.mxu0
        %v1350 = vadd.f32 0.0, %v1349
        %v1351 = vpop.f32.mrf.mxu0
        %v1352 = vadd.f32 0.0, %v1351
        %1353 = vmatmul.bf16.gmra.mxu0 %v942
        %v1354 = vpop.f32.mrf.mxu0
        %v1355 = vadd.f32 0.0, %v1354
        %v1356 = vpop.f32.mrf.mxu0
        %v1357 = vadd.f32 0.0, %v1356
        %1358 = vmatmul.bf16.gmra.mxu0 %v945
        %v1359 = vpop.f32.mrf.mxu0
        %v1360 = vadd.f32 0.0, %v1359
        %v1361 = vpop.f32.mrf.mxu0
        %v1362 = vadd.f32 0.0, %v1361
        %1363 = vmatmul.bf16.gmra.mxu0 %v948
        %v1364 = vpop.f32.mrf.mxu0
        %v1365 = vadd.f32 0.0, %v1364
        %v1366 = vpop.f32.mrf.mxu0
        %v1367 = vadd.f32 0.0, %v1366
        %1368 = vmatmul.bf16.gmra.mxu0 %v951
        %v1369 = vpop.f32.mrf.mxu0
        %v1370 = vadd.f32 0.0, %v1369
        %v1371 = vpop.f32.mrf.mxu0
        %v1372 = vadd.f32 0.0, %v1371
        %1373 = vmatmul.bf16.gmra.mxu0 %v954
        %v1374 = vpop.f32.mrf.mxu0
        %v1375 = vadd.f32 0.0, %v1374
        %v1376 = vpop.f32.mrf.mxu0
        %v1377 = vadd.f32 0.0, %v1376
        %1378 = vmatmul.bf16.gmra.mxu0 %v957
        %v1379 = vpop.f32.mrf.mxu0
        %v1380 = vadd.f32 0.0, %v1379
        %v1381 = vpop.f32.mrf.mxu0
        %v1382 = vadd.f32 0.0, %v1381
        %1383 = vmatmul.bf16.gmra.mxu0 %v960
        %v1384 = vpop.f32.mrf.mxu0
        %v1385 = vadd.f32 0.0, %v1384
        %v1386 = vpop.f32.mrf.mxu0
        %v1387 = vadd.f32 0.0, %v1386
        %1388 = vdwg.mxu0
        %v1391 = vunpack.c.l.b16 %v651
        %v1392 = vunpack.c.l.b16 %v652
        %v1393 = vpack.c.b16 %v1392, %v1391
        %v1402 = vunpack.c.l.b16 %v707
        %v1403 = vunpack.c.h.b16 %v707
        %v1404 = vunpack.c.l.b16 %v708
        %v1405 = vunpack.c.l.b16 %v709
        %v1406 = vunpack.c.h.b16 %v709
        %v1407 = vunpack.c.l.b16 %v710
        %v1408 = vunpack.c.l.b16 %v711
        %v1409 = vunpack.c.h.b16 %v711
        %v1410 = vunpack.c.l.b16 %v712
        %v1411 = vunpack.c.l.b16 %v713
        %v1412 = vunpack.c.h.b16 %v713
        %v1413 = vunpack.c.l.b16 %v714
        %v1414 = vpack.c.b16 %v1405, %v1402
        %v1415 = vpack.c.b16 %v1406, %v1403
        %v1416 = vpack.c.b16 %v1407, %v1404
        %v1417 = vpack.c.b16 %v1411, %v1408
        %v1418 = vpack.c.b16 %v1412, %v1409
        %v1419 = vpack.c.b16 %v1413, %v1410
        %v1424 = vsel %vm883, %v1393, 0
        %v1427 = vsel %vm962, %v1417, 0
        %v1430 = vsel %vm962, %v1418, 0
        %v1433 = vsel %vm962, %v1419, 0
        %1435 = vmatpush.bf16.msra.mxu0 0
        %1436 = vmatpush.bf16.msra.mxu0 0
        %1437 = vmatpush.bf16.msra.mxu0 0
        %1438 = vmatpush.bf16.msra.mxu0 0
        %1439 = vmatpush.bf16.msra.mxu0 0
        %1440 = vmatpush.bf16.msra.mxu0 0
        %1441 = vmatpush.bf16.msra.mxu0 %v1427
        %1442 = vmatpush.bf16.msra.mxu0 %v1414
        %1443 = vmatmul.bf16.gmra.mxu0 %v1424
        %v1444 = vpop.f32.mrf.mxu0
        %v1445 = vadd.f32 %v982, %v1444
        %v1446 = vpop.f32.mrf.mxu0
        %v1447 = vadd.f32 %v984, %v1446
        %1448 = vmatmul.bf16.gmra.mxu0 %v885
        %v1449 = vpop.f32.mrf.mxu0
        %v1450 = vadd.f32 %v987, %v1449
        %v1451 = vpop.f32.mrf.mxu0
        %v1452 = vadd.f32 %v989, %v1451
        %1453 = vmatmul.bf16.gmra.mxu0 %v888
        %v1454 = vpop.f32.mrf.mxu0
        %v1455 = vadd.f32 %v992, %v1454
        %v1456 = vpop.f32.mrf.mxu0
        %v1457 = vadd.f32 %v994, %v1456
        %1458 = vmatmul.bf16.gmra.mxu0 %v891
        %v1459 = vpop.f32.mrf.mxu0
        %v1460 = vadd.f32 %v997, %v1459
        %v1461 = vpop.f32.mrf.mxu0
        %v1462 = vadd.f32 %v999, %v1461
        %1463 = vmatmul.bf16.gmra.mxu0 %v894
        %v1464 = vpop.f32.mrf.mxu0
        %v1465 = vadd.f32 %v1002, %v1464
        %v1466 = vpop.f32.mrf.mxu0
        %v1467 = vadd.f32 %v1004, %v1466
        %1468 = vmatmul.bf16.gmra.mxu0 %v897
        %v1469 = vpop.f32.mrf.mxu0
        %v1470 = vadd.f32 %v1007, %v1469
        %v1471 = vpop.f32.mrf.mxu0
        %v1472 = vadd.f32 %v1009, %v1471
        %1473 = vmatmul.bf16.gmra.mxu0 %v900
        %v1474 = vpop.f32.mrf.mxu0
        %v1475 = vadd.f32 %v1012, %v1474
        %v1476 = vpop.f32.mrf.mxu0
        %v1477 = vadd.f32 %v1014, %v1476
        %1478 = vmatmul.bf16.gmra.mxu0 %v903
        %v1479 = vpop.f32.mrf.mxu0
        %v1480 = vadd.f32 %v1017, %v1479
        %v1481 = vpop.f32.mrf.mxu0
        %v1482 = vadd.f32 %v1019, %v1481
        %1483 = vmatmul.bf16.gmra.mxu0 %v906
        %v1484 = vpop.f32.mrf.mxu0
        %v1485 = vadd.f32 %v1022, %v1484
        %v1486 = vpop.f32.mrf.mxu0
        %v1487 = vadd.f32 %v1024, %v1486
        %1488 = vmatmul.bf16.gmra.mxu0 %v909
        %v1489 = vpop.f32.mrf.mxu0
        %v1490 = vadd.f32 %v1027, %v1489
        %v1491 = vpop.f32.mrf.mxu0
        %v1492 = vadd.f32 %v1029, %v1491
        %1493 = vmatmul.bf16.gmra.mxu0 %v912
        %v1494 = vpop.f32.mrf.mxu0
        %v1495 = vadd.f32 %v1032, %v1494
        %v1496 = vpop.f32.mrf.mxu0
        %v1497 = vadd.f32 %v1034, %v1496
        %1498 = vmatmul.bf16.gmra.mxu0 %v915
        %v1499 = vpop.f32.mrf.mxu0
        %v1500 = vadd.f32 %v1037, %v1499
        %v1501 = vpop.f32.mrf.mxu0
        %v1502 = vadd.f32 %v1039, %v1501
        %1503 = vmatmul.bf16.gmra.mxu0 %v918
        %v1504 = vpop.f32.mrf.mxu0
        %v1505 = vadd.f32 %v1042, %v1504
        %v1506 = vpop.f32.mrf.mxu0
        %v1507 = vadd.f32 %v1044, %v1506
        %1508 = vmatmul.bf16.gmra.mxu0 %v921
        %v1509 = vpop.f32.mrf.mxu0
        %v1510 = vadd.f32 %v1047, %v1509
        %v1511 = vpop.f32.mrf.mxu0
        %v1512 = vadd.f32 %v1049, %v1511
        %1513 = vmatmul.bf16.gmra.mxu0 %v924
        %v1514 = vpop.f32.mrf.mxu0
        %v1515 = vadd.f32 %v1052, %v1514
        %v1516 = vpop.f32.mrf.mxu0
        %v1517 = vadd.f32 %v1054, %v1516
        %1518 = vmatmul.bf16.gmra.mxu0 %v927
        %v1519 = vpop.f32.mrf.mxu0
        %v1520 = vadd.f32 %v1057, %v1519
        %v1521 = vpop.f32.mrf.mxu0
        %v1522 = vadd.f32 %v1059, %v1521
        %1523 = vmatmul.bf16.gmra.mxu0 %v930
        %v1524 = vpop.f32.mrf.mxu0
        %v1525 = vadd.f32 %v1062, %v1524
        %v1526 = vpop.f32.mrf.mxu0
        %v1527 = vadd.f32 %v1064, %v1526
        %1528 = vmatmul.bf16.gmra.mxu0 %v933
        %v1529 = vpop.f32.mrf.mxu0
        %v1530 = vadd.f32 %v1067, %v1529
        %v1531 = vpop.f32.mrf.mxu0
        %v1532 = vadd.f32 %v1069, %v1531
        %1533 = vmatmul.bf16.gmra.mxu0 %v936
        %v1534 = vpop.f32.mrf.mxu0
        %v1535 = vadd.f32 %v1072, %v1534
        %v1536 = vpop.f32.mrf.mxu0
        %v1537 = vadd.f32 %v1074, %v1536
        %1538 = vmatmul.bf16.gmra.mxu0 %v939
        %v1539 = vpop.f32.mrf.mxu0
        %v1540 = vadd.f32 %v1077, %v1539
        %v1541 = vpop.f32.mrf.mxu0
        %v1542 = vadd.f32 %v1079, %v1541
        %1543 = vmatmul.bf16.gmra.mxu0 %v942
        %v1544 = vpop.f32.mrf.mxu0
        %v1545 = vadd.f32 %v1082, %v1544
        %v1546 = vpop.f32.mrf.mxu0
        %v1547 = vadd.f32 %v1084, %v1546
        %1548 = vmatmul.bf16.gmra.mxu0 %v945
        %v1549 = vpop.f32.mrf.mxu0
        %v1550 = vadd.f32 %v1087, %v1549
        %v1551 = vpop.f32.mrf.mxu0
        %v1552 = vadd.f32 %v1089, %v1551
        %1553 = vmatmul.bf16.gmra.mxu0 %v948
        %v1554 = vpop.f32.mrf.mxu0
        %v1555 = vadd.f32 %v1092, %v1554
        %v1556 = vpop.f32.mrf.mxu0
        %v1557 = vadd.f32 %v1094, %v1556
        %1558 = vmatmul.bf16.gmra.mxu0 %v951
        %v1559 = vpop.f32.mrf.mxu0
        %v1560 = vadd.f32 %v1097, %v1559
        %v1561 = vpop.f32.mrf.mxu0
        %v1562 = vadd.f32 %v1099, %v1561
        %1563 = vmatmul.bf16.gmra.mxu0 %v954
        %v1564 = vpop.f32.mrf.mxu0
        %v1565 = vadd.f32 %v1102, %v1564
        %v1566 = vpop.f32.mrf.mxu0
        %v1567 = vadd.f32 %v1104, %v1566
        %1568 = vmatmul.bf16.gmra.mxu0 %v957
        %v1569 = vpop.f32.mrf.mxu0
        %v1570 = vadd.f32 %v1107, %v1569
        %v1571 = vpop.f32.mrf.mxu0
        %v1572 = vadd.f32 %v1109, %v1571
        %1573 = vdwg.mxu0
        %1574 = vmatpush.bf16.msra.mxu0 0
        %1575 = vmatpush.bf16.msra.mxu0 0
        %1576 = vmatpush.bf16.msra.mxu0 0
        %1577 = vmatpush.bf16.msra.mxu0 0
        %1578 = vmatpush.bf16.msra.mxu0 0
        %1579 = vmatpush.bf16.msra.mxu0 0
        %1580 = vmatpush.bf16.msra.mxu0 %v1430
        %1581 = vmatpush.bf16.msra.mxu0 %v1415
        %1582 = vmatmul.bf16.gmra.mxu0 %v1424
        %v1583 = vpop.f32.mrf.mxu0
        %v1584 = vadd.f32 %v1121, %v1583
        %v1585 = vpop.f32.mrf.mxu0
        %v1586 = vadd.f32 %v1123, %v1585
        %1587 = vmatmul.bf16.gmra.mxu0 %v885
        %v1588 = vpop.f32.mrf.mxu0
        %v1589 = vadd.f32 %v1126, %v1588
        %v1590 = vpop.f32.mrf.mxu0
        %v1591 = vadd.f32 %v1128, %v1590
        %1592 = vmatmul.bf16.gmra.mxu0 %v888
        %v1593 = vpop.f32.mrf.mxu0
        %v1594 = vadd.f32 %v1131, %v1593
        %v1595 = vpop.f32.mrf.mxu0
        %v1596 = vadd.f32 %v1133, %v1595
        %1597 = vmatmul.bf16.gmra.mxu0 %v891
        %v1598 = vpop.f32.mrf.mxu0
        %v1599 = vadd.f32 %v1136, %v1598
        %v1600 = vpop.f32.mrf.mxu0
        %v1601 = vadd.f32 %v1138, %v1600
        %1602 = vmatmul.bf16.gmra.mxu0 %v894
        %v1603 = vpop.f32.mrf.mxu0
        %v1604 = vadd.f32 %v1141, %v1603
        %v1605 = vpop.f32.mrf.mxu0
        %v1606 = vadd.f32 %v1143, %v1605
        %1607 = vmatmul.bf16.gmra.mxu0 %v897
        %v1608 = vpop.f32.mrf.mxu0
        %v1609 = vadd.f32 %v1146, %v1608
        %v1610 = vpop.f32.mrf.mxu0
        %v1611 = vadd.f32 %v1148, %v1610
        %1612 = vmatmul.bf16.gmra.mxu0 %v900
        %v1613 = vpop.f32.mrf.mxu0
        %v1614 = vadd.f32 %v1151, %v1613
        %v1615 = vpop.f32.mrf.mxu0
        %v1616 = vadd.f32 %v1153, %v1615
        %1617 = vmatmul.bf16.gmra.mxu0 %v903
        %v1618 = vpop.f32.mrf.mxu0
        %v1619 = vadd.f32 %v1156, %v1618
        %v1620 = vpop.f32.mrf.mxu0
        %v1621 = vadd.f32 %v1158, %v1620
        %1622 = vmatmul.bf16.gmra.mxu0 %v906
        %v1623 = vpop.f32.mrf.mxu0
        %v1624 = vadd.f32 %v1161, %v1623
        %v1625 = vpop.f32.mrf.mxu0
        %v1626 = vadd.f32 %v1163, %v1625
        %1627 = vmatmul.bf16.gmra.mxu0 %v909
        %v1628 = vpop.f32.mrf.mxu0
        %v1629 = vadd.f32 %v1166, %v1628
        %v1630 = vpop.f32.mrf.mxu0
        %v1631 = vadd.f32 %v1168, %v1630
        %1632 = vmatmul.bf16.gmra.mxu0 %v912
        %v1633 = vpop.f32.mrf.mxu0
        %v1634 = vadd.f32 %v1171, %v1633
        %v1635 = vpop.f32.mrf.mxu0
        %v1636 = vadd.f32 %v1173, %v1635
        %1637 = vmatmul.bf16.gmra.mxu0 %v915
        %v1638 = vpop.f32.mrf.mxu0
        %v1639 = vadd.f32 %v1176, %v1638
        %v1640 = vpop.f32.mrf.mxu0
        %v1641 = vadd.f32 %v1178, %v1640
        %1642 = vmatmul.bf16.gmra.mxu0 %v918
        %v1643 = vpop.f32.mrf.mxu0
        %v1644 = vadd.f32 %v1181, %v1643
        %v1645 = vpop.f32.mrf.mxu0
        %v1646 = vadd.f32 %v1183, %v1645
        %1647 = vmatmul.bf16.gmra.mxu0 %v921
        %v1648 = vpop.f32.mrf.mxu0
        %v1649 = vadd.f32 %v1186, %v1648
        %v1650 = vpop.f32.mrf.mxu0
        %v1651 = vadd.f32 %v1188, %v1650
        %1652 = vmatmul.bf16.gmra.mxu0 %v924
        %v1653 = vpop.f32.mrf.mxu0
        %v1654 = vadd.f32 %v1191, %v1653
        %v1655 = vpop.f32.mrf.mxu0
        %v1656 = vadd.f32 %v1193, %v1655
        %1657 = vmatmul.bf16.gmra.mxu0 %v927
        %v1658 = vpop.f32.mrf.mxu0
        %v1659 = vadd.f32 %v1196, %v1658
        %v1660 = vpop.f32.mrf.mxu0
        %v1661 = vadd.f32 %v1198, %v1660
        %1662 = vmatmul.bf16.gmra.mxu0 %v930
        %v1663 = vpop.f32.mrf.mxu0
        %v1664 = vadd.f32 %v1201, %v1663
        %v1665 = vpop.f32.mrf.mxu0
        %v1666 = vadd.f32 %v1203, %v1665
        %1667 = vmatmul.bf16.gmra.mxu0 %v933
        %v1668 = vpop.f32.mrf.mxu0
        %v1669 = vadd.f32 %v1206, %v1668
        %v1670 = vpop.f32.mrf.mxu0
        %v1671 = vadd.f32 %v1208, %v1670
        %1672 = vmatmul.bf16.gmra.mxu0 %v936
        %v1673 = vpop.f32.mrf.mxu0
        %v1674 = vadd.f32 %v1211, %v1673
        %v1675 = vpop.f32.mrf.mxu0
        %v1676 = vadd.f32 %v1213, %v1675
        %1677 = vmatmul.bf16.gmra.mxu0 %v939
        %v1678 = vpop.f32.mrf.mxu0
        %v1679 = vadd.f32 %v1216, %v1678
        %v1680 = vpop.f32.mrf.mxu0
        %v1681 = vadd.f32 %v1218, %v1680
        %1682 = vmatmul.bf16.gmra.mxu0 %v942
        %v1683 = vpop.f32.mrf.mxu0
        %v1684 = vadd.f32 %v1221, %v1683
        %v1685 = vpop.f32.mrf.mxu0
        %v1686 = vadd.f32 %v1223, %v1685
        %1687 = vmatmul.bf16.gmra.mxu0 %v945
        %v1688 = vpop.f32.mrf.mxu0
        %v1689 = vadd.f32 %v1226, %v1688
        %v1690 = vpop.f32.mrf.mxu0
        %v1691 = vadd.f32 %v1228, %v1690
        %1692 = vmatmul.bf16.gmra.mxu0 %v948
        %v1693 = vpop.f32.mrf.mxu0
        %v1694 = vadd.f32 %v1231, %v1693
        %v1695 = vpop.f32.mrf.mxu0
        %v1696 = vadd.f32 %v1233, %v1695
        %1697 = vmatmul.bf16.gmra.mxu0 %v951
        %v1698 = vpop.f32.mrf.mxu0
        %v1699 = vadd.f32 %v1236, %v1698
        %v1700 = vpop.f32.mrf.mxu0
        %v1701 = vadd.f32 %v1238, %v1700
        %1702 = vmatmul.bf16.gmra.mxu0 %v954
        %v1703 = vpop.f32.mrf.mxu0
        %v1704 = vadd.f32 %v1241, %v1703
        %v1705 = vpop.f32.mrf.mxu0
        %v1706 = vadd.f32 %v1243, %v1705
        %1707 = vmatmul.bf16.gmra.mxu0 %v957
        %v1708 = vpop.f32.mrf.mxu0
        %v1709 = vadd.f32 %v1246, %v1708
        %v1710 = vpop.f32.mrf.mxu0
        %v1711 = vadd.f32 %v1248, %v1710
        %1712 = vdwg.mxu0
        %1713 = vmatpush.bf16.msra.mxu0 0
        %1714 = vmatpush.bf16.msra.mxu0 0
        %1715 = vmatpush.bf16.msra.mxu0 0
        %1716 = vmatpush.bf16.msra.mxu0 0
        %1717 = vmatpush.bf16.msra.mxu0 0
        %1718 = vmatpush.bf16.msra.mxu0 0
        %1719 = vmatpush.bf16.msra.mxu0 %v1433
        %1720 = vmatpush.bf16.msra.mxu0 %v1416
        %1721 = vmatmul.bf16.gmra.mxu0 %v1424
        %v1722 = vpop.f32.mrf.mxu0
        %v1723 = vadd.f32 %v1260, %v1722
        %v1724 = vpop.f32.mrf.mxu0
        %v1725 = vadd.f32 %v1262, %v1724
        %1726 = vmatmul.bf16.gmra.mxu0 %v885
        %v1727 = vpop.f32.mrf.mxu0
        %v1728 = vadd.f32 %v1265, %v1727
        %v1729 = vpop.f32.mrf.mxu0
        %v1730 = vadd.f32 %v1267, %v1729
        %1731 = vmatmul.bf16.gmra.mxu0 %v888
        %v1732 = vpop.f32.mrf.mxu0
        %v1733 = vadd.f32 %v1270, %v1732
        %v1734 = vpop.f32.mrf.mxu0
        %v1735 = vadd.f32 %v1272, %v1734
        %1736 = vmatmul.bf16.gmra.mxu0 %v891
        %v1737 = vpop.f32.mrf.mxu0
        %v1738 = vadd.f32 %v1275, %v1737
        %v1739 = vpop.f32.mrf.mxu0
        %v1740 = vadd.f32 %v1277, %v1739
        %1741 = vmatmul.bf16.gmra.mxu0 %v894
        %v1742 = vpop.f32.mrf.mxu0
        %v1743 = vadd.f32 %v1280, %v1742
        %v1744 = vpop.f32.mrf.mxu0
        %v1745 = vadd.f32 %v1282, %v1744
        %1746 = vmatmul.bf16.gmra.mxu0 %v897
        %v1747 = vpop.f32.mrf.mxu0
        %v1748 = vadd.f32 %v1285, %v1747
        %v1749 = vpop.f32.mrf.mxu0
        %v1750 = vadd.f32 %v1287, %v1749
        %1751 = vmatmul.bf16.gmra.mxu0 %v900
        %v1752 = vpop.f32.mrf.mxu0
        %v1753 = vadd.f32 %v1290, %v1752
        %v1754 = vpop.f32.mrf.mxu0
        %v1755 = vadd.f32 %v1292, %v1754
        %1756 = vmatmul.bf16.gmra.mxu0 %v903
        %v1757 = vpop.f32.mrf.mxu0
        %v1758 = vadd.f32 %v1295, %v1757
        %v1759 = vpop.f32.mrf.mxu0
        %v1760 = vadd.f32 %v1297, %v1759
        %1761 = vmatmul.bf16.gmra.mxu0 %v906
        %v1762 = vpop.f32.mrf.mxu0
        %v1763 = vadd.f32 %v1300, %v1762
        %v1764 = vpop.f32.mrf.mxu0
        %v1765 = vadd.f32 %v1302, %v1764
        %1766 = vmatmul.bf16.gmra.mxu0 %v909
        %v1767 = vpop.f32.mrf.mxu0
        %v1768 = vadd.f32 %v1305, %v1767
        %v1769 = vpop.f32.mrf.mxu0
        %v1770 = vadd.f32 %v1307, %v1769
        %1771 = vmatmul.bf16.gmra.mxu0 %v912
        %v1772 = vpop.f32.mrf.mxu0
        %v1773 = vadd.f32 %v1310, %v1772
        %v1774 = vpop.f32.mrf.mxu0
        %v1775 = vadd.f32 %v1312, %v1774
        %1776 = vmatmul.bf16.gmra.mxu0 %v915
        %v1777 = vpop.f32.mrf.mxu0
        %v1778 = vadd.f32 %v1315, %v1777
        %v1779 = vpop.f32.mrf.mxu0
        %v1780 = vadd.f32 %v1317, %v1779
        %1781 = vmatmul.bf16.gmra.mxu0 %v918
        %v1782 = vpop.f32.mrf.mxu0
        %v1783 = vadd.f32 %v1320, %v1782
        %v1784 = vpop.f32.mrf.mxu0
        %v1785 = vadd.f32 %v1322, %v1784
        %1786 = vmatmul.bf16.gmra.mxu0 %v921
        %v1787 = vpop.f32.mrf.mxu0
        %v1788 = vadd.f32 %v1325, %v1787
        %v1789 = vpop.f32.mrf.mxu0
        %v1790 = vadd.f32 %v1327, %v1789
        %1791 = vmatmul.bf16.gmra.mxu0 %v924
        %v1792 = vpop.f32.mrf.mxu0
        %v1793 = vadd.f32 %v1330, %v1792
        %v1794 = vpop.f32.mrf.mxu0
        %v1795 = vadd.f32 %v1332, %v1794
        %1796 = vmatmul.bf16.gmra.mxu0 %v927
        %v1797 = vpop.f32.mrf.mxu0
        %v1798 = vadd.f32 %v1335, %v1797
        %v1799 = vpop.f32.mrf.mxu0
        %v1800 = vadd.f32 %v1337, %v1799
        %1801 = vmatmul.bf16.gmra.mxu0 %v930
        %v1802 = vpop.f32.mrf.mxu0
        %v1803 = vadd.f32 %v1340, %v1802
        %v1804 = vpop.f32.mrf.mxu0
        %v1805 = vadd.f32 %v1342, %v1804
        %1806 = vmatmul.bf16.gmra.mxu0 %v933
        %v1807 = vpop.f32.mrf.mxu0
        %v1808 = vadd.f32 %v1345, %v1807
        %v1809 = vpop.f32.mrf.mxu0
        %v1810 = vadd.f32 %v1347, %v1809
        %1811 = vmatmul.bf16.gmra.mxu0 %v936
        %v1812 = vpop.f32.mrf.mxu0
        %v1813 = vadd.f32 %v1350, %v1812
        %v1814 = vpop.f32.mrf.mxu0
        %v1815 = vadd.f32 %v1352, %v1814
        %1816 = vmatmul.bf16.gmra.mxu0 %v939
        %v1817 = vpop.f32.mrf.mxu0
        %v1818 = vadd.f32 %v1355, %v1817
        %v1819 = vpop.f32.mrf.mxu0
        %v1820 = vadd.f32 %v1357, %v1819
        %1821 = vmatmul.bf16.gmra.mxu0 %v942
        %v1822 = vpop.f32.mrf.mxu0
        %v1823 = vadd.f32 %v1360, %v1822
        %v1824 = vpop.f32.mrf.mxu0
        %v1825 = vadd.f32 %v1362, %v1824
        %1826 = vmatmul.bf16.gmra.mxu0 %v945
        %v1827 = vpop.f32.mrf.mxu0
        %v1828 = vadd.f32 %v1365, %v1827
        %v1829 = vpop.f32.mrf.mxu0
        %v1830 = vadd.f32 %v1367, %v1829
        %1831 = vmatmul.bf16.gmra.mxu0 %v948
        %v1832 = vpop.f32.mrf.mxu0
        %v1833 = vadd.f32 %v1370, %v1832
        %v1834 = vpop.f32.mrf.mxu0
        %v1835 = vadd.f32 %v1372, %v1834
        %1836 = vmatmul.bf16.gmra.mxu0 %v951
        %v1837 = vpop.f32.mrf.mxu0
        %v1838 = vadd.f32 %v1375, %v1837
        %v1839 = vpop.f32.mrf.mxu0
        %v1840 = vadd.f32 %v1377, %v1839
        %1841 = vmatmul.bf16.gmra.mxu0 %v954
        %v1842 = vpop.f32.mrf.mxu0
        %v1843 = vadd.f32 %v1380, %v1842
        %v1844 = vpop.f32.mrf.mxu0
        %v1845 = vadd.f32 %v1382, %v1844
        %1846 = vmatmul.bf16.gmra.mxu0 %v957
        %v1847 = vpop.f32.mrf.mxu0
        %v1848 = vadd.f32 %v1385, %v1847
        %v1849 = vpop.f32.mrf.mxu0
        %v1850 = vadd.f32 %v1387, %v1849
        %1851 = vdwg.mxu0
        %s1852 = scalar_lea.vmem %s1, 96
        %v1853 = vld [vmem:[%s1852] sm:$0xff]
        %v1854 = vld [vmem:[%s1852 + $0x8] sm:$0xf]
        %v1855 = vld [vmem:[%s1852 + $0xc] sm:$0xff]
        %v1856 = vld [vmem:[%s1852 + $0x14] sm:$0xf]
        %v1857 = vld [vmem:[%s1852 + $0x18] sm:$0xff]
        %v1858 = vld [vmem:[%s1852 + $0x20] sm:$0xf]
        %v1859 = vld [vmem:[%s1852 + $0x24] sm:$0x33]
        %v1860 = vld [vmem:[%s1852 + $0x2c] sm:$0x3]
        %v1863 = vunpack.c.l.b16 %v705
        %v1864 = vunpack.c.l.b16 %v706
        %v1865 = vpack.c.b16 %v1864, %v1863
        %v1874 = vunpack.c.l.b16 %v1853
        %v1875 = vunpack.c.h.b16 %v1853
        %v1876 = vunpack.c.l.b16 %v1854
        %v1877 = vunpack.c.l.b16 %v1855
        %v1878 = vunpack.c.h.b16 %v1855
        %v1879 = vunpack.c.l.b16 %v1856
        %v1880 = vunpack.c.l.b16 %v1857
        %v1881 = vunpack.c.h.b16 %v1857
        %v1882 = vunpack.c.l.b16 %v1858
        %v1883 = vunpack.c.l.b16 %v1859
        %v1884 = vunpack.c.h.b16 %v1859
        %v1885 = vunpack.c.l.b16 %v1860
        %v1886 = vpack.c.b16 %v1877, %v1874
        %v1887 = vpack.c.b16 %v1878, %v1875
        %v1888 = vpack.c.b16 %v1879, %v1876
        %v1889 = vpack.c.b16 %v1883, %v1880
        %v1890 = vpack.c.b16 %v1884, %v1881
        %v1891 = vpack.c.b16 %v1885, %v1882
        %v1896 = vsel %vm883, %v1865, 0
        %v1899 = vsel %vm962, %v1889, 0
        %v1902 = vsel %vm962, %v1890, 0
        %v1905 = vsel %vm962, %v1891, 0
        %1907 = vmatpush.bf16.msra.mxu0 0
        %1908 = vmatpush.bf16.msra.mxu0 0
        %1909 = vmatpush.bf16.msra.mxu0 0
        %1910 = vmatpush.bf16.msra.mxu0 0
        %1911 = vmatpush.bf16.msra.mxu0 0
        %1912 = vmatpush.bf16.msra.mxu0 0
        %1913 = vmatpush.bf16.msra.mxu0 %v1899
        %1914 = vmatpush.bf16.msra.mxu0 %v1886
        %1915 = vmatmul.bf16.gmra.mxu0 %v888
        %v1916 = vpop.f32.mrf.mxu0
        %v1917 = vadd.f32 0.0, %v1916
        %v1918 = vpop.f32.mrf.mxu0
        %v1919 = vadd.f32 0.0, %v1918
        %1920 = vmatmul.bf16.gmra.mxu0 %v891
        %v1921 = vpop.f32.mrf.mxu0
        %v1922 = vadd.f32 0.0, %v1921
        %v1923 = vpop.f32.mrf.mxu0
        %v1924 = vadd.f32 0.0, %v1923
        %1925 = vmatmul.bf16.gmra.mxu0 %v894
        %v1926 = vpop.f32.mrf.mxu0
        %v1927 = vadd.f32 0.0, %v1926
        %v1928 = vpop.f32.mrf.mxu0
        %v1929 = vadd.f32 0.0, %v1928
        %1930 = vmatmul.bf16.gmra.mxu0 %v897
        %v1931 = vpop.f32.mrf.mxu0
        %v1932 = vadd.f32 0.0, %v1931
        %v1933 = vpop.f32.mrf.mxu0
        %v1934 = vadd.f32 0.0, %v1933
        %1935 = vmatmul.bf16.gmra.mxu0 %v900
        %v1936 = vpop.f32.mrf.mxu0
        %v1937 = vadd.f32 0.0, %v1936
        %v1938 = vpop.f32.mrf.mxu0
        %v1939 = vadd.f32 0.0, %v1938
        %1940 = vmatmul.bf16.gmra.mxu0 %v903
        %v1941 = vpop.f32.mrf.mxu0
        %v1942 = vadd.f32 0.0, %v1941
        %v1943 = vpop.f32.mrf.mxu0
        %v1944 = vadd.f32 0.0, %v1943
        %1945 = vmatmul.bf16.gmra.mxu0 %v906
        %v1946 = vpop.f32.mrf.mxu0
        %v1947 = vadd.f32 0.0, %v1946
        %v1948 = vpop.f32.mrf.mxu0
        %v1949 = vadd.f32 0.0, %v1948
        %1950 = vmatmul.bf16.gmra.mxu0 %v909
        %v1951 = vpop.f32.mrf.mxu0
        %v1952 = vadd.f32 0.0, %v1951
        %v1953 = vpop.f32.mrf.mxu0
        %v1954 = vadd.f32 0.0, %v1953
        %1955 = vmatmul.bf16.gmra.mxu0 %v912
        %v1956 = vpop.f32.mrf.mxu0
        %v1957 = vadd.f32 0.0, %v1956
        %v1958 = vpop.f32.mrf.mxu0
        %v1959 = vadd.f32 0.0, %v1958
        %1960 = vmatmul.bf16.gmra.mxu0 %v915
        %v1961 = vpop.f32.mrf.mxu0
        %v1962 = vadd.f32 0.0, %v1961
        %v1963 = vpop.f32.mrf.mxu0
        %v1964 = vadd.f32 0.0, %v1963
        %1965 = vmatmul.bf16.gmra.mxu0 %v918
        %v1966 = vpop.f32.mrf.mxu0
        %v1967 = vadd.f32 0.0, %v1966
        %v1968 = vpop.f32.mrf.mxu0
        %v1969 = vadd.f32 0.0, %v1968
        %1970 = vmatmul.bf16.gmra.mxu0 %v921
        %v1971 = vpop.f32.mrf.mxu0
        %v1972 = vadd.f32 0.0, %v1971
        %v1973 = vpop.f32.mrf.mxu0
        %v1974 = vadd.f32 0.0, %v1973
        %1975 = vmatmul.bf16.gmra.mxu0 %v924
        %v1976 = vpop.f32.mrf.mxu0
        %v1977 = vadd.f32 0.0, %v1976
        %v1978 = vpop.f32.mrf.mxu0
        %v1979 = vadd.f32 0.0, %v1978
        %1980 = vmatmul.bf16.gmra.mxu0 %v927
        %v1981 = vpop.f32.mrf.mxu0
        %v1982 = vadd.f32 0.0, %v1981
        %v1983 = vpop.f32.mrf.mxu0
        %v1984 = vadd.f32 0.0, %v1983
        %1985 = vmatmul.bf16.gmra.mxu0 %v930
        %v1986 = vpop.f32.mrf.mxu0
        %v1987 = vadd.f32 0.0, %v1986
        %v1988 = vpop.f32.mrf.mxu0
        %v1989 = vadd.f32 0.0, %v1988
        %1990 = vmatmul.bf16.gmra.mxu0 %v933
        %v1991 = vpop.f32.mrf.mxu0
        %v1992 = vadd.f32 0.0, %v1991
        %v1993 = vpop.f32.mrf.mxu0
        %v1994 = vadd.f32 0.0, %v1993
        %1995 = vmatmul.bf16.gmra.mxu0 %v936
        %v1996 = vpop.f32.mrf.mxu0
        %v1997 = vadd.f32 0.0, %v1996
        %v1998 = vpop.f32.mrf.mxu0
        %v1999 = vadd.f32 0.0, %v1998
        %2000 = vmatmul.bf16.gmra.mxu0 %v939
        %v2001 = vpop.f32.mrf.mxu0
        %v2002 = vadd.f32 0.0, %v2001
        %v2003 = vpop.f32.mrf.mxu0
        %v2004 = vadd.f32 0.0, %v2003
        %2005 = vmatmul.bf16.gmra.mxu0 %v942
        %v2006 = vpop.f32.mrf.mxu0
        %v2007 = vadd.f32 0.0, %v2006
        %v2008 = vpop.f32.mrf.mxu0
        %v2009 = vadd.f32 0.0, %v2008
        %2010 = vmatmul.bf16.gmra.mxu0 %v945
        %v2011 = vpop.f32.mrf.mxu0
        %v2012 = vadd.f32 0.0, %v2011
        %v2013 = vpop.f32.mrf.mxu0
        %v2014 = vadd.f32 0.0, %v2013
        %2015 = vmatmul.bf16.gmra.mxu0 %v948
        %v2016 = vpop.f32.mrf.mxu0
        %v2017 = vadd.f32 0.0, %v2016
        %v2018 = vpop.f32.mrf.mxu0
        %v2019 = vadd.f32 0.0, %v2018
        %2020 = vmatmul.bf16.gmra.mxu0 %v951
        %v2021 = vpop.f32.mrf.mxu0
        %v2022 = vadd.f32 0.0, %v2021
        %v2023 = vpop.f32.mrf.mxu0
        %v2024 = vadd.f32 0.0, %v2023
        %2025 = vmatmul.bf16.gmra.mxu0 %v954
        %v2026 = vpop.f32.mrf.mxu0
        %v2027 = vadd.f32 0.0, %v2026
        %v2028 = vpop.f32.mrf.mxu0
        %v2029 = vadd.f32 0.0, %v2028
        %2030 = vmatmul.bf16.gmra.mxu0 %v957
        %v2031 = vpop.f32.mrf.mxu0
        %v2032 = vadd.f32 0.0, %v2031
        %v2033 = vpop.f32.mrf.mxu0
        %v2034 = vadd.f32 0.0, %v2033
        %2035 = vmatmul.bf16.gmra.mxu0 %v960
        %v2036 = vpop.f32.mrf.mxu0
        %v2037 = vadd.f32 0.0, %v2036
        %v2038 = vpop.f32.mrf.mxu0
        %v2039 = vadd.f32 0.0, %v2038
        %2040 = vmatmul.bf16.gmra.mxu0 %v1896
        %v2041 = vpop.f32.mrf.mxu0
        %v2042 = vadd.f32 0.0, %v2041
        %v2043 = vpop.f32.mrf.mxu0
        %v2044 = vadd.f32 0.0, %v2043
        %2045 = vdwg.mxu0
        %2046 = vmatpush.bf16.msra.mxu0 0
        %2047 = vmatpush.bf16.msra.mxu0 0
        %2048 = vmatpush.bf16.msra.mxu0 0
        %2049 = vmatpush.bf16.msra.mxu0 0
        %2050 = vmatpush.bf16.msra.mxu0 0
        %2051 = vmatpush.bf16.msra.mxu0 0
        %2052 = vmatpush.bf16.msra.mxu0 %v1902
        %2053 = vmatpush.bf16.msra.mxu0 %v1887
        %2054 = vmatmul.bf16.gmra.mxu0 %v888
        %v2055 = vpop.f32.mrf.mxu0
        %v2056 = vadd.f32 0.0, %v2055
        %v2057 = vpop.f32.mrf.mxu0
        %v2058 = vadd.f32 0.0, %v2057
        %2059 = vmatmul.bf16.gmra.mxu0 %v891
        %v2060 = vpop.f32.mrf.mxu0
        %v2061 = vadd.f32 0.0, %v2060
        %v2062 = vpop.f32.mrf.mxu0
        %v2063 = vadd.f32 0.0, %v2062
        %2064 = vmatmul.bf16.gmra.mxu0 %v894
        %v2065 = vpop.f32.mrf.mxu0
        %v2066 = vadd.f32 0.0, %v2065
        %v2067 = vpop.f32.mrf.mxu0
        %v2068 = vadd.f32 0.0, %v2067
        %2069 = vmatmul.bf16.gmra.mxu0 %v897
        %v2070 = vpop.f32.mrf.mxu0
        %v2071 = vadd.f32 0.0, %v2070
        %v2072 = vpop.f32.mrf.mxu0
        %v2073 = vadd.f32 0.0, %v2072
        %2074 = vmatmul.bf16.gmra.mxu0 %v900
        %v2075 = vpop.f32.mrf.mxu0
        %v2076 = vadd.f32 0.0, %v2075
        %v2077 = vpop.f32.mrf.mxu0
        %v2078 = vadd.f32 0.0, %v2077
        %2079 = vmatmul.bf16.gmra.mxu0 %v903
        %v2080 = vpop.f32.mrf.mxu0
        %v2081 = vadd.f32 0.0, %v2080
        %v2082 = vpop.f32.mrf.mxu0
        %v2083 = vadd.f32 0.0, %v2082
        %2084 = vmatmul.bf16.gmra.mxu0 %v906
        %v2085 = vpop.f32.mrf.mxu0
        %v2086 = vadd.f32 0.0, %v2085
        %v2087 = vpop.f32.mrf.mxu0
        %v2088 = vadd.f32 0.0, %v2087
        %2089 = vmatmul.bf16.gmra.mxu0 %v909
        %v2090 = vpop.f32.mrf.mxu0
        %v2091 = vadd.f32 0.0, %v2090
        %v2092 = vpop.f32.mrf.mxu0
        %v2093 = vadd.f32 0.0, %v2092
        %2094 = vmatmul.bf16.gmra.mxu0 %v912
        %v2095 = vpop.f32.mrf.mxu0
        %v2096 = vadd.f32 0.0, %v2095
        %v2097 = vpop.f32.mrf.mxu0
        %v2098 = vadd.f32 0.0, %v2097
        %2099 = vmatmul.bf16.gmra.mxu0 %v915
        %v2100 = vpop.f32.mrf.mxu0
        %v2101 = vadd.f32 0.0, %v2100
        %v2102 = vpop.f32.mrf.mxu0
        %v2103 = vadd.f32 0.0, %v2102
        %2104 = vmatmul.bf16.gmra.mxu0 %v918
        %v2105 = vpop.f32.mrf.mxu0
        %v2106 = vadd.f32 0.0, %v2105
        %v2107 = vpop.f32.mrf.mxu0
        %v2108 = vadd.f32 0.0, %v2107
        %2109 = vmatmul.bf16.gmra.mxu0 %v921
        %v2110 = vpop.f32.mrf.mxu0
        %v2111 = vadd.f32 0.0, %v2110
        %v2112 = vpop.f32.mrf.mxu0
        %v2113 = vadd.f32 0.0, %v2112
        %2114 = vmatmul.bf16.gmra.mxu0 %v924
        %v2115 = vpop.f32.mrf.mxu0
        %v2116 = vadd.f32 0.0, %v2115
        %v2117 = vpop.f32.mrf.mxu0
        %v2118 = vadd.f32 0.0, %v2117
        %2119 = vmatmul.bf16.gmra.mxu0 %v927
        %v2120 = vpop.f32.mrf.mxu0
        %v2121 = vadd.f32 0.0, %v2120
        %v2122 = vpop.f32.mrf.mxu0
        %v2123 = vadd.f32 0.0, %v2122
        %2124 = vmatmul.bf16.gmra.mxu0 %v930
        %v2125 = vpop.f32.mrf.mxu0
        %v2126 = vadd.f32 0.0, %v2125
        %v2127 = vpop.f32.mrf.mxu0
        %v2128 = vadd.f32 0.0, %v2127
        %2129 = vmatmul.bf16.gmra.mxu0 %v933
        %v2130 = vpop.f32.mrf.mxu0
        %v2131 = vadd.f32 0.0, %v2130
        %v2132 = vpop.f32.mrf.mxu0
        %v2133 = vadd.f32 0.0, %v2132
        %2134 = vmatmul.bf16.gmra.mxu0 %v936
        %v2135 = vpop.f32.mrf.mxu0
        %v2136 = vadd.f32 0.0, %v2135
        %v2137 = vpop.f32.mrf.mxu0
        %v2138 = vadd.f32 0.0, %v2137
        %2139 = vmatmul.bf16.gmra.mxu0 %v939
        %v2140 = vpop.f32.mrf.mxu0
        %v2141 = vadd.f32 0.0, %v2140
        %v2142 = vpop.f32.mrf.mxu0
        %v2143 = vadd.f32 0.0, %v2142
        %2144 = vmatmul.bf16.gmra.mxu0 %v942
        %v2145 = vpop.f32.mrf.mxu0
        %v2146 = vadd.f32 0.0, %v2145
        %v2147 = vpop.f32.mrf.mxu0
        %v2148 = vadd.f32 0.0, %v2147
        %2149 = vmatmul.bf16.gmra.mxu0 %v945
        %v2150 = vpop.f32.mrf.mxu0
        %v2151 = vadd.f32 0.0, %v2150
        %v2152 = vpop.f32.mrf.mxu0
        %v2153 = vadd.f32 0.0, %v2152
        %2154 = vmatmul.bf16.gmra.mxu0 %v948
        %v2155 = vpop.f32.mrf.mxu0
        %v2156 = vadd.f32 0.0, %v2155
        %v2157 = vpop.f32.mrf.mxu0
        %v2158 = vadd.f32 0.0, %v2157
        %2159 = vmatmul.bf16.gmra.mxu0 %v951
        %v2160 = vpop.f32.mrf.mxu0
        %v2161 = vadd.f32 0.0, %v2160
        %v2162 = vpop.f32.mrf.mxu0
        %v2163 = vadd.f32 0.0, %v2162
        %2164 = vmatmul.bf16.gmra.mxu0 %v954
        %v2165 = vpop.f32.mrf.mxu0
        %v2166 = vadd.f32 0.0, %v2165
        %v2167 = vpop.f32.mrf.mxu0
        %v2168 = vadd.f32 0.0, %v2167
        %2169 = vmatmul.bf16.gmra.mxu0 %v957
        %v2170 = vpop.f32.mrf.mxu0
        %v2171 = vadd.f32 0.0, %v2170
        %v2172 = vpop.f32.mrf.mxu0
        %v2173 = vadd.f32 0.0, %v2172
        %2174 = vmatmul.bf16.gmra.mxu0 %v960
        %v2175 = vpop.f32.mrf.mxu0
        %v2176 = vadd.f32 0.0, %v2175
        %v2177 = vpop.f32.mrf.mxu0
        %v2178 = vadd.f32 0.0, %v2177
        %2179 = vmatmul.bf16.gmra.mxu0 %v1896
        %v2180 = vpop.f32.mrf.mxu0
        %v2181 = vadd.f32 0.0, %v2180
        %v2182 = vpop.f32.mrf.mxu0
        %v2183 = vadd.f32 0.0, %v2182
        %2184 = vdwg.mxu0
        %2185 = vmatpush.bf16.msra.mxu0 0
        %2186 = vmatpush.bf16.msra.mxu0 0
        %2187 = vmatpush.bf16.msra.mxu0 0
        %2188 = vmatpush.bf16.msra.mxu0 0
        %2189 = vmatpush.bf16.msra.mxu0 0
        %2190 = vmatpush.bf16.msra.mxu0 0
        %2191 = vmatpush.bf16.msra.mxu0 %v1905
        %2192 = vmatpush.bf16.msra.mxu0 %v1888
        %2193 = vmatmul.bf16.gmra.mxu0 %v888
        %v2194 = vpop.f32.mrf.mxu0
        %v2195 = vadd.f32 0.0, %v2194
        %v2196 = vpop.f32.mrf.mxu0
        %v2197 = vadd.f32 0.0, %v2196
        %2198 = vmatmul.bf16.gmra.mxu0 %v891
        %v2199 = vpop.f32.mrf.mxu0
        %v2200 = vadd.f32 0.0, %v2199
        %v2201 = vpop.f32.mrf.mxu0
        %v2202 = vadd.f32 0.0, %v2201
        %2203 = vmatmul.bf16.gmra.mxu0 %v894
        %v2204 = vpop.f32.mrf.mxu0
        %v2205 = vadd.f32 0.0, %v2204
        %v2206 = vpop.f32.mrf.mxu0
        %v2207 = vadd.f32 0.0, %v2206
        %2208 = vmatmul.bf16.gmra.mxu0 %v897
        %v2209 = vpop.f32.mrf.mxu0
        %v2210 = vadd.f32 0.0, %v2209
        %v2211 = vpop.f32.mrf.mxu0
        %v2212 = vadd.f32 0.0, %v2211
        %2213 = vmatmul.bf16.gmra.mxu0 %v900
        %v2214 = vpop.f32.mrf.mxu0
        %v2215 = vadd.f32 0.0, %v2214
        %v2216 = vpop.f32.mrf.mxu0
        %v2217 = vadd.f32 0.0, %v2216
        %2218 = vmatmul.bf16.gmra.mxu0 %v903
        %v2219 = vpop.f32.mrf.mxu0
        %v2220 = vadd.f32 0.0, %v2219
        %v2221 = vpop.f32.mrf.mxu0
        %v2222 = vadd.f32 0.0, %v2221
        %2223 = vmatmul.bf16.gmra.mxu0 %v906
        %v2224 = vpop.f32.mrf.mxu0
        %v2225 = vadd.f32 0.0, %v2224
        %v2226 = vpop.f32.mrf.mxu0
        %v2227 = vadd.f32 0.0, %v2226
        %2228 = vmatmul.bf16.gmra.mxu0 %v909
        %v2229 = vpop.f32.mrf.mxu0
        %v2230 = vadd.f32 0.0, %v2229
        %v2231 = vpop.f32.mrf.mxu0
        %v2232 = vadd.f32 0.0, %v2231
        %2233 = vmatmul.bf16.gmra.mxu0 %v912
        %v2234 = vpop.f32.mrf.mxu0
        %v2235 = vadd.f32 0.0, %v2234
        %v2236 = vpop.f32.mrf.mxu0
        %v2237 = vadd.f32 0.0, %v2236
        %2238 = vmatmul.bf16.gmra.mxu0 %v915
        %v2239 = vpop.f32.mrf.mxu0
        %v2240 = vadd.f32 0.0, %v2239
        %v2241 = vpop.f32.mrf.mxu0
        %v2242 = vadd.f32 0.0, %v2241
        %2243 = vmatmul.bf16.gmra.mxu0 %v918
        %v2244 = vpop.f32.mrf.mxu0
        %v2245 = vadd.f32 0.0, %v2244
        %v2246 = vpop.f32.mrf.mxu0
        %v2247 = vadd.f32 0.0, %v2246
        %2248 = vmatmul.bf16.gmra.mxu0 %v921
        %v2249 = vpop.f32.mrf.mxu0
        %v2250 = vadd.f32 0.0, %v2249
        %v2251 = vpop.f32.mrf.mxu0
        %v2252 = vadd.f32 0.0, %v2251
        %2253 = vmatmul.bf16.gmra.mxu0 %v924
        %v2254 = vpop.f32.mrf.mxu0
        %v2255 = vadd.f32 0.0, %v2254
        %v2256 = vpop.f32.mrf.mxu0
        %v2257 = vadd.f32 0.0, %v2256
        %2258 = vmatmul.bf16.gmra.mxu0 %v927
        %v2259 = vpop.f32.mrf.mxu0
        %v2260 = vadd.f32 0.0, %v2259
        %v2261 = vpop.f32.mrf.mxu0
        %v2262 = vadd.f32 0.0, %v2261
        %2263 = vmatmul.bf16.gmra.mxu0 %v930
        %v2264 = vpop.f32.mrf.mxu0
        %v2265 = vadd.f32 0.0, %v2264
        %v2266 = vpop.f32.mrf.mxu0
        %v2267 = vadd.f32 0.0, %v2266
        %2268 = vmatmul.bf16.gmra.mxu0 %v933
        %v2269 = vpop.f32.mrf.mxu0
        %v2270 = vadd.f32 0.0, %v2269
        %v2271 = vpop.f32.mrf.mxu0
        %v2272 = vadd.f32 0.0, %v2271
        %2273 = vmatmul.bf16.gmra.mxu0 %v936
        %v2274 = vpop.f32.mrf.mxu0
        %v2275 = vadd.f32 0.0, %v2274
        %v2276 = vpop.f32.mrf.mxu0
        %v2277 = vadd.f32 0.0, %v2276
        %2278 = vmatmul.bf16.gmra.mxu0 %v939
        %v2279 = vpop.f32.mrf.mxu0
        %v2280 = vadd.f32 0.0, %v2279
        %v2281 = vpop.f32.mrf.mxu0
        %v2282 = vadd.f32 0.0, %v2281
        %2283 = vmatmul.bf16.gmra.mxu0 %v942
        %v2284 = vpop.f32.mrf.mxu0
        %v2285 = vadd.f32 0.0, %v2284
        %v2286 = vpop.f32.mrf.mxu0
        %v2287 = vadd.f32 0.0, %v2286
        %2288 = vmatmul.bf16.gmra.mxu0 %v945
        %v2289 = vpop.f32.mrf.mxu0
        %v2290 = vadd.f32 0.0, %v2289
        %v2291 = vpop.f32.mrf.mxu0
        %v2292 = vadd.f32 0.0, %v2291
        %2293 = vmatmul.bf16.gmra.mxu0 %v948
        %v2294 = vpop.f32.mrf.mxu0
        %v2295 = vadd.f32 0.0, %v2294
        %v2296 = vpop.f32.mrf.mxu0
        %v2297 = vadd.f32 0.0, %v2296
        %2298 = vmatmul.bf16.gmra.mxu0 %v951
        %v2299 = vpop.f32.mrf.mxu0
        %v2300 = vadd.f32 0.0, %v2299
        %v2301 = vpop.f32.mrf.mxu0
        %v2302 = vadd.f32 0.0, %v2301
        %2303 = vmatmul.bf16.gmra.mxu0 %v954
        %v2304 = vpop.f32.mrf.mxu0
        %v2305 = vadd.f32 0.0, %v2304
        %v2306 = vpop.f32.mrf.mxu0
        %v2307 = vadd.f32 0.0, %v2306
        %2308 = vmatmul.bf16.gmra.mxu0 %v957
        %v2309 = vpop.f32.mrf.mxu0
        %v2310 = vadd.f32 0.0, %v2309
        %v2311 = vpop.f32.mrf.mxu0
        %v2312 = vadd.f32 0.0, %v2311
        %2313 = vmatmul.bf16.gmra.mxu0 %v960
        %v2314 = vpop.f32.mrf.mxu0
        %v2315 = vadd.f32 0.0, %v2314
        %v2316 = vpop.f32.mrf.mxu0
        %v2317 = vadd.f32 0.0, %v2316
        %2318 = vmatmul.bf16.gmra.mxu0 %v1896
        %v2319 = vpop.f32.mrf.mxu0
        %v2320 = vadd.f32 0.0, %v2319
        %v2321 = vpop.f32.mrf.mxu0
        %v2322 = vadd.f32 0.0, %v2321
        %2323 = vdwg.mxu0
        %v2324 = vadd.f32 %v1445, %v1917
        %v2325 = vadd.f32 %v1584, %v2056
        %v2326 = vadd.f32 %v1723, %v2195
        %v2327 = vadd.f32 %v1447, %v1919
        %v2328 = vadd.f32 %v1586, %v2058
        %v2329 = vadd.f32 %v1725, %v2197
        %v2330 = vadd.f32 %v1450, %v1922
        %v2331 = vadd.f32 %v1589, %v2061
        %v2332 = vadd.f32 %v1728, %v2200
        %v2333 = vadd.f32 %v1452, %v1924
        %v2334 = vadd.f32 %v1591, %v2063
        %v2335 = vadd.f32 %v1730, %v2202
        %v2336 = vadd.f32 %v1455, %v1927
        %v2337 = vadd.f32 %v1594, %v2066
        %v2338 = vadd.f32 %v1733, %v2205
        %v2339 = vadd.f32 %v1457, %v1929
        %v2340 = vadd.f32 %v1596, %v2068
        %v2341 = vadd.f32 %v1735, %v2207
        %v2342 = vadd.f32 %v1460, %v1932
        %v2343 = vadd.f32 %v1599, %v2071
        %v2344 = vadd.f32 %v1738, %v2210
        %v2345 = vadd.f32 %v1462, %v1934
        %v2346 = vadd.f32 %v1601, %v2073
        %v2347 = vadd.f32 %v1740, %v2212
        %v2348 = vadd.f32 %v1465, %v1937
        %v2349 = vadd.f32 %v1604, %v2076
        %v2350 = vadd.f32 %v1743, %v2215
        %v2351 = vadd.f32 %v1467, %v1939
        %v2352 = vadd.f32 %v1606, %v2078
        %v2353 = vadd.f32 %v1745, %v2217
        %v2354 = vadd.f32 %v1470, %v1942
        %v2355 = vadd.f32 %v1609, %v2081
        %v2356 = vadd.f32 %v1748, %v2220
        %v2357 = vadd.f32 %v1472, %v1944
        %v2358 = vadd.f32 %v1611, %v2083
        %v2359 = vadd.f32 %v1750, %v2222
        %v2360 = vadd.f32 %v1475, %v1947
        %v2361 = vadd.f32 %v1614, %v2086
        %v2362 = vadd.f32 %v1753, %v2225
        %v2363 = vadd.f32 %v1477, %v1949
        %v2364 = vadd.f32 %v1616, %v2088
        %v2365 = vadd.f32 %v1755, %v2227
        %v2366 = vadd.f32 %v1480, %v1952
        %v2367 = vadd.f32 %v1619, %v2091
        %v2368 = vadd.f32 %v1758, %v2230
        %v2369 = vadd.f32 %v1482, %v1954
        %v2370 = vadd.f32 %v1621, %v2093
        %v2371 = vadd.f32 %v1760, %v2232
        %v2372 = vadd.f32 %v1485, %v1957
        %v2373 = vadd.f32 %v1624, %v2096
        %v2374 = vadd.f32 %v1763, %v2235
        %v2375 = vadd.f32 %v1487, %v1959
        %v2376 = vadd.f32 %v1626, %v2098
        %v2377 = vadd.f32 %v1765, %v2237
        %v2378 = vadd.f32 %v1490, %v1962
        %v2379 = vadd.f32 %v1629, %v2101
        %v2380 = vadd.f32 %v1768, %v2240
        %v2381 = vadd.f32 %v1492, %v1964
        %v2382 = vadd.f32 %v1631, %v2103
        %v2383 = vadd.f32 %v1770, %v2242
        %v2384 = vadd.f32 %v1495, %v1967
        %v2385 = vadd.f32 %v1634, %v2106
        %v2386 = vadd.f32 %v1773, %v2245
        %v2387 = vadd.f32 %v1497, %v1969
        %v2388 = vadd.f32 %v1636, %v2108
        %v2389 = vadd.f32 %v1775, %v2247
        %v2390 = vadd.f32 %v1500, %v1972
        %v2391 = vadd.f32 %v1639, %v2111
        %v2392 = vadd.f32 %v1778, %v2250
        %v2393 = vadd.f32 %v1502, %v1974
        %v2394 = vadd.f32 %v1641, %v2113
        %v2395 = vadd.f32 %v1780, %v2252
        %v2396 = vadd.f32 %v1505, %v1977
        %v2397 = vadd.f32 %v1644, %v2116
        %v2398 = vadd.f32 %v1783, %v2255
        %v2399 = vadd.f32 %v1507, %v1979
        %v2400 = vadd.f32 %v1646, %v2118
        %v2401 = vadd.f32 %v1785, %v2257
        %v2402 = vadd.f32 %v1510, %v1982
        %v2403 = vadd.f32 %v1649, %v2121
        %v2404 = vadd.f32 %v1788, %v2260
        %v2405 = vadd.f32 %v1512, %v1984
        %v2406 = vadd.f32 %v1651, %v2123
        %v2407 = vadd.f32 %v1790, %v2262
        %v2408 = vadd.f32 %v1515, %v1987
        %v2409 = vadd.f32 %v1654, %v2126
        %v2410 = vadd.f32 %v1793, %v2265
        %v2411 = vadd.f32 %v1517, %v1989
        %v2412 = vadd.f32 %v1656, %v2128
        %v2413 = vadd.f32 %v1795, %v2267
        %v2414 = vadd.f32 %v1520, %v1992
        %v2415 = vadd.f32 %v1659, %v2131
        %v2416 = vadd.f32 %v1798, %v2270
        %v2417 = vadd.f32 %v1522, %v1994
        %v2418 = vadd.f32 %v1661, %v2133
        %v2419 = vadd.f32 %v1800, %v2272
        %v2420 = vadd.f32 %v1525, %v1997
        %v2421 = vadd.f32 %v1664, %v2136
        %v2422 = vadd.f32 %v1803, %v2275
        %v2423 = vadd.f32 %v1527, %v1999
        %v2424 = vadd.f32 %v1666, %v2138
        %v2425 = vadd.f32 %v1805, %v2277
        %v2426 = vadd.f32 %v1530, %v2002
        %v2427 = vadd.f32 %v1669, %v2141
        %v2428 = vadd.f32 %v1808, %v2280
        %v2429 = vadd.f32 %v1532, %v2004
        %v2430 = vadd.f32 %v1671, %v2143
        %v2431 = vadd.f32 %v1810, %v2282
        %v2432 = vadd.f32 %v1535, %v2007
        %v2433 = vadd.f32 %v1674, %v2146
        %v2434 = vadd.f32 %v1813, %v2285
        %v2435 = vadd.f32 %v1537, %v2009
        %v2436 = vadd.f32 %v1676, %v2148
        %v2437 = vadd.f32 %v1815, %v2287
        %v2438 = vadd.f32 %v1540, %v2012
        %v2439 = vadd.f32 %v1679, %v2151
        %v2440 = vadd.f32 %v1818, %v2290
        %v2441 = vadd.f32 %v1542, %v2014
        %v2442 = vadd.f32 %v1681, %v2153
        %v2443 = vadd.f32 %v1820, %v2292
        %v2444 = vadd.f32 %v1545, %v2017
        %v2445 = vadd.f32 %v1684, %v2156
        %v2446 = vadd.f32 %v1823, %v2295
        %v2447 = vadd.f32 %v1547, %v2019
        %v2448 = vadd.f32 %v1686, %v2158
        %v2449 = vadd.f32 %v1825, %v2297
        %v2450 = vadd.f32 %v1550, %v2022
        %v2451 = vadd.f32 %v1689, %v2161
        %v2452 = vadd.f32 %v1828, %v2300
        %v2453 = vadd.f32 %v1552, %v2024
        %v2454 = vadd.f32 %v1691, %v2163
        %v2455 = vadd.f32 %v1830, %v2302
        %v2456 = vadd.f32 %v1555, %v2027
        %v2457 = vadd.f32 %v1694, %v2166
        %v2458 = vadd.f32 %v1833, %v2305
        %v2459 = vadd.f32 %v1557, %v2029
        %v2460 = vadd.f32 %v1696, %v2168
        %v2461 = vadd.f32 %v1835, %v2307
        %v2462 = vadd.f32 %v1560, %v2032
        %v2463 = vadd.f32 %v1699, %v2171
        %v2464 = vadd.f32 %v1838, %v2310
        %v2465 = vadd.f32 %v1562, %v2034
        %v2466 = vadd.f32 %v1701, %v2173
        %v2467 = vadd.f32 %v1840, %v2312
        %v2468 = vadd.f32 %v1565, %v2037
        %v2469 = vadd.f32 %v1704, %v2176
        %v2470 = vadd.f32 %v1843, %v2315
        %v2471 = vadd.f32 %v1567, %v2039
        %v2472 = vadd.f32 %v1706, %v2178
        %v2473 = vadd.f32 %v1845, %v2317
        %v2474 = vadd.f32 %v1570, %v2042
        %v2475 = vadd.f32 %v1709, %v2181
        %v2476 = vadd.f32 %v1848, %v2320
        %v2477 = vadd.f32 %v1572, %v2044
        %v2478 = vadd.f32 %v1711, %v2183
        %v2479 = vadd.f32 %v1850, %v2322
        %v2480 = vperm.slane %v592, 0
        %v2481 = vperm.slane %v593, 0
        %v2482 = vperm.slane %v594, 0
        %v2483 = vadd.f32 %v2324, %v2480
        %v2484 = vadd.f32 %v2325, %v2481
        %v2485 = vadd.f32 %v2326, %v2482
        %v2486 = vadd.f32 %v2327, %v2480
        %v2487 = vadd.f32 %v2328, %v2481
        %v2488 = vadd.f32 %v2329, %v2482
        %v2489 = vadd.f32 %v2330, %v2480
        %v2490 = vadd.f32 %v2331, %v2481
        %v2491 = vadd.f32 %v2332, %v2482
        %v2492 = vadd.f32 %v2333, %v2480
        %v2493 = vadd.f32 %v2334, %v2481
        %v2494 = vadd.f32 %v2335, %v2482
        %v2495 = vadd.f32 %v2336, %v2480
        %v2496 = vadd.f32 %v2337, %v2481
        %v2497 = vadd.f32 %v2338, %v2482
        %v2498 = vadd.f32 %v2339, %v2480
        %v2499 = vadd.f32 %v2340, %v2481
        %v2500 = vadd.f32 %v2341, %v2482
        %v2501 = vadd.f32 %v2342, %v2480
        %v2502 = vadd.f32 %v2343, %v2481
        %v2503 = vadd.f32 %v2344, %v2482
        %v2504 = vadd.f32 %v2345, %v2480
        %v2505 = vadd.f32 %v2346, %v2481
        %v2506 = vadd.f32 %v2347, %v2482
        %v2507 = vadd.f32 %v2348, %v2480
        %v2508 = vadd.f32 %v2349, %v2481
        %v2509 = vadd.f32 %v2350, %v2482
        %v2510 = vadd.f32 %v2351, %v2480
        %v2511 = vadd.f32 %v2352, %v2481
        %v2512 = vadd.f32 %v2353, %v2482
        %v2513 = vadd.f32 %v2354, %v2480
        %v2514 = vadd.f32 %v2355, %v2481
        %v2515 = vadd.f32 %v2356, %v2482
        %v2516 = vadd.f32 %v2357, %v2480
        %v2517 = vadd.f32 %v2358, %v2481
        %v2518 = vadd.f32 %v2359, %v2482
        %v2519 = vadd.f32 %v2360, %v2480
        %v2520 = vadd.f32 %v2361, %v2481
        %v2521 = vadd.f32 %v2362, %v2482
        %v2522 = vadd.f32 %v2363, %v2480
        %v2523 = vadd.f32 %v2364, %v2481
        %v2524 = vadd.f32 %v2365, %v2482
        %v2525 = vadd.f32 %v2366, %v2480
        %v2526 = vadd.f32 %v2367, %v2481
        %v2527 = vadd.f32 %v2368, %v2482
        %v2528 = vadd.f32 %v2369, %v2480
        %v2529 = vadd.f32 %v2370, %v2481
        %v2530 = vadd.f32 %v2371, %v2482
        %v2531 = vadd.f32 %v2372, %v2480
        %v2532 = vadd.f32 %v2373, %v2481
        %v2533 = vadd.f32 %v2374, %v2482
        %v2534 = vadd.f32 %v2375, %v2480
        %v2535 = vadd.f32 %v2376, %v2481
        %v2536 = vadd.f32 %v2377, %v2482
        %v2537 = vadd.f32 %v2378, %v2480
        %v2538 = vadd.f32 %v2379, %v2481
        %v2539 = vadd.f32 %v2380, %v2482
        %v2540 = vadd.f32 %v2381, %v2480
        %v2541 = vadd.f32 %v2382, %v2481
        %v2542 = vadd.f32 %v2383, %v2482
        %v2543 = vadd.f32 %v2384, %v2480
        %v2544 = vadd.f32 %v2385, %v2481
        %v2545 = vadd.f32 %v2386, %v2482
        %v2546 = vadd.f32 %v2387, %v2480
        %v2547 = vadd.f32 %v2388, %v2481
        %v2548 = vadd.f32 %v2389, %v2482
        %v2549 = vadd.f32 %v2390, %v2480
        %v2550 = vadd.f32 %v2391, %v2481
        %v2551 = vadd.f32 %v2392, %v2482
        %v2552 = vadd.f32 %v2393, %v2480
        %v2553 = vadd.f32 %v2394, %v2481
        %v2554 = vadd.f32 %v2395, %v2482
        %v2555 = vadd.f32 %v2396, %v2480
        %v2556 = vadd.f32 %v2397, %v2481
        %v2557 = vadd.f32 %v2398, %v2482
        %v2558 = vadd.f32 %v2399, %v2480
        %v2559 = vadd.f32 %v2400, %v2481
        %v2560 = vadd.f32 %v2401, %v2482
        %v2561 = vadd.f32 %v2402, %v2480
        %v2562 = vadd.f32 %v2403, %v2481
        %v2563 = vadd.f32 %v2404, %v2482
        %v2564 = vadd.f32 %v2405, %v2480
        %v2565 = vadd.f32 %v2406, %v2481
        %v2566 = vadd.f32 %v2407, %v2482
        %v2567 = vadd.f32 %v2408, %v2480
        %v2568 = vadd.f32 %v2409, %v2481
        %v2569 = vadd.f32 %v2410, %v2482
        %v2570 = vadd.f32 %v2411, %v2480
        %v2571 = vadd.f32 %v2412, %v2481
        %v2572 = vadd.f32 %v2413, %v2482
        %v2573 = vadd.f32 %v2414, %v2480
        %v2574 = vadd.f32 %v2415, %v2481
        %v2575 = vadd.f32 %v2416, %v2482
        %v2576 = vadd.f32 %v2417, %v2480
        %v2577 = vadd.f32 %v2418, %v2481
        %v2578 = vadd.f32 %v2419, %v2482
        %v2579 = vadd.f32 %v2420, %v2480
        %v2580 = vadd.f32 %v2421, %v2481
        %v2581 = vadd.f32 %v2422, %v2482
        %v2582 = vadd.f32 %v2423, %v2480
        %v2583 = vadd.f32 %v2424, %v2481
        %v2584 = vadd.f32 %v2425, %v2482
        %v2585 = vadd.f32 %v2426, %v2480
        %v2586 = vadd.f32 %v2427, %v2481
        %v2587 = vadd.f32 %v2428, %v2482
        %v2588 = vadd.f32 %v2429, %v2480
        %v2589 = vadd.f32 %v2430, %v2481
        %v2590 = vadd.f32 %v2431, %v2482
        %v2591 = vadd.f32 %v2432, %v2480
        %v2592 = vadd.f32 %v2433, %v2481
        %v2593 = vadd.f32 %v2434, %v2482
        %v2594 = vadd.f32 %v2435, %v2480
        %v2595 = vadd.f32 %v2436, %v2481
        %v2596 = vadd.f32 %v2437, %v2482
        %v2597 = vadd.f32 %v2438, %v2480
        %v2598 = vadd.f32 %v2439, %v2481
        %v2599 = vadd.f32 %v2440, %v2482
        %v2600 = vadd.f32 %v2441, %v2480
        %v2601 = vadd.f32 %v2442, %v2481
        %v2602 = vadd.f32 %v2443, %v2482
        %v2603 = vadd.f32 %v2444, %v2480
        %v2604 = vadd.f32 %v2445, %v2481
        %v2605 = vadd.f32 %v2446, %v2482
        %v2606 = vadd.f32 %v2447, %v2480
        %v2607 = vadd.f32 %v2448, %v2481
        %v2608 = vadd.f32 %v2449, %v2482
        %v2609 = vadd.f32 %v2450, %v2480
        %v2610 = vadd.f32 %v2451, %v2481
        %v2611 = vadd.f32 %v2452, %v2482
        %v2612 = vadd.f32 %v2453, %v2480
        %v2613 = vadd.f32 %v2454, %v2481
        %v2614 = vadd.f32 %v2455, %v2482
        %v2615 = vadd.f32 %v2456, %v2480
        %v2616 = vadd.f32 %v2457, %v2481
        %v2617 = vadd.f32 %v2458, %v2482
        %v2618 = vadd.f32 %v2459, %v2480
        %v2619 = vadd.f32 %v2460, %v2481
        %v2620 = vadd.f32 %v2461, %v2482
        %v2621 = vadd.f32 %v2462, %v2480
        %v2622 = vadd.f32 %v2463, %v2481
        %v2623 = vadd.f32 %v2464, %v2482
        %v2624 = vadd.f32 %v2465, %v2480
        %v2625 = vadd.f32 %v2466, %v2481
        %v2626 = vadd.f32 %v2467, %v2482
        %v2627 = vadd.f32 %v2468, %v2480
        %v2628 = vadd.f32 %v2469, %v2481
        %v2629 = vadd.f32 %v2470, %v2482
        %v2630 = vadd.f32 %v2471, %v2480
        %v2631 = vadd.f32 %v2472, %v2481
        %v2632 = vadd.f32 %v2473, %v2482
        %v2633 = vadd.f32 %v2474, %v2480
        %v2634 = vadd.f32 %v2475, %v2481
        %v2635 = vadd.f32 %v2476, %v2482
        %v2636 = vadd.f32 %v2477, %v2480
        %v2637 = vadd.f32 %v2478, %v2481
        %v2638 = vadd.f32 %v2479, %v2482
        %v2639 = vmax.f32 %v2483, 0.0
        %v2640 = vmax.f32 %v2484, 0.0
        %v2641 = vmax.f32 %v2485, 0.0
        %v2642 = vmax.f32 %v2486, 0.0
        %v2643 = vmax.f32 %v2487, 0.0
        %v2644 = vmax.f32 %v2488, 0.0
        %v2645 = vmax.f32 %v2489, 0.0
        %v2646 = vmax.f32 %v2490, 0.0
        %v2647 = vmax.f32 %v2491, 0.0
        %v2648 = vmax.f32 %v2492, 0.0
        %v2649 = vmax.f32 %v2493, 0.0
        %v2650 = vmax.f32 %v2494, 0.0
        %v2651 = vmax.f32 %v2495, 0.0
        %v2652 = vmax.f32 %v2496, 0.0
        %v2653 = vmax.f32 %v2497, 0.0
        %v2654 = vmax.f32 %v2498, 0.0
        %v2655 = vmax.f32 %v2499, 0.0
        %v2656 = vmax.f32 %v2500, 0.0
        %v2657 = vmax.f32 %v2501, 0.0
        %v2658 = vmax.f32 %v2502, 0.0
        %v2659 = vmax.f32 %v2503, 0.0
        %v2660 = vmax.f32 %v2504, 0.0
        %v2661 = vmax.f32 %v2505, 0.0
        %v2662 = vmax.f32 %v2506, 0.0
        %v2663 = vmax.f32 %v2507, 0.0
        %v2664 = vmax.f32 %v2508, 0.0
        %v2665 = vmax.f32 %v2509, 0.0
        %v2666 = vmax.f32 %v2510, 0.0
        %v2667 = vmax.f32 %v2511, 0.0
        %v2668 = vmax.f32 %v2512, 0.0
        %v2669 = vmax.f32 %v2513, 0.0
        %v2670 = vmax.f32 %v2514, 0.0
        %v2671 = vmax.f32 %v2515, 0.0
        %v2672 = vmax.f32 %v2516, 0.0
        %v2673 = vmax.f32 %v2517, 0.0
        %v2674 = vmax.f32 %v2518, 0.0
        %v2675 = vmax.f32 %v2519, 0.0
        %v2676 = vmax.f32 %v2520, 0.0
        %v2677 = vmax.f32 %v2521, 0.0
        %v2678 = vmax.f32 %v2522, 0.0
        %v2679 = vmax.f32 %v2523, 0.0
        %v2680 = vmax.f32 %v2524, 0.0
        %v2681 = vmax.f32 %v2525, 0.0
        %v2682 = vmax.f32 %v2526, 0.0
        %v2683 = vmax.f32 %v2527, 0.0
        %v2684 = vmax.f32 %v2528, 0.0
        %v2685 = vmax.f32 %v2529, 0.0
        %v2686 = vmax.f32 %v2530, 0.0
        %v2687 = vmax.f32 %v2531, 0.0
        %v2688 = vmax.f32 %v2532, 0.0
        %v2689 = vmax.f32 %v2533, 0.0
        %v2690 = vmax.f32 %v2534, 0.0
        %v2691 = vmax.f32 %v2535, 0.0
        %v2692 = vmax.f32 %v2536, 0.0
        %v2693 = vmax.f32 %v2537, 0.0
        %v2694 = vmax.f32 %v2538, 0.0
        %v2695 = vmax.f32 %v2539, 0.0
        %v2696 = vmax.f32 %v2540, 0.0
        %v2697 = vmax.f32 %v2541, 0.0
        %v2698 = vmax.f32 %v2542, 0.0
        %v2699 = vmax.f32 %v2543, 0.0
        %v2700 = vmax.f32 %v2544, 0.0
        %v2701 = vmax.f32 %v2545, 0.0
        %v2702 = vmax.f32 %v2546, 0.0
        %v2703 = vmax.f32 %v2547, 0.0
        %v2704 = vmax.f32 %v2548, 0.0
        %v2705 = vmax.f32 %v2549, 0.0
        %v2706 = vmax.f32 %v2550, 0.0
        %v2707 = vmax.f32 %v2551, 0.0
        %v2708 = vmax.f32 %v2552, 0.0
        %v2709 = vmax.f32 %v2553, 0.0
        %v2710 = vmax.f32 %v2554, 0.0
        %v2711 = vmax.f32 %v2555, 0.0
        %v2712 = vmax.f32 %v2556, 0.0
        %v2713 = vmax.f32 %v2557, 0.0
        %v2714 = vmax.f32 %v2558, 0.0
        %v2715 = vmax.f32 %v2559, 0.0
        %v2716 = vmax.f32 %v2560, 0.0
        %v2717 = vmax.f32 %v2561, 0.0
        %v2718 = vmax.f32 %v2562, 0.0
        %v2719 = vmax.f32 %v2563, 0.0
        %v2720 = vmax.f32 %v2564, 0.0
        %v2721 = vmax.f32 %v2565, 0.0
        %v2722 = vmax.f32 %v2566, 0.0
        %v2723 = vmax.f32 %v2567, 0.0
        %v2724 = vmax.f32 %v2568, 0.0
        %v2725 = vmax.f32 %v2569, 0.0
        %v2726 = vmax.f32 %v2570, 0.0
        %v2727 = vmax.f32 %v2571, 0.0
        %v2728 = vmax.f32 %v2572, 0.0
        %v2729 = vmax.f32 %v2573, 0.0
        %v2730 = vmax.f32 %v2574, 0.0
        %v2731 = vmax.f32 %v2575, 0.0
        %v2732 = vmax.f32 %v2576, 0.0
        %v2733 = vmax.f32 %v2577, 0.0
        %v2734 = vmax.f32 %v2578, 0.0
        %v2735 = vmax.f32 %v2579, 0.0
        %v2736 = vmax.f32 %v2580, 0.0
        %v2737 = vmax.f32 %v2581, 0.0
        %v2738 = vmax.f32 %v2582, 0.0
        %v2739 = vmax.f32 %v2583, 0.0
        %v2740 = vmax.f32 %v2584, 0.0
        %v2741 = vmax.f32 %v2585, 0.0
        %v2742 = vmax.f32 %v2586, 0.0
        %v2743 = vmax.f32 %v2587, 0.0
        %v2744 = vmax.f32 %v2588, 0.0
        %v2745 = vmax.f32 %v2589, 0.0
        %v2746 = vmax.f32 %v2590, 0.0
        %v2747 = vmax.f32 %v2591, 0.0
        %v2748 = vmax.f32 %v2592, 0.0
        %v2749 = vmax.f32 %v2593, 0.0
        %v2750 = vmax.f32 %v2594, 0.0
        %v2751 = vmax.f32 %v2595, 0.0
        %v2752 = vmax.f32 %v2596, 0.0
        %v2753 = vmax.f32 %v2597, 0.0
        %v2754 = vmax.f32 %v2598, 0.0
        %v2755 = vmax.f32 %v2599, 0.0
        %v2756 = vmax.f32 %v2600, 0.0
        %v2757 = vmax.f32 %v2601, 0.0
        %v2758 = vmax.f32 %v2602, 0.0
        %v2759 = vmax.f32 %v2603, 0.0
        %v2760 = vmax.f32 %v2604, 0.0
        %v2761 = vmax.f32 %v2605, 0.0
        %v2762 = vmax.f32 %v2606, 0.0
        %v2763 = vmax.f32 %v2607, 0.0
        %v2764 = vmax.f32 %v2608, 0.0
        %v2765 = vmax.f32 %v2609, 0.0
        %v2766 = vmax.f32 %v2610, 0.0
        %v2767 = vmax.f32 %v2611, 0.0
        %v2768 = vmax.f32 %v2612, 0.0
        %v2769 = vmax.f32 %v2613, 0.0
        %v2770 = vmax.f32 %v2614, 0.0
        %v2771 = vmax.f32 %v2615, 0.0
        %v2772 = vmax.f32 %v2616, 0.0
        %v2773 = vmax.f32 %v2617, 0.0
        %v2774 = vmax.f32 %v2618, 0.0
        %v2775 = vmax.f32 %v2619, 0.0
        %v2776 = vmax.f32 %v2620, 0.0
        %v2777 = vmax.f32 %v2621, 0.0
        %v2778 = vmax.f32 %v2622, 0.0
        %v2779 = vmax.f32 %v2623, 0.0
        %v2780 = vmax.f32 %v2624, 0.0
        %v2781 = vmax.f32 %v2625, 0.0
        %v2782 = vmax.f32 %v2626, 0.0
        %v2783 = vmax.f32 %v2627, 0.0
        %v2784 = vmax.f32 %v2628, 0.0
        %v2785 = vmax.f32 %v2629, 0.0
        %v2786 = vmax.f32 %v2630, 0.0
        %v2787 = vmax.f32 %v2631, 0.0
        %v2788 = vmax.f32 %v2632, 0.0
        %v2789 = vmax.f32 %v2633, 0.0
        %v2790 = vmax.f32 %v2634, 0.0
        %v2791 = vmax.f32 %v2635, 0.0
        %v2792 = vmax.f32 %v2636, 0.0
        %v2793 = vmax.f32 %v2637, 0.0
        %v2794 = vmax.f32 %v2638, 0.0
        %v2795 = vpack.c.bf16 %v2640, %v2639
        %v2796 = vpack.c.bf16 %v2641, %v2641
        %v2797 = vpack.c.bf16 %v2643, %v2642
        %v2798 = vpack.c.bf16 %v2644, %v2644
        %v2799 = vpack.c.bf16 %v2646, %v2645
        %v2800 = vpack.c.bf16 %v2647, %v2647
        %v2801 = vpack.c.bf16 %v2649, %v2648
        %v2802 = vpack.c.bf16 %v2650, %v2650
        %v2803 = vpack.c.bf16 %v2652, %v2651
        %v2804 = vpack.c.bf16 %v2653, %v2653
        %v2805 = vpack.c.bf16 %v2655, %v2654
        %v2806 = vpack.c.bf16 %v2656, %v2656
        %v2807 = vpack.c.bf16 %v2658, %v2657
        %v2808 = vpack.c.bf16 %v2659, %v2659
        %v2809 = vpack.c.bf16 %v2661, %v2660
        %v2810 = vpack.c.bf16 %v2662, %v2662
        %v2811 = vpack.c.bf16 %v2664, %v2663
        %v2812 = vpack.c.bf16 %v2665, %v2665
        %v2813 = vpack.c.bf16 %v2667, %v2666
        %v2814 = vpack.c.bf16 %v2668, %v2668
        %v2815 = vpack.c.bf16 %v2670, %v2669
        %v2816 = vpack.c.bf16 %v2671, %v2671
        %v2817 = vpack.c.bf16 %v2673, %v2672
        %v2818 = vpack.c.bf16 %v2674, %v2674
        %v2819 = vpack.c.bf16 %v2676, %v2675
        %v2820 = vpack.c.bf16 %v2677, %v2677
        %v2821 = vpack.c.bf16 %v2679, %v2678
        %v2822 = vpack.c.bf16 %v2680, %v2680
        %v2823 = vpack.c.bf16 %v2682, %v2681
        %v2824 = vpack.c.bf16 %v2683, %v2683
        %v2825 = vpack.c.bf16 %v2685, %v2684
        %v2826 = vpack.c.bf16 %v2686, %v2686
        %v2827 = vpack.c.bf16 %v2688, %v2687
        %v2828 = vpack.c.bf16 %v2689, %v2689
        %v2829 = vpack.c.bf16 %v2691, %v2690
        %v2830 = vpack.c.bf16 %v2692, %v2692
        %v2831 = vpack.c.bf16 %v2694, %v2693
        %v2832 = vpack.c.bf16 %v2695, %v2695
        %v2833 = vpack.c.bf16 %v2697, %v2696
        %v2834 = vpack.c.bf16 %v2698, %v2698
        %v2835 = vpack.c.bf16 %v2700, %v2699
        %v2836 = vpack.c.bf16 %v2701, %v2701
        %v2837 = vpack.c.bf16 %v2703, %v2702
        %v2838 = vpack.c.bf16 %v2704, %v2704
        %v2839 = vpack.c.bf16 %v2706, %v2705
        %v2840 = vpack.c.bf16 %v2707, %v2707
        %v2841 = vpack.c.bf16 %v2709, %v2708
        %v2842 = vpack.c.bf16 %v2710, %v2710
        %v2843 = vpack.c.bf16 %v2712, %v2711
        %v2844 = vpack.c.bf16 %v2713, %v2713
        %v2845 = vpack.c.bf16 %v2715, %v2714
        %v2846 = vpack.c.bf16 %v2716, %v2716
        %v2847 = vpack.c.bf16 %v2718, %v2717
        %v2848 = vpack.c.bf16 %v2719, %v2719
        %v2849 = vpack.c.bf16 %v2721, %v2720
        %v2850 = vpack.c.bf16 %v2722, %v2722
        %v2851 = vpack.c.bf16 %v2724, %v2723
        %v2852 = vpack.c.bf16 %v2725, %v2725
        %v2853 = vpack.c.bf16 %v2727, %v2726
        %v2854 = vpack.c.bf16 %v2728, %v2728
        %v2855 = vpack.c.bf16 %v2730, %v2729
        %v2856 = vpack.c.bf16 %v2731, %v2731
        %v2857 = vpack.c.bf16 %v2733, %v2732
        %v2858 = vpack.c.bf16 %v2734, %v2734
        %v2859 = vpack.c.bf16 %v2736, %v2735
        %v2860 = vpack.c.bf16 %v2737, %v2737
        %v2861 = vpack.c.bf16 %v2739, %v2738
        %v2862 = vpack.c.bf16 %v2740, %v2740
        %v2863 = vpack.c.bf16 %v2742, %v2741
        %v2864 = vpack.c.bf16 %v2743, %v2743
        %v2865 = vpack.c.bf16 %v2745, %v2744
        %v2866 = vpack.c.bf16 %v2746, %v2746
        %v2867 = vpack.c.bf16 %v2748, %v2747
        %v2868 = vpack.c.bf16 %v2749, %v2749
        %v2869 = vpack.c.bf16 %v2751, %v2750
        %v2870 = vpack.c.bf16 %v2752, %v2752
        %v2871 = vpack.c.bf16 %v2754, %v2753
        %v2872 = vpack.c.bf16 %v2755, %v2755
        %v2873 = vpack.c.bf16 %v2757, %v2756
        %v2874 = vpack.c.bf16 %v2758, %v2758
        %v2875 = vpack.c.bf16 %v2760, %v2759
        %v2876 = vpack.c.bf16 %v2761, %v2761
        %v2877 = vpack.c.bf16 %v2763, %v2762
        %v2878 = vpack.c.bf16 %v2764, %v2764
        %v2879 = vpack.c.bf16 %v2766, %v2765
        %v2880 = vpack.c.bf16 %v2767, %v2767
        %v2881 = vpack.c.bf16 %v2769, %v2768
        %v2882 = vpack.c.bf16 %v2770, %v2770
        %v2883 = vpack.c.bf16 %v2772, %v2771
        %v2884 = vpack.c.bf16 %v2773, %v2773
        %v2885 = vpack.c.bf16 %v2775, %v2774
        %v2886 = vpack.c.bf16 %v2776, %v2776
        %v2887 = vpack.c.bf16 %v2778, %v2777
        %v2888 = vpack.c.bf16 %v2779, %v2779
        %v2889 = vpack.c.bf16 %v2781, %v2780
        %v2890 = vpack.c.bf16 %v2782, %v2782
        %v2891 = vpack.c.bf16 %v2784, %v2783
        %v2892 = vpack.c.bf16 %v2785, %v2785
        %v2893 = vpack.c.bf16 %v2787, %v2786
        %v2894 = vpack.c.bf16 %v2788, %v2788
        %v2895 = vpack.c.bf16 %v2790, %v2789
        %v2896 = vpack.c.bf16 %v2791, %v2791
        %v2897 = vpack.c.bf16 %v2793, %v2792
        %v2898 = vpack.c.bf16 %v2794, %v2794
        %v2899 = vld [vmem:[%s2] sm:$0xf]
        %v2900 = vld [vmem:[%s2 + $0x4] sm:$0xf]
        %v2901 = vld [vmem:[%s2 + $0x8] sm:$0xf]
        %v2902 = vld [vmem:[%s2 + $0xc] sm:$0xf]
        %v2903 = vld [vmem:[%s2 + $0x10] sm:$0xf]
        %v2904 = vld [vmem:[%s2 + $0x14] sm:$0xf]
        %v2905 = vld [vmem:[%s2 + $0x18] sm:$0xf]
        %v2906 = vld [vmem:[%s2 + $0x1c] sm:$0xf]
        %v2907 = vld [vmem:[%s2 + $0x20] sm:$0xf]
        %v2908 = vld [vmem:[%s2 + $0x24] sm:$0xf]
        %v2909 = vld [vmem:[%s2 + $0x28] sm:$0xf]
        %v2910 = vld [vmem:[%s2 + $0x2c] sm:$0xf]
        %v2911 = vld [vmem:[%s2 + $0x30] sm:$0xf]
        %v2912 = vld [vmem:[%s2 + $0x34] sm:$0xf]
        %v2913 = vld [vmem:[%s2 + $0x38] sm:$0xf]
        %v2914 = vld [vmem:[%s2 + $0x3c] sm:$0xf]
        %v2915 = vld [vmem:[%s2 + $0x40] sm:$0xf]
        %v2916 = vld [vmem:[%s2 + $0x44] sm:$0xf]
        %v2917 = vld [vmem:[%s2 + $0x48] sm:$0xf]
        %v2918 = vld [vmem:[%s2 + $0x4c] sm:$0xf]
        %v2919 = vld [vmem:[%s2 + $0x50] sm:$0xf]
        %v2920 = vld [vmem:[%s2 + $0x54] sm:$0xf]
        %v2921 = vld [vmem:[%s2 + $0x58] sm:$0xf]
        %v2922 = vld [vmem:[%s2 + $0x5c] sm:$0xf]
        %v2923 = vld [vmem:[%s2 + $0x60] sm:$0xf]
        %v2924 = vld [vmem:[%s2 + $0x64] sm:$0xf]
        %v2925 = vld [vmem:[%s2 + $0x68] sm:$0xf]
        %v2926 = vld [vmem:[%s2 + $0x6c] sm:$0xf]
        %v2927 = vld [vmem:[%s2 + $0x70] sm:$0xf]
        %v2928 = vld [vmem:[%s2 + $0x74] sm:$0xf]
        %v2929 = vld [vmem:[%s2 + $0x78] sm:$0xf]
        %v2930 = vld [vmem:[%s2 + $0x7c] sm:$0xf]
        %v2931 = vld [vmem:[%s2 + $0x80] sm:$0x3]
        %s2932 = scalar_lea.vmem %s2, 132
        %v2933 = vld [vmem:[%s2932] sm:$0xf]
        %v2934 = vld [vmem:[%s2932 + $0x4] sm:$0xf]
        %v2935 = vld [vmem:[%s2932 + $0x8] sm:$0xf]
        %v2936 = vld [vmem:[%s2932 + $0xc] sm:$0xf]
        %v2937 = vld [vmem:[%s2932 + $0x10] sm:$0xf]
        %v2938 = vld [vmem:[%s2932 + $0x14] sm:$0xf]
        %v2939 = vld [vmem:[%s2932 + $0x18] sm:$0xf]
        %v2940 = vld [vmem:[%s2932 + $0x1c] sm:$0xf]
        %v2941 = vld [vmem:[%s2932 + $0x20] sm:$0xf]
        %v2942 = vld [vmem:[%s2932 + $0x24] sm:$0xf]
        %v2943 = vld [vmem:[%s2932 + $0x28] sm:$0xf]
        %v2944 = vld [vmem:[%s2932 + $0x2c] sm:$0xf]
        %v2945 = vld [vmem:[%s2932 + $0x30] sm:$0xf]
        %v2946 = vld [vmem:[%s2932 + $0x34] sm:$0xf]
        %v2947 = vld [vmem:[%s2932 + $0x38] sm:$0xf]
        %v2948 = vld [vmem:[%s2932 + $0x3c] sm:$0xf]
        %v2949 = vld [vmem:[%s2932 + $0x40] sm:$0xf]
        %v2950 = vld [vmem:[%s2932 + $0x44] sm:$0xf]
        %v2951 = vld [vmem:[%s2932 + $0x48] sm:$0xf]
        %v2952 = vld [vmem:[%s2932 + $0x4c] sm:$0xf]
        %v2953 = vld [vmem:[%s2932 + $0x50] sm:$0xf]
        %v2954 = vld [vmem:[%s2932 + $0x54] sm:$0xf]
        %v2955 = vld [vmem:[%s2932 + $0x58] sm:$0xf]
        %v2956 = vld [vmem:[%s2932 + $0x5c] sm:$0xf]
        %v2957 = vld [vmem:[%s2932 + $0x60] sm:$0xf]
        %v2958 = vld [vmem:[%s2932 + $0x64] sm:$0xf]
        %v2959 = vld [vmem:[%s2932 + $0x68] sm:$0xf]
        %v2960 = vld [vmem:[%s2932 + $0x6c] sm:$0xf]
        %v2961 = vld [vmem:[%s2932 + $0x70] sm:$0xf]
        %v2962 = vld [vmem:[%s2932 + $0x74] sm:$0xf]
        %v2963 = vld [vmem:[%s2932 + $0x78] sm:$0xf]
        %v2964 = vld [vmem:[%s2932 + $0x7c] sm:$0xf]
        %v2965 = vld [vmem:[%s2932 + $0x80] sm:$0x3]
        %v3062 = vunpack.c.l.b16 %v2799
        %v3063 = vunpack.c.h.b16 %v2799
        %v3064 = vunpack.c.l.b16 %v2800
        %v3065 = vunpack.c.l.b16 %v2801
        %v3066 = vunpack.c.h.b16 %v2801
        %v3067 = vunpack.c.l.b16 %v2802
        %v3068 = vunpack.c.l.b16 %v2803
        %v3069 = vunpack.c.h.b16 %v2803
        %v3070 = vunpack.c.l.b16 %v2804
        %v3071 = vunpack.c.l.b16 %v2805
        %v3072 = vunpack.c.h.b16 %v2805
        %v3073 = vunpack.c.l.b16 %v2806
        %v3074 = vunpack.c.l.b16 %v2807
        %v3075 = vunpack.c.h.b16 %v2807
        %v3076 = vunpack.c.l.b16 %v2808
        %v3077 = vunpack.c.l.b16 %v2809
        %v3078 = vunpack.c.h.b16 %v2809
        %v3079 = vunpack.c.l.b16 %v2810
        %v3080 = vunpack.c.l.b16 %v2811
        %v3081 = vunpack.c.h.b16 %v2811
        %v3082 = vunpack.c.l.b16 %v2812
        %v3083 = vunpack.c.l.b16 %v2813
        %v3084 = vunpack.c.h.b16 %v2813
        %v3085 = vunpack.c.l.b16 %v2814
        %v3086 = vunpack.c.l.b16 %v2815
        %v3087 = vunpack.c.h.b16 %v2815
        %v3088 = vunpack.c.l.b16 %v2816
        %v3089 = vunpack.c.l.b16 %v2817
        %v3090 = vunpack.c.h.b16 %v2817
        %v3091 = vunpack.c.l.b16 %v2818
        %v3092 = vunpack.c.l.b16 %v2819
        %v3093 = vunpack.c.h.b16 %v2819
        %v3094 = vunpack.c.l.b16 %v2820
        %v3095 = vunpack.c.l.b16 %v2821
        %v3096 = vunpack.c.h.b16 %v2821
        %v3097 = vunpack.c.l.b16 %v2822
        %v3098 = vunpack.c.l.b16 %v2823
        %v3099 = vunpack.c.h.b16 %v2823
        %v3100 = vunpack.c.l.b16 %v2824
        %v3101 = vunpack.c.l.b16 %v2825
        %v3102 = vunpack.c.h.b16 %v2825
        %v3103 = vunpack.c.l.b16 %v2826
        %v3104 = vunpack.c.l.b16 %v2827
        %v3105 = vunpack.c.h.b16 %v2827
        %v3106 = vunpack.c.l.b16 %v2828
        %v3107 = vunpack.c.l.b16 %v2829
        %v3108 = vunpack.c.h.b16 %v2829
        %v3109 = vunpack.c.l.b16 %v2830
        %v3110 = vunpack.c.l.b16 %v2831
        %v3111 = vunpack.c.h.b16 %v2831
        %v3112 = vunpack.c.l.b16 %v2832
        %v3113 = vunpack.c.l.b16 %v2833
        %v3114 = vunpack.c.h.b16 %v2833
        %v3115 = vunpack.c.l.b16 %v2834
        %v3116 = vunpack.c.l.b16 %v2835
        %v3117 = vunpack.c.h.b16 %v2835
        %v3118 = vunpack.c.l.b16 %v2836
        %v3119 = vunpack.c.l.b16 %v2837
        %v3120 = vunpack.c.h.b16 %v2837
        %v3121 = vunpack.c.l.b16 %v2838
        %v3122 = vunpack.c.l.b16 %v2839
        %v3123 = vunpack.c.h.b16 %v2839
        %v3124 = vunpack.c.l.b16 %v2840
        %v3125 = vunpack.c.l.b16 %v2841
        %v3126 = vunpack.c.h.b16 %v2841
        %v3127 = vunpack.c.l.b16 %v2842
        %v3128 = vunpack.c.l.b16 %v2843
        %v3129 = vunpack.c.h.b16 %v2843
        %v3130 = vunpack.c.l.b16 %v2844
        %v3131 = vunpack.c.l.b16 %v2845
        %v3132 = vunpack.c.h.b16 %v2845
        %v3133 = vunpack.c.l.b16 %v2846
        %v3134 = vunpack.c.l.b16 %v2847
        %v3135 = vunpack.c.h.b16 %v2847
        %v3136 = vunpack.c.l.b16 %v2848
        %v3137 = vunpack.c.l.b16 %v2849
        %v3138 = vunpack.c.h.b16 %v2849
        %v3139 = vunpack.c.l.b16 %v2850
        %v3140 = vunpack.c.l.b16 %v2851
        %v3141 = vunpack.c.h.b16 %v2851
        %v3142 = vunpack.c.l.b16 %v2852
        %v3143 = vunpack.c.l.b16 %v2853
        %v3144 = vunpack.c.h.b16 %v2853
        %v3145 = vunpack.c.l.b16 %v2854
        %v3146 = vunpack.c.l.b16 %v2855
        %v3147 = vunpack.c.h.b16 %v2855
        %v3148 = vunpack.c.l.b16 %v2856
        %v3149 = vunpack.c.l.b16 %v2857
        %v3150 = vunpack.c.h.b16 %v2857
        %v3151 = vunpack.c.l.b16 %v2858
        %v3152 = vunpack.c.l.b16 %v2859
        %v3153 = vunpack.c.h.b16 %v2859
        %v3154 = vunpack.c.l.b16 %v2860
        %v3155 = vunpack.c.l.b16 %v2861
        %v3156 = vunpack.c.h.b16 %v2861
        %v3157 = vunpack.c.l.b16 %v2862
        %v3158 = vunpack.c.l.b16 %v2863
        %v3159 = vunpack.c.h.b16 %v2863
        %v3160 = vunpack.c.l.b16 %v2864
        %v3161 = vunpack.c.l.b16 %v2865
        %v3162 = vunpack.c.h.b16 %v2865
        %v3163 = vunpack.c.l.b16 %v2866
        %v3164 = vunpack.c.l.b16 %v2867
        %v3165 = vunpack.c.h.b16 %v2867
        %v3166 = vunpack.c.l.b16 %v2868
        %v3167 = vunpack.c.l.b16 %v2869
        %v3168 = vunpack.c.h.b16 %v2869
        %v3169 = vunpack.c.l.b16 %v2870
        %v3170 = vunpack.c.l.b16 %v2871
        %v3171 = vunpack.c.h.b16 %v2871
        %v3172 = vunpack.c.l.b16 %v2872
        %v3173 = vunpack.c.l.b16 %v2873
        %v3174 = vunpack.c.h.b16 %v2873
        %v3175 = vunpack.c.l.b16 %v2874
        %v3176 = vunpack.c.l.b16 %v2875
        %v3177 = vunpack.c.h.b16 %v2875
        %v3178 = vunpack.c.l.b16 %v2876
        %v3179 = vunpack.c.l.b16 %v2877
        %v3180 = vunpack.c.h.b16 %v2877
        %v3181 = vunpack.c.l.b16 %v2878
        %v3182 = vunpack.c.l.b16 %v2879
        %v3183 = vunpack.c.h.b16 %v2879
        %v3184 = vunpack.c.l.b16 %v2880
        %v3185 = vunpack.c.l.b16 %v2881
        %v3186 = vunpack.c.h.b16 %v2881
        %v3187 = vunpack.c.l.b16 %v2882
        %v3188 = vunpack.c.l.b16 %v2883
        %v3189 = vunpack.c.h.b16 %v2883
        %v3190 = vunpack.c.l.b16 %v2884
        %v3191 = vunpack.c.l.b16 %v2885
        %v3192 = vunpack.c.h.b16 %v2885
        %v3193 = vunpack.c.l.b16 %v2886
        %v3194 = vunpack.c.l.b16 %v2887
        %v3195 = vunpack.c.h.b16 %v2887
        %v3196 = vunpack.c.l.b16 %v2888
        %v3197 = vunpack.c.l.b16 %v2889
        %v3198 = vunpack.c.h.b16 %v2889
        %v3199 = vunpack.c.l.b16 %v2890
        %v3200 = vunpack.c.l.b16 %v2891
        %v3201 = vunpack.c.h.b16 %v2891
        %v3202 = vunpack.c.l.b16 %v2892
        %v3203 = vunpack.c.l.b16 %v2893
        %v3204 = vunpack.c.h.b16 %v2893
        %v3205 = vunpack.c.l.b16 %v2894
        %v3206 = vpack.c.b16 %v3065, %v3062
        %v3207 = vpack.c.b16 %v3066, %v3063
        %v3208 = vpack.c.b16 %v3067, %v3064
        %v3209 = vpack.c.b16 %v3071, %v3068
        %v3210 = vpack.c.b16 %v3072, %v3069
        %v3211 = vpack.c.b16 %v3073, %v3070
        %v3212 = vpack.c.b16 %v3077, %v3074
        %v3213 = vpack.c.b16 %v3078, %v3075
        %v3214 = vpack.c.b16 %v3079, %v3076
        %v3215 = vpack.c.b16 %v3083, %v3080
        %v3216 = vpack.c.b16 %v3084, %v3081
        %v3217 = vpack.c.b16 %v3085, %v3082
        %v3218 = vpack.c.b16 %v3089, %v3086
        %v3219 = vpack.c.b16 %v3090, %v3087
        %v3220 = vpack.c.b16 %v3091, %v3088
        %v3221 = vpack.c.b16 %v3095, %v3092
        %v3222 = vpack.c.b16 %v3096, %v3093
        %v3223 = vpack.c.b16 %v3097, %v3094
        %v3224 = vpack.c.b16 %v3101, %v3098
        %v3225 = vpack.c.b16 %v3102, %v3099
        %v3226 = vpack.c.b16 %v3103, %v3100
        %v3227 = vpack.c.b16 %v3107, %v3104
        %v3228 = vpack.c.b16 %v3108, %v3105
        %v3229 = vpack.c.b16 %v3109, %v3106
        %v3230 = vpack.c.b16 %v3113, %v3110
        %v3231 = vpack.c.b16 %v3114, %v3111
        %v3232 = vpack.c.b16 %v3115, %v3112
        %v3233 = vpack.c.b16 %v3119, %v3116
        %v3234 = vpack.c.b16 %v3120, %v3117
        %v3235 = vpack.c.b16 %v3121, %v3118
        %v3236 = vpack.c.b16 %v3125, %v3122
        %v3237 = vpack.c.b16 %v3126, %v3123
        %v3238 = vpack.c.b16 %v3127, %v3124
        %v3239 = vpack.c.b16 %v3131, %v3128
        %v3240 = vpack.c.b16 %v3132, %v3129
        %v3241 = vpack.c.b16 %v3133, %v3130
        %v3242 = vpack.c.b16 %v3137, %v3134
        %v3243 = vpack.c.b16 %v3138, %v3135
        %v3244 = vpack.c.b16 %v3139, %v3136
        %v3245 = vpack.c.b16 %v3143, %v3140
        %v3246 = vpack.c.b16 %v3144, %v3141
        %v3247 = vpack.c.b16 %v3145, %v3142
        %v3248 = vpack.c.b16 %v3149, %v3146
        %v3249 = vpack.c.b16 %v3150, %v3147
        %v3250 = vpack.c.b16 %v3151, %v3148
        %v3251 = vpack.c.b16 %v3155, %v3152
        %v3252 = vpack.c.b16 %v3156, %v3153
        %v3253 = vpack.c.b16 %v3157, %v3154
        %v3254 = vpack.c.b16 %v3161, %v3158
        %v3255 = vpack.c.b16 %v3162, %v3159
        %v3256 = vpack.c.b16 %v3163, %v3160
        %v3257 = vpack.c.b16 %v3167, %v3164
        %v3258 = vpack.c.b16 %v3168, %v3165
        %v3259 = vpack.c.b16 %v3169, %v3166
        %v3260 = vpack.c.b16 %v3173, %v3170
        %v3261 = vpack.c.b16 %v3174, %v3171
        %v3262 = vpack.c.b16 %v3175, %v3172
        %v3263 = vpack.c.b16 %v3179, %v3176
        %v3264 = vpack.c.b16 %v3180, %v3177
        %v3265 = vpack.c.b16 %v3181, %v3178
        %v3266 = vpack.c.b16 %v3185, %v3182
        %v3267 = vpack.c.b16 %v3186, %v3183
        %v3268 = vpack.c.b16 %v3187, %v3184
        %v3269 = vpack.c.b16 %v3191, %v3188
        %v3270 = vpack.c.b16 %v3192, %v3189
        %v3271 = vpack.c.b16 %v3193, %v3190
        %v3272 = vpack.c.b16 %v3197, %v3194
        %v3273 = vpack.c.b16 %v3198, %v3195
        %v3274 = vpack.c.b16 %v3199, %v3196
        %v3275 = vpack.c.b16 %v3203, %v3200
        %v3276 = vpack.c.b16 %v3204, %v3201
        %v3277 = vpack.c.b16 %v3205, %v3202
        %v3359 = vunpack.c.l.b16 %v2933
        %v3360 = vunpack.c.l.b16 %v2934
        %v3361 = vunpack.c.l.b16 %v2935
        %v3362 = vunpack.c.l.b16 %v2936
        %v3363 = vunpack.c.l.b16 %v2937
        %v3364 = vunpack.c.l.b16 %v2938
        %v3365 = vunpack.c.l.b16 %v2939
        %v3366 = vunpack.c.l.b16 %v2940
        %v3367 = vunpack.c.l.b16 %v2941
        %v3368 = vunpack.c.l.b16 %v2942
        %v3369 = vunpack.c.l.b16 %v2943
        %v3370 = vunpack.c.l.b16 %v2944
        %v3371 = vunpack.c.l.b16 %v2945
        %v3372 = vunpack.c.l.b16 %v2946
        %v3373 = vunpack.c.l.b16 %v2947
        %v3374 = vunpack.c.l.b16 %v2948
        %v3375 = vunpack.c.l.b16 %v2949
        %v3376 = vunpack.c.l.b16 %v2950
        %v3377 = vunpack.c.l.b16 %v2951
        %v3378 = vunpack.c.l.b16 %v2952
        %v3379 = vunpack.c.l.b16 %v2953
        %v3380 = vunpack.c.l.b16 %v2954
        %v3381 = vunpack.c.l.b16 %v2955
        %v3382 = vunpack.c.l.b16 %v2956
        %v3383 = vunpack.c.l.b16 %v2957
        %v3384 = vunpack.c.l.b16 %v2958
        %v3385 = vunpack.c.l.b16 %v2959
        %v3386 = vunpack.c.l.b16 %v2960
        %v3387 = vunpack.c.l.b16 %v2961
        %v3388 = vunpack.c.l.b16 %v2962
        %v3389 = vunpack.c.l.b16 %v2963
        %v3390 = vunpack.c.l.b16 %v2964
        %v3391 = vunpack.c.l.b16 %v2965
        %v3392 = vpack.c.b16 %v3360, %v3359
        %v3393 = vpack.c.b16 %v3362, %v3361
        %v3394 = vpack.c.b16 %v3364, %v3363
        %v3395 = vpack.c.b16 %v3366, %v3365
        %v3396 = vpack.c.b16 %v3368, %v3367
        %v3397 = vpack.c.b16 %v3370, %v3369
        %v3398 = vpack.c.b16 %v3372, %v3371
        %v3399 = vpack.c.b16 %v3374, %v3373
        %v3400 = vpack.c.b16 %v3376, %v3375
        %v3401 = vpack.c.b16 %v3378, %v3377
        %v3402 = vpack.c.b16 %v3380, %v3379
        %v3403 = vpack.c.b16 %v3382, %v3381
        %v3404 = vpack.c.b16 %v3384, %v3383
        %v3405 = vpack.c.b16 %v3386, %v3385
        %v3406 = vpack.c.b16 %v3388, %v3387
        %v3407 = vpack.c.b16 %v3390, %v3389
        %v3408 = vpack.c.b16 %v3391, %v3391
        %vm3425 = vcmask 31744
        %v3427 = vsel %vm3425, %v3208, 0
        %v3430 = vsel %vm3425, %v3211, 0
        %v3433 = vsel %vm3425, %v3214, 0
        %v3436 = vsel %vm3425, %v3217, 0
        %v3439 = vsel %vm3425, %v3220, 0
        %v3442 = vsel %vm3425, %v3223, 0
        %v3445 = vsel %vm3425, %v3226, 0
        %v3448 = vsel %vm3425, %v3229, 0
        %v3451 = vsel %vm3425, %v3232, 0
        %v3454 = vsel %vm3425, %v3235, 0
        %v3457 = vsel %vm3425, %v3238, 0
        %v3460 = vsel %vm3425, %v3241, 0
        %v3463 = vsel %vm3425, %v3244, 0
        %v3466 = vsel %vm3425, %v3247, 0
        %v3469 = vsel %vm3425, %v3250, 0
        %v3472 = vsel %vm3425, %v3253, 0
        %v3475 = vsel %vm3425, %v3256, 0
        %v3478 = vsel %vm3425, %v3259, 0
        %v3481 = vsel %vm3425, %v3262, 0
        %v3484 = vsel %vm3425, %v3265, 0
        %v3487 = vsel %vm3425, %v3268, 0
        %v3490 = vsel %vm3425, %v3271, 0
        %v3493 = vsel %vm3425, %v3274, 0
        %v3496 = vsel %vm3425, %v3277, 0
        %vm3498 = vcmask 1041408
        %v3500 = vsel %vm3498, %v3408, 0
        %3502 = vmatpush.bf16.msra.mxu0 %v3399
        %3503 = vmatpush.bf16.msra.mxu0 %v3398
        %3504 = vmatpush.bf16.msra.mxu0 %v3397
        %3505 = vmatpush.bf16.msra.mxu0 %v3396
        %3506 = vmatpush.bf16.msra.mxu0 %v3395
        %3507 = vmatpush.bf16.msra.mxu0 %v3394
        %3508 = vmatpush.bf16.msra.mxu0 %v3393
        %3509 = vmatpush.bf16.msra.mxu0 %v3392
        %3510 = vmatmul.bf16.gmra.mxu0 %v3206
        %v3511 = vpop.f32.mrf.mxu0
        %v3512 = vadd.f32 0.0, %v3511
        %v3513 = vpop.f32.mrf.mxu0
        %v3514 = vadd.f32 0.0, %v3513
        %3515 = vmatmul.bf16.gmra.mxu0 %v3209
        %v3516 = vpop.f32.mrf.mxu0
        %v3517 = vadd.f32 0.0, %v3516
        %v3518 = vpop.f32.mrf.mxu0
        %v3519 = vadd.f32 0.0, %v3518
        %3520 = vmatmul.bf16.gmra.mxu0 %v3212
        %v3521 = vpop.f32.mrf.mxu0
        %v3522 = vadd.f32 0.0, %v3521
        %v3523 = vpop.f32.mrf.mxu0
        %v3524 = vadd.f32 0.0, %v3523
        %3525 = vmatmul.bf16.gmra.mxu0 %v3215
        %v3526 = vpop.f32.mrf.mxu0
        %v3527 = vadd.f32 0.0, %v3526
        %v3528 = vpop.f32.mrf.mxu0
        %v3529 = vadd.f32 0.0, %v3528
        %3530 = vmatmul.bf16.gmra.mxu0 %v3218
        %v3531 = vpop.f32.mrf.mxu0
        %v3532 = vadd.f32 0.0, %v3531
        %v3533 = vpop.f32.mrf.mxu0
        %v3534 = vadd.f32 0.0, %v3533
        %3535 = vmatmul.bf16.gmra.mxu0 %v3221
        %v3536 = vpop.f32.mrf.mxu0
        %v3537 = vadd.f32 0.0, %v3536
        %v3538 = vpop.f32.mrf.mxu0
        %v3539 = vadd.f32 0.0, %v3538
        %3540 = vmatmul.bf16.gmra.mxu0 %v3224
        %v3541 = vpop.f32.mrf.mxu0
        %v3542 = vadd.f32 0.0, %v3541
        %v3543 = vpop.f32.mrf.mxu0
        %v3544 = vadd.f32 0.0, %v3543
        %3545 = vmatmul.bf16.gmra.mxu0 %v3227
        %v3546 = vpop.f32.mrf.mxu0
        %v3547 = vadd.f32 0.0, %v3546
        %v3548 = vpop.f32.mrf.mxu0
        %v3549 = vadd.f32 0.0, %v3548
        %3550 = vmatmul.bf16.gmra.mxu0 %v3230
        %v3551 = vpop.f32.mrf.mxu0
        %v3552 = vadd.f32 0.0, %v3551
        %v3553 = vpop.f32.mrf.mxu0
        %v3554 = vadd.f32 0.0, %v3553
        %3555 = vmatmul.bf16.gmra.mxu0 %v3233
        %v3556 = vpop.f32.mrf.mxu0
        %v3557 = vadd.f32 0.0, %v3556
        %v3558 = vpop.f32.mrf.mxu0
        %v3559 = vadd.f32 0.0, %v3558
        %3560 = vmatmul.bf16.gmra.mxu0 %v3236
        %v3561 = vpop.f32.mrf.mxu0
        %v3562 = vadd.f32 0.0, %v3561
        %v3563 = vpop.f32.mrf.mxu0
        %v3564 = vadd.f32 0.0, %v3563
        %3565 = vmatmul.bf16.gmra.mxu0 %v3239
        %v3566 = vpop.f32.mrf.mxu0
        %v3567 = vadd.f32 0.0, %v3566
        %v3568 = vpop.f32.mrf.mxu0
        %v3569 = vadd.f32 0.0, %v3568
        %3570 = vmatmul.bf16.gmra.mxu0 %v3242
        %v3571 = vpop.f32.mrf.mxu0
        %v3572 = vadd.f32 0.0, %v3571
        %v3573 = vpop.f32.mrf.mxu0
        %v3574 = vadd.f32 0.0, %v3573
        %3575 = vmatmul.bf16.gmra.mxu0 %v3245
        %v3576 = vpop.f32.mrf.mxu0
        %v3577 = vadd.f32 0.0, %v3576
        %v3578 = vpop.f32.mrf.mxu0
        %v3579 = vadd.f32 0.0, %v3578
        %3580 = vmatmul.bf16.gmra.mxu0 %v3248
        %v3581 = vpop.f32.mrf.mxu0
        %v3582 = vadd.f32 0.0, %v3581
        %v3583 = vpop.f32.mrf.mxu0
        %v3584 = vadd.f32 0.0, %v3583
        %3585 = vmatmul.bf16.gmra.mxu0 %v3251
        %v3586 = vpop.f32.mrf.mxu0
        %v3587 = vadd.f32 0.0, %v3586
        %v3588 = vpop.f32.mrf.mxu0
        %v3589 = vadd.f32 0.0, %v3588
        %3590 = vmatmul.bf16.gmra.mxu0 %v3254
        %v3591 = vpop.f32.mrf.mxu0
        %v3592 = vadd.f32 0.0, %v3591
        %v3593 = vpop.f32.mrf.mxu0
        %v3594 = vadd.f32 0.0, %v3593
        %3595 = vmatmul.bf16.gmra.mxu0 %v3257
        %v3596 = vpop.f32.mrf.mxu0
        %v3597 = vadd.f32 0.0, %v3596
        %v3598 = vpop.f32.mrf.mxu0
        %v3599 = vadd.f32 0.0, %v3598
        %3600 = vmatmul.bf16.gmra.mxu0 %v3260
        %v3601 = vpop.f32.mrf.mxu0
        %v3602 = vadd.f32 0.0, %v3601
        %v3603 = vpop.f32.mrf.mxu0
        %v3604 = vadd.f32 0.0, %v3603
        %3605 = vmatmul.bf16.gmra.mxu0 %v3263
        %v3606 = vpop.f32.mrf.mxu0
        %v3607 = vadd.f32 0.0, %v3606
        %v3608 = vpop.f32.mrf.mxu0
        %v3609 = vadd.f32 0.0, %v3608
        %3610 = vmatmul.bf16.gmra.mxu0 %v3266
        %v3611 = vpop.f32.mrf.mxu0
        %v3612 = vadd.f32 0.0, %v3611
        %v3613 = vpop.f32.mrf.mxu0
        %v3614 = vadd.f32 0.0, %v3613
        %3615 = vmatmul.bf16.gmra.mxu0 %v3269
        %v3616 = vpop.f32.mrf.mxu0
        %v3617 = vadd.f32 0.0, %v3616
        %v3618 = vpop.f32.mrf.mxu0
        %v3619 = vadd.f32 0.0, %v3618
        %3620 = vmatmul.bf16.gmra.mxu0 %v3272
        %v3621 = vpop.f32.mrf.mxu0
        %v3622 = vadd.f32 0.0, %v3621
        %v3623 = vpop.f32.mrf.mxu0
        %v3624 = vadd.f32 0.0, %v3623
        %3625 = vmatmul.bf16.gmra.mxu0 %v3275
        %v3626 = vpop.f32.mrf.mxu0
        %v3627 = vadd.f32 0.0, %v3626
        %v3628 = vpop.f32.mrf.mxu0
        %v3629 = vadd.f32 0.0, %v3628
        %3630 = vdwg.mxu0
        %3631 = vmatpush.bf16.msra.mxu0 %v3407
        %3632 = vmatpush.bf16.msra.mxu0 %v3406
        %3633 = vmatpush.bf16.msra.mxu0 %v3405
        %3634 = vmatpush.bf16.msra.mxu0 %v3404
        %3635 = vmatpush.bf16.msra.mxu0 %v3403
        %3636 = vmatpush.bf16.msra.mxu0 %v3402
        %3637 = vmatpush.bf16.msra.mxu0 %v3401
        %3638 = vmatpush.bf16.msra.mxu0 %v3400
        %3639 = vmatmul.bf16.gmra.mxu0 %v3207
        %v3640 = vpop.f32.mrf.mxu0
        %v3641 = vadd.f32 %v3512, %v3640
        %v3642 = vpop.f32.mrf.mxu0
        %v3643 = vadd.f32 %v3514, %v3642
        %3644 = vmatmul.bf16.gmra.mxu0 %v3210
        %v3645 = vpop.f32.mrf.mxu0
        %v3646 = vadd.f32 %v3517, %v3645
        %v3647 = vpop.f32.mrf.mxu0
        %v3648 = vadd.f32 %v3519, %v3647
        %3649 = vmatmul.bf16.gmra.mxu0 %v3213
        %v3650 = vpop.f32.mrf.mxu0
        %v3651 = vadd.f32 %v3522, %v3650
        %v3652 = vpop.f32.mrf.mxu0
        %v3653 = vadd.f32 %v3524, %v3652
        %3654 = vmatmul.bf16.gmra.mxu0 %v3216
        %v3655 = vpop.f32.mrf.mxu0
        %v3656 = vadd.f32 %v3527, %v3655
        %v3657 = vpop.f32.mrf.mxu0
        %v3658 = vadd.f32 %v3529, %v3657
        %3659 = vmatmul.bf16.gmra.mxu0 %v3219
        %v3660 = vpop.f32.mrf.mxu0
        %v3661 = vadd.f32 %v3532, %v3660
        %v3662 = vpop.f32.mrf.mxu0
        %v3663 = vadd.f32 %v3534, %v3662
        %3664 = vmatmul.bf16.gmra.mxu0 %v3222
        %v3665 = vpop.f32.mrf.mxu0
        %v3666 = vadd.f32 %v3537, %v3665
        %v3667 = vpop.f32.mrf.mxu0
        %v3668 = vadd.f32 %v3539, %v3667
        %3669 = vmatmul.bf16.gmra.mxu0 %v3225
        %v3670 = vpop.f32.mrf.mxu0
        %v3671 = vadd.f32 %v3542, %v3670
        %v3672 = vpop.f32.mrf.mxu0
        %v3673 = vadd.f32 %v3544, %v3672
        %3674 = vmatmul.bf16.gmra.mxu0 %v3228
        %v3675 = vpop.f32.mrf.mxu0
        %v3676 = vadd.f32 %v3547, %v3675
        %v3677 = vpop.f32.mrf.mxu0
        %v3678 = vadd.f32 %v3549, %v3677
        %3679 = vmatmul.bf16.gmra.mxu0 %v3231
        %v3680 = vpop.f32.mrf.mxu0
        %v3681 = vadd.f32 %v3552, %v3680
        %v3682 = vpop.f32.mrf.mxu0
        %v3683 = vadd.f32 %v3554, %v3682
        %3684 = vmatmul.bf16.gmra.mxu0 %v3234
        %v3685 = vpop.f32.mrf.mxu0
        %v3686 = vadd.f32 %v3557, %v3685
        %v3687 = vpop.f32.mrf.mxu0
        %v3688 = vadd.f32 %v3559, %v3687
        %3689 = vmatmul.bf16.gmra.mxu0 %v3237
        %v3690 = vpop.f32.mrf.mxu0
        %v3691 = vadd.f32 %v3562, %v3690
        %v3692 = vpop.f32.mrf.mxu0
        %v3693 = vadd.f32 %v3564, %v3692
        %3694 = vmatmul.bf16.gmra.mxu0 %v3240
        %v3695 = vpop.f32.mrf.mxu0
        %v3696 = vadd.f32 %v3567, %v3695
        %v3697 = vpop.f32.mrf.mxu0
        %v3698 = vadd.f32 %v3569, %v3697
        %3699 = vmatmul.bf16.gmra.mxu0 %v3243
        %v3700 = vpop.f32.mrf.mxu0
        %v3701 = vadd.f32 %v3572, %v3700
        %v3702 = vpop.f32.mrf.mxu0
        %v3703 = vadd.f32 %v3574, %v3702
        %3704 = vmatmul.bf16.gmra.mxu0 %v3246
        %v3705 = vpop.f32.mrf.mxu0
        %v3706 = vadd.f32 %v3577, %v3705
        %v3707 = vpop.f32.mrf.mxu0
        %v3708 = vadd.f32 %v3579, %v3707
        %3709 = vmatmul.bf16.gmra.mxu0 %v3249
        %v3710 = vpop.f32.mrf.mxu0
        %v3711 = vadd.f32 %v3582, %v3710
        %v3712 = vpop.f32.mrf.mxu0
        %v3713 = vadd.f32 %v3584, %v3712
        %3714 = vmatmul.bf16.gmra.mxu0 %v3252
        %v3715 = vpop.f32.mrf.mxu0
        %v3716 = vadd.f32 %v3587, %v3715
        %v3717 = vpop.f32.mrf.mxu0
        %v3718 = vadd.f32 %v3589, %v3717
        %3719 = vmatmul.bf16.gmra.mxu0 %v3255
        %v3720 = vpop.f32.mrf.mxu0
        %v3721 = vadd.f32 %v3592, %v3720
        %v3722 = vpop.f32.mrf.mxu0
        %v3723 = vadd.f32 %v3594, %v3722
        %3724 = vmatmul.bf16.gmra.mxu0 %v3258
        %v3725 = vpop.f32.mrf.mxu0
        %v3726 = vadd.f32 %v3597, %v3725
        %v3727 = vpop.f32.mrf.mxu0
        %v3728 = vadd.f32 %v3599, %v3727
        %3729 = vmatmul.bf16.gmra.mxu0 %v3261
        %v3730 = vpop.f32.mrf.mxu0
        %v3731 = vadd.f32 %v3602, %v3730
        %v3732 = vpop.f32.mrf.mxu0
        %v3733 = vadd.f32 %v3604, %v3732
        %3734 = vmatmul.bf16.gmra.mxu0 %v3264
        %v3735 = vpop.f32.mrf.mxu0
        %v3736 = vadd.f32 %v3607, %v3735
        %v3737 = vpop.f32.mrf.mxu0
        %v3738 = vadd.f32 %v3609, %v3737
        %3739 = vmatmul.bf16.gmra.mxu0 %v3267
        %v3740 = vpop.f32.mrf.mxu0
        %v3741 = vadd.f32 %v3612, %v3740
        %v3742 = vpop.f32.mrf.mxu0
        %v3743 = vadd.f32 %v3614, %v3742
        %3744 = vmatmul.bf16.gmra.mxu0 %v3270
        %v3745 = vpop.f32.mrf.mxu0
        %v3746 = vadd.f32 %v3617, %v3745
        %v3747 = vpop.f32.mrf.mxu0
        %v3748 = vadd.f32 %v3619, %v3747
        %3749 = vmatmul.bf16.gmra.mxu0 %v3273
        %v3750 = vpop.f32.mrf.mxu0
        %v3751 = vadd.f32 %v3622, %v3750
        %v3752 = vpop.f32.mrf.mxu0
        %v3753 = vadd.f32 %v3624, %v3752
        %3754 = vmatmul.bf16.gmra.mxu0 %v3276
        %v3755 = vpop.f32.mrf.mxu0
        %v3756 = vadd.f32 %v3627, %v3755
        %v3757 = vpop.f32.mrf.mxu0
        %v3758 = vadd.f32 %v3629, %v3757
        %3759 = vdwg.mxu0
        %3760 = vmatpush.bf16.msra.mxu0 0
        %3761 = vmatpush.bf16.msra.mxu0 0
        %3762 = vmatpush.bf16.msra.mxu0 0
        %3763 = vmatpush.bf16.msra.mxu0 0
        %3764 = vmatpush.bf16.msra.mxu0 0
        %3765 = vmatpush.bf16.msra.mxu0 0
        %3766 = vmatpush.bf16.msra.mxu0 0
        %3767 = vmatpush.bf16.msra.mxu0 %v3500
        %3768 = vmatmul.bf16.gmra.mxu0 %v3427
        %v3769 = vpop.f32.mrf.mxu0
        %v3770 = vadd.f32 %v3641, %v3769
        %v3771 = vpop.f32.mrf.mxu0
        %v3772 = vadd.f32 %v3643, %v3771
        %3773 = vmatmul.bf16.gmra.mxu0 %v3430
        %v3774 = vpop.f32.mrf.mxu0
        %v3775 = vadd.f32 %v3646, %v3774
        %v3776 = vpop.f32.mrf.mxu0
        %v3777 = vadd.f32 %v3648, %v3776
        %3778 = vmatmul.bf16.gmra.mxu0 %v3433
        %v3779 = vpop.f32.mrf.mxu0
        %v3780 = vadd.f32 %v3651, %v3779
        %v3781 = vpop.f32.mrf.mxu0
        %v3782 = vadd.f32 %v3653, %v3781
        %3783 = vmatmul.bf16.gmra.mxu0 %v3436
        %v3784 = vpop.f32.mrf.mxu0
        %v3785 = vadd.f32 %v3656, %v3784
        %v3786 = vpop.f32.mrf.mxu0
        %v3787 = vadd.f32 %v3658, %v3786
        %3788 = vmatmul.bf16.gmra.mxu0 %v3439
        %v3789 = vpop.f32.mrf.mxu0
        %v3790 = vadd.f32 %v3661, %v3789
        %v3791 = vpop.f32.mrf.mxu0
        %v3792 = vadd.f32 %v3663, %v3791
        %3793 = vmatmul.bf16.gmra.mxu0 %v3442
        %v3794 = vpop.f32.mrf.mxu0
        %v3795 = vadd.f32 %v3666, %v3794
        %v3796 = vpop.f32.mrf.mxu0
        %v3797 = vadd.f32 %v3668, %v3796
        %3798 = vmatmul.bf16.gmra.mxu0 %v3445
        %v3799 = vpop.f32.mrf.mxu0
        %v3800 = vadd.f32 %v3671, %v3799
        %v3801 = vpop.f32.mrf.mxu0
        %v3802 = vadd.f32 %v3673, %v3801
        %3803 = vmatmul.bf16.gmra.mxu0 %v3448
        %v3804 = vpop.f32.mrf.mxu0
        %v3805 = vadd.f32 %v3676, %v3804
        %v3806 = vpop.f32.mrf.mxu0
        %v3807 = vadd.f32 %v3678, %v3806
        %3808 = vmatmul.bf16.gmra.mxu0 %v3451
        %v3809 = vpop.f32.mrf.mxu0
        %v3810 = vadd.f32 %v3681, %v3809
        %v3811 = vpop.f32.mrf.mxu0
        %v3812 = vadd.f32 %v3683, %v3811
        %3813 = vmatmul.bf16.gmra.mxu0 %v3454
        %v3814 = vpop.f32.mrf.mxu0
        %v3815 = vadd.f32 %v3686, %v3814
        %v3816 = vpop.f32.mrf.mxu0
        %v3817 = vadd.f32 %v3688, %v3816
        %3818 = vmatmul.bf16.gmra.mxu0 %v3457
        %v3819 = vpop.f32.mrf.mxu0
        %v3820 = vadd.f32 %v3691, %v3819
        %v3821 = vpop.f32.mrf.mxu0
        %v3822 = vadd.f32 %v3693, %v3821
        %3823 = vmatmul.bf16.gmra.mxu0 %v3460
        %v3824 = vpop.f32.mrf.mxu0
        %v3825 = vadd.f32 %v3696, %v3824
        %v3826 = vpop.f32.mrf.mxu0
        %v3827 = vadd.f32 %v3698, %v3826
        %3828 = vmatmul.bf16.gmra.mxu0 %v3463
        %v3829 = vpop.f32.mrf.mxu0
        %v3830 = vadd.f32 %v3701, %v3829
        %v3831 = vpop.f32.mrf.mxu0
        %v3832 = vadd.f32 %v3703, %v3831
        %3833 = vmatmul.bf16.gmra.mxu0 %v3466
        %v3834 = vpop.f32.mrf.mxu0
        %v3835 = vadd.f32 %v3706, %v3834
        %v3836 = vpop.f32.mrf.mxu0
        %v3837 = vadd.f32 %v3708, %v3836
        %3838 = vmatmul.bf16.gmra.mxu0 %v3469
        %v3839 = vpop.f32.mrf.mxu0
        %v3840 = vadd.f32 %v3711, %v3839
        %v3841 = vpop.f32.mrf.mxu0
        %v3842 = vadd.f32 %v3713, %v3841
        %3843 = vmatmul.bf16.gmra.mxu0 %v3472
        %v3844 = vpop.f32.mrf.mxu0
        %v3845 = vadd.f32 %v3716, %v3844
        %v3846 = vpop.f32.mrf.mxu0
        %v3847 = vadd.f32 %v3718, %v3846
        %3848 = vmatmul.bf16.gmra.mxu0 %v3475
        %v3849 = vpop.f32.mrf.mxu0
        %v3850 = vadd.f32 %v3721, %v3849
        %v3851 = vpop.f32.mrf.mxu0
        %v3852 = vadd.f32 %v3723, %v3851
        %3853 = vmatmul.bf16.gmra.mxu0 %v3478
        %v3854 = vpop.f32.mrf.mxu0
        %v3855 = vadd.f32 %v3726, %v3854
        %v3856 = vpop.f32.mrf.mxu0
        %v3857 = vadd.f32 %v3728, %v3856
        %3858 = vmatmul.bf16.gmra.mxu0 %v3481
        %v3859 = vpop.f32.mrf.mxu0
        %v3860 = vadd.f32 %v3731, %v3859
        %v3861 = vpop.f32.mrf.mxu0
        %v3862 = vadd.f32 %v3733, %v3861
        %3863 = vmatmul.bf16.gmra.mxu0 %v3484
        %v3864 = vpop.f32.mrf.mxu0
        %v3865 = vadd.f32 %v3736, %v3864
        %v3866 = vpop.f32.mrf.mxu0
        %v3867 = vadd.f32 %v3738, %v3866
        %3868 = vmatmul.bf16.gmra.mxu0 %v3487
        %v3869 = vpop.f32.mrf.mxu0
        %v3870 = vadd.f32 %v3741, %v3869
        %v3871 = vpop.f32.mrf.mxu0
        %v3872 = vadd.f32 %v3743, %v3871
        %3873 = vmatmul.bf16.gmra.mxu0 %v3490
        %v3874 = vpop.f32.mrf.mxu0
        %v3875 = vadd.f32 %v3746, %v3874
        %v3876 = vpop.f32.mrf.mxu0
        %v3877 = vadd.f32 %v3748, %v3876
        %3878 = vmatmul.bf16.gmra.mxu0 %v3493
        %v3879 = vpop.f32.mrf.mxu0
        %v3880 = vadd.f32 %v3751, %v3879
        %v3881 = vpop.f32.mrf.mxu0
        %v3882 = vadd.f32 %v3753, %v3881
        %3883 = vmatmul.bf16.gmra.mxu0 %v3496
        %v3884 = vpop.f32.mrf.mxu0
        %v3885 = vadd.f32 %v3756, %v3884
        %v3886 = vpop.f32.mrf.mxu0
        %v3887 = vadd.f32 %v3758, %v3886
        %3888 = vdwg.mxu0
        %v3893 = vunpack.c.l.b16 %v2795
        %v3894 = vunpack.c.h.b16 %v2795
        %v3895 = vunpack.c.l.b16 %v2796
        %v3896 = vunpack.c.l.b16 %v2797
        %v3897 = vunpack.c.h.b16 %v2797
        %v3898 = vunpack.c.l.b16 %v2798
        %v3899 = vpack.c.b16 %v3896, %v3893
        %v3900 = vpack.c.b16 %v3897, %v3894
        %v3901 = vpack.c.b16 %v3898, %v3895
        %v3937 = vunpack.c.l.b16 %v2899
        %v3938 = vunpack.c.l.b16 %v2900
        %v3939 = vunpack.c.l.b16 %v2901
        %v3940 = vunpack.c.l.b16 %v2902
        %v3941 = vunpack.c.l.b16 %v2903
        %v3942 = vunpack.c.l.b16 %v2904
        %v3943 = vunpack.c.l.b16 %v2905
        %v3944 = vunpack.c.l.b16 %v2906
        %v3945 = vunpack.c.l.b16 %v2907
        %v3946 = vunpack.c.l.b16 %v2908
        %v3947 = vunpack.c.l.b16 %v2909
        %v3948 = vunpack.c.l.b16 %v2910
        %v3949 = vunpack.c.l.b16 %v2911
        %v3950 = vunpack.c.l.b16 %v2912
        %v3951 = vunpack.c.l.b16 %v2913
        %v3952 = vunpack.c.l.b16 %v2914
        %v3953 = vunpack.c.l.b16 %v2915
        %v3954 = vunpack.c.l.b16 %v2916
        %v3955 = vunpack.c.l.b16 %v2917
        %v3956 = vunpack.c.l.b16 %v2918
        %v3957 = vunpack.c.l.b16 %v2919
        %v3958 = vunpack.c.l.b16 %v2920
        %v3959 = vunpack.c.l.b16 %v2921
        %v3960 = vunpack.c.l.b16 %v2922
        %v3961 = vunpack.c.l.b16 %v2923
        %v3962 = vunpack.c.l.b16 %v2924
        %v3963 = vunpack.c.l.b16 %v2925
        %v3964 = vunpack.c.l.b16 %v2926
        %v3965 = vunpack.c.l.b16 %v2927
        %v3966 = vunpack.c.l.b16 %v2928
        %v3967 = vunpack.c.l.b16 %v2929
        %v3968 = vunpack.c.l.b16 %v2930
        %v3969 = vunpack.c.l.b16 %v2931
        %v3970 = vpack.c.b16 %v3938, %v3937
        %v3971 = vpack.c.b16 %v3940, %v3939
        %v3972 = vpack.c.b16 %v3942, %v3941
        %v3973 = vpack.c.b16 %v3944, %v3943
        %v3974 = vpack.c.b16 %v3946, %v3945
        %v3975 = vpack.c.b16 %v3948, %v3947
        %v3976 = vpack.c.b16 %v3950, %v3949
        %v3977 = vpack.c.b16 %v3952, %v3951
        %v3978 = vpack.c.b16 %v3954, %v3953
        %v3979 = vpack.c.b16 %v3956, %v3955
        %v3980 = vpack.c.b16 %v3958, %v3957
        %v3981 = vpack.c.b16 %v3960, %v3959
        %v3982 = vpack.c.b16 %v3962, %v3961
        %v3983 = vpack.c.b16 %v3964, %v3963
        %v3984 = vpack.c.b16 %v3966, %v3965
        %v3985 = vpack.c.b16 %v3968, %v3967
        %v3986 = vpack.c.b16 %v3969, %v3969
        %v4004 = vsel %vm3425, %v3901, 0
        %v4007 = vsel %vm3498, %v3986, 0
        %4009 = vmatpush.bf16.msra.mxu0 %v3977
        %4010 = vmatpush.bf16.msra.mxu0 %v3976
        %4011 = vmatpush.bf16.msra.mxu0 %v3975
        %4012 = vmatpush.bf16.msra.mxu0 %v3974
        %4013 = vmatpush.bf16.msra.mxu0 %v3973
        %4014 = vmatpush.bf16.msra.mxu0 %v3972
        %4015 = vmatpush.bf16.msra.mxu0 %v3971
        %4016 = vmatpush.bf16.msra.mxu0 %v3970
        %4017 = vmatmul.bf16.gmra.mxu0 %v3899
        %v4018 = vpop.f32.mrf.mxu0
        %v4019 = vadd.f32 %v3770, %v4018
        %v4020 = vpop.f32.mrf.mxu0
        %v4021 = vadd.f32 %v3772, %v4020
        %4022 = vmatmul.bf16.gmra.mxu0 %v3206
        %v4023 = vpop.f32.mrf.mxu0
        %v4024 = vadd.f32 %v3775, %v4023
        %v4025 = vpop.f32.mrf.mxu0
        %v4026 = vadd.f32 %v3777, %v4025
        %4027 = vmatmul.bf16.gmra.mxu0 %v3209
        %v4028 = vpop.f32.mrf.mxu0
        %v4029 = vadd.f32 %v3780, %v4028
        %v4030 = vpop.f32.mrf.mxu0
        %v4031 = vadd.f32 %v3782, %v4030
        %4032 = vmatmul.bf16.gmra.mxu0 %v3212
        %v4033 = vpop.f32.mrf.mxu0
        %v4034 = vadd.f32 %v3785, %v4033
        %v4035 = vpop.f32.mrf.mxu0
        %v4036 = vadd.f32 %v3787, %v4035
        %4037 = vmatmul.bf16.gmra.mxu0 %v3215
        %v4038 = vpop.f32.mrf.mxu0
        %v4039 = vadd.f32 %v3790, %v4038
        %v4040 = vpop.f32.mrf.mxu0
        %v4041 = vadd.f32 %v3792, %v4040
        %4042 = vmatmul.bf16.gmra.mxu0 %v3218
        %v4043 = vpop.f32.mrf.mxu0
        %v4044 = vadd.f32 %v3795, %v4043
        %v4045 = vpop.f32.mrf.mxu0
        %v4046 = vadd.f32 %v3797, %v4045
        %4047 = vmatmul.bf16.gmra.mxu0 %v3221
        %v4048 = vpop.f32.mrf.mxu0
        %v4049 = vadd.f32 %v3800, %v4048
        %v4050 = vpop.f32.mrf.mxu0
        %v4051 = vadd.f32 %v3802, %v4050
        %4052 = vmatmul.bf16.gmra.mxu0 %v3224
        %v4053 = vpop.f32.mrf.mxu0
        %v4054 = vadd.f32 %v3805, %v4053
        %v4055 = vpop.f32.mrf.mxu0
        %v4056 = vadd.f32 %v3807, %v4055
        %4057 = vmatmul.bf16.gmra.mxu0 %v3227
        %v4058 = vpop.f32.mrf.mxu0
        %v4059 = vadd.f32 %v3810, %v4058
        %v4060 = vpop.f32.mrf.mxu0
        %v4061 = vadd.f32 %v3812, %v4060
        %4062 = vmatmul.bf16.gmra.mxu0 %v3230
        %v4063 = vpop.f32.mrf.mxu0
        %v4064 = vadd.f32 %v3815, %v4063
        %v4065 = vpop.f32.mrf.mxu0
        %v4066 = vadd.f32 %v3817, %v4065
        %4067 = vmatmul.bf16.gmra.mxu0 %v3233
        %v4068 = vpop.f32.mrf.mxu0
        %v4069 = vadd.f32 %v3820, %v4068
        %v4070 = vpop.f32.mrf.mxu0
        %v4071 = vadd.f32 %v3822, %v4070
        %4072 = vmatmul.bf16.gmra.mxu0 %v3236
        %v4073 = vpop.f32.mrf.mxu0
        %v4074 = vadd.f32 %v3825, %v4073
        %v4075 = vpop.f32.mrf.mxu0
        %v4076 = vadd.f32 %v3827, %v4075
        %4077 = vmatmul.bf16.gmra.mxu0 %v3239
        %v4078 = vpop.f32.mrf.mxu0
        %v4079 = vadd.f32 %v3830, %v4078
        %v4080 = vpop.f32.mrf.mxu0
        %v4081 = vadd.f32 %v3832, %v4080
        %4082 = vmatmul.bf16.gmra.mxu0 %v3242
        %v4083 = vpop.f32.mrf.mxu0
        %v4084 = vadd.f32 %v3835, %v4083
        %v4085 = vpop.f32.mrf.mxu0
        %v4086 = vadd.f32 %v3837, %v4085
        %4087 = vmatmul.bf16.gmra.mxu0 %v3245
        %v4088 = vpop.f32.mrf.mxu0
        %v4089 = vadd.f32 %v3840, %v4088
        %v4090 = vpop.f32.mrf.mxu0
        %v4091 = vadd.f32 %v3842, %v4090
        %4092 = vmatmul.bf16.gmra.mxu0 %v3248
        %v4093 = vpop.f32.mrf.mxu0
        %v4094 = vadd.f32 %v3845, %v4093
        %v4095 = vpop.f32.mrf.mxu0
        %v4096 = vadd.f32 %v3847, %v4095
        %4097 = vmatmul.bf16.gmra.mxu0 %v3251
        %v4098 = vpop.f32.mrf.mxu0
        %v4099 = vadd.f32 %v3850, %v4098
        %v4100 = vpop.f32.mrf.mxu0
        %v4101 = vadd.f32 %v3852, %v4100
        %4102 = vmatmul.bf16.gmra.mxu0 %v3254
        %v4103 = vpop.f32.mrf.mxu0
        %v4104 = vadd.f32 %v3855, %v4103
        %v4105 = vpop.f32.mrf.mxu0
        %v4106 = vadd.f32 %v3857, %v4105
        %4107 = vmatmul.bf16.gmra.mxu0 %v3257
        %v4108 = vpop.f32.mrf.mxu0
        %v4109 = vadd.f32 %v3860, %v4108
        %v4110 = vpop.f32.mrf.mxu0
        %v4111 = vadd.f32 %v3862, %v4110
        %4112 = vmatmul.bf16.gmra.mxu0 %v3260
        %v4113 = vpop.f32.mrf.mxu0
        %v4114 = vadd.f32 %v3865, %v4113
        %v4115 = vpop.f32.mrf.mxu0
        %v4116 = vadd.f32 %v3867, %v4115
        %4117 = vmatmul.bf16.gmra.mxu0 %v3263
        %v4118 = vpop.f32.mrf.mxu0
        %v4119 = vadd.f32 %v3870, %v4118
        %v4120 = vpop.f32.mrf.mxu0
        %v4121 = vadd.f32 %v3872, %v4120
        %4122 = vmatmul.bf16.gmra.mxu0 %v3266
        %v4123 = vpop.f32.mrf.mxu0
        %v4124 = vadd.f32 %v3875, %v4123
        %v4125 = vpop.f32.mrf.mxu0
        %v4126 = vadd.f32 %v3877, %v4125
        %4127 = vmatmul.bf16.gmra.mxu0 %v3269
        %v4128 = vpop.f32.mrf.mxu0
        %v4129 = vadd.f32 %v3880, %v4128
        %v4130 = vpop.f32.mrf.mxu0
        %v4131 = vadd.f32 %v3882, %v4130
        %4132 = vmatmul.bf16.gmra.mxu0 %v3272
        %v4133 = vpop.f32.mrf.mxu0
        %v4134 = vadd.f32 %v3885, %v4133
        %v4135 = vpop.f32.mrf.mxu0
        %v4136 = vadd.f32 %v3887, %v4135
        %4137 = vdwg.mxu0
        %4138 = vmatpush.bf16.msra.mxu0 %v3985
        %4139 = vmatpush.bf16.msra.mxu0 %v3984
        %4140 = vmatpush.bf16.msra.mxu0 %v3983
        %4141 = vmatpush.bf16.msra.mxu0 %v3982
        %4142 = vmatpush.bf16.msra.mxu0 %v3981
        %4143 = vmatpush.bf16.msra.mxu0 %v3980
        %4144 = vmatpush.bf16.msra.mxu0 %v3979
        %4145 = vmatpush.bf16.msra.mxu0 %v3978
        %4146 = vmatmul.bf16.gmra.mxu0 %v3900
        %v4147 = vpop.f32.mrf.mxu0
        %v4148 = vadd.f32 %v4019, %v4147
        %v4149 = vpop.f32.mrf.mxu0
        %v4150 = vadd.f32 %v4021, %v4149
        %4151 = vmatmul.bf16.gmra.mxu0 %v3207
        %v4152 = vpop.f32.mrf.mxu0
        %v4153 = vadd.f32 %v4024, %v4152
        %v4154 = vpop.f32.mrf.mxu0
        %v4155 = vadd.f32 %v4026, %v4154
        %4156 = vmatmul.bf16.gmra.mxu0 %v3210
        %v4157 = vpop.f32.mrf.mxu0
        %v4158 = vadd.f32 %v4029, %v4157
        %v4159 = vpop.f32.mrf.mxu0
        %v4160 = vadd.f32 %v4031, %v4159
        %4161 = vmatmul.bf16.gmra.mxu0 %v3213
        %v4162 = vpop.f32.mrf.mxu0
        %v4163 = vadd.f32 %v4034, %v4162
        %v4164 = vpop.f32.mrf.mxu0
        %v4165 = vadd.f32 %v4036, %v4164
        %4166 = vmatmul.bf16.gmra.mxu0 %v3216
        %v4167 = vpop.f32.mrf.mxu0
        %v4168 = vadd.f32 %v4039, %v4167
        %v4169 = vpop.f32.mrf.mxu0
        %v4170 = vadd.f32 %v4041, %v4169
        %4171 = vmatmul.bf16.gmra.mxu0 %v3219
        %v4172 = vpop.f32.mrf.mxu0
        %v4173 = vadd.f32 %v4044, %v4172
        %v4174 = vpop.f32.mrf.mxu0
        %v4175 = vadd.f32 %v4046, %v4174
        %4176 = vmatmul.bf16.gmra.mxu0 %v3222
        %v4177 = vpop.f32.mrf.mxu0
        %v4178 = vadd.f32 %v4049, %v4177
        %v4179 = vpop.f32.mrf.mxu0
        %v4180 = vadd.f32 %v4051, %v4179
        %4181 = vmatmul.bf16.gmra.mxu0 %v3225
        %v4182 = vpop.f32.mrf.mxu0
        %v4183 = vadd.f32 %v4054, %v4182
        %v4184 = vpop.f32.mrf.mxu0
        %v4185 = vadd.f32 %v4056, %v4184
        %4186 = vmatmul.bf16.gmra.mxu0 %v3228
        %v4187 = vpop.f32.mrf.mxu0
        %v4188 = vadd.f32 %v4059, %v4187
        %v4189 = vpop.f32.mrf.mxu0
        %v4190 = vadd.f32 %v4061, %v4189
        %4191 = vmatmul.bf16.gmra.mxu0 %v3231
        %v4192 = vpop.f32.mrf.mxu0
        %v4193 = vadd.f32 %v4064, %v4192
        %v4194 = vpop.f32.mrf.mxu0
        %v4195 = vadd.f32 %v4066, %v4194
        %4196 = vmatmul.bf16.gmra.mxu0 %v3234
        %v4197 = vpop.f32.mrf.mxu0
        %v4198 = vadd.f32 %v4069, %v4197
        %v4199 = vpop.f32.mrf.mxu0
        %v4200 = vadd.f32 %v4071, %v4199
        %4201 = vmatmul.bf16.gmra.mxu0 %v3237
        %v4202 = vpop.f32.mrf.mxu0
        %v4203 = vadd.f32 %v4074, %v4202
        %v4204 = vpop.f32.mrf.mxu0
        %v4205 = vadd.f32 %v4076, %v4204
        %4206 = vmatmul.bf16.gmra.mxu0 %v3240
        %v4207 = vpop.f32.mrf.mxu0
        %v4208 = vadd.f32 %v4079, %v4207
        %v4209 = vpop.f32.mrf.mxu0
        %v4210 = vadd.f32 %v4081, %v4209
        %4211 = vmatmul.bf16.gmra.mxu0 %v3243
        %v4212 = vpop.f32.mrf.mxu0
        %v4213 = vadd.f32 %v4084, %v4212
        %v4214 = vpop.f32.mrf.mxu0
        %v4215 = vadd.f32 %v4086, %v4214
        %4216 = vmatmul.bf16.gmra.mxu0 %v3246
        %v4217 = vpop.f32.mrf.mxu0
        %v4218 = vadd.f32 %v4089, %v4217
        %v4219 = vpop.f32.mrf.mxu0
        %v4220 = vadd.f32 %v4091, %v4219
        %4221 = vmatmul.bf16.gmra.mxu0 %v3249
        %v4222 = vpop.f32.mrf.mxu0
        %v4223 = vadd.f32 %v4094, %v4222
        %v4224 = vpop.f32.mrf.mxu0
        %v4225 = vadd.f32 %v4096, %v4224
        %4226 = vmatmul.bf16.gmra.mxu0 %v3252
        %v4227 = vpop.f32.mrf.mxu0
        %v4228 = vadd.f32 %v4099, %v4227
        %v4229 = vpop.f32.mrf.mxu0
        %v4230 = vadd.f32 %v4101, %v4229
        %4231 = vmatmul.bf16.gmra.mxu0 %v3255
        %v4232 = vpop.f32.mrf.mxu0
        %v4233 = vadd.f32 %v4104, %v4232
        %v4234 = vpop.f32.mrf.mxu0
        %v4235 = vadd.f32 %v4106, %v4234
        %4236 = vmatmul.bf16.gmra.mxu0 %v3258
        %v4237 = vpop.f32.mrf.mxu0
        %v4238 = vadd.f32 %v4109, %v4237
        %v4239 = vpop.f32.mrf.mxu0
        %v4240 = vadd.f32 %v4111, %v4239
        %4241 = vmatmul.bf16.gmra.mxu0 %v3261
        %v4242 = vpop.f32.mrf.mxu0
        %v4243 = vadd.f32 %v4114, %v4242
        %v4244 = vpop.f32.mrf.mxu0
        %v4245 = vadd.f32 %v4116, %v4244
        %4246 = vmatmul.bf16.gmra.mxu0 %v3264
        %v4247 = vpop.f32.mrf.mxu0
        %v4248 = vadd.f32 %v4119, %v4247
        %v4249 = vpop.f32.mrf.mxu0
        %v4250 = vadd.f32 %v4121, %v4249
        %4251 = vmatmul.bf16.gmra.mxu0 %v3267
        %v4252 = vpop.f32.mrf.mxu0
        %v4253 = vadd.f32 %v4124, %v4252
        %v4254 = vpop.f32.mrf.mxu0
        %v4255 = vadd.f32 %v4126, %v4254
        %4256 = vmatmul.bf16.gmra.mxu0 %v3270
        %v4257 = vpop.f32.mrf.mxu0
        %v4258 = vadd.f32 %v4129, %v4257
        %v4259 = vpop.f32.mrf.mxu0
        %v4260 = vadd.f32 %v4131, %v4259
        %4261 = vmatmul.bf16.gmra.mxu0 %v3273
        %v4262 = vpop.f32.mrf.mxu0
        %v4263 = vadd.f32 %v4134, %v4262
        %v4264 = vpop.f32.mrf.mxu0
        %v4265 = vadd.f32 %v4136, %v4264
        %4266 = vdwg.mxu0
        %4267 = vmatpush.bf16.msra.mxu0 0
        %4268 = vmatpush.bf16.msra.mxu0 0
        %4269 = vmatpush.bf16.msra.mxu0 0
        %4270 = vmatpush.bf16.msra.mxu0 0
        %4271 = vmatpush.bf16.msra.mxu0 0
        %4272 = vmatpush.bf16.msra.mxu0 0
        %4273 = vmatpush.bf16.msra.mxu0 0
        %4274 = vmatpush.bf16.msra.mxu0 %v4007
        %4275 = vmatmul.bf16.gmra.mxu0 %v4004
        %v4276 = vpop.f32.mrf.mxu0
        %v4277 = vadd.f32 %v4148, %v4276
        %v4278 = vpop.f32.mrf.mxu0
        %v4279 = vadd.f32 %v4150, %v4278
        %4280 = vmatmul.bf16.gmra.mxu0 %v3427
        %v4281 = vpop.f32.mrf.mxu0
        %v4282 = vadd.f32 %v4153, %v4281
        %v4283 = vpop.f32.mrf.mxu0
        %v4284 = vadd.f32 %v4155, %v4283
        %4285 = vmatmul.bf16.gmra.mxu0 %v3430
        %v4286 = vpop.f32.mrf.mxu0
        %v4287 = vadd.f32 %v4158, %v4286
        %v4288 = vpop.f32.mrf.mxu0
        %v4289 = vadd.f32 %v4160, %v4288
        %4290 = vmatmul.bf16.gmra.mxu0 %v3433
        %v4291 = vpop.f32.mrf.mxu0
        %v4292 = vadd.f32 %v4163, %v4291
        %v4293 = vpop.f32.mrf.mxu0
        %v4294 = vadd.f32 %v4165, %v4293
        %4295 = vmatmul.bf16.gmra.mxu0 %v3436
        %v4296 = vpop.f32.mrf.mxu0
        %v4297 = vadd.f32 %v4168, %v4296
        %v4298 = vpop.f32.mrf.mxu0
        %v4299 = vadd.f32 %v4170, %v4298
        %4300 = vmatmul.bf16.gmra.mxu0 %v3439
        %v4301 = vpop.f32.mrf.mxu0
        %v4302 = vadd.f32 %v4173, %v4301
        %v4303 = vpop.f32.mrf.mxu0
        %v4304 = vadd.f32 %v4175, %v4303
        %4305 = vmatmul.bf16.gmra.mxu0 %v3442
        %v4306 = vpop.f32.mrf.mxu0
        %v4307 = vadd.f32 %v4178, %v4306
        %v4308 = vpop.f32.mrf.mxu0
        %v4309 = vadd.f32 %v4180, %v4308
        %4310 = vmatmul.bf16.gmra.mxu0 %v3445
        %v4311 = vpop.f32.mrf.mxu0
        %v4312 = vadd.f32 %v4183, %v4311
        %v4313 = vpop.f32.mrf.mxu0
        %v4314 = vadd.f32 %v4185, %v4313
        %4315 = vmatmul.bf16.gmra.mxu0 %v3448
        %v4316 = vpop.f32.mrf.mxu0
        %v4317 = vadd.f32 %v4188, %v4316
        %v4318 = vpop.f32.mrf.mxu0
        %v4319 = vadd.f32 %v4190, %v4318
        %4320 = vmatmul.bf16.gmra.mxu0 %v3451
        %v4321 = vpop.f32.mrf.mxu0
        %v4322 = vadd.f32 %v4193, %v4321
        %v4323 = vpop.f32.mrf.mxu0
        %v4324 = vadd.f32 %v4195, %v4323
        %4325 = vmatmul.bf16.gmra.mxu0 %v3454
        %v4326 = vpop.f32.mrf.mxu0
        %v4327 = vadd.f32 %v4198, %v4326
        %v4328 = vpop.f32.mrf.mxu0
        %v4329 = vadd.f32 %v4200, %v4328
        %4330 = vmatmul.bf16.gmra.mxu0 %v3457
        %v4331 = vpop.f32.mrf.mxu0
        %v4332 = vadd.f32 %v4203, %v4331
        %v4333 = vpop.f32.mrf.mxu0
        %v4334 = vadd.f32 %v4205, %v4333
        %4335 = vmatmul.bf16.gmra.mxu0 %v3460
        %v4336 = vpop.f32.mrf.mxu0
        %v4337 = vadd.f32 %v4208, %v4336
        %v4338 = vpop.f32.mrf.mxu0
        %v4339 = vadd.f32 %v4210, %v4338
        %4340 = vmatmul.bf16.gmra.mxu0 %v3463
        %v4341 = vpop.f32.mrf.mxu0
        %v4342 = vadd.f32 %v4213, %v4341
        %v4343 = vpop.f32.mrf.mxu0
        %v4344 = vadd.f32 %v4215, %v4343
        %4345 = vmatmul.bf16.gmra.mxu0 %v3466
        %v4346 = vpop.f32.mrf.mxu0
        %v4347 = vadd.f32 %v4218, %v4346
        %v4348 = vpop.f32.mrf.mxu0
        %v4349 = vadd.f32 %v4220, %v4348
        %4350 = vmatmul.bf16.gmra.mxu0 %v3469
        %v4351 = vpop.f32.mrf.mxu0
        %v4352 = vadd.f32 %v4223, %v4351
        %v4353 = vpop.f32.mrf.mxu0
        %v4354 = vadd.f32 %v4225, %v4353
        %4355 = vmatmul.bf16.gmra.mxu0 %v3472
        %v4356 = vpop.f32.mrf.mxu0
        %v4357 = vadd.f32 %v4228, %v4356
        %v4358 = vpop.f32.mrf.mxu0
        %v4359 = vadd.f32 %v4230, %v4358
        %4360 = vmatmul.bf16.gmra.mxu0 %v3475
        %v4361 = vpop.f32.mrf.mxu0
        %v4362 = vadd.f32 %v4233, %v4361
        %v4363 = vpop.f32.mrf.mxu0
        %v4364 = vadd.f32 %v4235, %v4363
        %4365 = vmatmul.bf16.gmra.mxu0 %v3478
        %v4366 = vpop.f32.mrf.mxu0
        %v4367 = vadd.f32 %v4238, %v4366
        %v4368 = vpop.f32.mrf.mxu0
        %v4369 = vadd.f32 %v4240, %v4368
        %4370 = vmatmul.bf16.gmra.mxu0 %v3481
        %v4371 = vpop.f32.mrf.mxu0
        %v4372 = vadd.f32 %v4243, %v4371
        %v4373 = vpop.f32.mrf.mxu0
        %v4374 = vadd.f32 %v4245, %v4373
        %4375 = vmatmul.bf16.gmra.mxu0 %v3484
        %v4376 = vpop.f32.mrf.mxu0
        %v4377 = vadd.f32 %v4248, %v4376
        %v4378 = vpop.f32.mrf.mxu0
        %v4379 = vadd.f32 %v4250, %v4378
        %4380 = vmatmul.bf16.gmra.mxu0 %v3487
        %v4381 = vpop.f32.mrf.mxu0
        %v4382 = vadd.f32 %v4253, %v4381
        %v4383 = vpop.f32.mrf.mxu0
        %v4384 = vadd.f32 %v4255, %v4383
        %4385 = vmatmul.bf16.gmra.mxu0 %v3490
        %v4386 = vpop.f32.mrf.mxu0
        %v4387 = vadd.f32 %v4258, %v4386
        %v4388 = vpop.f32.mrf.mxu0
        %v4389 = vadd.f32 %v4260, %v4388
        %4390 = vmatmul.bf16.gmra.mxu0 %v3493
        %v4391 = vpop.f32.mrf.mxu0
        %v4392 = vadd.f32 %v4263, %v4391
        %v4393 = vpop.f32.mrf.mxu0
        %v4394 = vadd.f32 %v4265, %v4393
        %4395 = vdwg.mxu0
        %s4396 = scalar_lea.vmem %s2, 264
        %v4397 = vld [vmem:[%s4396] sm:$0xf]
        %v4398 = vld [vmem:[%s4396 + $0x4] sm:$0xf]
        %v4399 = vld [vmem:[%s4396 + $0x8] sm:$0xf]
        %v4400 = vld [vmem:[%s4396 + $0xc] sm:$0xf]
        %v4401 = vld [vmem:[%s4396 + $0x10] sm:$0xf]
        %v4402 = vld [vmem:[%s4396 + $0x14] sm:$0xf]
        %v4403 = vld [vmem:[%s4396 + $0x18] sm:$0xf]
        %v4404 = vld [vmem:[%s4396 + $0x1c] sm:$0xf]
        %v4405 = vld [vmem:[%s4396 + $0x20] sm:$0xf]
        %v4406 = vld [vmem:[%s4396 + $0x24] sm:$0xf]
        %v4407 = vld [vmem:[%s4396 + $0x28] sm:$0xf]
        %v4408 = vld [vmem:[%s4396 + $0x2c] sm:$0xf]
        %v4409 = vld [vmem:[%s4396 + $0x30] sm:$0xf]
        %v4410 = vld [vmem:[%s4396 + $0x34] sm:$0xf]
        %v4411 = vld [vmem:[%s4396 + $0x38] sm:$0xf]
        %v4412 = vld [vmem:[%s4396 + $0x3c] sm:$0xf]
        %v4413 = vld [vmem:[%s4396 + $0x40] sm:$0xf]
        %v4414 = vld [vmem:[%s4396 + $0x44] sm:$0xf]
        %v4415 = vld [vmem:[%s4396 + $0x48] sm:$0xf]
        %v4416 = vld [vmem:[%s4396 + $0x4c] sm:$0xf]
        %v4417 = vld [vmem:[%s4396 + $0x50] sm:$0xf]
        %v4418 = vld [vmem:[%s4396 + $0x54] sm:$0xf]
        %v4419 = vld [vmem:[%s4396 + $0x58] sm:$0xf]
        %v4420 = vld [vmem:[%s4396 + $0x5c] sm:$0xf]
        %v4421 = vld [vmem:[%s4396 + $0x60] sm:$0xf]
        %v4422 = vld [vmem:[%s4396 + $0x64] sm:$0xf]
        %v4423 = vld [vmem:[%s4396 + $0x68] sm:$0xf]
        %v4424 = vld [vmem:[%s4396 + $0x6c] sm:$0xf]
        %v4425 = vld [vmem:[%s4396 + $0x70] sm:$0xf]
        %v4426 = vld [vmem:[%s4396 + $0x74] sm:$0xf]
        %v4427 = vld [vmem:[%s4396 + $0x78] sm:$0xf]
        %v4428 = vld [vmem:[%s4396 + $0x7c] sm:$0xf]
        %v4429 = vld [vmem:[%s4396 + $0x80] sm:$0x3]
        %v4434 = vunpack.c.l.b16 %v2895
        %v4435 = vunpack.c.h.b16 %v2895
        %v4436 = vunpack.c.l.b16 %v2896
        %v4437 = vunpack.c.l.b16 %v2897
        %v4438 = vunpack.c.h.b16 %v2897
        %v4439 = vunpack.c.l.b16 %v2898
        %v4440 = vpack.c.b16 %v4437, %v4434
        %v4441 = vpack.c.b16 %v4438, %v4435
        %v4442 = vpack.c.b16 %v4439, %v4436
        %v4478 = vunpack.c.l.b16 %v4397
        %v4479 = vunpack.c.l.b16 %v4398
        %v4480 = vunpack.c.l.b16 %v4399
        %v4481 = vunpack.c.l.b16 %v4400
        %v4482 = vunpack.c.l.b16 %v4401
        %v4483 = vunpack.c.l.b16 %v4402
        %v4484 = vunpack.c.l.b16 %v4403
        %v4485 = vunpack.c.l.b16 %v4404
        %v4486 = vunpack.c.l.b16 %v4405
        %v4487 = vunpack.c.l.b16 %v4406
        %v4488 = vunpack.c.l.b16 %v4407
        %v4489 = vunpack.c.l.b16 %v4408
        %v4490 = vunpack.c.l.b16 %v4409
        %v4491 = vunpack.c.l.b16 %v4410
        %v4492 = vunpack.c.l.b16 %v4411
        %v4493 = vunpack.c.l.b16 %v4412
        %v4494 = vunpack.c.l.b16 %v4413
        %v4495 = vunpack.c.l.b16 %v4414
        %v4496 = vunpack.c.l.b16 %v4415
        %v4497 = vunpack.c.l.b16 %v4416
        %v4498 = vunpack.c.l.b16 %v4417
        %v4499 = vunpack.c.l.b16 %v4418
        %v4500 = vunpack.c.l.b16 %v4419
        %v4501 = vunpack.c.l.b16 %v4420
        %v4502 = vunpack.c.l.b16 %v4421
        %v4503 = vunpack.c.l.b16 %v4422
        %v4504 = vunpack.c.l.b16 %v4423
        %v4505 = vunpack.c.l.b16 %v4424
        %v4506 = vunpack.c.l.b16 %v4425
        %v4507 = vunpack.c.l.b16 %v4426
        %v4508 = vunpack.c.l.b16 %v4427
        %v4509 = vunpack.c.l.b16 %v4428
        %v4510 = vunpack.c.l.b16 %v4429
        %v4511 = vpack.c.b16 %v4479, %v4478
        %v4512 = vpack.c.b16 %v4481, %v4480
        %v4513 = vpack.c.b16 %v4483, %v4482
        %v4514 = vpack.c.b16 %v4485, %v4484
        %v4515 = vpack.c.b16 %v4487, %v4486
        %v4516 = vpack.c.b16 %v4489, %v4488
        %v4517 = vpack.c.b16 %v4491, %v4490
        %v4518 = vpack.c.b16 %v4493, %v4492
        %v4519 = vpack.c.b16 %v4495, %v4494
        %v4520 = vpack.c.b16 %v4497, %v4496
        %v4521 = vpack.c.b16 %v4499, %v4498
        %v4522 = vpack.c.b16 %v4501, %v4500
        %v4523 = vpack.c.b16 %v4503, %v4502
        %v4524 = vpack.c.b16 %v4505, %v4504
        %v4525 = vpack.c.b16 %v4507, %v4506
        %v4526 = vpack.c.b16 %v4509, %v4508
        %v4527 = vpack.c.b16 %v4510, %v4510
        %v4545 = vsel %vm3425, %v4442, 0
        %v4548 = vsel %vm3498, %v4527, 0
        %4550 = vmatpush.bf16.msra.mxu0 %v4518
        %4551 = vmatpush.bf16.msra.mxu0 %v4517
        %4552 = vmatpush.bf16.msra.mxu0 %v4516
        %4553 = vmatpush.bf16.msra.mxu0 %v4515
        %4554 = vmatpush.bf16.msra.mxu0 %v4514
        %4555 = vmatpush.bf16.msra.mxu0 %v4513
        %4556 = vmatpush.bf16.msra.mxu0 %v4512
        %4557 = vmatpush.bf16.msra.mxu0 %v4511
        %4558 = vmatmul.bf16.gmra.mxu0 %v3209
        %v4559 = vpop.f32.mrf.mxu0
        %v4560 = vadd.f32 0.0, %v4559
        %v4561 = vpop.f32.mrf.mxu0
        %v4562 = vadd.f32 0.0, %v4561
        %4563 = vmatmul.bf16.gmra.mxu0 %v3212
        %v4564 = vpop.f32.mrf.mxu0
        %v4565 = vadd.f32 0.0, %v4564
        %v4566 = vpop.f32.mrf.mxu0
        %v4567 = vadd.f32 0.0, %v4566
        %4568 = vmatmul.bf16.gmra.mxu0 %v3215
        %v4569 = vpop.f32.mrf.mxu0
        %v4570 = vadd.f32 0.0, %v4569
        %v4571 = vpop.f32.mrf.mxu0
        %v4572 = vadd.f32 0.0, %v4571
        %4573 = vmatmul.bf16.gmra.mxu0 %v3218
        %v4574 = vpop.f32.mrf.mxu0
        %v4575 = vadd.f32 0.0, %v4574
        %v4576 = vpop.f32.mrf.mxu0
        %v4577 = vadd.f32 0.0, %v4576
        %4578 = vmatmul.bf16.gmra.mxu0 %v3221
        %v4579 = vpop.f32.mrf.mxu0
        %v4580 = vadd.f32 0.0, %v4579
        %v4581 = vpop.f32.mrf.mxu0
        %v4582 = vadd.f32 0.0, %v4581
        %4583 = vmatmul.bf16.gmra.mxu0 %v3224
        %v4584 = vpop.f32.mrf.mxu0
        %v4585 = vadd.f32 0.0, %v4584
        %v4586 = vpop.f32.mrf.mxu0
        %v4587 = vadd.f32 0.0, %v4586
        %4588 = vmatmul.bf16.gmra.mxu0 %v3227
        %v4589 = vpop.f32.mrf.mxu0
        %v4590 = vadd.f32 0.0, %v4589
        %v4591 = vpop.f32.mrf.mxu0
        %v4592 = vadd.f32 0.0, %v4591
        %4593 = vmatmul.bf16.gmra.mxu0 %v3230
        %v4594 = vpop.f32.mrf.mxu0
        %v4595 = vadd.f32 0.0, %v4594
        %v4596 = vpop.f32.mrf.mxu0
        %v4597 = vadd.f32 0.0, %v4596
        %4598 = vmatmul.bf16.gmra.mxu0 %v3233
        %v4599 = vpop.f32.mrf.mxu0
        %v4600 = vadd.f32 0.0, %v4599
        %v4601 = vpop.f32.mrf.mxu0
        %v4602 = vadd.f32 0.0, %v4601
        %4603 = vmatmul.bf16.gmra.mxu0 %v3236
        %v4604 = vpop.f32.mrf.mxu0
        %v4605 = vadd.f32 0.0, %v4604
        %v4606 = vpop.f32.mrf.mxu0
        %v4607 = vadd.f32 0.0, %v4606
        %4608 = vmatmul.bf16.gmra.mxu0 %v3239
        %v4609 = vpop.f32.mrf.mxu0
        %v4610 = vadd.f32 0.0, %v4609
        %v4611 = vpop.f32.mrf.mxu0
        %v4612 = vadd.f32 0.0, %v4611
        %4613 = vmatmul.bf16.gmra.mxu0 %v3242
        %v4614 = vpop.f32.mrf.mxu0
        %v4615 = vadd.f32 0.0, %v4614
        %v4616 = vpop.f32.mrf.mxu0
        %v4617 = vadd.f32 0.0, %v4616
        %4618 = vmatmul.bf16.gmra.mxu0 %v3245
        %v4619 = vpop.f32.mrf.mxu0
        %v4620 = vadd.f32 0.0, %v4619
        %v4621 = vpop.f32.mrf.mxu0
        %v4622 = vadd.f32 0.0, %v4621
        %4623 = vmatmul.bf16.gmra.mxu0 %v3248
        %v4624 = vpop.f32.mrf.mxu0
        %v4625 = vadd.f32 0.0, %v4624
        %v4626 = vpop.f32.mrf.mxu0
        %v4627 = vadd.f32 0.0, %v4626
        %4628 = vmatmul.bf16.gmra.mxu0 %v3251
        %v4629 = vpop.f32.mrf.mxu0
        %v4630 = vadd.f32 0.0, %v4629
        %v4631 = vpop.f32.mrf.mxu0
        %v4632 = vadd.f32 0.0, %v4631
        %4633 = vmatmul.bf16.gmra.mxu0 %v3254
        %v4634 = vpop.f32.mrf.mxu0
        %v4635 = vadd.f32 0.0, %v4634
        %v4636 = vpop.f32.mrf.mxu0
        %v4637 = vadd.f32 0.0, %v4636
        %4638 = vmatmul.bf16.gmra.mxu0 %v3257
        %v4639 = vpop.f32.mrf.mxu0
        %v4640 = vadd.f32 0.0, %v4639
        %v4641 = vpop.f32.mrf.mxu0
        %v4642 = vadd.f32 0.0, %v4641
        %4643 = vmatmul.bf16.gmra.mxu0 %v3260
        %v4644 = vpop.f32.mrf.mxu0
        %v4645 = vadd.f32 0.0, %v4644
        %v4646 = vpop.f32.mrf.mxu0
        %v4647 = vadd.f32 0.0, %v4646
        %4648 = vmatmul.bf16.gmra.mxu0 %v3263
        %v4649 = vpop.f32.mrf.mxu0
        %v4650 = vadd.f32 0.0, %v4649
        %v4651 = vpop.f32.mrf.mxu0
        %v4652 = vadd.f32 0.0, %v4651
        %4653 = vmatmul.bf16.gmra.mxu0 %v3266
        %v4654 = vpop.f32.mrf.mxu0
        %v4655 = vadd.f32 0.0, %v4654
        %v4656 = vpop.f32.mrf.mxu0
        %v4657 = vadd.f32 0.0, %v4656
        %4658 = vmatmul.bf16.gmra.mxu0 %v3269
        %v4659 = vpop.f32.mrf.mxu0
        %v4660 = vadd.f32 0.0, %v4659
        %v4661 = vpop.f32.mrf.mxu0
        %v4662 = vadd.f32 0.0, %v4661
        %4663 = vmatmul.bf16.gmra.mxu0 %v3272
        %v4664 = vpop.f32.mrf.mxu0
        %v4665 = vadd.f32 0.0, %v4664
        %v4666 = vpop.f32.mrf.mxu0
        %v4667 = vadd.f32 0.0, %v4666
        %4668 = vmatmul.bf16.gmra.mxu0 %v3275
        %v4669 = vpop.f32.mrf.mxu0
        %v4670 = vadd.f32 0.0, %v4669
        %v4671 = vpop.f32.mrf.mxu0
        %v4672 = vadd.f32 0.0, %v4671
        %4673 = vmatmul.bf16.gmra.mxu0 %v4440
        %v4674 = vpop.f32.mrf.mxu0
        %v4675 = vadd.f32 0.0, %v4674
        %v4676 = vpop.f32.mrf.mxu0
        %v4677 = vadd.f32 0.0, %v4676
        %4678 = vdwg.mxu0
        %4679 = vmatpush.bf16.msra.mxu0 %v4526
        %4680 = vmatpush.bf16.msra.mxu0 %v4525
        %4681 = vmatpush.bf16.msra.mxu0 %v4524
        %4682 = vmatpush.bf16.msra.mxu0 %v4523
        %4683 = vmatpush.bf16.msra.mxu0 %v4522
        %4684 = vmatpush.bf16.msra.mxu0 %v4521
        %4685 = vmatpush.bf16.msra.mxu0 %v4520
        %4686 = vmatpush.bf16.msra.mxu0 %v4519
        %4687 = vmatmul.bf16.gmra.mxu0 %v3210
        %v4688 = vpop.f32.mrf.mxu0
        %v4689 = vadd.f32 %v4560, %v4688
        %v4690 = vpop.f32.mrf.mxu0
        %v4691 = vadd.f32 %v4562, %v4690
        %4692 = vmatmul.bf16.gmra.mxu0 %v3213
        %v4693 = vpop.f32.mrf.mxu0
        %v4694 = vadd.f32 %v4565, %v4693
        %v4695 = vpop.f32.mrf.mxu0
        %v4696 = vadd.f32 %v4567, %v4695
        %4697 = vmatmul.bf16.gmra.mxu0 %v3216
        %v4698 = vpop.f32.mrf.mxu0
        %v4699 = vadd.f32 %v4570, %v4698
        %v4700 = vpop.f32.mrf.mxu0
        %v4701 = vadd.f32 %v4572, %v4700
        %4702 = vmatmul.bf16.gmra.mxu0 %v3219
        %v4703 = vpop.f32.mrf.mxu0
        %v4704 = vadd.f32 %v4575, %v4703
        %v4705 = vpop.f32.mrf.mxu0
        %v4706 = vadd.f32 %v4577, %v4705
        %4707 = vmatmul.bf16.gmra.mxu0 %v3222
        %v4708 = vpop.f32.mrf.mxu0
        %v4709 = vadd.f32 %v4580, %v4708
        %v4710 = vpop.f32.mrf.mxu0
        %v4711 = vadd.f32 %v4582, %v4710
        %4712 = vmatmul.bf16.gmra.mxu0 %v3225
        %v4713 = vpop.f32.mrf.mxu0
        %v4714 = vadd.f32 %v4585, %v4713
        %v4715 = vpop.f32.mrf.mxu0
        %v4716 = vadd.f32 %v4587, %v4715
        %4717 = vmatmul.bf16.gmra.mxu0 %v3228
        %v4718 = vpop.f32.mrf.mxu0
        %v4719 = vadd.f32 %v4590, %v4718
        %v4720 = vpop.f32.mrf.mxu0
        %v4721 = vadd.f32 %v4592, %v4720
        %4722 = vmatmul.bf16.gmra.mxu0 %v3231
        %v4723 = vpop.f32.mrf.mxu0
        %v4724 = vadd.f32 %v4595, %v4723
        %v4725 = vpop.f32.mrf.mxu0
        %v4726 = vadd.f32 %v4597, %v4725
        %4727 = vmatmul.bf16.gmra.mxu0 %v3234
        %v4728 = vpop.f32.mrf.mxu0
        %v4729 = vadd.f32 %v4600, %v4728
        %v4730 = vpop.f32.mrf.mxu0
        %v4731 = vadd.f32 %v4602, %v4730
        %4732 = vmatmul.bf16.gmra.mxu0 %v3237
        %v4733 = vpop.f32.mrf.mxu0
        %v4734 = vadd.f32 %v4605, %v4733
        %v4735 = vpop.f32.mrf.mxu0
        %v4736 = vadd.f32 %v4607, %v4735
        %4737 = vmatmul.bf16.gmra.mxu0 %v3240
        %v4738 = vpop.f32.mrf.mxu0
        %v4739 = vadd.f32 %v4610, %v4738
        %v4740 = vpop.f32.mrf.mxu0
        %v4741 = vadd.f32 %v4612, %v4740
        %4742 = vmatmul.bf16.gmra.mxu0 %v3243
        %v4743 = vpop.f32.mrf.mxu0
        %v4744 = vadd.f32 %v4615, %v4743
        %v4745 = vpop.f32.mrf.mxu0
        %v4746 = vadd.f32 %v4617, %v4745
        %4747 = vmatmul.bf16.gmra.mxu0 %v3246
        %v4748 = vpop.f32.mrf.mxu0
        %v4749 = vadd.f32 %v4620, %v4748
        %v4750 = vpop.f32.mrf.mxu0
        %v4751 = vadd.f32 %v4622, %v4750
        %4752 = vmatmul.bf16.gmra.mxu0 %v3249
        %v4753 = vpop.f32.mrf.mxu0
        %v4754 = vadd.f32 %v4625, %v4753
        %v4755 = vpop.f32.mrf.mxu0
        %v4756 = vadd.f32 %v4627, %v4755
        %4757 = vmatmul.bf16.gmra.mxu0 %v3252
        %v4758 = vpop.f32.mrf.mxu0
        %v4759 = vadd.f32 %v4630, %v4758
        %v4760 = vpop.f32.mrf.mxu0
        %v4761 = vadd.f32 %v4632, %v4760
        %4762 = vmatmul.bf16.gmra.mxu0 %v3255
        %v4763 = vpop.f32.mrf.mxu0
        %v4764 = vadd.f32 %v4635, %v4763
        %v4765 = vpop.f32.mrf.mxu0
        %v4766 = vadd.f32 %v4637, %v4765
        %4767 = vmatmul.bf16.gmra.mxu0 %v3258
        %v4768 = vpop.f32.mrf.mxu0
        %v4769 = vadd.f32 %v4640, %v4768
        %v4770 = vpop.f32.mrf.mxu0
        %v4771 = vadd.f32 %v4642, %v4770
        %4772 = vmatmul.bf16.gmra.mxu0 %v3261
        %v4773 = vpop.f32.mrf.mxu0
        %v4774 = vadd.f32 %v4645, %v4773
        %v4775 = vpop.f32.mrf.mxu0
        %v4776 = vadd.f32 %v4647, %v4775
        %4777 = vmatmul.bf16.gmra.mxu0 %v3264
        %v4778 = vpop.f32.mrf.mxu0
        %v4779 = vadd.f32 %v4650, %v4778
        %v4780 = vpop.f32.mrf.mxu0
        %v4781 = vadd.f32 %v4652, %v4780
        %4782 = vmatmul.bf16.gmra.mxu0 %v3267
        %v4783 = vpop.f32.mrf.mxu0
        %v4784 = vadd.f32 %v4655, %v4783
        %v4785 = vpop.f32.mrf.mxu0
        %v4786 = vadd.f32 %v4657, %v4785
        %4787 = vmatmul.bf16.gmra.mxu0 %v3270
        %v4788 = vpop.f32.mrf.mxu0
        %v4789 = vadd.f32 %v4660, %v4788
        %v4790 = vpop.f32.mrf.mxu0
        %v4791 = vadd.f32 %v4662, %v4790
        %4792 = vmatmul.bf16.gmra.mxu0 %v3273
        %v4793 = vpop.f32.mrf.mxu0
        %v4794 = vadd.f32 %v4665, %v4793
        %v4795 = vpop.f32.mrf.mxu0
        %v4796 = vadd.f32 %v4667, %v4795
        %4797 = vmatmul.bf16.gmra.mxu0 %v3276
        %v4798 = vpop.f32.mrf.mxu0
        %v4799 = vadd.f32 %v4670, %v4798
        %v4800 = vpop.f32.mrf.mxu0
        %v4801 = vadd.f32 %v4672, %v4800
        %4802 = vmatmul.bf16.gmra.mxu0 %v4441
        %v4803 = vpop.f32.mrf.mxu0
        %v4804 = vadd.f32 %v4675, %v4803
        %v4805 = vpop.f32.mrf.mxu0
        %v4806 = vadd.f32 %v4677, %v4805
        %4807 = vdwg.mxu0
        %4808 = vmatpush.bf16.msra.mxu0 0
        %4809 = vmatpush.bf16.msra.mxu0 0
        %4810 = vmatpush.bf16.msra.mxu0 0
        %4811 = vmatpush.bf16.msra.mxu0 0
        %4812 = vmatpush.bf16.msra.mxu0 0
        %4813 = vmatpush.bf16.msra.mxu0 0
        %4814 = vmatpush.bf16.msra.mxu0 0
        %4815 = vmatpush.bf16.msra.mxu0 %v4548
        %4816 = vmatmul.bf16.gmra.mxu0 %v3430
        %v4817 = vpop.f32.mrf.mxu0
        %v4818 = vadd.f32 %v4689, %v4817
        %v4819 = vpop.f32.mrf.mxu0
        %v4820 = vadd.f32 %v4691, %v4819
        %4821 = vmatmul.bf16.gmra.mxu0 %v3433
        %v4822 = vpop.f32.mrf.mxu0
        %v4823 = vadd.f32 %v4694, %v4822
        %v4824 = vpop.f32.mrf.mxu0
        %v4825 = vadd.f32 %v4696, %v4824
        %4826 = vmatmul.bf16.gmra.mxu0 %v3436
        %v4827 = vpop.f32.mrf.mxu0
        %v4828 = vadd.f32 %v4699, %v4827
        %v4829 = vpop.f32.mrf.mxu0
        %v4830 = vadd.f32 %v4701, %v4829
        %4831 = vmatmul.bf16.gmra.mxu0 %v3439
        %v4832 = vpop.f32.mrf.mxu0
        %v4833 = vadd.f32 %v4704, %v4832
        %v4834 = vpop.f32.mrf.mxu0
        %v4835 = vadd.f32 %v4706, %v4834
        %4836 = vmatmul.bf16.gmra.mxu0 %v3442
        %v4837 = vpop.f32.mrf.mxu0
        %v4838 = vadd.f32 %v4709, %v4837
        %v4839 = vpop.f32.mrf.mxu0
        %v4840 = vadd.f32 %v4711, %v4839
        %4841 = vmatmul.bf16.gmra.mxu0 %v3445
        %v4842 = vpop.f32.mrf.mxu0
        %v4843 = vadd.f32 %v4714, %v4842
        %v4844 = vpop.f32.mrf.mxu0
        %v4845 = vadd.f32 %v4716, %v4844
        %4846 = vmatmul.bf16.gmra.mxu0 %v3448
        %v4847 = vpop.f32.mrf.mxu0
        %v4848 = vadd.f32 %v4719, %v4847
        %v4849 = vpop.f32.mrf.mxu0
        %v4850 = vadd.f32 %v4721, %v4849
        %4851 = vmatmul.bf16.gmra.mxu0 %v3451
        %v4852 = vpop.f32.mrf.mxu0
        %v4853 = vadd.f32 %v4724, %v4852
        %v4854 = vpop.f32.mrf.mxu0
        %v4855 = vadd.f32 %v4726, %v4854
        %4856 = vmatmul.bf16.gmra.mxu0 %v3454
        %v4857 = vpop.f32.mrf.mxu0
        %v4858 = vadd.f32 %v4729, %v4857
        %v4859 = vpop.f32.mrf.mxu0
        %v4860 = vadd.f32 %v4731, %v4859
        %4861 = vmatmul.bf16.gmra.mxu0 %v3457
        %v4862 = vpop.f32.mrf.mxu0
        %v4863 = vadd.f32 %v4734, %v4862
        %v4864 = vpop.f32.mrf.mxu0
        %v4865 = vadd.f32 %v4736, %v4864
        %4866 = vmatmul.bf16.gmra.mxu0 %v3460
        %v4867 = vpop.f32.mrf.mxu0
        %v4868 = vadd.f32 %v4739, %v4867
        %v4869 = vpop.f32.mrf.mxu0
        %v4870 = vadd.f32 %v4741, %v4869
        %4871 = vmatmul.bf16.gmra.mxu0 %v3463
        %v4872 = vpop.f32.mrf.mxu0
        %v4873 = vadd.f32 %v4744, %v4872
        %v4874 = vpop.f32.mrf.mxu0
        %v4875 = vadd.f32 %v4746, %v4874
        %4876 = vmatmul.bf16.gmra.mxu0 %v3466
        %v4877 = vpop.f32.mrf.mxu0
        %v4878 = vadd.f32 %v4749, %v4877
        %v4879 = vpop.f32.mrf.mxu0
        %v4880 = vadd.f32 %v4751, %v4879
        %4881 = vmatmul.bf16.gmra.mxu0 %v3469
        %v4882 = vpop.f32.mrf.mxu0
        %v4883 = vadd.f32 %v4754, %v4882
        %v4884 = vpop.f32.mrf.mxu0
        %v4885 = vadd.f32 %v4756, %v4884
        %4886 = vmatmul.bf16.gmra.mxu0 %v3472
        %v4887 = vpop.f32.mrf.mxu0
        %v4888 = vadd.f32 %v4759, %v4887
        %v4889 = vpop.f32.mrf.mxu0
        %v4890 = vadd.f32 %v4761, %v4889
        %4891 = vmatmul.bf16.gmra.mxu0 %v3475
        %v4892 = vpop.f32.mrf.mxu0
        %v4893 = vadd.f32 %v4764, %v4892
        %v4894 = vpop.f32.mrf.mxu0
        %v4895 = vadd.f32 %v4766, %v4894
        %4896 = vmatmul.bf16.gmra.mxu0 %v3478
        %v4897 = vpop.f32.mrf.mxu0
        %v4898 = vadd.f32 %v4769, %v4897
        %v4899 = vpop.f32.mrf.mxu0
        %v4900 = vadd.f32 %v4771, %v4899
        %4901 = vmatmul.bf16.gmra.mxu0 %v3481
        %v4902 = vpop.f32.mrf.mxu0
        %v4903 = vadd.f32 %v4774, %v4902
        %v4904 = vpop.f32.mrf.mxu0
        %v4905 = vadd.f32 %v4776, %v4904
        %4906 = vmatmul.bf16.gmra.mxu0 %v3484
        %v4907 = vpop.f32.mrf.mxu0
        %v4908 = vadd.f32 %v4779, %v4907
        %v4909 = vpop.f32.mrf.mxu0
        %v4910 = vadd.f32 %v4781, %v4909
        %4911 = vmatmul.bf16.gmra.mxu0 %v3487
        %v4912 = vpop.f32.mrf.mxu0
        %v4913 = vadd.f32 %v4784, %v4912
        %v4914 = vpop.f32.mrf.mxu0
        %v4915 = vadd.f32 %v4786, %v4914
        %4916 = vmatmul.bf16.gmra.mxu0 %v3490
        %v4917 = vpop.f32.mrf.mxu0
        %v4918 = vadd.f32 %v4789, %v4917
        %v4919 = vpop.f32.mrf.mxu0
        %v4920 = vadd.f32 %v4791, %v4919
        %4921 = vmatmul.bf16.gmra.mxu0 %v3493
        %v4922 = vpop.f32.mrf.mxu0
        %v4923 = vadd.f32 %v4794, %v4922
        %v4924 = vpop.f32.mrf.mxu0
        %v4925 = vadd.f32 %v4796, %v4924
        %4926 = vmatmul.bf16.gmra.mxu0 %v3496
        %v4927 = vpop.f32.mrf.mxu0
        %v4928 = vadd.f32 %v4799, %v4927
        %v4929 = vpop.f32.mrf.mxu0
        %v4930 = vadd.f32 %v4801, %v4929
        %4931 = vmatmul.bf16.gmra.mxu0 %v4545
        %v4932 = vpop.f32.mrf.mxu0
        %v4933 = vadd.f32 %v4804, %v4932
        %v4934 = vpop.f32.mrf.mxu0
        %v4935 = vadd.f32 %v4806, %v4934
        %4936 = vdwg.mxu0
        %v4937 = vadd.f32 %v4277, %v4818
        %v4938 = vadd.f32 %v4279, %v4820
        %v4939 = vadd.f32 %v4282, %v4823
        %v4940 = vadd.f32 %v4284, %v4825
        %v4941 = vadd.f32 %v4287, %v4828
        %v4942 = vadd.f32 %v4289, %v4830
        %v4943 = vadd.f32 %v4292, %v4833
        %v4944 = vadd.f32 %v4294, %v4835
        %v4945 = vadd.f32 %v4297, %v4838
        %v4946 = vadd.f32 %v4299, %v4840
        %v4947 = vadd.f32 %v4302, %v4843
        %v4948 = vadd.f32 %v4304, %v4845
        %v4949 = vadd.f32 %v4307, %v4848
        %v4950 = vadd.f32 %v4309, %v4850
        %v4951 = vadd.f32 %v4312, %v4853
        %v4952 = vadd.f32 %v4314, %v4855
        %v4953 = vadd.f32 %v4317, %v4858
        %v4954 = vadd.f32 %v4319, %v4860
        %v4955 = vadd.f32 %v4322, %v4863
        %v4956 = vadd.f32 %v4324, %v4865
        %v4957 = vadd.f32 %v4327, %v4868
        %v4958 = vadd.f32 %v4329, %v4870
        %v4959 = vadd.f32 %v4332, %v4873
        %v4960 = vadd.f32 %v4334, %v4875
        %v4961 = vadd.f32 %v4337, %v4878
        %v4962 = vadd.f32 %v4339, %v4880
        %v4963 = vadd.f32 %v4342, %v4883
        %v4964 = vadd.f32 %v4344, %v4885
        %v4965 = vadd.f32 %v4347, %v4888
        %v4966 = vadd.f32 %v4349, %v4890
        %v4967 = vadd.f32 %v4352, %v4893
        %v4968 = vadd.f32 %v4354, %v4895
        %v4969 = vadd.f32 %v4357, %v4898
        %v4970 = vadd.f32 %v4359, %v4900
        %v4971 = vadd.f32 %v4362, %v4903
        %v4972 = vadd.f32 %v4364, %v4905
        %v4973 = vadd.f32 %v4367, %v4908
        %v4974 = vadd.f32 %v4369, %v4910
        %v4975 = vadd.f32 %v4372, %v4913
        %v4976 = vadd.f32 %v4374, %v4915
        %v4977 = vadd.f32 %v4377, %v4918
        %v4978 = vadd.f32 %v4379, %v4920
        %v4979 = vadd.f32 %v4382, %v4923
        %v4980 = vadd.f32 %v4384, %v4925
        %v4981 = vadd.f32 %v4387, %v4928
        %v4982 = vadd.f32 %v4389, %v4930
        %v4983 = vadd.f32 %v4392, %v4933
        %v4984 = vadd.f32 %v4394, %v4935
        %v4985 = vld [vmem:[%s3] sm:$0xf]
        %v4986 = vld [vmem:[%s3 + $0x4] sm:$0xf]
        %v4987 = vld [vmem:[%s3 + $0x8] sm:$0xf]
        %v4988 = vld [vmem:[%s3 + $0xc] sm:$0xf]
        %v4989 = vld [vmem:[%s3 + $0x10] sm:$0xf]
        %v4990 = vld [vmem:[%s3 + $0x14] sm:$0xf]
        %v4991 = vld [vmem:[%s3 + $0x18] sm:$0xf]
        %v4992 = vld [vmem:[%s3 + $0x1c] sm:$0xf]
        %v4993 = vld [vmem:[%s3 + $0x20] sm:$0xf]
        %v4994 = vld [vmem:[%s3 + $0x24] sm:$0xf]
        %v4995 = vld [vmem:[%s3 + $0x28] sm:$0xf]
        %v4996 = vld [vmem:[%s3 + $0x2c] sm:$0xf]
        %v4997 = vld [vmem:[%s3 + $0x30] sm:$0xf]
        %v4998 = vld [vmem:[%s3 + $0x34] sm:$0xf]
        %v4999 = vld [vmem:[%s3 + $0x38] sm:$0xf]
        %v5000 = vld [vmem:[%s3 + $0x3c] sm:$0xf]
        %v5001 = vld [vmem:[%s3 + $0x40] sm:$0xf]
        %v5002 = vld [vmem:[%s3 + $0x44] sm:$0xf]
        %v5003 = vld [vmem:[%s3 + $0x48] sm:$0xf]
        %v5004 = vld [vmem:[%s3 + $0x4c] sm:$0xf]
        %v5005 = vld [vmem:[%s3 + $0x50] sm:$0xf]
        %v5006 = vld [vmem:[%s3 + $0x54] sm:$0xf]
        %v5007 = vld [vmem:[%s3 + $0x58] sm:$0xf]
        %v5008 = vld [vmem:[%s3 + $0x5c] sm:$0xf]
        %v5009 = vld [vmem:[%s3 + $0x60] sm:$0xf]
        %v5010 = vld [vmem:[%s3 + $0x64] sm:$0xf]
        %v5011 = vld [vmem:[%s3 + $0x68] sm:$0xf]
        %v5012 = vld [vmem:[%s3 + $0x6c] sm:$0xf]
        %v5013 = vld [vmem:[%s3 + $0x70] sm:$0xf]
        %v5014 = vld [vmem:[%s3 + $0x74] sm:$0xf]
        %v5015 = vld [vmem:[%s3 + $0x78] sm:$0xf]
        %v5016 = vld [vmem:[%s3 + $0x7c] sm:$0xf]
        %v5017 = vld [vmem:[%s3 + $0x80] sm:$0x3]
        %s5018 = scalar_lea.vmem %s3, 132
        %v5019 = vld [vmem:[%s5018] sm:$0xf]
        %v5020 = vld [vmem:[%s5018 + $0x4] sm:$0xf]
        %v5021 = vld [vmem:[%s5018 + $0x8] sm:$0xf]
        %v5022 = vld [vmem:[%s5018 + $0xc] sm:$0xf]
        %v5023 = vld [vmem:[%s5018 + $0x10] sm:$0xf]
        %v5024 = vld [vmem:[%s5018 + $0x14] sm:$0xf]
        %v5025 = vld [vmem:[%s5018 + $0x18] sm:$0xf]
        %v5026 = vld [vmem:[%s5018 + $0x1c] sm:$0xf]
        %v5027 = vld [vmem:[%s5018 + $0x20] sm:$0xf]
        %v5028 = vld [vmem:[%s5018 + $0x24] sm:$0xf]
        %v5029 = vld [vmem:[%s5018 + $0x28] sm:$0xf]
        %v5030 = vld [vmem:[%s5018 + $0x2c] sm:$0xf]
        %v5031 = vld [vmem:[%s5018 + $0x30] sm:$0xf]
        %v5032 = vld [vmem:[%s5018 + $0x34] sm:$0xf]
        %v5033 = vld [vmem:[%s5018 + $0x38] sm:$0xf]
        %v5034 = vld [vmem:[%s5018 + $0x3c] sm:$0xf]
        %v5035 = vld [vmem:[%s5018 + $0x40] sm:$0xf]
        %v5036 = vld [vmem:[%s5018 + $0x44] sm:$0xf]
        %v5037 = vld [vmem:[%s5018 + $0x48] sm:$0xf]
        %v5038 = vld [vmem:[%s5018 + $0x4c] sm:$0xf]
        %v5039 = vld [vmem:[%s5018 + $0x50] sm:$0xf]
        %v5040 = vld [vmem:[%s5018 + $0x54] sm:$0xf]
        %v5041 = vld [vmem:[%s5018 + $0x58] sm:$0xf]
        %v5042 = vld [vmem:[%s5018 + $0x5c] sm:$0xf]
        %v5043 = vld [vmem:[%s5018 + $0x60] sm:$0xf]
        %v5044 = vld [vmem:[%s5018 + $0x64] sm:$0xf]
        %v5045 = vld [vmem:[%s5018 + $0x68] sm:$0xf]
        %v5046 = vld [vmem:[%s5018 + $0x6c] sm:$0xf]
        %v5047 = vld [vmem:[%s5018 + $0x70] sm:$0xf]
        %v5048 = vld [vmem:[%s5018 + $0x74] sm:$0xf]
        %v5049 = vld [vmem:[%s5018 + $0x78] sm:$0xf]
        %v5050 = vld [vmem:[%s5018 + $0x7c] sm:$0xf]
        %v5051 = vld [vmem:[%s5018 + $0x80] sm:$0x3]
        %v5085 = vunpack.c.l.b16 %v5019
        %v5086 = vunpack.c.l.b16 %v5020
        %v5087 = vunpack.c.l.b16 %v5021
        %v5088 = vunpack.c.l.b16 %v5022
        %v5089 = vunpack.c.l.b16 %v5023
        %v5090 = vunpack.c.l.b16 %v5024
        %v5091 = vunpack.c.l.b16 %v5025
        %v5092 = vunpack.c.l.b16 %v5026
        %v5093 = vunpack.c.l.b16 %v5027
        %v5094 = vunpack.c.l.b16 %v5028
        %v5095 = vunpack.c.l.b16 %v5029
        %v5096 = vunpack.c.l.b16 %v5030
        %v5097 = vunpack.c.l.b16 %v5031
        %v5098 = vunpack.c.l.b16 %v5032
        %v5099 = vunpack.c.l.b16 %v5033
        %v5100 = vunpack.c.l.b16 %v5034
        %v5101 = vunpack.c.l.b16 %v5035
        %v5102 = vunpack.c.l.b16 %v5036
        %v5103 = vunpack.c.l.b16 %v5037
        %v5104 = vunpack.c.l.b16 %v5038
        %v5105 = vunpack.c.l.b16 %v5039
        %v5106 = vunpack.c.l.b16 %v5040
        %v5107 = vunpack.c.l.b16 %v5041
        %v5108 = vunpack.c.l.b16 %v5042
        %v5109 = vunpack.c.l.b16 %v5043
        %v5110 = vunpack.c.l.b16 %v5044
        %v5111 = vunpack.c.l.b16 %v5045
        %v5112 = vunpack.c.l.b16 %v5046
        %v5113 = vunpack.c.l.b16 %v5047
        %v5114 = vunpack.c.l.b16 %v5048
        %v5115 = vunpack.c.l.b16 %v5049
        %v5116 = vunpack.c.l.b16 %v5050
        %v5117 = vunpack.c.l.b16 %v5051
        %v5118 = vpack.c.b16 %v5086, %v5085
        %v5119 = vpack.c.b16 %v5088, %v5087
        %v5120 = vpack.c.b16 %v5090, %v5089
        %v5121 = vpack.c.b16 %v5092, %v5091
        %v5122 = vpack.c.b16 %v5094, %v5093
        %v5123 = vpack.c.b16 %v5096, %v5095
        %v5124 = vpack.c.b16 %v5098, %v5097
        %v5125 = vpack.c.b16 %v5100, %v5099
        %v5126 = vpack.c.b16 %v5102, %v5101
        %v5127 = vpack.c.b16 %v5104, %v5103
        %v5128 = vpack.c.b16 %v5106, %v5105
        %v5129 = vpack.c.b16 %v5108, %v5107
        %v5130 = vpack.c.b16 %v5110, %v5109
        %v5131 = vpack.c.b16 %v5112, %v5111
        %v5132 = vpack.c.b16 %v5114, %v5113
        %v5133 = vpack.c.b16 %v5116, %v5115
        %v5134 = vpack.c.b16 %v5117, %v5117
        %v5152 = vsel %vm3498, %v5134, 0
        %5154 = vmatpush.bf16.msra.mxu0 %v5125
        %5155 = vmatpush.bf16.msra.mxu0 %v5124
        %5156 = vmatpush.bf16.msra.mxu0 %v5123
        %5157 = vmatpush.bf16.msra.mxu0 %v5122
        %5158 = vmatpush.bf16.msra.mxu0 %v5121
        %5159 = vmatpush.bf16.msra.mxu0 %v5120
        %5160 = vmatpush.bf16.msra.mxu0 %v5119
        %5161 = vmatpush.bf16.msra.mxu0 %v5118
        %5162 = vmatmul.bf16.gmra.mxu0 %v3206
        %v5163 = vpop.f32.mrf.mxu0
        %v5164 = vadd.f32 0.0, %v5163
        %v5165 = vpop.f32.mrf.mxu0
        %v5166 = vadd.f32 0.0, %v5165
        %5167 = vmatmul.bf16.gmra.mxu0 %v3209
        %v5168 = vpop.f32.mrf.mxu0
        %v5169 = vadd.f32 0.0, %v5168
        %v5170 = vpop.f32.mrf.mxu0
        %v5171 = vadd.f32 0.0, %v5170
        %5172 = vmatmul.bf16.gmra.mxu0 %v3212
        %v5173 = vpop.f32.mrf.mxu0
        %v5174 = vadd.f32 0.0, %v5173
        %v5175 = vpop.f32.mrf.mxu0
        %v5176 = vadd.f32 0.0, %v5175
        %5177 = vmatmul.bf16.gmra.mxu0 %v3215
        %v5178 = vpop.f32.mrf.mxu0
        %v5179 = vadd.f32 0.0, %v5178
        %v5180 = vpop.f32.mrf.mxu0
        %v5181 = vadd.f32 0.0, %v5180
        %5182 = vmatmul.bf16.gmra.mxu0 %v3218
        %v5183 = vpop.f32.mrf.mxu0
        %v5184 = vadd.f32 0.0, %v5183
        %v5185 = vpop.f32.mrf.mxu0
        %v5186 = vadd.f32 0.0, %v5185
        %5187 = vmatmul.bf16.gmra.mxu0 %v3221
        %v5188 = vpop.f32.mrf.mxu0
        %v5189 = vadd.f32 0.0, %v5188
        %v5190 = vpop.f32.mrf.mxu0
        %v5191 = vadd.f32 0.0, %v5190
        %5192 = vmatmul.bf16.gmra.mxu0 %v3224
        %v5193 = vpop.f32.mrf.mxu0
        %v5194 = vadd.f32 0.0, %v5193
        %v5195 = vpop.f32.mrf.mxu0
        %v5196 = vadd.f32 0.0, %v5195
        %5197 = vmatmul.bf16.gmra.mxu0 %v3227
        %v5198 = vpop.f32.mrf.mxu0
        %v5199 = vadd.f32 0.0, %v5198
        %v5200 = vpop.f32.mrf.mxu0
        %v5201 = vadd.f32 0.0, %v5200
        %5202 = vmatmul.bf16.gmra.mxu0 %v3230
        %v5203 = vpop.f32.mrf.mxu0
        %v5204 = vadd.f32 0.0, %v5203
        %v5205 = vpop.f32.mrf.mxu0
        %v5206 = vadd.f32 0.0, %v5205
        %5207 = vmatmul.bf16.gmra.mxu0 %v3233
        %v5208 = vpop.f32.mrf.mxu0
        %v5209 = vadd.f32 0.0, %v5208
        %v5210 = vpop.f32.mrf.mxu0
        %v5211 = vadd.f32 0.0, %v5210
        %5212 = vmatmul.bf16.gmra.mxu0 %v3236
        %v5213 = vpop.f32.mrf.mxu0
        %v5214 = vadd.f32 0.0, %v5213
        %v5215 = vpop.f32.mrf.mxu0
        %v5216 = vadd.f32 0.0, %v5215
        %5217 = vmatmul.bf16.gmra.mxu0 %v3239
        %v5218 = vpop.f32.mrf.mxu0
        %v5219 = vadd.f32 0.0, %v5218
        %v5220 = vpop.f32.mrf.mxu0
        %v5221 = vadd.f32 0.0, %v5220
        %5222 = vmatmul.bf16.gmra.mxu0 %v3242
        %v5223 = vpop.f32.mrf.mxu0
        %v5224 = vadd.f32 0.0, %v5223
        %v5225 = vpop.f32.mrf.mxu0
        %v5226 = vadd.f32 0.0, %v5225
        %5227 = vmatmul.bf16.gmra.mxu0 %v3245
        %v5228 = vpop.f32.mrf.mxu0
        %v5229 = vadd.f32 0.0, %v5228
        %v5230 = vpop.f32.mrf.mxu0
        %v5231 = vadd.f32 0.0, %v5230
        %5232 = vmatmul.bf16.gmra.mxu0 %v3248
        %v5233 = vpop.f32.mrf.mxu0
        %v5234 = vadd.f32 0.0, %v5233
        %v5235 = vpop.f32.mrf.mxu0
        %v5236 = vadd.f32 0.0, %v5235
        %5237 = vmatmul.bf16.gmra.mxu0 %v3251
        %v5238 = vpop.f32.mrf.mxu0
        %v5239 = vadd.f32 0.0, %v5238
        %v5240 = vpop.f32.mrf.mxu0
        %v5241 = vadd.f32 0.0, %v5240
        %5242 = vmatmul.bf16.gmra.mxu0 %v3254
        %v5243 = vpop.f32.mrf.mxu0
        %v5244 = vadd.f32 0.0, %v5243
        %v5245 = vpop.f32.mrf.mxu0
        %v5246 = vadd.f32 0.0, %v5245
        %5247 = vmatmul.bf16.gmra.mxu0 %v3257
        %v5248 = vpop.f32.mrf.mxu0
        %v5249 = vadd.f32 0.0, %v5248
        %v5250 = vpop.f32.mrf.mxu0
        %v5251 = vadd.f32 0.0, %v5250
        %5252 = vmatmul.bf16.gmra.mxu0 %v3260
        %v5253 = vpop.f32.mrf.mxu0
        %v5254 = vadd.f32 0.0, %v5253
        %v5255 = vpop.f32.mrf.mxu0
        %v5256 = vadd.f32 0.0, %v5255
        %5257 = vmatmul.bf16.gmra.mxu0 %v3263
        %v5258 = vpop.f32.mrf.mxu0
        %v5259 = vadd.f32 0.0, %v5258
        %v5260 = vpop.f32.mrf.mxu0
        %v5261 = vadd.f32 0.0, %v5260
        %5262 = vmatmul.bf16.gmra.mxu0 %v3266
        %v5263 = vpop.f32.mrf.mxu0
        %v5264 = vadd.f32 0.0, %v5263
        %v5265 = vpop.f32.mrf.mxu0
        %v5266 = vadd.f32 0.0, %v5265
        %5267 = vmatmul.bf16.gmra.mxu0 %v3269
        %v5268 = vpop.f32.mrf.mxu0
        %v5269 = vadd.f32 0.0, %v5268
        %v5270 = vpop.f32.mrf.mxu0
        %v5271 = vadd.f32 0.0, %v5270
        %5272 = vmatmul.bf16.gmra.mxu0 %v3272
        %v5273 = vpop.f32.mrf.mxu0
        %v5274 = vadd.f32 0.0, %v5273
        %v5275 = vpop.f32.mrf.mxu0
        %v5276 = vadd.f32 0.0, %v5275
        %5277 = vmatmul.bf16.gmra.mxu0 %v3275
        %v5278 = vpop.f32.mrf.mxu0
        %v5279 = vadd.f32 0.0, %v5278
        %v5280 = vpop.f32.mrf.mxu0
        %v5281 = vadd.f32 0.0, %v5280
        %5282 = vdwg.mxu0
        %5283 = vmatpush.bf16.msra.mxu0 %v5133
        %5284 = vmatpush.bf16.msra.mxu0 %v5132
        %5285 = vmatpush.bf16.msra.mxu0 %v5131
        %5286 = vmatpush.bf16.msra.mxu0 %v5130
        %5287 = vmatpush.bf16.msra.mxu0 %v5129
        %5288 = vmatpush.bf16.msra.mxu0 %v5128
        %5289 = vmatpush.bf16.msra.mxu0 %v5127
        %5290 = vmatpush.bf16.msra.mxu0 %v5126
        %5291 = vmatmul.bf16.gmra.mxu0 %v3207
        %v5292 = vpop.f32.mrf.mxu0
        %v5293 = vadd.f32 %v5164, %v5292
        %v5294 = vpop.f32.mrf.mxu0
        %v5295 = vadd.f32 %v5166, %v5294
        %5296 = vmatmul.bf16.gmra.mxu0 %v3210
        %v5297 = vpop.f32.mrf.mxu0
        %v5298 = vadd.f32 %v5169, %v5297
        %v5299 = vpop.f32.mrf.mxu0
        %v5300 = vadd.f32 %v5171, %v5299
        %5301 = vmatmul.bf16.gmra.mxu0 %v3213
        %v5302 = vpop.f32.mrf.mxu0
        %v5303 = vadd.f32 %v5174, %v5302
        %v5304 = vpop.f32.mrf.mxu0
        %v5305 = vadd.f32 %v5176, %v5304
        %5306 = vmatmul.bf16.gmra.mxu0 %v3216
        %v5307 = vpop.f32.mrf.mxu0
        %v5308 = vadd.f32 %v5179, %v5307
        %v5309 = vpop.f32.mrf.mxu0
        %v5310 = vadd.f32 %v5181, %v5309
        %5311 = vmatmul.bf16.gmra.mxu0 %v3219
        %v5312 = vpop.f32.mrf.mxu0
        %v5313 = vadd.f32 %v5184, %v5312
        %v5314 = vpop.f32.mrf.mxu0
        %v5315 = vadd.f32 %v5186, %v5314
        %5316 = vmatmul.bf16.gmra.mxu0 %v3222
        %v5317 = vpop.f32.mrf.mxu0
        %v5318 = vadd.f32 %v5189, %v5317
        %v5319 = vpop.f32.mrf.mxu0
        %v5320 = vadd.f32 %v5191, %v5319
        %5321 = vmatmul.bf16.gmra.mxu0 %v3225
        %v5322 = vpop.f32.mrf.mxu0
        %v5323 = vadd.f32 %v5194, %v5322
        %v5324 = vpop.f32.mrf.mxu0
        %v5325 = vadd.f32 %v5196, %v5324
        %5326 = vmatmul.bf16.gmra.mxu0 %v3228
        %v5327 = vpop.f32.mrf.mxu0
        %v5328 = vadd.f32 %v5199, %v5327
        %v5329 = vpop.f32.mrf.mxu0
        %v5330 = vadd.f32 %v5201, %v5329
        %5331 = vmatmul.bf16.gmra.mxu0 %v3231
        %v5332 = vpop.f32.mrf.mxu0
        %v5333 = vadd.f32 %v5204, %v5332
        %v5334 = vpop.f32.mrf.mxu0
        %v5335 = vadd.f32 %v5206, %v5334
        %5336 = vmatmul.bf16.gmra.mxu0 %v3234
        %v5337 = vpop.f32.mrf.mxu0
        %v5338 = vadd.f32 %v5209, %v5337
        %v5339 = vpop.f32.mrf.mxu0
        %v5340 = vadd.f32 %v5211, %v5339
        %5341 = vmatmul.bf16.gmra.mxu0 %v3237
        %v5342 = vpop.f32.mrf.mxu0
        %v5343 = vadd.f32 %v5214, %v5342
        %v5344 = vpop.f32.mrf.mxu0
        %v5345 = vadd.f32 %v5216, %v5344
        %5346 = vmatmul.bf16.gmra.mxu0 %v3240
        %v5347 = vpop.f32.mrf.mxu0
        %v5348 = vadd.f32 %v5219, %v5347
        %v5349 = vpop.f32.mrf.mxu0
        %v5350 = vadd.f32 %v5221, %v5349
        %5351 = vmatmul.bf16.gmra.mxu0 %v3243
        %v5352 = vpop.f32.mrf.mxu0
        %v5353 = vadd.f32 %v5224, %v5352
        %v5354 = vpop.f32.mrf.mxu0
        %v5355 = vadd.f32 %v5226, %v5354
        %5356 = vmatmul.bf16.gmra.mxu0 %v3246
        %v5357 = vpop.f32.mrf.mxu0
        %v5358 = vadd.f32 %v5229, %v5357
        %v5359 = vpop.f32.mrf.mxu0
        %v5360 = vadd.f32 %v5231, %v5359
        %5361 = vmatmul.bf16.gmra.mxu0 %v3249
        %v5362 = vpop.f32.mrf.mxu0
        %v5363 = vadd.f32 %v5234, %v5362
        %v5364 = vpop.f32.mrf.mxu0
        %v5365 = vadd.f32 %v5236, %v5364
        %5366 = vmatmul.bf16.gmra.mxu0 %v3252
        %v5367 = vpop.f32.mrf.mxu0
        %v5368 = vadd.f32 %v5239, %v5367
        %v5369 = vpop.f32.mrf.mxu0
        %v5370 = vadd.f32 %v5241, %v5369
        %5371 = vmatmul.bf16.gmra.mxu0 %v3255
        %v5372 = vpop.f32.mrf.mxu0
        %v5373 = vadd.f32 %v5244, %v5372
        %v5374 = vpop.f32.mrf.mxu0
        %v5375 = vadd.f32 %v5246, %v5374
        %5376 = vmatmul.bf16.gmra.mxu0 %v3258
        %v5377 = vpop.f32.mrf.mxu0
        %v5378 = vadd.f32 %v5249, %v5377
        %v5379 = vpop.f32.mrf.mxu0
        %v5380 = vadd.f32 %v5251, %v5379
        %5381 = vmatmul.bf16.gmra.mxu0 %v3261
        %v5382 = vpop.f32.mrf.mxu0
        %v5383 = vadd.f32 %v5254, %v5382
        %v5384 = vpop.f32.mrf.mxu0
        %v5385 = vadd.f32 %v5256, %v5384
        %5386 = vmatmul.bf16.gmra.mxu0 %v3264
        %v5387 = vpop.f32.mrf.mxu0
        %v5388 = vadd.f32 %v5259, %v5387
        %v5389 = vpop.f32.mrf.mxu0
        %v5390 = vadd.f32 %v5261, %v5389
        %5391 = vmatmul.bf16.gmra.mxu0 %v3267
        %v5392 = vpop.f32.mrf.mxu0
        %v5393 = vadd.f32 %v5264, %v5392
        %v5394 = vpop.f32.mrf.mxu0
        %v5395 = vadd.f32 %v5266, %v5394
        %5396 = vmatmul.bf16.gmra.mxu0 %v3270
        %v5397 = vpop.f32.mrf.mxu0
        %v5398 = vadd.f32 %v5269, %v5397
        %v5399 = vpop.f32.mrf.mxu0
        %v5400 = vadd.f32 %v5271, %v5399
        %5401 = vmatmul.bf16.gmra.mxu0 %v3273
        %v5402 = vpop.f32.mrf.mxu0
        %v5403 = vadd.f32 %v5274, %v5402
        %v5404 = vpop.f32.mrf.mxu0
        %v5405 = vadd.f32 %v5276, %v5404
        %5406 = vmatmul.bf16.gmra.mxu0 %v3276
        %v5407 = vpop.f32.mrf.mxu0
        %v5408 = vadd.f32 %v5279, %v5407
        %v5409 = vpop.f32.mrf.mxu0
        %v5410 = vadd.f32 %v5281, %v5409
        %5411 = vdwg.mxu0
        %5412 = vmatpush.bf16.msra.mxu0 0
        %5413 = vmatpush.bf16.msra.mxu0 0
        %5414 = vmatpush.bf16.msra.mxu0 0
        %5415 = vmatpush.bf16.msra.mxu0 0
        %5416 = vmatpush.bf16.msra.mxu0 0
        %5417 = vmatpush.bf16.msra.mxu0 0
        %5418 = vmatpush.bf16.msra.mxu0 0
        %5419 = vmatpush.bf16.msra.mxu0 %v5152
        %5420 = vmatmul.bf16.gmra.mxu0 %v3427
        %v5421 = vpop.f32.mrf.mxu0
        %v5422 = vadd.f32 %v5293, %v5421
        %v5423 = vpop.f32.mrf.mxu0
        %v5424 = vadd.f32 %v5295, %v5423
        %5425 = vmatmul.bf16.gmra.mxu0 %v3430
        %v5426 = vpop.f32.mrf.mxu0
        %v5427 = vadd.f32 %v5298, %v5426
        %v5428 = vpop.f32.mrf.mxu0
        %v5429 = vadd.f32 %v5300, %v5428
        %5430 = vmatmul.bf16.gmra.mxu0 %v3433
        %v5431 = vpop.f32.mrf.mxu0
        %v5432 = vadd.f32 %v5303, %v5431
        %v5433 = vpop.f32.mrf.mxu0
        %v5434 = vadd.f32 %v5305, %v5433
        %5435 = vmatmul.bf16.gmra.mxu0 %v3436
        %v5436 = vpop.f32.mrf.mxu0
        %v5437 = vadd.f32 %v5308, %v5436
        %v5438 = vpop.f32.mrf.mxu0
        %v5439 = vadd.f32 %v5310, %v5438
        %5440 = vmatmul.bf16.gmra.mxu0 %v3439
        %v5441 = vpop.f32.mrf.mxu0
        %v5442 = vadd.f32 %v5313, %v5441
        %v5443 = vpop.f32.mrf.mxu0
        %v5444 = vadd.f32 %v5315, %v5443
        %5445 = vmatmul.bf16.gmra.mxu0 %v3442
        %v5446 = vpop.f32.mrf.mxu0
        %v5447 = vadd.f32 %v5318, %v5446
        %v5448 = vpop.f32.mrf.mxu0
        %v5449 = vadd.f32 %v5320, %v5448
        %5450 = vmatmul.bf16.gmra.mxu0 %v3445
        %v5451 = vpop.f32.mrf.mxu0
        %v5452 = vadd.f32 %v5323, %v5451
        %v5453 = vpop.f32.mrf.mxu0
        %v5454 = vadd.f32 %v5325, %v5453
        %5455 = vmatmul.bf16.gmra.mxu0 %v3448
        %v5456 = vpop.f32.mrf.mxu0
        %v5457 = vadd.f32 %v5328, %v5456
        %v5458 = vpop.f32.mrf.mxu0
        %v5459 = vadd.f32 %v5330, %v5458
        %5460 = vmatmul.bf16.gmra.mxu0 %v3451
        %v5461 = vpop.f32.mrf.mxu0
        %v5462 = vadd.f32 %v5333, %v5461
        %v5463 = vpop.f32.mrf.mxu0
        %v5464 = vadd.f32 %v5335, %v5463
        %5465 = vmatmul.bf16.gmra.mxu0 %v3454
        %v5466 = vpop.f32.mrf.mxu0
        %v5467 = vadd.f32 %v5338, %v5466
        %v5468 = vpop.f32.mrf.mxu0
        %v5469 = vadd.f32 %v5340, %v5468
        %5470 = vmatmul.bf16.gmra.mxu0 %v3457
        %v5471 = vpop.f32.mrf.mxu0
        %v5472 = vadd.f32 %v5343, %v5471
        %v5473 = vpop.f32.mrf.mxu0
        %v5474 = vadd.f32 %v5345, %v5473
        %5475 = vmatmul.bf16.gmra.mxu0 %v3460
        %v5476 = vpop.f32.mrf.mxu0
        %v5477 = vadd.f32 %v5348, %v5476
        %v5478 = vpop.f32.mrf.mxu0
        %v5479 = vadd.f32 %v5350, %v5478
        %5480 = vmatmul.bf16.gmra.mxu0 %v3463
        %v5481 = vpop.f32.mrf.mxu0
        %v5482 = vadd.f32 %v5353, %v5481
        %v5483 = vpop.f32.mrf.mxu0
        %v5484 = vadd.f32 %v5355, %v5483
        %5485 = vmatmul.bf16.gmra.mxu0 %v3466
        %v5486 = vpop.f32.mrf.mxu0
        %v5487 = vadd.f32 %v5358, %v5486
        %v5488 = vpop.f32.mrf.mxu0
        %v5489 = vadd.f32 %v5360, %v5488
        %5490 = vmatmul.bf16.gmra.mxu0 %v3469
        %v5491 = vpop.f32.mrf.mxu0
        %v5492 = vadd.f32 %v5363, %v5491
        %v5493 = vpop.f32.mrf.mxu0
        %v5494 = vadd.f32 %v5365, %v5493
        %5495 = vmatmul.bf16.gmra.mxu0 %v3472
        %v5496 = vpop.f32.mrf.mxu0
        %v5497 = vadd.f32 %v5368, %v5496
        %v5498 = vpop.f32.mrf.mxu0
        %v5499 = vadd.f32 %v5370, %v5498
        %5500 = vmatmul.bf16.gmra.mxu0 %v3475
        %v5501 = vpop.f32.mrf.mxu0
        %v5502 = vadd.f32 %v5373, %v5501
        %v5503 = vpop.f32.mrf.mxu0
        %v5504 = vadd.f32 %v5375, %v5503
        %5505 = vmatmul.bf16.gmra.mxu0 %v3478
        %v5506 = vpop.f32.mrf.mxu0
        %v5507 = vadd.f32 %v5378, %v5506
        %v5508 = vpop.f32.mrf.mxu0
        %v5509 = vadd.f32 %v5380, %v5508
        %5510 = vmatmul.bf16.gmra.mxu0 %v3481
        %v5511 = vpop.f32.mrf.mxu0
        %v5512 = vadd.f32 %v5383, %v5511
        %v5513 = vpop.f32.mrf.mxu0
        %v5514 = vadd.f32 %v5385, %v5513
        %5515 = vmatmul.bf16.gmra.mxu0 %v3484
        %v5516 = vpop.f32.mrf.mxu0
        %v5517 = vadd.f32 %v5388, %v5516
        %v5518 = vpop.f32.mrf.mxu0
        %v5519 = vadd.f32 %v5390, %v5518
        %5520 = vmatmul.bf16.gmra.mxu0 %v3487
        %v5521 = vpop.f32.mrf.mxu0
        %v5522 = vadd.f32 %v5393, %v5521
        %v5523 = vpop.f32.mrf.mxu0
        %v5524 = vadd.f32 %v5395, %v5523
        %5525 = vmatmul.bf16.gmra.mxu0 %v3490
        %v5526 = vpop.f32.mrf.mxu0
        %v5527 = vadd.f32 %v5398, %v5526
        %v5528 = vpop.f32.mrf.mxu0
        %v5529 = vadd.f32 %v5400, %v5528
        %5530 = vmatmul.bf16.gmra.mxu0 %v3493
        %v5531 = vpop.f32.mrf.mxu0
        %v5532 = vadd.f32 %v5403, %v5531
        %v5533 = vpop.f32.mrf.mxu0
        %v5534 = vadd.f32 %v5405, %v5533
        %5535 = vmatmul.bf16.gmra.mxu0 %v3496
        %v5536 = vpop.f32.mrf.mxu0
        %v5537 = vadd.f32 %v5408, %v5536
        %v5538 = vpop.f32.mrf.mxu0
        %v5539 = vadd.f32 %v5410, %v5538
        %5540 = vdwg.mxu0
        %v5574 = vunpack.c.l.b16 %v4985
        %v5575 = vunpack.c.l.b16 %v4986
        %v5576 = vunpack.c.l.b16 %v4987
        %v5577 = vunpack.c.l.b16 %v4988
        %v5578 = vunpack.c.l.b16 %v4989
        %v5579 = vunpack.c.l.b16 %v4990
        %v5580 = vunpack.c.l.b16 %v4991
        %v5581 = vunpack.c.l.b16 %v4992
        %v5582 = vunpack.c.l.b16 %v4993
        %v5583 = vunpack.c.l.b16 %v4994
        %v5584 = vunpack.c.l.b16 %v4995
        %v5585 = vunpack.c.l.b16 %v4996
        %v5586 = vunpack.c.l.b16 %v4997
        %v5587 = vunpack.c.l.b16 %v4998
        %v5588 = vunpack.c.l.b16 %v4999
        %v5589 = vunpack.c.l.b16 %v5000
        %v5590 = vunpack.c.l.b16 %v5001
        %v5591 = vunpack.c.l.b16 %v5002
        %v5592 = vunpack.c.l.b16 %v5003
        %v5593 = vunpack.c.l.b16 %v5004
        %v5594 = vunpack.c.l.b16 %v5005
        %v5595 = vunpack.c.l.b16 %v5006
        %v5596 = vunpack.c.l.b16 %v5007
        %v5597 = vunpack.c.l.b16 %v5008
        %v5598 = vunpack.c.l.b16 %v5009
        %v5599 = vunpack.c.l.b16 %v5010
        %v5600 = vunpack.c.l.b16 %v5011
        %v5601 = vunpack.c.l.b16 %v5012
        %v5602 = vunpack.c.l.b16 %v5013
        %v5603 = vunpack.c.l.b16 %v5014
        %v5604 = vunpack.c.l.b16 %v5015
        %v5605 = vunpack.c.l.b16 %v5016
        %v5606 = vunpack.c.l.b16 %v5017
        %v5607 = vpack.c.b16 %v5575, %v5574
        %v5608 = vpack.c.b16 %v5577, %v5576
        %v5609 = vpack.c.b16 %v5579, %v5578
        %v5610 = vpack.c.b16 %v5581, %v5580
        %v5611 = vpack.c.b16 %v5583, %v5582
        %v5612 = vpack.c.b16 %v5585, %v5584
        %v5613 = vpack.c.b16 %v5587, %v5586
        %v5614 = vpack.c.b16 %v5589, %v5588
        %v5615 = vpack.c.b16 %v5591, %v5590
        %v5616 = vpack.c.b16 %v5593, %v5592
        %v5617 = vpack.c.b16 %v5595, %v5594
        %v5618 = vpack.c.b16 %v5597, %v5596
        %v5619 = vpack.c.b16 %v5599, %v5598
        %v5620 = vpack.c.b16 %v5601, %v5600
        %v5621 = vpack.c.b16 %v5603, %v5602
        %v5622 = vpack.c.b16 %v5605, %v5604
        %v5623 = vpack.c.b16 %v5606, %v5606
        %v5641 = vsel %vm3498, %v5623, 0
        %5643 = vmatpush.bf16.msra.mxu0 %v5614
        %5644 = vmatpush.bf16.msra.mxu0 %v5613
        %5645 = vmatpush.bf16.msra.mxu0 %v5612
        %5646 = vmatpush.bf16.msra.mxu0 %v5611
        %5647 = vmatpush.bf16.msra.mxu0 %v5610
        %5648 = vmatpush.bf16.msra.mxu0 %v5609
        %5649 = vmatpush.bf16.msra.mxu0 %v5608
        %5650 = vmatpush.bf16.msra.mxu0 %v5607
        %5651 = vmatmul.bf16.gmra.mxu0 %v3899
        %v5652 = vpop.f32.mrf.mxu0
        %v5653 = vadd.f32 %v5422, %v5652
        %v5654 = vpop.f32.mrf.mxu0
        %v5655 = vadd.f32 %v5424, %v5654
        %5656 = vmatmul.bf16.gmra.mxu0 %v3206
        %v5657 = vpop.f32.mrf.mxu0
        %v5658 = vadd.f32 %v5427, %v5657
        %v5659 = vpop.f32.mrf.mxu0
        %v5660 = vadd.f32 %v5429, %v5659
        %5661 = vmatmul.bf16.gmra.mxu0 %v3209
        %v5662 = vpop.f32.mrf.mxu0
        %v5663 = vadd.f32 %v5432, %v5662
        %v5664 = vpop.f32.mrf.mxu0
        %v5665 = vadd.f32 %v5434, %v5664
        %5666 = vmatmul.bf16.gmra.mxu0 %v3212
        %v5667 = vpop.f32.mrf.mxu0
        %v5668 = vadd.f32 %v5437, %v5667
        %v5669 = vpop.f32.mrf.mxu0
        %v5670 = vadd.f32 %v5439, %v5669
        %5671 = vmatmul.bf16.gmra.mxu0 %v3215
        %v5672 = vpop.f32.mrf.mxu0
        %v5673 = vadd.f32 %v5442, %v5672
        %v5674 = vpop.f32.mrf.mxu0
        %v5675 = vadd.f32 %v5444, %v5674
        %5676 = vmatmul.bf16.gmra.mxu0 %v3218
        %v5677 = vpop.f32.mrf.mxu0
        %v5678 = vadd.f32 %v5447, %v5677
        %v5679 = vpop.f32.mrf.mxu0
        %v5680 = vadd.f32 %v5449, %v5679
        %5681 = vmatmul.bf16.gmra.mxu0 %v3221
        %v5682 = vpop.f32.mrf.mxu0
        %v5683 = vadd.f32 %v5452, %v5682
        %v5684 = vpop.f32.mrf.mxu0
        %v5685 = vadd.f32 %v5454, %v5684
        %5686 = vmatmul.bf16.gmra.mxu0 %v3224
        %v5687 = vpop.f32.mrf.mxu0
        %v5688 = vadd.f32 %v5457, %v5687
        %v5689 = vpop.f32.mrf.mxu0
        %v5690 = vadd.f32 %v5459, %v5689
        %5691 = vmatmul.bf16.gmra.mxu0 %v3227
        %v5692 = vpop.f32.mrf.mxu0
        %v5693 = vadd.f32 %v5462, %v5692
        %v5694 = vpop.f32.mrf.mxu0
        %v5695 = vadd.f32 %v5464, %v5694
        %5696 = vmatmul.bf16.gmra.mxu0 %v3230
        %v5697 = vpop.f32.mrf.mxu0
        %v5698 = vadd.f32 %v5467, %v5697
        %v5699 = vpop.f32.mrf.mxu0
        %v5700 = vadd.f32 %v5469, %v5699
        %5701 = vmatmul.bf16.gmra.mxu0 %v3233
        %v5702 = vpop.f32.mrf.mxu0
        %v5703 = vadd.f32 %v5472, %v5702
        %v5704 = vpop.f32.mrf.mxu0
        %v5705 = vadd.f32 %v5474, %v5704
        %5706 = vmatmul.bf16.gmra.mxu0 %v3236
        %v5707 = vpop.f32.mrf.mxu0
        %v5708 = vadd.f32 %v5477, %v5707
        %v5709 = vpop.f32.mrf.mxu0
        %v5710 = vadd.f32 %v5479, %v5709
        %5711 = vmatmul.bf16.gmra.mxu0 %v3239
        %v5712 = vpop.f32.mrf.mxu0
        %v5713 = vadd.f32 %v5482, %v5712
        %v5714 = vpop.f32.mrf.mxu0
        %v5715 = vadd.f32 %v5484, %v5714
        %5716 = vmatmul.bf16.gmra.mxu0 %v3242
        %v5717 = vpop.f32.mrf.mxu0
        %v5718 = vadd.f32 %v5487, %v5717
        %v5719 = vpop.f32.mrf.mxu0
        %v5720 = vadd.f32 %v5489, %v5719
        %5721 = vmatmul.bf16.gmra.mxu0 %v3245
        %v5722 = vpop.f32.mrf.mxu0
        %v5723 = vadd.f32 %v5492, %v5722
        %v5724 = vpop.f32.mrf.mxu0
        %v5725 = vadd.f32 %v5494, %v5724
        %5726 = vmatmul.bf16.gmra.mxu0 %v3248
        %v5727 = vpop.f32.mrf.mxu0
        %v5728 = vadd.f32 %v5497, %v5727
        %v5729 = vpop.f32.mrf.mxu0
        %v5730 = vadd.f32 %v5499, %v5729
        %5731 = vmatmul.bf16.gmra.mxu0 %v3251
        %v5732 = vpop.f32.mrf.mxu0
        %v5733 = vadd.f32 %v5502, %v5732
        %v5734 = vpop.f32.mrf.mxu0
        %v5735 = vadd.f32 %v5504, %v5734
        %5736 = vmatmul.bf16.gmra.mxu0 %v3254
        %v5737 = vpop.f32.mrf.mxu0
        %v5738 = vadd.f32 %v5507, %v5737
        %v5739 = vpop.f32.mrf.mxu0
        %v5740 = vadd.f32 %v5509, %v5739
        %5741 = vmatmul.bf16.gmra.mxu0 %v3257
        %v5742 = vpop.f32.mrf.mxu0
        %v5743 = vadd.f32 %v5512, %v5742
        %v5744 = vpop.f32.mrf.mxu0
        %v5745 = vadd.f32 %v5514, %v5744
        %5746 = vmatmul.bf16.gmra.mxu0 %v3260
        %v5747 = vpop.f32.mrf.mxu0
        %v5748 = vadd.f32 %v5517, %v5747
        %v5749 = vpop.f32.mrf.mxu0
        %v5750 = vadd.f32 %v5519, %v5749
        %5751 = vmatmul.bf16.gmra.mxu0 %v3263
        %v5752 = vpop.f32.mrf.mxu0
        %v5753 = vadd.f32 %v5522, %v5752
        %v5754 = vpop.f32.mrf.mxu0
        %v5755 = vadd.f32 %v5524, %v5754
        %5756 = vmatmul.bf16.gmra.mxu0 %v3266
        %v5757 = vpop.f32.mrf.mxu0
        %v5758 = vadd.f32 %v5527, %v5757
        %v5759 = vpop.f32.mrf.mxu0
        %v5760 = vadd.f32 %v5529, %v5759
        %5761 = vmatmul.bf16.gmra.mxu0 %v3269
        %v5762 = vpop.f32.mrf.mxu0
        %v5763 = vadd.f32 %v5532, %v5762
        %v5764 = vpop.f32.mrf.mxu0
        %v5765 = vadd.f32 %v5534, %v5764
        %5766 = vmatmul.bf16.gmra.mxu0 %v3272
        %v5767 = vpop.f32.mrf.mxu0
        %v5768 = vadd.f32 %v5537, %v5767
        %v5769 = vpop.f32.mrf.mxu0
        %v5770 = vadd.f32 %v5539, %v5769
        %5771 = vdwg.mxu0
        %5772 = vmatpush.bf16.msra.mxu0 %v5622
        %5773 = vmatpush.bf16.msra.mxu0 %v5621
        %5774 = vmatpush.bf16.msra.mxu0 %v5620
        %5775 = vmatpush.bf16.msra.mxu0 %v5619
        %5776 = vmatpush.bf16.msra.mxu0 %v5618
        %5777 = vmatpush.bf16.msra.mxu0 %v5617
        %5778 = vmatpush.bf16.msra.mxu0 %v5616
        %5779 = vmatpush.bf16.msra.mxu0 %v5615
        %5780 = vmatmul.bf16.gmra.mxu0 %v3900
        %v5781 = vpop.f32.mrf.mxu0
        %v5782 = vadd.f32 %v5653, %v5781
        %v5783 = vpop.f32.mrf.mxu0
        %v5784 = vadd.f32 %v5655, %v5783
        %5785 = vmatmul.bf16.gmra.mxu0 %v3207
        %v5786 = vpop.f32.mrf.mxu0
        %v5787 = vadd.f32 %v5658, %v5786
        %v5788 = vpop.f32.mrf.mxu0
        %v5789 = vadd.f32 %v5660, %v5788
        %5790 = vmatmul.bf16.gmra.mxu0 %v3210
        %v5791 = vpop.f32.mrf.mxu0
        %v5792 = vadd.f32 %v5663, %v5791
        %v5793 = vpop.f32.mrf.mxu0
        %v5794 = vadd.f32 %v5665, %v5793
        %5795 = vmatmul.bf16.gmra.mxu0 %v3213
        %v5796 = vpop.f32.mrf.mxu0
        %v5797 = vadd.f32 %v5668, %v5796
        %v5798 = vpop.f32.mrf.mxu0
        %v5799 = vadd.f32 %v5670, %v5798
        %5800 = vmatmul.bf16.gmra.mxu0 %v3216
        %v5801 = vpop.f32.mrf.mxu0
        %v5802 = vadd.f32 %v5673, %v5801
        %v5803 = vpop.f32.mrf.mxu0
        %v5804 = vadd.f32 %v5675, %v5803
        %5805 = vmatmul.bf16.gmra.mxu0 %v3219
        %v5806 = vpop.f32.mrf.mxu0
        %v5807 = vadd.f32 %v5678, %v5806
        %v5808 = vpop.f32.mrf.mxu0
        %v5809 = vadd.f32 %v5680, %v5808
        %5810 = vmatmul.bf16.gmra.mxu0 %v3222
        %v5811 = vpop.f32.mrf.mxu0
        %v5812 = vadd.f32 %v5683, %v5811
        %v5813 = vpop.f32.mrf.mxu0
        %v5814 = vadd.f32 %v5685, %v5813
        %5815 = vmatmul.bf16.gmra.mxu0 %v3225
        %v5816 = vpop.f32.mrf.mxu0
        %v5817 = vadd.f32 %v5688, %v5816
        %v5818 = vpop.f32.mrf.mxu0
        %v5819 = vadd.f32 %v5690, %v5818
        %5820 = vmatmul.bf16.gmra.mxu0 %v3228
        %v5821 = vpop.f32.mrf.mxu0
        %v5822 = vadd.f32 %v5693, %v5821
        %v5823 = vpop.f32.mrf.mxu0
        %v5824 = vadd.f32 %v5695, %v5823
        %5825 = vmatmul.bf16.gmra.mxu0 %v3231
        %v5826 = vpop.f32.mrf.mxu0
        %v5827 = vadd.f32 %v5698, %v5826
        %v5828 = vpop.f32.mrf.mxu0
        %v5829 = vadd.f32 %v5700, %v5828
        %5830 = vmatmul.bf16.gmra.mxu0 %v3234
        %v5831 = vpop.f32.mrf.mxu0
        %v5832 = vadd.f32 %v5703, %v5831
        %v5833 = vpop.f32.mrf.mxu0
        %v5834 = vadd.f32 %v5705, %v5833
        %5835 = vmatmul.bf16.gmra.mxu0 %v3237
        %v5836 = vpop.f32.mrf.mxu0
        %v5837 = vadd.f32 %v5708, %v5836
        %v5838 = vpop.f32.mrf.mxu0
        %v5839 = vadd.f32 %v5710, %v5838
        %5840 = vmatmul.bf16.gmra.mxu0 %v3240
        %v5841 = vpop.f32.mrf.mxu0
        %v5842 = vadd.f32 %v5713, %v5841
        %v5843 = vpop.f32.mrf.mxu0
        %v5844 = vadd.f32 %v5715, %v5843
        %5845 = vmatmul.bf16.gmra.mxu0 %v3243
        %v5846 = vpop.f32.mrf.mxu0
        %v5847 = vadd.f32 %v5718, %v5846
        %v5848 = vpop.f32.mrf.mxu0
        %v5849 = vadd.f32 %v5720, %v5848
        %5850 = vmatmul.bf16.gmra.mxu0 %v3246
        %v5851 = vpop.f32.mrf.mxu0
        %v5852 = vadd.f32 %v5723, %v5851
        %v5853 = vpop.f32.mrf.mxu0
        %v5854 = vadd.f32 %v5725, %v5853
        %5855 = vmatmul.bf16.gmra.mxu0 %v3249
        %v5856 = vpop.f32.mrf.mxu0
        %v5857 = vadd.f32 %v5728, %v5856
        %v5858 = vpop.f32.mrf.mxu0
        %v5859 = vadd.f32 %v5730, %v5858
        %5860 = vmatmul.bf16.gmra.mxu0 %v3252
        %v5861 = vpop.f32.mrf.mxu0
        %v5862 = vadd.f32 %v5733, %v5861
        %v5863 = vpop.f32.mrf.mxu0
        %v5864 = vadd.f32 %v5735, %v5863
        %5865 = vmatmul.bf16.gmra.mxu0 %v3255
        %v5866 = vpop.f32.mrf.mxu0
        %v5867 = vadd.f32 %v5738, %v5866
        %v5868 = vpop.f32.mrf.mxu0
        %v5869 = vadd.f32 %v5740, %v5868
        %5870 = vmatmul.bf16.gmra.mxu0 %v3258
        %v5871 = vpop.f32.mrf.mxu0
        %v5872 = vadd.f32 %v5743, %v5871
        %v5873 = vpop.f32.mrf.mxu0
        %v5874 = vadd.f32 %v5745, %v5873
        %5875 = vmatmul.bf16.gmra.mxu0 %v3261
        %v5876 = vpop.f32.mrf.mxu0
        %v5877 = vadd.f32 %v5748, %v5876
        %v5878 = vpop.f32.mrf.mxu0
        %v5879 = vadd.f32 %v5750, %v5878
        %5880 = vmatmul.bf16.gmra.mxu0 %v3264
        %v5881 = vpop.f32.mrf.mxu0
        %v5882 = vadd.f32 %v5753, %v5881
        %v5883 = vpop.f32.mrf.mxu0
        %v5884 = vadd.f32 %v5755, %v5883
        %5885 = vmatmul.bf16.gmra.mxu0 %v3267
        %v5886 = vpop.f32.mrf.mxu0
        %v5887 = vadd.f32 %v5758, %v5886
        %v5888 = vpop.f32.mrf.mxu0
        %v5889 = vadd.f32 %v5760, %v5888
        %5890 = vmatmul.bf16.gmra.mxu0 %v3270
        %v5891 = vpop.f32.mrf.mxu0
        %v5892 = vadd.f32 %v5763, %v5891
        %v5893 = vpop.f32.mrf.mxu0
        %v5894 = vadd.f32 %v5765, %v5893
        %5895 = vmatmul.bf16.gmra.mxu0 %v3273
        %v5896 = vpop.f32.mrf.mxu0
        %v5897 = vadd.f32 %v5768, %v5896
        %v5898 = vpop.f32.mrf.mxu0
        %v5899 = vadd.f32 %v5770, %v5898
        %5900 = vdwg.mxu0
        %5901 = vmatpush.bf16.msra.mxu0 0
        %5902 = vmatpush.bf16.msra.mxu0 0
        %5903 = vmatpush.bf16.msra.mxu0 0
        %5904 = vmatpush.bf16.msra.mxu0 0
        %5905 = vmatpush.bf16.msra.mxu0 0
        %5906 = vmatpush.bf16.msra.mxu0 0
        %5907 = vmatpush.bf16.msra.mxu0 0
        %5908 = vmatpush.bf16.msra.mxu0 %v5641
        %5909 = vmatmul.bf16.gmra.mxu0 %v4004
        %v5910 = vpop.f32.mrf.mxu0
        %v5911 = vadd.f32 %v5782, %v5910
        %v5912 = vpop.f32.mrf.mxu0
        %v5913 = vadd.f32 %v5784, %v5912
        %5914 = vmatmul.bf16.gmra.mxu0 %v3427
        %v5915 = vpop.f32.mrf.mxu0
        %v5916 = vadd.f32 %v5787, %v5915
        %v5917 = vpop.f32.mrf.mxu0
        %v5918 = vadd.f32 %v5789, %v5917
        %5919 = vmatmul.bf16.gmra.mxu0 %v3430
        %v5920 = vpop.f32.mrf.mxu0
        %v5921 = vadd.f32 %v5792, %v5920
        %v5922 = vpop.f32.mrf.mxu0
        %v5923 = vadd.f32 %v5794, %v5922
        %5924 = vmatmul.bf16.gmra.mxu0 %v3433
        %v5925 = vpop.f32.mrf.mxu0
        %v5926 = vadd.f32 %v5797, %v5925
        %v5927 = vpop.f32.mrf.mxu0
        %v5928 = vadd.f32 %v5799, %v5927
        %5929 = vmatmul.bf16.gmra.mxu0 %v3436
        %v5930 = vpop.f32.mrf.mxu0
        %v5931 = vadd.f32 %v5802, %v5930
        %v5932 = vpop.f32.mrf.mxu0
        %v5933 = vadd.f32 %v5804, %v5932
        %5934 = vmatmul.bf16.gmra.mxu0 %v3439
        %v5935 = vpop.f32.mrf.mxu0
        %v5936 = vadd.f32 %v5807, %v5935
        %v5937 = vpop.f32.mrf.mxu0
        %v5938 = vadd.f32 %v5809, %v5937
        %5939 = vmatmul.bf16.gmra.mxu0 %v3442
        %v5940 = vpop.f32.mrf.mxu0
        %v5941 = vadd.f32 %v5812, %v5940
        %v5942 = vpop.f32.mrf.mxu0
        %v5943 = vadd.f32 %v5814, %v5942
        %5944 = vmatmul.bf16.gmra.mxu0 %v3445
        %v5945 = vpop.f32.mrf.mxu0
        %v5946 = vadd.f32 %v5817, %v5945
        %v5947 = vpop.f32.mrf.mxu0
        %v5948 = vadd.f32 %v5819, %v5947
        %5949 = vmatmul.bf16.gmra.mxu0 %v3448
        %v5950 = vpop.f32.mrf.mxu0
        %v5951 = vadd.f32 %v5822, %v5950
        %v5952 = vpop.f32.mrf.mxu0
        %v5953 = vadd.f32 %v5824, %v5952
        %5954 = vmatmul.bf16.gmra.mxu0 %v3451
        %v5955 = vpop.f32.mrf.mxu0
        %v5956 = vadd.f32 %v5827, %v5955
        %v5957 = vpop.f32.mrf.mxu0
        %v5958 = vadd.f32 %v5829, %v5957
        %5959 = vmatmul.bf16.gmra.mxu0 %v3454
        %v5960 = vpop.f32.mrf.mxu0
        %v5961 = vadd.f32 %v5832, %v5960
        %v5962 = vpop.f32.mrf.mxu0
        %v5963 = vadd.f32 %v5834, %v5962
        %5964 = vmatmul.bf16.gmra.mxu0 %v3457
        %v5965 = vpop.f32.mrf.mxu0
        %v5966 = vadd.f32 %v5837, %v5965
        %v5967 = vpop.f32.mrf.mxu0
        %v5968 = vadd.f32 %v5839, %v5967
        %5969 = vmatmul.bf16.gmra.mxu0 %v3460
        %v5970 = vpop.f32.mrf.mxu0
        %v5971 = vadd.f32 %v5842, %v5970
        %v5972 = vpop.f32.mrf.mxu0
        %v5973 = vadd.f32 %v5844, %v5972
        %5974 = vmatmul.bf16.gmra.mxu0 %v3463
        %v5975 = vpop.f32.mrf.mxu0
        %v5976 = vadd.f32 %v5847, %v5975
        %v5977 = vpop.f32.mrf.mxu0
        %v5978 = vadd.f32 %v5849, %v5977
        %5979 = vmatmul.bf16.gmra.mxu0 %v3466
        %v5980 = vpop.f32.mrf.mxu0
        %v5981 = vadd.f32 %v5852, %v5980
        %v5982 = vpop.f32.mrf.mxu0
        %v5983 = vadd.f32 %v5854, %v5982
        %5984 = vmatmul.bf16.gmra.mxu0 %v3469
        %v5985 = vpop.f32.mrf.mxu0
        %v5986 = vadd.f32 %v5857, %v5985
        %v5987 = vpop.f32.mrf.mxu0
        %v5988 = vadd.f32 %v5859, %v5987
        %5989 = vmatmul.bf16.gmra.mxu0 %v3472
        %v5990 = vpop.f32.mrf.mxu0
        %v5991 = vadd.f32 %v5862, %v5990
        %v5992 = vpop.f32.mrf.mxu0
        %v5993 = vadd.f32 %v5864, %v5992
        %5994 = vmatmul.bf16.gmra.mxu0 %v3475
        %v5995 = vpop.f32.mrf.mxu0
        %v5996 = vadd.f32 %v5867, %v5995
        %v5997 = vpop.f32.mrf.mxu0
        %v5998 = vadd.f32 %v5869, %v5997
        %5999 = vmatmul.bf16.gmra.mxu0 %v3478
        %v6000 = vpop.f32.mrf.mxu0
        %v6001 = vadd.f32 %v5872, %v6000
        %v6002 = vpop.f32.mrf.mxu0
        %v6003 = vadd.f32 %v5874, %v6002
        %6004 = vmatmul.bf16.gmra.mxu0 %v3481
        %v6005 = vpop.f32.mrf.mxu0
        %v6006 = vadd.f32 %v5877, %v6005
        %v6007 = vpop.f32.mrf.mxu0
        %v6008 = vadd.f32 %v5879, %v6007
        %6009 = vmatmul.bf16.gmra.mxu0 %v3484
        %v6010 = vpop.f32.mrf.mxu0
        %v6011 = vadd.f32 %v5882, %v6010
        %v6012 = vpop.f32.mrf.mxu0
        %v6013 = vadd.f32 %v5884, %v6012
        %6014 = vmatmul.bf16.gmra.mxu0 %v3487
        %v6015 = vpop.f32.mrf.mxu0
        %v6016 = vadd.f32 %v5887, %v6015
        %v6017 = vpop.f32.mrf.mxu0
        %v6018 = vadd.f32 %v5889, %v6017
        %6019 = vmatmul.bf16.gmra.mxu0 %v3490
        %v6020 = vpop.f32.mrf.mxu0
        %v6021 = vadd.f32 %v5892, %v6020
        %v6022 = vpop.f32.mrf.mxu0
        %v6023 = vadd.f32 %v5894, %v6022
        %6024 = vmatmul.bf16.gmra.mxu0 %v3493
        %v6025 = vpop.f32.mrf.mxu0
        %v6026 = vadd.f32 %v5897, %v6025
        %v6027 = vpop.f32.mrf.mxu0
        %v6028 = vadd.f32 %v5899, %v6027
        %6029 = vdwg.mxu0
        %s6030 = scalar_lea.vmem %s3, 264
        %v6031 = vld [vmem:[%s6030] sm:$0xf]
        %v6032 = vld [vmem:[%s6030 + $0x4] sm:$0xf]
        %v6033 = vld [vmem:[%s6030 + $0x8] sm:$0xf]
        %v6034 = vld [vmem:[%s6030 + $0xc] sm:$0xf]
        %v6035 = vld [vmem:[%s6030 + $0x10] sm:$0xf]
        %v6036 = vld [vmem:[%s6030 + $0x14] sm:$0xf]
        %v6037 = vld [vmem:[%s6030 + $0x18] sm:$0xf]
        %v6038 = vld [vmem:[%s6030 + $0x1c] sm:$0xf]
        %v6039 = vld [vmem:[%s6030 + $0x20] sm:$0xf]
        %v6040 = vld [vmem:[%s6030 + $0x24] sm:$0xf]
        %v6041 = vld [vmem:[%s6030 + $0x28] sm:$0xf]
        %v6042 = vld [vmem:[%s6030 + $0x2c] sm:$0xf]
        %v6043 = vld [vmem:[%s6030 + $0x30] sm:$0xf]
        %v6044 = vld [vmem:[%s6030 + $0x34] sm:$0xf]
        %v6045 = vld [vmem:[%s6030 + $0x38] sm:$0xf]
        %v6046 = vld [vmem:[%s6030 + $0x3c] sm:$0xf]
        %v6047 = vld [vmem:[%s6030 + $0x40] sm:$0xf]
        %v6048 = vld [vmem:[%s6030 + $0x44] sm:$0xf]
        %v6049 = vld [vmem:[%s6030 + $0x48] sm:$0xf]
        %v6050 = vld [vmem:[%s6030 + $0x4c] sm:$0xf]
        %v6051 = vld [vmem:[%s6030 + $0x50] sm:$0xf]
        %v6052 = vld [vmem:[%s6030 + $0x54] sm:$0xf]
        %v6053 = vld [vmem:[%s6030 + $0x58] sm:$0xf]
        %v6054 = vld [vmem:[%s6030 + $0x5c] sm:$0xf]
        %v6055 = vld [vmem:[%s6030 + $0x60] sm:$0xf]
        %v6056 = vld [vmem:[%s6030 + $0x64] sm:$0xf]
        %v6057 = vld [vmem:[%s6030 + $0x68] sm:$0xf]
        %v6058 = vld [vmem:[%s6030 + $0x6c] sm:$0xf]
        %v6059 = vld [vmem:[%s6030 + $0x70] sm:$0xf]
        %v6060 = vld [vmem:[%s6030 + $0x74] sm:$0xf]
        %v6061 = vld [vmem:[%s6030 + $0x78] sm:$0xf]
        %v6062 = vld [vmem:[%s6030 + $0x7c] sm:$0xf]
        %v6063 = vld [vmem:[%s6030 + $0x80] sm:$0x3]
        %v6097 = vunpack.c.l.b16 %v6031
        %v6098 = vunpack.c.l.b16 %v6032
        %v6099 = vunpack.c.l.b16 %v6033
        %v6100 = vunpack.c.l.b16 %v6034
        %v6101 = vunpack.c.l.b16 %v6035
        %v6102 = vunpack.c.l.b16 %v6036
        %v6103 = vunpack.c.l.b16 %v6037
        %v6104 = vunpack.c.l.b16 %v6038
        %v6105 = vunpack.c.l.b16 %v6039
        %v6106 = vunpack.c.l.b16 %v6040
        %v6107 = vunpack.c.l.b16 %v6041
        %v6108 = vunpack.c.l.b16 %v6042
        %v6109 = vunpack.c.l.b16 %v6043
        %v6110 = vunpack.c.l.b16 %v6044
        %v6111 = vunpack.c.l.b16 %v6045
        %v6112 = vunpack.c.l.b16 %v6046
        %v6113 = vunpack.c.l.b16 %v6047
        %v6114 = vunpack.c.l.b16 %v6048
        %v6115 = vunpack.c.l.b16 %v6049
        %v6116 = vunpack.c.l.b16 %v6050
        %v6117 = vunpack.c.l.b16 %v6051
        %v6118 = vunpack.c.l.b16 %v6052
        %v6119 = vunpack.c.l.b16 %v6053
        %v6120 = vunpack.c.l.b16 %v6054
        %v6121 = vunpack.c.l.b16 %v6055
        %v6122 = vunpack.c.l.b16 %v6056
        %v6123 = vunpack.c.l.b16 %v6057
        %v6124 = vunpack.c.l.b16 %v6058
        %v6125 = vunpack.c.l.b16 %v6059
        %v6126 = vunpack.c.l.b16 %v6060
        %v6127 = vunpack.c.l.b16 %v6061
        %v6128 = vunpack.c.l.b16 %v6062
        %v6129 = vunpack.c.l.b16 %v6063
        %v6130 = vpack.c.b16 %v6098, %v6097
        %v6131 = vpack.c.b16 %v6100, %v6099
        %v6132 = vpack.c.b16 %v6102, %v6101
        %v6133 = vpack.c.b16 %v6104, %v6103
        %v6134 = vpack.c.b16 %v6106, %v6105
        %v6135 = vpack.c.b16 %v6108, %v6107
        %v6136 = vpack.c.b16 %v6110, %v6109
        %v6137 = vpack.c.b16 %v6112, %v6111
        %v6138 = vpack.c.b16 %v6114, %v6113
        %v6139 = vpack.c.b16 %v6116, %v6115
        %v6140 = vpack.c.b16 %v6118, %v6117
        %v6141 = vpack.c.b16 %v6120, %v6119
        %v6142 = vpack.c.b16 %v6122, %v6121
        %v6143 = vpack.c.b16 %v6124, %v6123
        %v6144 = vpack.c.b16 %v6126, %v6125
        %v6145 = vpack.c.b16 %v6128, %v6127
        %v6146 = vpack.c.b16 %v6129, %v6129
        %v6164 = vsel %vm3498, %v6146, 0
        %6166 = vmatpush.bf16.msra.mxu0 %v6137
        %6167 = vmatpush.bf16.msra.mxu0 %v6136
        %6168 = vmatpush.bf16.msra.mxu0 %v6135
        %6169 = vmatpush.bf16.msra.mxu0 %v6134
        %6170 = vmatpush.bf16.msra.mxu0 %v6133
        %6171 = vmatpush.bf16.msra.mxu0 %v6132
        %6172 = vmatpush.bf16.msra.mxu0 %v6131
        %6173 = vmatpush.bf16.msra.mxu0 %v6130
        %6174 = vmatmul.bf16.gmra.mxu0 %v3209
        %v6175 = vpop.f32.mrf.mxu0
        %v6176 = vadd.f32 0.0, %v6175
        %v6177 = vpop.f32.mrf.mxu0
        %v6178 = vadd.f32 0.0, %v6177
        %6179 = vmatmul.bf16.gmra.mxu0 %v3212
        %v6180 = vpop.f32.mrf.mxu0
        %v6181 = vadd.f32 0.0, %v6180
        %v6182 = vpop.f32.mrf.mxu0
        %v6183 = vadd.f32 0.0, %v6182
        %6184 = vmatmul.bf16.gmra.mxu0 %v3215
        %v6185 = vpop.f32.mrf.mxu0
        %v6186 = vadd.f32 0.0, %v6185
        %v6187 = vpop.f32.mrf.mxu0
        %v6188 = vadd.f32 0.0, %v6187
        %6189 = vmatmul.bf16.gmra.mxu0 %v3218
        %v6190 = vpop.f32.mrf.mxu0
        %v6191 = vadd.f32 0.0, %v6190
        %v6192 = vpop.f32.mrf.mxu0
        %v6193 = vadd.f32 0.0, %v6192
        %6194 = vmatmul.bf16.gmra.mxu0 %v3221
        %v6195 = vpop.f32.mrf.mxu0
        %v6196 = vadd.f32 0.0, %v6195
        %v6197 = vpop.f32.mrf.mxu0
        %v6198 = vadd.f32 0.0, %v6197
        %6199 = vmatmul.bf16.gmra.mxu0 %v3224
        %v6200 = vpop.f32.mrf.mxu0
        %v6201 = vadd.f32 0.0, %v6200
        %v6202 = vpop.f32.mrf.mxu0
        %v6203 = vadd.f32 0.0, %v6202
        %6204 = vmatmul.bf16.gmra.mxu0 %v3227
        %v6205 = vpop.f32.mrf.mxu0
        %v6206 = vadd.f32 0.0, %v6205
        %v6207 = vpop.f32.mrf.mxu0
        %v6208 = vadd.f32 0.0, %v6207
        %6209 = vmatmul.bf16.gmra.mxu0 %v3230
        %v6210 = vpop.f32.mrf.mxu0
        %v6211 = vadd.f32 0.0, %v6210
        %v6212 = vpop.f32.mrf.mxu0
        %v6213 = vadd.f32 0.0, %v6212
        %6214 = vmatmul.bf16.gmra.mxu0 %v3233
        %v6215 = vpop.f32.mrf.mxu0
        %v6216 = vadd.f32 0.0, %v6215
        %v6217 = vpop.f32.mrf.mxu0
        %v6218 = vadd.f32 0.0, %v6217
        %6219 = vmatmul.bf16.gmra.mxu0 %v3236
        %v6220 = vpop.f32.mrf.mxu0
        %v6221 = vadd.f32 0.0, %v6220
        %v6222 = vpop.f32.mrf.mxu0
        %v6223 = vadd.f32 0.0, %v6222
        %6224 = vmatmul.bf16.gmra.mxu0 %v3239
        %v6225 = vpop.f32.mrf.mxu0
        %v6226 = vadd.f32 0.0, %v6225
        %v6227 = vpop.f32.mrf.mxu0
        %v6228 = vadd.f32 0.0, %v6227
        %6229 = vmatmul.bf16.gmra.mxu0 %v3242
        %v6230 = vpop.f32.mrf.mxu0
        %v6231 = vadd.f32 0.0, %v6230
        %v6232 = vpop.f32.mrf.mxu0
        %v6233 = vadd.f32 0.0, %v6232
        %6234 = vmatmul.bf16.gmra.mxu0 %v3245
        %v6235 = vpop.f32.mrf.mxu0
        %v6236 = vadd.f32 0.0, %v6235
        %v6237 = vpop.f32.mrf.mxu0
        %v6238 = vadd.f32 0.0, %v6237
        %6239 = vmatmul.bf16.gmra.mxu0 %v3248
        %v6240 = vpop.f32.mrf.mxu0
        %v6241 = vadd.f32 0.0, %v6240
        %v6242 = vpop.f32.mrf.mxu0
        %v6243 = vadd.f32 0.0, %v6242
        %6244 = vmatmul.bf16.gmra.mxu0 %v3251
        %v6245 = vpop.f32.mrf.mxu0
        %v6246 = vadd.f32 0.0, %v6245
        %v6247 = vpop.f32.mrf.mxu0
        %v6248 = vadd.f32 0.0, %v6247
        %6249 = vmatmul.bf16.gmra.mxu0 %v3254
        %v6250 = vpop.f32.mrf.mxu0
        %v6251 = vadd.f32 0.0, %v6250
        %v6252 = vpop.f32.mrf.mxu0
        %v6253 = vadd.f32 0.0, %v6252
        %6254 = vmatmul.bf16.gmra.mxu0 %v3257
        %v6255 = vpop.f32.mrf.mxu0
        %v6256 = vadd.f32 0.0, %v6255
        %v6257 = vpop.f32.mrf.mxu0
        %v6258 = vadd.f32 0.0, %v6257
        %6259 = vmatmul.bf16.gmra.mxu0 %v3260
        %v6260 = vpop.f32.mrf.mxu0
        %v6261 = vadd.f32 0.0, %v6260
        %v6262 = vpop.f32.mrf.mxu0
        %v6263 = vadd.f32 0.0, %v6262
        %6264 = vmatmul.bf16.gmra.mxu0 %v3263
        %v6265 = vpop.f32.mrf.mxu0
        %v6266 = vadd.f32 0.0, %v6265
        %v6267 = vpop.f32.mrf.mxu0
        %v6268 = vadd.f32 0.0, %v6267
        %6269 = vmatmul.bf16.gmra.mxu0 %v3266
        %v6270 = vpop.f32.mrf.mxu0
        %v6271 = vadd.f32 0.0, %v6270
        %v6272 = vpop.f32.mrf.mxu0
        %v6273 = vadd.f32 0.0, %v6272
        %6274 = vmatmul.bf16.gmra.mxu0 %v3269
        %v6275 = vpop.f32.mrf.mxu0
        %v6276 = vadd.f32 0.0, %v6275
        %v6277 = vpop.f32.mrf.mxu0
        %v6278 = vadd.f32 0.0, %v6277
        %6279 = vmatmul.bf16.gmra.mxu0 %v3272
        %v6280 = vpop.f32.mrf.mxu0
        %v6281 = vadd.f32 0.0, %v6280
        %v6282 = vpop.f32.mrf.mxu0
        %v6283 = vadd.f32 0.0, %v6282
        %6284 = vmatmul.bf16.gmra.mxu0 %v3275
        %v6285 = vpop.f32.mrf.mxu0
        %v6286 = vadd.f32 0.0, %v6285
        %v6287 = vpop.f32.mrf.mxu0
        %v6288 = vadd.f32 0.0, %v6287
        %6289 = vmatmul.bf16.gmra.mxu0 %v4440
        %v6290 = vpop.f32.mrf.mxu0
        %v6291 = vadd.f32 0.0, %v6290
        %v6292 = vpop.f32.mrf.mxu0
        %v6293 = vadd.f32 0.0, %v6292
        %6294 = vdwg.mxu0
        %6295 = vmatpush.bf16.msra.mxu0 %v6145
        %6296 = vmatpush.bf16.msra.mxu0 %v6144
        %6297 = vmatpush.bf16.msra.mxu0 %v6143
        %6298 = vmatpush.bf16.msra.mxu0 %v6142
        %6299 = vmatpush.bf16.msra.mxu0 %v6141
        %6300 = vmatpush.bf16.msra.mxu0 %v6140
        %6301 = vmatpush.bf16.msra.mxu0 %v6139
        %6302 = vmatpush.bf16.msra.mxu0 %v6138
        %6303 = vmatmul.bf16.gmra.mxu0 %v3210
        %v6304 = vpop.f32.mrf.mxu0
        %v6305 = vadd.f32 %v6176, %v6304
        %v6306 = vpop.f32.mrf.mxu0
        %v6307 = vadd.f32 %v6178, %v6306
        %6308 = vmatmul.bf16.gmra.mxu0 %v3213
        %v6309 = vpop.f32.mrf.mxu0
        %v6310 = vadd.f32 %v6181, %v6309
        %v6311 = vpop.f32.mrf.mxu0
        %v6312 = vadd.f32 %v6183, %v6311
        %6313 = vmatmul.bf16.gmra.mxu0 %v3216
        %v6314 = vpop.f32.mrf.mxu0
        %v6315 = vadd.f32 %v6186, %v6314
        %v6316 = vpop.f32.mrf.mxu0
        %v6317 = vadd.f32 %v6188, %v6316
        %6318 = vmatmul.bf16.gmra.mxu0 %v3219
        %v6319 = vpop.f32.mrf.mxu0
        %v6320 = vadd.f32 %v6191, %v6319
        %v6321 = vpop.f32.mrf.mxu0
        %v6322 = vadd.f32 %v6193, %v6321
        %6323 = vmatmul.bf16.gmra.mxu0 %v3222
        %v6324 = vpop.f32.mrf.mxu0
        %v6325 = vadd.f32 %v6196, %v6324
        %v6326 = vpop.f32.mrf.mxu0
        %v6327 = vadd.f32 %v6198, %v6326
        %6328 = vmatmul.bf16.gmra.mxu0 %v3225
        %v6329 = vpop.f32.mrf.mxu0
        %v6330 = vadd.f32 %v6201, %v6329
        %v6331 = vpop.f32.mrf.mxu0
        %v6332 = vadd.f32 %v6203, %v6331
        %6333 = vmatmul.bf16.gmra.mxu0 %v3228
        %v6334 = vpop.f32.mrf.mxu0
        %v6335 = vadd.f32 %v6206, %v6334
        %v6336 = vpop.f32.mrf.mxu0
        %v6337 = vadd.f32 %v6208, %v6336
        %6338 = vmatmul.bf16.gmra.mxu0 %v3231
        %v6339 = vpop.f32.mrf.mxu0
        %v6340 = vadd.f32 %v6211, %v6339
        %v6341 = vpop.f32.mrf.mxu0
        %v6342 = vadd.f32 %v6213, %v6341
        %6343 = vmatmul.bf16.gmra.mxu0 %v3234
        %v6344 = vpop.f32.mrf.mxu0
        %v6345 = vadd.f32 %v6216, %v6344
        %v6346 = vpop.f32.mrf.mxu0
        %v6347 = vadd.f32 %v6218, %v6346
        %6348 = vmatmul.bf16.gmra.mxu0 %v3237
        %v6349 = vpop.f32.mrf.mxu0
        %v6350 = vadd.f32 %v6221, %v6349
        %v6351 = vpop.f32.mrf.mxu0
        %v6352 = vadd.f32 %v6223, %v6351
        %6353 = vmatmul.bf16.gmra.mxu0 %v3240
        %v6354 = vpop.f32.mrf.mxu0
        %v6355 = vadd.f32 %v6226, %v6354
        %v6356 = vpop.f32.mrf.mxu0
        %v6357 = vadd.f32 %v6228, %v6356
        %6358 = vmatmul.bf16.gmra.mxu0 %v3243
        %v6359 = vpop.f32.mrf.mxu0
        %v6360 = vadd.f32 %v6231, %v6359
        %v6361 = vpop.f32.mrf.mxu0
        %v6362 = vadd.f32 %v6233, %v6361
        %6363 = vmatmul.bf16.gmra.mxu0 %v3246
        %v6364 = vpop.f32.mrf.mxu0
        %v6365 = vadd.f32 %v6236, %v6364
        %v6366 = vpop.f32.mrf.mxu0
        %v6367 = vadd.f32 %v6238, %v6366
        %6368 = vmatmul.bf16.gmra.mxu0 %v3249
        %v6369 = vpop.f32.mrf.mxu0
        %v6370 = vadd.f32 %v6241, %v6369
        %v6371 = vpop.f32.mrf.mxu0
        %v6372 = vadd.f32 %v6243, %v6371
        %6373 = vmatmul.bf16.gmra.mxu0 %v3252
        %v6374 = vpop.f32.mrf.mxu0
        %v6375 = vadd.f32 %v6246, %v6374
        %v6376 = vpop.f32.mrf.mxu0
        %v6377 = vadd.f32 %v6248, %v6376
        %6378 = vmatmul.bf16.gmra.mxu0 %v3255
        %v6379 = vpop.f32.mrf.mxu0
        %v6380 = vadd.f32 %v6251, %v6379
        %v6381 = vpop.f32.mrf.mxu0
        %v6382 = vadd.f32 %v6253, %v6381
        %6383 = vmatmul.bf16.gmra.mxu0 %v3258
        %v6384 = vpop.f32.mrf.mxu0
        %v6385 = vadd.f32 %v6256, %v6384
        %v6386 = vpop.f32.mrf.mxu0
        %v6387 = vadd.f32 %v6258, %v6386
        %6388 = vmatmul.bf16.gmra.mxu0 %v3261
        %v6389 = vpop.f32.mrf.mxu0
        %v6390 = vadd.f32 %v6261, %v6389
        %v6391 = vpop.f32.mrf.mxu0
        %v6392 = vadd.f32 %v6263, %v6391
        %6393 = vmatmul.bf16.gmra.mxu0 %v3264
        %v6394 = vpop.f32.mrf.mxu0
        %v6395 = vadd.f32 %v6266, %v6394
        %v6396 = vpop.f32.mrf.mxu0
        %v6397 = vadd.f32 %v6268, %v6396
        %6398 = vmatmul.bf16.gmra.mxu0 %v3267
        %v6399 = vpop.f32.mrf.mxu0
        %v6400 = vadd.f32 %v6271, %v6399
        %v6401 = vpop.f32.mrf.mxu0
        %v6402 = vadd.f32 %v6273, %v6401
        %6403 = vmatmul.bf16.gmra.mxu0 %v3270
        %v6404 = vpop.f32.mrf.mxu0
        %v6405 = vadd.f32 %v6276, %v6404
        %v6406 = vpop.f32.mrf.mxu0
        %v6407 = vadd.f32 %v6278, %v6406
        %6408 = vmatmul.bf16.gmra.mxu0 %v3273
        %v6409 = vpop.f32.mrf.mxu0
        %v6410 = vadd.f32 %v6281, %v6409
        %v6411 = vpop.f32.mrf.mxu0
        %v6412 = vadd.f32 %v6283, %v6411
        %6413 = vmatmul.bf16.gmra.mxu0 %v3276
        %v6414 = vpop.f32.mrf.mxu0
        %v6415 = vadd.f32 %v6286, %v6414
        %v6416 = vpop.f32.mrf.mxu0
        %v6417 = vadd.f32 %v6288, %v6416
        %6418 = vmatmul.bf16.gmra.mxu0 %v4441
        %v6419 = vpop.f32.mrf.mxu0
        %v6420 = vadd.f32 %v6291, %v6419
        %v6421 = vpop.f32.mrf.mxu0
        %v6422 = vadd.f32 %v6293, %v6421
        %6423 = vdwg.mxu0
        %6424 = vmatpush.bf16.msra.mxu0 0
        %6425 = vmatpush.bf16.msra.mxu0 0
        %6426 = vmatpush.bf16.msra.mxu0 0
        %6427 = vmatpush.bf16.msra.mxu0 0
        %6428 = vmatpush.bf16.msra.mxu0 0
        %6429 = vmatpush.bf16.msra.mxu0 0
        %6430 = vmatpush.bf16.msra.mxu0 0
        %6431 = vmatpush.bf16.msra.mxu0 %v6164
        %6432 = vmatmul.bf16.gmra.mxu0 %v3430
        %v6433 = vpop.f32.mrf.mxu0
        %v6434 = vadd.f32 %v6305, %v6433
        %v6435 = vpop.f32.mrf.mxu0
        %v6436 = vadd.f32 %v6307, %v6435
        %6437 = vmatmul.bf16.gmra.mxu0 %v3433
        %v6438 = vpop.f32.mrf.mxu0
        %v6439 = vadd.f32 %v6310, %v6438
        %v6440 = vpop.f32.mrf.mxu0
        %v6441 = vadd.f32 %v6312, %v6440
        %6442 = vmatmul.bf16.gmra.mxu0 %v3436
        %v6443 = vpop.f32.mrf.mxu0
        %v6444 = vadd.f32 %v6315, %v6443
        %v6445 = vpop.f32.mrf.mxu0
        %v6446 = vadd.f32 %v6317, %v6445
        %6447 = vmatmul.bf16.gmra.mxu0 %v3439
        %v6448 = vpop.f32.mrf.mxu0
        %v6449 = vadd.f32 %v6320, %v6448
        %v6450 = vpop.f32.mrf.mxu0
        %v6451 = vadd.f32 %v6322, %v6450
        %6452 = vmatmul.bf16.gmra.mxu0 %v3442
        %v6453 = vpop.f32.mrf.mxu0
        %v6454 = vadd.f32 %v6325, %v6453
        %v6455 = vpop.f32.mrf.mxu0
        %v6456 = vadd.f32 %v6327, %v6455
        %6457 = vmatmul.bf16.gmra.mxu0 %v3445
        %v6458 = vpop.f32.mrf.mxu0
        %v6459 = vadd.f32 %v6330, %v6458
        %v6460 = vpop.f32.mrf.mxu0
        %v6461 = vadd.f32 %v6332, %v6460
        %6462 = vmatmul.bf16.gmra.mxu0 %v3448
        %v6463 = vpop.f32.mrf.mxu0
        %v6464 = vadd.f32 %v6335, %v6463
        %v6465 = vpop.f32.mrf.mxu0
        %v6466 = vadd.f32 %v6337, %v6465
        %6467 = vmatmul.bf16.gmra.mxu0 %v3451
        %v6468 = vpop.f32.mrf.mxu0
        %v6469 = vadd.f32 %v6340, %v6468
        %v6470 = vpop.f32.mrf.mxu0
        %v6471 = vadd.f32 %v6342, %v6470
        %6472 = vmatmul.bf16.gmra.mxu0 %v3454
        %v6473 = vpop.f32.mrf.mxu0
        %v6474 = vadd.f32 %v6345, %v6473
        %v6475 = vpop.f32.mrf.mxu0
        %v6476 = vadd.f32 %v6347, %v6475
        %6477 = vmatmul.bf16.gmra.mxu0 %v3457
        %v6478 = vpop.f32.mrf.mxu0
        %v6479 = vadd.f32 %v6350, %v6478
        %v6480 = vpop.f32.mrf.mxu0
        %v6481 = vadd.f32 %v6352, %v6480
        %6482 = vmatmul.bf16.gmra.mxu0 %v3460
        %v6483 = vpop.f32.mrf.mxu0
        %v6484 = vadd.f32 %v6355, %v6483
        %v6485 = vpop.f32.mrf.mxu0
        %v6486 = vadd.f32 %v6357, %v6485
        %6487 = vmatmul.bf16.gmra.mxu0 %v3463
        %v6488 = vpop.f32.mrf.mxu0
        %v6489 = vadd.f32 %v6360, %v6488
        %v6490 = vpop.f32.mrf.mxu0
        %v6491 = vadd.f32 %v6362, %v6490
        %6492 = vmatmul.bf16.gmra.mxu0 %v3466
        %v6493 = vpop.f32.mrf.mxu0
        %v6494 = vadd.f32 %v6365, %v6493
        %v6495 = vpop.f32.mrf.mxu0
        %v6496 = vadd.f32 %v6367, %v6495
        %6497 = vmatmul.bf16.gmra.mxu0 %v3469
        %v6498 = vpop.f32.mrf.mxu0
        %v6499 = vadd.f32 %v6370, %v6498
        %v6500 = vpop.f32.mrf.mxu0
        %v6501 = vadd.f32 %v6372, %v6500
        %6502 = vmatmul.bf16.gmra.mxu0 %v3472
        %v6503 = vpop.f32.mrf.mxu0
        %v6504 = vadd.f32 %v6375, %v6503
        %v6505 = vpop.f32.mrf.mxu0
        %v6506 = vadd.f32 %v6377, %v6505
        %6507 = vmatmul.bf16.gmra.mxu0 %v3475
        %v6508 = vpop.f32.mrf.mxu0
        %v6509 = vadd.f32 %v6380, %v6508
        %v6510 = vpop.f32.mrf.mxu0
        %v6511 = vadd.f32 %v6382, %v6510
        %6512 = vmatmul.bf16.gmra.mxu0 %v3478
        %v6513 = vpop.f32.mrf.mxu0
        %v6514 = vadd.f32 %v6385, %v6513
        %v6515 = vpop.f32.mrf.mxu0
        %v6516 = vadd.f32 %v6387, %v6515
        %6517 = vmatmul.bf16.gmra.mxu0 %v3481
        %v6518 = vpop.f32.mrf.mxu0
        %v6519 = vadd.f32 %v6390, %v6518
        %v6520 = vpop.f32.mrf.mxu0
        %v6521 = vadd.f32 %v6392, %v6520
        %6522 = vmatmul.bf16.gmra.mxu0 %v3484
        %v6523 = vpop.f32.mrf.mxu0
        %v6524 = vadd.f32 %v6395, %v6523
        %v6525 = vpop.f32.mrf.mxu0
        %v6526 = vadd.f32 %v6397, %v6525
        %6527 = vmatmul.bf16.gmra.mxu0 %v3487
        %v6528 = vpop.f32.mrf.mxu0
        %v6529 = vadd.f32 %v6400, %v6528
        %v6530 = vpop.f32.mrf.mxu0
        %v6531 = vadd.f32 %v6402, %v6530
        %6532 = vmatmul.bf16.gmra.mxu0 %v3490
        %v6533 = vpop.f32.mrf.mxu0
        %v6534 = vadd.f32 %v6405, %v6533
        %v6535 = vpop.f32.mrf.mxu0
        %v6536 = vadd.f32 %v6407, %v6535
        %6537 = vmatmul.bf16.gmra.mxu0 %v3493
        %v6538 = vpop.f32.mrf.mxu0
        %v6539 = vadd.f32 %v6410, %v6538
        %v6540 = vpop.f32.mrf.mxu0
        %v6541 = vadd.f32 %v6412, %v6540
        %6542 = vmatmul.bf16.gmra.mxu0 %v3496
        %v6543 = vpop.f32.mrf.mxu0
        %v6544 = vadd.f32 %v6415, %v6543
        %v6545 = vpop.f32.mrf.mxu0
        %v6546 = vadd.f32 %v6417, %v6545
        %6547 = vmatmul.bf16.gmra.mxu0 %v4545
        %v6548 = vpop.f32.mrf.mxu0
        %v6549 = vadd.f32 %v6420, %v6548
        %v6550 = vpop.f32.mrf.mxu0
        %v6551 = vadd.f32 %v6422, %v6550
        %6552 = vdwg.mxu0
        %v6553 = vadd.f32 %v5911, %v6434
        %v6554 = vadd.f32 %v5913, %v6436
        %v6555 = vadd.f32 %v5916, %v6439
        %v6556 = vadd.f32 %v5918, %v6441
        %v6557 = vadd.f32 %v5921, %v6444
        %v6558 = vadd.f32 %v5923, %v6446
        %v6559 = vadd.f32 %v5926, %v6449
        %v6560 = vadd.f32 %v5928, %v6451
        %v6561 = vadd.f32 %v5931, %v6454
        %v6562 = vadd.f32 %v5933, %v6456
        %v6563 = vadd.f32 %v5936, %v6459
        %v6564 = vadd.f32 %v5938, %v6461
        %v6565 = vadd.f32 %v5941, %v6464
        %v6566 = vadd.f32 %v5943, %v6466
        %v6567 = vadd.f32 %v5946, %v6469
        %v6568 = vadd.f32 %v5948, %v6471
        %v6569 = vadd.f32 %v5951, %v6474
        %v6570 = vadd.f32 %v5953, %v6476
        %v6571 = vadd.f32 %v5956, %v6479
        %v6572 = vadd.f32 %v5958, %v6481
        %v6573 = vadd.f32 %v5961, %v6484
        %v6574 = vadd.f32 %v5963, %v6486
        %v6575 = vadd.f32 %v5966, %v6489
        %v6576 = vadd.f32 %v5968, %v6491
        %v6577 = vadd.f32 %v5971, %v6494
        %v6578 = vadd.f32 %v5973, %v6496
        %v6579 = vadd.f32 %v5976, %v6499
        %v6580 = vadd.f32 %v5978, %v6501
        %v6581 = vadd.f32 %v5981, %v6504
        %v6582 = vadd.f32 %v5983, %v6506
        %v6583 = vadd.f32 %v5986, %v6509
        %v6584 = vadd.f32 %v5988, %v6511
        %v6585 = vadd.f32 %v5991, %v6514
        %v6586 = vadd.f32 %v5993, %v6516
        %v6587 = vadd.f32 %v5996, %v6519
        %v6588 = vadd.f32 %v5998, %v6521
        %v6589 = vadd.f32 %v6001, %v6524
        %v6590 = vadd.f32 %v6003, %v6526
        %v6591 = vadd.f32 %v6006, %v6529
        %v6592 = vadd.f32 %v6008, %v6531
        %v6593 = vadd.f32 %v6011, %v6534
        %v6594 = vadd.f32 %v6013, %v6536
        %v6595 = vadd.f32 %v6016, %v6539
        %v6596 = vadd.f32 %v6018, %v6541
        %v6597 = vadd.f32 %v6021, %v6544
        %v6598 = vadd.f32 %v6023, %v6546
        %v6599 = vadd.f32 %v6026, %v6549
        %v6600 = vadd.f32 %v6028, %v6551
        %v6601 = vmax.f32 %v4937, %v6553
        %v6602 = vmax.f32 %v4938, %v6554
        %v6603 = vmax.f32 %v4939, %v6555
        %v6604 = vmax.f32 %v4940, %v6556
        %v6605 = vmax.f32 %v4941, %v6557
        %v6606 = vmax.f32 %v4942, %v6558
        %v6607 = vmax.f32 %v4943, %v6559
        %v6608 = vmax.f32 %v4944, %v6560
        %v6609 = vmax.f32 %v4945, %v6561
        %v6610 = vmax.f32 %v4946, %v6562
        %v6611 = vmax.f32 %v4947, %v6563
        %v6612 = vmax.f32 %v4948, %v6564
        %v6613 = vmax.f32 %v4949, %v6565
        %v6614 = vmax.f32 %v4950, %v6566
        %v6615 = vmax.f32 %v4951, %v6567
        %v6616 = vmax.f32 %v4952, %v6568
        %v6617 = vmax.f32 %v4953, %v6569
        %v6618 = vmax.f32 %v4954, %v6570
        %v6619 = vmax.f32 %v4955, %v6571
        %v6620 = vmax.f32 %v4956, %v6572
        %v6621 = vmax.f32 %v4957, %v6573
        %v6622 = vmax.f32 %v4958, %v6574
        %v6623 = vmax.f32 %v4959, %v6575
        %v6624 = vmax.f32 %v4960, %v6576
        %v6625 = vmax.f32 %v4961, %v6577
        %v6626 = vmax.f32 %v4962, %v6578
        %v6627 = vmax.f32 %v4963, %v6579
        %v6628 = vmax.f32 %v4964, %v6580
        %v6629 = vmax.f32 %v4965, %v6581
        %v6630 = vmax.f32 %v4966, %v6582
        %v6631 = vmax.f32 %v4967, %v6583
        %v6632 = vmax.f32 %v4968, %v6584
        %v6633 = vmax.f32 %v4969, %v6585
        %v6634 = vmax.f32 %v4970, %v6586
        %v6635 = vmax.f32 %v4971, %v6587
        %v6636 = vmax.f32 %v4972, %v6588
        %v6637 = vmax.f32 %v4973, %v6589
        %v6638 = vmax.f32 %v4974, %v6590
        %v6639 = vmax.f32 %v4975, %v6591
        %v6640 = vmax.f32 %v4976, %v6592
        %v6641 = vmax.f32 %v4977, %v6593
        %v6642 = vmax.f32 %v4978, %v6594
        %v6643 = vmax.f32 %v4979, %v6595
        %v6644 = vmax.f32 %v4980, %v6596
        %v6645 = vmax.f32 %v4981, %v6597
        %v6646 = vmax.f32 %v4982, %v6598
        %v6647 = vmax.f32 %v4983, %v6599
        %v6648 = vmax.f32 %v4984, %v6600
        %v6649 = vmax.f32 %v6601, %v6603
        %v6650 = vmax.f32 %v6602, %v6604
        %v6651 = vmax.f32 %v6605, %v6607
        %v6652 = vmax.f32 %v6606, %v6608
        %v6653 = vmax.f32 %v6609, %v6611
        %v6654 = vmax.f32 %v6610, %v6612
        %v6655 = vmax.f32 %v6613, %v6615
        %v6656 = vmax.f32 %v6614, %v6616
        %v6657 = vmax.f32 %v6617, %v6619
        %v6658 = vmax.f32 %v6618, %v6620
        %v6659 = vmax.f32 %v6621, %v6623
        %v6660 = vmax.f32 %v6622, %v6624
        %v6661 = vmax.f32 %v6625, %v6627
        %v6662 = vmax.f32 %v6626, %v6628
        %v6663 = vmax.f32 %v6629, %v6631
        %v6664 = vmax.f32 %v6630, %v6632
        %v6665 = vmax.f32 %v6633, %v6635
        %v6666 = vmax.f32 %v6634, %v6636
        %v6667 = vmax.f32 %v6637, %v6639
        %v6668 = vmax.f32 %v6638, %v6640
        %v6669 = vmax.f32 %v6641, %v6643
        %v6670 = vmax.f32 %v6642, %v6644
        %v6671 = vmax.f32 %v6645, %v6647
        %v6672 = vmax.f32 %v6646, %v6648
        %v6673 = vperm.slane %v592, 1
        %v6674 = vadd.f32 %v6649, %v6673
        %v6675 = vadd.f32 %v6650, %v6673
        %v6676 = vadd.f32 %v6651, %v6673
        %v6677 = vadd.f32 %v6652, %v6673
        %v6678 = vadd.f32 %v6653, %v6673
        %v6679 = vadd.f32 %v6654, %v6673
        %v6680 = vadd.f32 %v6655, %v6673
        %v6681 = vadd.f32 %v6656, %v6673
        %v6682 = vadd.f32 %v6657, %v6673
        %v6683 = vadd.f32 %v6658, %v6673
        %v6684 = vadd.f32 %v6659, %v6673
        %v6685 = vadd.f32 %v6660, %v6673
        %v6686 = vadd.f32 %v6661, %v6673
        %v6687 = vadd.f32 %v6662, %v6673
        %v6688 = vadd.f32 %v6663, %v6673
        %v6689 = vadd.f32 %v6664, %v6673
        %v6690 = vadd.f32 %v6665, %v6673
        %v6691 = vadd.f32 %v6666, %v6673
        %v6692 = vadd.f32 %v6667, %v6673
        %v6693 = vadd.f32 %v6668, %v6673
        %v6694 = vadd.f32 %v6669, %v6673
        %v6695 = vadd.f32 %v6670, %v6673
        %v6696 = vadd.f32 %v6671, %v6673
        %v6697 = vadd.f32 %v6672, %v6673
        %v6698 = vmax.f32 %v6674, 0.0
        %v6699 = vmax.f32 %v6675, 0.0
        %v6700 = vmax.f32 %v6676, 0.0
        %v6701 = vmax.f32 %v6677, 0.0
        %v6702 = vmax.f32 %v6678, 0.0
        %v6703 = vmax.f32 %v6679, 0.0
        %v6704 = vmax.f32 %v6680, 0.0
        %v6705 = vmax.f32 %v6681, 0.0
        %v6706 = vmax.f32 %v6682, 0.0
        %v6707 = vmax.f32 %v6683, 0.0
        %v6708 = vmax.f32 %v6684, 0.0
        %v6709 = vmax.f32 %v6685, 0.0
        %v6710 = vmax.f32 %v6686, 0.0
        %v6711 = vmax.f32 %v6687, 0.0
        %v6712 = vmax.f32 %v6688, 0.0
        %v6713 = vmax.f32 %v6689, 0.0
        %v6714 = vmax.f32 %v6690, 0.0
        %v6715 = vmax.f32 %v6691, 0.0
        %v6716 = vmax.f32 %v6692, 0.0
        %v6717 = vmax.f32 %v6693, 0.0
        %v6718 = vmax.f32 %v6694, 0.0
        %v6719 = vmax.f32 %v6695, 0.0
        %v6720 = vmax.f32 %v6696, 0.0
        %v6721 = vmax.f32 %v6697, 0.0
        %v6722 = vpack.c.bf16 %v6698, %v6698
        %v6723 = vpack.c.bf16 %v6699, %v6699
        %v6724 = vpack.c.bf16 %v6700, %v6700
        %v6725 = vpack.c.bf16 %v6701, %v6701
        %v6726 = vpack.c.bf16 %v6702, %v6702
        %v6727 = vpack.c.bf16 %v6703, %v6703
        %v6728 = vpack.c.bf16 %v6704, %v6704
        %v6729 = vpack.c.bf16 %v6705, %v6705
        %v6730 = vpack.c.bf16 %v6706, %v6706
        %v6731 = vpack.c.bf16 %v6707, %v6707
        %v6732 = vpack.c.bf16 %v6708, %v6708
        %v6733 = vpack.c.bf16 %v6709, %v6709
        %v6734 = vpack.c.bf16 %v6710, %v6710
        %v6735 = vpack.c.bf16 %v6711, %v6711
        %v6736 = vpack.c.bf16 %v6712, %v6712
        %v6737 = vpack.c.bf16 %v6713, %v6713
        %v6738 = vpack.c.bf16 %v6714, %v6714
        %v6739 = vpack.c.bf16 %v6715, %v6715
        %v6740 = vpack.c.bf16 %v6716, %v6716
        %v6741 = vpack.c.bf16 %v6717, %v6717
        %v6742 = vpack.c.bf16 %v6718, %v6718
        %v6743 = vpack.c.bf16 %v6719, %v6719
        %v6744 = vpack.c.bf16 %v6720, %v6720
        %v6745 = vpack.c.bf16 %v6721, %v6721
        %v6746 = vld [vmem:[%s4] sm:$0xf]
        %v6747 = vld [vmem:[%s4 + $0x4] sm:$0xf]
        %v6748 = vld [vmem:[%s4 + $0x8] sm:$0xf]
        %v6749 = vld [vmem:[%s4 + $0xc] sm:$0xf]
        %v6750 = vld [vmem:[%s4 + $0x10] sm:$0xf]
        %v6751 = vld [vmem:[%s4 + $0x14] sm:$0xf]
        %v6752 = vld [vmem:[%s4 + $0x18] sm:$0xf]
        %v6753 = vld [vmem:[%s4 + $0x1c] sm:$0xf]
        %v6754 = vld [vmem:[%s4 + $0x20] sm:$0xf]
        %v6755 = vld [vmem:[%s4 + $0x24] sm:$0xf]
        %v6756 = vld [vmem:[%s4 + $0x28] sm:$0xf]
        %v6757 = vld [vmem:[%s4 + $0x2c] sm:$0xf]
        %v6758 = vld [vmem:[%s4 + $0x30] sm:$0xf]
        %v6759 = vld [vmem:[%s4 + $0x34] sm:$0xf]
        %v6760 = vld [vmem:[%s4 + $0x38] sm:$0xf]
        %s6761 = scalar_lea.vmem %s4, 60
        %v6762 = vld [vmem:[%s6761] sm:$0xf]
        %v6763 = vld [vmem:[%s6761 + $0x4] sm:$0xf]
        %v6764 = vld [vmem:[%s6761 + $0x8] sm:$0xf]
        %v6765 = vld [vmem:[%s6761 + $0xc] sm:$0xf]
        %v6766 = vld [vmem:[%s6761 + $0x10] sm:$0xf]
        %v6767 = vld [vmem:[%s6761 + $0x14] sm:$0xf]
        %v6768 = vld [vmem:[%s6761 + $0x18] sm:$0xf]
        %v6769 = vld [vmem:[%s6761 + $0x1c] sm:$0xf]
        %v6770 = vld [vmem:[%s6761 + $0x20] sm:$0xf]
        %v6771 = vld [vmem:[%s6761 + $0x24] sm:$0xf]
        %v6772 = vld [vmem:[%s6761 + $0x28] sm:$0xf]
        %v6773 = vld [vmem:[%s6761 + $0x2c] sm:$0xf]
        %v6774 = vld [vmem:[%s6761 + $0x30] sm:$0xf]
        %v6775 = vld [vmem:[%s6761 + $0x34] sm:$0xf]
        %v6776 = vld [vmem:[%s6761 + $0x38] sm:$0xf]
        %v6797 = vunpack.c.l.b16 %v6724
        %v6798 = vunpack.c.l.b16 %v6725
        %v6799 = vunpack.c.l.b16 %v6726
        %v6800 = vunpack.c.l.b16 %v6727
        %v6801 = vunpack.c.l.b16 %v6728
        %v6802 = vunpack.c.l.b16 %v6729
        %v6803 = vunpack.c.l.b16 %v6730
        %v6804 = vunpack.c.l.b16 %v6731
        %v6805 = vunpack.c.l.b16 %v6732
        %v6806 = vunpack.c.l.b16 %v6733
        %v6807 = vunpack.c.l.b16 %v6734
        %v6808 = vunpack.c.l.b16 %v6735
        %v6809 = vunpack.c.l.b16 %v6736
        %v6810 = vunpack.c.l.b16 %v6737
        %v6811 = vunpack.c.l.b16 %v6738
        %v6812 = vunpack.c.l.b16 %v6739
        %v6813 = vunpack.c.l.b16 %v6740
        %v6814 = vunpack.c.l.b16 %v6741
        %v6815 = vunpack.c.l.b16 %v6742
        %v6816 = vunpack.c.l.b16 %v6743
        %v6817 = vpack.c.b16 %v6798, %v6797
        %v6818 = vpack.c.b16 %v6800, %v6799
        %v6819 = vpack.c.b16 %v6802, %v6801
        %v6820 = vpack.c.b16 %v6804, %v6803
        %v6821 = vpack.c.b16 %v6806, %v6805
        %v6822 = vpack.c.b16 %v6808, %v6807
        %v6823 = vpack.c.b16 %v6810, %v6809
        %v6824 = vpack.c.b16 %v6812, %v6811
        %v6825 = vpack.c.b16 %v6814, %v6813
        %v6826 = vpack.c.b16 %v6816, %v6815
        %v6842 = vunpack.c.l.b16 %v6762
        %v6843 = vunpack.c.l.b16 %v6763
        %v6844 = vunpack.c.l.b16 %v6764
        %v6845 = vunpack.c.l.b16 %v6765
        %v6846 = vunpack.c.l.b16 %v6766
        %v6847 = vunpack.c.l.b16 %v6767
        %v6848 = vunpack.c.l.b16 %v6768
        %v6849 = vunpack.c.l.b16 %v6769
        %v6850 = vunpack.c.l.b16 %v6770
        %v6851 = vunpack.c.l.b16 %v6771
        %v6852 = vunpack.c.l.b16 %v6772
        %v6853 = vunpack.c.l.b16 %v6773
        %v6854 = vunpack.c.l.b16 %v6774
        %v6855 = vunpack.c.l.b16 %v6775
        %v6856 = vunpack.c.l.b16 %v6776
        %v6857 = vpack.c.b16 %v6843, %v6842
        %v6858 = vpack.c.b16 %v6845, %v6844
        %v6859 = vpack.c.b16 %v6847, %v6846
        %v6860 = vpack.c.b16 %v6849, %v6848
        %v6861 = vpack.c.b16 %v6851, %v6850
        %v6862 = vpack.c.b16 %v6853, %v6852
        %v6863 = vpack.c.b16 %v6855, %v6854
        %v6864 = vpack.c.b16 %v6856, %v6856
        %vm6872 = vcmask 982016
        %v6874 = vsel %vm6872, %v6817, 0
        %v6877 = vsel %vm6872, %v6818, 0
        %v6880 = vsel %vm6872, %v6819, 0
        %v6883 = vsel %vm6872, %v6820, 0
        %v6886 = vsel %vm6872, %v6821, 0
        %v6889 = vsel %vm6872, %v6822, 0
        %v6892 = vsel %vm6872, %v6823, 0
        %v6895 = vsel %vm6872, %v6824, 0
        %v6898 = vsel %vm6872, %v6825, 0
        %v6901 = vsel %vm6872, %v6826, 0
        %vm6903 = vcmask 1043456
        %v6905 = vsel %vm6903, %v6864, 0
        %6907 = vmatpush.bf16.msra.mxu0 %v6905
        %6908 = vmatpush.bf16.msra.mxu0 %v6863
        %6909 = vmatpush.bf16.msra.mxu0 %v6862
        %6910 = vmatpush.bf16.msra.mxu0 %v6861
        %6911 = vmatpush.bf16.msra.mxu0 %v6860
        %6912 = vmatpush.bf16.msra.mxu0 %v6859
        %6913 = vmatpush.bf16.msra.mxu0 %v6858
        %6914 = vmatpush.bf16.msra.mxu0 %v6857
        %6915 = vmatmul.bf16.gmra.mxu0 %v6874
        %v6916 = vpop.f32.mrf.mxu0
        %v6917 = vadd.f32 0.0, %v6916
        %v6918 = vpop.f32.mrf.mxu0
        %v6919 = vadd.f32 0.0, %v6918
        %6920 = vmatmul.bf16.gmra.mxu0 %v6877
        %v6921 = vpop.f32.mrf.mxu0
        %v6922 = vadd.f32 0.0, %v6921
        %v6923 = vpop.f32.mrf.mxu0
        %v6924 = vadd.f32 0.0, %v6923
        %6925 = vmatmul.bf16.gmra.mxu0 %v6880
        %v6926 = vpop.f32.mrf.mxu0
        %v6927 = vadd.f32 0.0, %v6926
        %v6928 = vpop.f32.mrf.mxu0
        %v6929 = vadd.f32 0.0, %v6928
        %6930 = vmatmul.bf16.gmra.mxu0 %v6883
        %v6931 = vpop.f32.mrf.mxu0
        %v6932 = vadd.f32 0.0, %v6931
        %v6933 = vpop.f32.mrf.mxu0
        %v6934 = vadd.f32 0.0, %v6933
        %6935 = vmatmul.bf16.gmra.mxu0 %v6886
        %v6936 = vpop.f32.mrf.mxu0
        %v6937 = vadd.f32 0.0, %v6936
        %v6938 = vpop.f32.mrf.mxu0
        %v6939 = vadd.f32 0.0, %v6938
        %6940 = vmatmul.bf16.gmra.mxu0 %v6889
        %v6941 = vpop.f32.mrf.mxu0
        %v6942 = vadd.f32 0.0, %v6941
        %v6943 = vpop.f32.mrf.mxu0
        %v6944 = vadd.f32 0.0, %v6943
        %6945 = vmatmul.bf16.gmra.mxu0 %v6892
        %v6946 = vpop.f32.mrf.mxu0
        %v6947 = vadd.f32 0.0, %v6946
        %v6948 = vpop.f32.mrf.mxu0
        %v6949 = vadd.f32 0.0, %v6948
        %6950 = vmatmul.bf16.gmra.mxu0 %v6895
        %v6951 = vpop.f32.mrf.mxu0
        %v6952 = vadd.f32 0.0, %v6951
        %v6953 = vpop.f32.mrf.mxu0
        %v6954 = vadd.f32 0.0, %v6953
        %6955 = vmatmul.bf16.gmra.mxu0 %v6898
        %v6956 = vpop.f32.mrf.mxu0
        %v6957 = vadd.f32 0.0, %v6956
        %v6958 = vpop.f32.mrf.mxu0
        %v6959 = vadd.f32 0.0, %v6958
        %6960 = vmatmul.bf16.gmra.mxu0 %v6901
        %v6961 = vpop.f32.mrf.mxu0
        %v6962 = vadd.f32 0.0, %v6961
        %v6963 = vpop.f32.mrf.mxu0
        %v6964 = vadd.f32 0.0, %v6963
        %6965 = vdwg.mxu0
        %v6968 = vunpack.c.l.b16 %v6722
        %v6969 = vunpack.c.l.b16 %v6723
        %v6970 = vpack.c.b16 %v6969, %v6968
        %v6986 = vunpack.c.l.b16 %v6746
        %v6987 = vunpack.c.l.b16 %v6747
        %v6988 = vunpack.c.l.b16 %v6748
        %v6989 = vunpack.c.l.b16 %v6749
        %v6990 = vunpack.c.l.b16 %v6750
        %v6991 = vunpack.c.l.b16 %v6751
        %v6992 = vunpack.c.l.b16 %v6752
        %v6993 = vunpack.c.l.b16 %v6753
        %v6994 = vunpack.c.l.b16 %v6754
        %v6995 = vunpack.c.l.b16 %v6755
        %v6996 = vunpack.c.l.b16 %v6756
        %v6997 = vunpack.c.l.b16 %v6757
        %v6998 = vunpack.c.l.b16 %v6758
        %v6999 = vunpack.c.l.b16 %v6759
        %v7000 = vunpack.c.l.b16 %v6760
        %v7001 = vpack.c.b16 %v6987, %v6986
        %v7002 = vpack.c.b16 %v6989, %v6988
        %v7003 = vpack.c.b16 %v6991, %v6990
        %v7004 = vpack.c.b16 %v6993, %v6992
        %v7005 = vpack.c.b16 %v6995, %v6994
        %v7006 = vpack.c.b16 %v6997, %v6996
        %v7007 = vpack.c.b16 %v6999, %v6998
        %v7008 = vpack.c.b16 %v7000, %v7000
        %v7017 = vsel %vm6872, %v6970, 0
        %v7020 = vsel %vm6903, %v7008, 0
        %7022 = vmatpush.bf16.msra.mxu0 %v7020
        %7023 = vmatpush.bf16.msra.mxu0 %v7007
        %7024 = vmatpush.bf16.msra.mxu0 %v7006
        %7025 = vmatpush.bf16.msra.mxu0 %v7005
        %7026 = vmatpush.bf16.msra.mxu0 %v7004
        %7027 = vmatpush.bf16.msra.mxu0 %v7003
        %7028 = vmatpush.bf16.msra.mxu0 %v7002
        %7029 = vmatpush.bf16.msra.mxu0 %v7001
        %7030 = vmatmul.bf16.gmra.mxu0 %v7017
        %v7031 = vpop.f32.mrf.mxu0
        %v7032 = vadd.f32 %v6917, %v7031
        %v7033 = vpop.f32.mrf.mxu0
        %v7034 = vadd.f32 %v6919, %v7033
        %7035 = vmatmul.bf16.gmra.mxu0 %v6874
        %v7036 = vpop.f32.mrf.mxu0
        %v7037 = vadd.f32 %v6922, %v7036
        %v7038 = vpop.f32.mrf.mxu0
        %v7039 = vadd.f32 %v6924, %v7038
        %7040 = vmatmul.bf16.gmra.mxu0 %v6877
        %v7041 = vpop.f32.mrf.mxu0
        %v7042 = vadd.f32 %v6927, %v7041
        %v7043 = vpop.f32.mrf.mxu0
        %v7044 = vadd.f32 %v6929, %v7043
        %7045 = vmatmul.bf16.gmra.mxu0 %v6880
        %v7046 = vpop.f32.mrf.mxu0
        %v7047 = vadd.f32 %v6932, %v7046
        %v7048 = vpop.f32.mrf.mxu0
        %v7049 = vadd.f32 %v6934, %v7048
        %7050 = vmatmul.bf16.gmra.mxu0 %v6883
        %v7051 = vpop.f32.mrf.mxu0
        %v7052 = vadd.f32 %v6937, %v7051
        %v7053 = vpop.f32.mrf.mxu0
        %v7054 = vadd.f32 %v6939, %v7053
        %7055 = vmatmul.bf16.gmra.mxu0 %v6886
        %v7056 = vpop.f32.mrf.mxu0
        %v7057 = vadd.f32 %v6942, %v7056
        %v7058 = vpop.f32.mrf.mxu0
        %v7059 = vadd.f32 %v6944, %v7058
        %7060 = vmatmul.bf16.gmra.mxu0 %v6889
        %v7061 = vpop.f32.mrf.mxu0
        %v7062 = vadd.f32 %v6947, %v7061
        %v7063 = vpop.f32.mrf.mxu0
        %v7064 = vadd.f32 %v6949, %v7063
        %7065 = vmatmul.bf16.gmra.mxu0 %v6892
        %v7066 = vpop.f32.mrf.mxu0
        %v7067 = vadd.f32 %v6952, %v7066
        %v7068 = vpop.f32.mrf.mxu0
        %v7069 = vadd.f32 %v6954, %v7068
        %7070 = vmatmul.bf16.gmra.mxu0 %v6895
        %v7071 = vpop.f32.mrf.mxu0
        %v7072 = vadd.f32 %v6957, %v7071
        %v7073 = vpop.f32.mrf.mxu0
        %v7074 = vadd.f32 %v6959, %v7073
        %7075 = vmatmul.bf16.gmra.mxu0 %v6898
        %v7076 = vpop.f32.mrf.mxu0
        %v7077 = vadd.f32 %v6962, %v7076
        %v7078 = vpop.f32.mrf.mxu0
        %v7079 = vadd.f32 %v6964, %v7078
        %7080 = vdwg.mxu0
        %s7081 = scalar_lea.vmem %s4, 120
        %v7082 = vld [vmem:[%s7081] sm:$0xf]
        %v7083 = vld [vmem:[%s7081 + $0x4] sm:$0xf]
        %v7084 = vld [vmem:[%s7081 + $0x8] sm:$0xf]
        %v7085 = vld [vmem:[%s7081 + $0xc] sm:$0xf]
        %v7086 = vld [vmem:[%s7081 + $0x10] sm:$0xf]
        %v7087 = vld [vmem:[%s7081 + $0x14] sm:$0xf]
        %v7088 = vld [vmem:[%s7081 + $0x18] sm:$0xf]
        %v7089 = vld [vmem:[%s7081 + $0x1c] sm:$0xf]
        %v7090 = vld [vmem:[%s7081 + $0x20] sm:$0xf]
        %v7091 = vld [vmem:[%s7081 + $0x24] sm:$0xf]
        %v7092 = vld [vmem:[%s7081 + $0x28] sm:$0xf]
        %v7093 = vld [vmem:[%s7081 + $0x2c] sm:$0xf]
        %v7094 = vld [vmem:[%s7081 + $0x30] sm:$0xf]
        %v7095 = vld [vmem:[%s7081 + $0x34] sm:$0xf]
        %v7096 = vld [vmem:[%s7081 + $0x38] sm:$0xf]
        %v7099 = vunpack.c.l.b16 %v6744
        %v7100 = vunpack.c.l.b16 %v6745
        %v7101 = vpack.c.b16 %v7100, %v7099
        %v7117 = vunpack.c.l.b16 %v7082
        %v7118 = vunpack.c.l.b16 %v7083
        %v7119 = vunpack.c.l.b16 %v7084
        %v7120 = vunpack.c.l.b16 %v7085
        %v7121 = vunpack.c.l.b16 %v7086
        %v7122 = vunpack.c.l.b16 %v7087
        %v7123 = vunpack.c.l.b16 %v7088
        %v7124 = vunpack.c.l.b16 %v7089
        %v7125 = vunpack.c.l.b16 %v7090
        %v7126 = vunpack.c.l.b16 %v7091
        %v7127 = vunpack.c.l.b16 %v7092
        %v7128 = vunpack.c.l.b16 %v7093
        %v7129 = vunpack.c.l.b16 %v7094
        %v7130 = vunpack.c.l.b16 %v7095
        %v7131 = vunpack.c.l.b16 %v7096
        %v7132 = vpack.c.b16 %v7118, %v7117
        %v7133 = vpack.c.b16 %v7120, %v7119
        %v7134 = vpack.c.b16 %v7122, %v7121
        %v7135 = vpack.c.b16 %v7124, %v7123
        %v7136 = vpack.c.b16 %v7126, %v7125
        %v7137 = vpack.c.b16 %v7128, %v7127
        %v7138 = vpack.c.b16 %v7130, %v7129
        %v7139 = vpack.c.b16 %v7131, %v7131
        %v7148 = vsel %vm6872, %v7101, 0
        %v7151 = vsel %vm6903, %v7139, 0
        %7153 = vmatpush.bf16.msra.mxu0 %v7151
        %7154 = vmatpush.bf16.msra.mxu0 %v7138
        %7155 = vmatpush.bf16.msra.mxu0 %v7137
        %7156 = vmatpush.bf16.msra.mxu0 %v7136
        %7157 = vmatpush.bf16.msra.mxu0 %v7135
        %7158 = vmatpush.bf16.msra.mxu0 %v7134
        %7159 = vmatpush.bf16.msra.mxu0 %v7133
        %7160 = vmatpush.bf16.msra.mxu0 %v7132
        %7161 = vmatmul.bf16.gmra.mxu0 %v6877
        %v7162 = vpop.f32.mrf.mxu0
        %v7163 = vadd.f32 0.0, %v7162
        %v7164 = vpop.f32.mrf.mxu0
        %v7165 = vadd.f32 0.0, %v7164
        %7166 = vmatmul.bf16.gmra.mxu0 %v6880
        %v7167 = vpop.f32.mrf.mxu0
        %v7168 = vadd.f32 0.0, %v7167
        %v7169 = vpop.f32.mrf.mxu0
        %v7170 = vadd.f32 0.0, %v7169
        %7171 = vmatmul.bf16.gmra.mxu0 %v6883
        %v7172 = vpop.f32.mrf.mxu0
        %v7173 = vadd.f32 0.0, %v7172
        %v7174 = vpop.f32.mrf.mxu0
        %v7175 = vadd.f32 0.0, %v7174
        %7176 = vmatmul.bf16.gmra.mxu0 %v6886
        %v7177 = vpop.f32.mrf.mxu0
        %v7178 = vadd.f32 0.0, %v7177
        %v7179 = vpop.f32.mrf.mxu0
        %v7180 = vadd.f32 0.0, %v7179
        %7181 = vmatmul.bf16.gmra.mxu0 %v6889
        %v7182 = vpop.f32.mrf.mxu0
        %v7183 = vadd.f32 0.0, %v7182
        %v7184 = vpop.f32.mrf.mxu0
        %v7185 = vadd.f32 0.0, %v7184
        %7186 = vmatmul.bf16.gmra.mxu0 %v6892
        %v7187 = vpop.f32.mrf.mxu0
        %v7188 = vadd.f32 0.0, %v7187
        %v7189 = vpop.f32.mrf.mxu0
        %v7190 = vadd.f32 0.0, %v7189
        %7191 = vmatmul.bf16.gmra.mxu0 %v6895
        %v7192 = vpop.f32.mrf.mxu0
        %v7193 = vadd.f32 0.0, %v7192
        %v7194 = vpop.f32.mrf.mxu0
        %v7195 = vadd.f32 0.0, %v7194
        %7196 = vmatmul.bf16.gmra.mxu0 %v6898
        %v7197 = vpop.f32.mrf.mxu0
        %v7198 = vadd.f32 0.0, %v7197
        %v7199 = vpop.f32.mrf.mxu0
        %v7200 = vadd.f32 0.0, %v7199
        %7201 = vmatmul.bf16.gmra.mxu0 %v6901
        %v7202 = vpop.f32.mrf.mxu0
        %v7203 = vadd.f32 0.0, %v7202
        %v7204 = vpop.f32.mrf.mxu0
        %v7205 = vadd.f32 0.0, %v7204
        %7206 = vmatmul.bf16.gmra.mxu0 %v7148
        %v7207 = vpop.f32.mrf.mxu0
        %v7208 = vadd.f32 0.0, %v7207
        %v7209 = vpop.f32.mrf.mxu0
        %v7210 = vadd.f32 0.0, %v7209
        %7211 = vdwg.mxu0
        %v7212 = vadd.f32 %v7032, %v7163
        %v7213 = vadd.f32 %v7034, %v7165
        %v7214 = vadd.f32 %v7037, %v7168
        %v7215 = vadd.f32 %v7039, %v7170
        %v7216 = vadd.f32 %v7042, %v7173
        %v7217 = vadd.f32 %v7044, %v7175
        %v7218 = vadd.f32 %v7047, %v7178
        %v7219 = vadd.f32 %v7049, %v7180
        %v7220 = vadd.f32 %v7052, %v7183
        %v7221 = vadd.f32 %v7054, %v7185
        %v7222 = vadd.f32 %v7057, %v7188
        %v7223 = vadd.f32 %v7059, %v7190
        %v7224 = vadd.f32 %v7062, %v7193
        %v7225 = vadd.f32 %v7064, %v7195
        %v7226 = vadd.f32 %v7067, %v7198
        %v7227 = vadd.f32 %v7069, %v7200
        %v7228 = vadd.f32 %v7072, %v7203
        %v7229 = vadd.f32 %v7074, %v7205
        %v7230 = vadd.f32 %v7077, %v7208
        %v7231 = vadd.f32 %v7079, %v7210
        %v7232 = vperm.slane %v592, 2
        %v7233 = vadd.f32 %v7212, %v7232
        %v7234 = vadd.f32 %v7213, %v7232
        %v7235 = vadd.f32 %v7214, %v7232
        %v7236 = vadd.f32 %v7215, %v7232
        %v7237 = vadd.f32 %v7216, %v7232
        %v7238 = vadd.f32 %v7217, %v7232
        %v7239 = vadd.f32 %v7218, %v7232
        %v7240 = vadd.f32 %v7219, %v7232
        %v7241 = vadd.f32 %v7220, %v7232
        %v7242 = vadd.f32 %v7221, %v7232
        %v7243 = vadd.f32 %v7222, %v7232
        %v7244 = vadd.f32 %v7223, %v7232
        %v7245 = vadd.f32 %v7224, %v7232
        %v7246 = vadd.f32 %v7225, %v7232
        %v7247 = vadd.f32 %v7226, %v7232
        %v7248 = vadd.f32 %v7227, %v7232
        %v7249 = vadd.f32 %v7228, %v7232
        %v7250 = vadd.f32 %v7229, %v7232
        %v7251 = vadd.f32 %v7230, %v7232
        %v7252 = vadd.f32 %v7231, %v7232
        %v7253 = vmax.f32 %v7233, 0.0
        %v7254 = vmax.f32 %v7234, 0.0
        %v7255 = vmax.f32 %v7235, 0.0
        %v7256 = vmax.f32 %v7236, 0.0
        %v7257 = vmax.f32 %v7237, 0.0
        %v7258 = vmax.f32 %v7238, 0.0
        %v7259 = vmax.f32 %v7239, 0.0
        %v7260 = vmax.f32 %v7240, 0.0
        %v7261 = vmax.f32 %v7241, 0.0
        %v7262 = vmax.f32 %v7242, 0.0
        %v7263 = vmax.f32 %v7243, 0.0
        %v7264 = vmax.f32 %v7244, 0.0
        %v7265 = vmax.f32 %v7245, 0.0
        %v7266 = vmax.f32 %v7246, 0.0
        %v7267 = vmax.f32 %v7247, 0.0
        %v7268 = vmax.f32 %v7248, 0.0
        %v7269 = vmax.f32 %v7249, 0.0
        %v7270 = vmax.f32 %v7250, 0.0
        %v7271 = vmax.f32 %v7251, 0.0
        %v7272 = vmax.f32 %v7252, 0.0
        %v7273 = vpack.c.bf16 %v7253, %v7253
        %v7274 = vpack.c.bf16 %v7254, %v7254
        %v7275 = vpack.c.bf16 %v7255, %v7255
        %v7276 = vpack.c.bf16 %v7256, %v7256
        %v7277 = vpack.c.bf16 %v7257, %v7257
        %v7278 = vpack.c.bf16 %v7258, %v7258
        %v7279 = vpack.c.bf16 %v7259, %v7259
        %v7280 = vpack.c.bf16 %v7260, %v7260
        %v7281 = vpack.c.bf16 %v7261, %v7261
        %v7282 = vpack.c.bf16 %v7262, %v7262
        %v7283 = vpack.c.bf16 %v7263, %v7263
        %v7284 = vpack.c.bf16 %v7264, %v7264
        %v7285 = vpack.c.bf16 %v7265, %v7265
        %v7286 = vpack.c.bf16 %v7266, %v7266
        %v7287 = vpack.c.bf16 %v7267, %v7267
        %v7288 = vpack.c.bf16 %v7268, %v7268
        %v7289 = vpack.c.bf16 %v7269, %v7269
        %v7290 = vpack.c.bf16 %v7270, %v7270
        %v7291 = vpack.c.bf16 %v7271, %v7271
        %v7292 = vpack.c.bf16 %v7272, %v7272
        %v7293 = vld [vmem:[%s5] sm:$0xf]
        %v7294 = vld [vmem:[%s5 + $0x4] sm:$0xf]
        %v7295 = vld [vmem:[%s5 + $0x8] sm:$0xf]
        %v7296 = vld [vmem:[%s5 + $0xc] sm:$0xf]
        %v7297 = vld [vmem:[%s5 + $0x10] sm:$0xf]
        %v7298 = vld [vmem:[%s5 + $0x14] sm:$0xf]
        %v7299 = vld [vmem:[%s5 + $0x18] sm:$0xf]
        %v7300 = vld [vmem:[%s5 + $0x1c] sm:$0xf]
        %v7301 = vld [vmem:[%s5 + $0x20] sm:$0xf]
        %v7302 = vld [vmem:[%s5 + $0x24] sm:$0xf]
        %v7303 = vld [vmem:[%s5 + $0x28] sm:$0xf]
        %v7304 = vld [vmem:[%s5 + $0x2c] sm:$0xf]
        %v7305 = vld [vmem:[%s5 + $0x30] sm:$0x3]
        %s7306 = scalar_lea.vmem %s5, 52
        %v7307 = vld [vmem:[%s7306] sm:$0xf]
        %v7308 = vld [vmem:[%s7306 + $0x4] sm:$0xf]
        %v7309 = vld [vmem:[%s7306 + $0x8] sm:$0xf]
        %v7310 = vld [vmem:[%s7306 + $0xc] sm:$0xf]
        %v7311 = vld [vmem:[%s7306 + $0x10] sm:$0xf]
        %v7312 = vld [vmem:[%s7306 + $0x14] sm:$0xf]
        %v7313 = vld [vmem:[%s7306 + $0x18] sm:$0xf]
        %v7314 = vld [vmem:[%s7306 + $0x1c] sm:$0xf]
        %v7315 = vld [vmem:[%s7306 + $0x20] sm:$0xf]
        %v7316 = vld [vmem:[%s7306 + $0x24] sm:$0xf]
        %v7317 = vld [vmem:[%s7306 + $0x28] sm:$0xf]
        %v7318 = vld [vmem:[%s7306 + $0x2c] sm:$0xf]
        %v7319 = vld [vmem:[%s7306 + $0x30] sm:$0x3]
        %v7336 = vunpack.c.l.b16 %v7275
        %v7337 = vunpack.c.l.b16 %v7276
        %v7338 = vunpack.c.l.b16 %v7277
        %v7339 = vunpack.c.l.b16 %v7278
        %v7340 = vunpack.c.l.b16 %v7279
        %v7341 = vunpack.c.l.b16 %v7280
        %v7342 = vunpack.c.l.b16 %v7281
        %v7343 = vunpack.c.l.b16 %v7282
        %v7344 = vunpack.c.l.b16 %v7283
        %v7345 = vunpack.c.l.b16 %v7284
        %v7346 = vunpack.c.l.b16 %v7285
        %v7347 = vunpack.c.l.b16 %v7286
        %v7348 = vunpack.c.l.b16 %v7287
        %v7349 = vunpack.c.l.b16 %v7288
        %v7350 = vunpack.c.l.b16 %v7289
        %v7351 = vunpack.c.l.b16 %v7290
        %v7352 = vpack.c.b16 %v7337, %v7336
        %v7353 = vpack.c.b16 %v7339, %v7338
        %v7354 = vpack.c.b16 %v7341, %v7340
        %v7355 = vpack.c.b16 %v7343, %v7342
        %v7356 = vpack.c.b16 %v7345, %v7344
        %v7357 = vpack.c.b16 %v7347, %v7346
        %v7358 = vpack.c.b16 %v7349, %v7348
        %v7359 = vpack.c.b16 %v7351, %v7350
        %v7373 = vunpack.c.l.b16 %v7307
        %v7374 = vunpack.c.l.b16 %v7308
        %v7375 = vunpack.c.l.b16 %v7309
        %v7376 = vunpack.c.l.b16 %v7310
        %v7377 = vunpack.c.l.b16 %v7311
        %v7378 = vunpack.c.l.b16 %v7312
        %v7379 = vunpack.c.l.b16 %v7313
        %v7380 = vunpack.c.l.b16 %v7314
        %v7381 = vunpack.c.l.b16 %v7315
        %v7382 = vunpack.c.l.b16 %v7316
        %v7383 = vunpack.c.l.b16 %v7317
        %v7384 = vunpack.c.l.b16 %v7318
        %v7385 = vunpack.c.l.b16 %v7319
        %v7386 = vpack.c.b16 %v7374, %v7373
        %v7387 = vpack.c.b16 %v7376, %v7375
        %v7388 = vpack.c.b16 %v7378, %v7377
        %v7389 = vpack.c.b16 %v7380, %v7379
        %v7390 = vpack.c.b16 %v7382, %v7381
        %v7391 = vpack.c.b16 %v7384, %v7383
        %v7392 = vpack.c.b16 %v7385, %v7385
        %vm7399 = vcmask 818176
        %v7401 = vsel %vm7399, %v7352, 0
        %v7404 = vsel %vm7399, %v7353, 0
        %v7407 = vsel %vm7399, %v7354, 0
        %v7410 = vsel %vm7399, %v7355, 0
        %v7413 = vsel %vm7399, %v7356, 0
        %v7416 = vsel %vm7399, %v7357, 0
        %v7419 = vsel %vm7399, %v7358, 0
        %v7422 = vsel %vm7399, %v7359, 0
        %v7425 = vsel %vm3498, %v7392, 0
        %7427 = vmatpush.bf16.msra.mxu0 0
        %7428 = vmatpush.bf16.msra.mxu0 %v7425
        %7429 = vmatpush.bf16.msra.mxu0 %v7391
        %7430 = vmatpush.bf16.msra.mxu0 %v7390
        %7431 = vmatpush.bf16.msra.mxu0 %v7389
        %7432 = vmatpush.bf16.msra.mxu0 %v7388
        %7433 = vmatpush.bf16.msra.mxu0 %v7387
        %7434 = vmatpush.bf16.msra.mxu0 %v7386
        %7435 = vmatmul.bf16.gmra.mxu0 %v7401
        %v7436 = vpop.f32.mrf.mxu0
        %v7437 = vadd.f32 0.0, %v7436
        %v7438 = vpop.f32.mrf.mxu0
        %v7439 = vadd.f32 0.0, %v7438
        %7440 = vmatmul.bf16.gmra.mxu0 %v7404
        %v7441 = vpop.f32.mrf.mxu0
        %v7442 = vadd.f32 0.0, %v7441
        %v7443 = vpop.f32.mrf.mxu0
        %v7444 = vadd.f32 0.0, %v7443
        %7445 = vmatmul.bf16.gmra.mxu0 %v7407
        %v7446 = vpop.f32.mrf.mxu0
        %v7447 = vadd.f32 0.0, %v7446
        %v7448 = vpop.f32.mrf.mxu0
        %v7449 = vadd.f32 0.0, %v7448
        %7450 = vmatmul.bf16.gmra.mxu0 %v7410
        %v7451 = vpop.f32.mrf.mxu0
        %v7452 = vadd.f32 0.0, %v7451
        %v7453 = vpop.f32.mrf.mxu0
        %v7454 = vadd.f32 0.0, %v7453
        %7455 = vmatmul.bf16.gmra.mxu0 %v7413
        %v7456 = vpop.f32.mrf.mxu0
        %v7457 = vadd.f32 0.0, %v7456
        %v7458 = vpop.f32.mrf.mxu0
        %v7459 = vadd.f32 0.0, %v7458
        %7460 = vmatmul.bf16.gmra.mxu0 %v7416
        %v7461 = vpop.f32.mrf.mxu0
        %v7462 = vadd.f32 0.0, %v7461
        %v7463 = vpop.f32.mrf.mxu0
        %v7464 = vadd.f32 0.0, %v7463
        %7465 = vmatmul.bf16.gmra.mxu0 %v7419
        %v7466 = vpop.f32.mrf.mxu0
        %v7467 = vadd.f32 0.0, %v7466
        %v7468 = vpop.f32.mrf.mxu0
        %v7469 = vadd.f32 0.0, %v7468
        %7470 = vmatmul.bf16.gmra.mxu0 %v7422
        %v7471 = vpop.f32.mrf.mxu0
        %v7472 = vadd.f32 0.0, %v7471
        %v7473 = vpop.f32.mrf.mxu0
        %v7474 = vadd.f32 0.0, %v7473
        %7475 = vdwg.mxu0
        %v7478 = vunpack.c.l.b16 %v7273
        %v7479 = vunpack.c.l.b16 %v7274
        %v7480 = vpack.c.b16 %v7479, %v7478
        %v7494 = vunpack.c.l.b16 %v7293
        %v7495 = vunpack.c.l.b16 %v7294
        %v7496 = vunpack.c.l.b16 %v7295
        %v7497 = vunpack.c.l.b16 %v7296
        %v7498 = vunpack.c.l.b16 %v7297
        %v7499 = vunpack.c.l.b16 %v7298
        %v7500 = vunpack.c.l.b16 %v7299
        %v7501 = vunpack.c.l.b16 %v7300
        %v7502 = vunpack.c.l.b16 %v7301
        %v7503 = vunpack.c.l.b16 %v7302
        %v7504 = vunpack.c.l.b16 %v7303
        %v7505 = vunpack.c.l.b16 %v7304
        %v7506 = vunpack.c.l.b16 %v7305
        %v7507 = vpack.c.b16 %v7495, %v7494
        %v7508 = vpack.c.b16 %v7497, %v7496
        %v7509 = vpack.c.b16 %v7499, %v7498
        %v7510 = vpack.c.b16 %v7501, %v7500
        %v7511 = vpack.c.b16 %v7503, %v7502
        %v7512 = vpack.c.b16 %v7505, %v7504
        %v7513 = vpack.c.b16 %v7506, %v7506
        %v7521 = vsel %vm7399, %v7480, 0
        %v7524 = vsel %vm3498, %v7513, 0
        %7526 = vmatpush.bf16.msra.mxu0 0
        %7527 = vmatpush.bf16.msra.mxu0 %v7524
        %7528 = vmatpush.bf16.msra.mxu0 %v7512
        %7529 = vmatpush.bf16.msra.mxu0 %v7511
        %7530 = vmatpush.bf16.msra.mxu0 %v7510
        %7531 = vmatpush.bf16.msra.mxu0 %v7509
        %7532 = vmatpush.bf16.msra.mxu0 %v7508
        %7533 = vmatpush.bf16.msra.mxu0 %v7507
        %7534 = vmatmul.bf16.gmra.mxu0 %v7521
        %v7535 = vpop.f32.mrf.mxu0
        %v7536 = vadd.f32 %v7437, %v7535
        %v7537 = vpop.f32.mrf.mxu0
        %v7538 = vadd.f32 %v7439, %v7537
        %7539 = vmatmul.bf16.gmra.mxu0 %v7401
        %v7540 = vpop.f32.mrf.mxu0
        %v7541 = vadd.f32 %v7442, %v7540
        %v7542 = vpop.f32.mrf.mxu0
        %v7543 = vadd.f32 %v7444, %v7542
        %7544 = vmatmul.bf16.gmra.mxu0 %v7404
        %v7545 = vpop.f32.mrf.mxu0
        %v7546 = vadd.f32 %v7447, %v7545
        %v7547 = vpop.f32.mrf.mxu0
        %v7548 = vadd.f32 %v7449, %v7547
        %7549 = vmatmul.bf16.gmra.mxu0 %v7407
        %v7550 = vpop.f32.mrf.mxu0
        %v7551 = vadd.f32 %v7452, %v7550
        %v7552 = vpop.f32.mrf.mxu0
        %v7553 = vadd.f32 %v7454, %v7552
        %7554 = vmatmul.bf16.gmra.mxu0 %v7410
        %v7555 = vpop.f32.mrf.mxu0
        %v7556 = vadd.f32 %v7457, %v7555
        %v7557 = vpop.f32.mrf.mxu0
        %v7558 = vadd.f32 %v7459, %v7557
        %7559 = vmatmul.bf16.gmra.mxu0 %v7413
        %v7560 = vpop.f32.mrf.mxu0
        %v7561 = vadd.f32 %v7462, %v7560
        %v7562 = vpop.f32.mrf.mxu0
        %v7563 = vadd.f32 %v7464, %v7562
        %7564 = vmatmul.bf16.gmra.mxu0 %v7416
        %v7565 = vpop.f32.mrf.mxu0
        %v7566 = vadd.f32 %v7467, %v7565
        %v7567 = vpop.f32.mrf.mxu0
        %v7568 = vadd.f32 %v7469, %v7567
        %7569 = vmatmul.bf16.gmra.mxu0 %v7419
        %v7570 = vpop.f32.mrf.mxu0
        %v7571 = vadd.f32 %v7472, %v7570
        %v7572 = vpop.f32.mrf.mxu0
        %v7573 = vadd.f32 %v7474, %v7572
        %7574 = vdwg.mxu0
        %s7575 = scalar_lea.vmem %s5, 104
        %v7576 = vld [vmem:[%s7575] sm:$0xf]
        %v7577 = vld [vmem:[%s7575 + $0x4] sm:$0xf]
        %v7578 = vld [vmem:[%s7575 + $0x8] sm:$0xf]
        %v7579 = vld [vmem:[%s7575 + $0xc] sm:$0xf]
        %v7580 = vld [vmem:[%s7575 + $0x10] sm:$0xf]
        %v7581 = vld [vmem:[%s7575 + $0x14] sm:$0xf]
        %v7582 = vld [vmem:[%s7575 + $0x18] sm:$0xf]
        %v7583 = vld [vmem:[%s7575 + $0x1c] sm:$0xf]
        %v7584 = vld [vmem:[%s7575 + $0x20] sm:$0xf]
        %v7585 = vld [vmem:[%s7575 + $0x24] sm:$0xf]
        %v7586 = vld [vmem:[%s7575 + $0x28] sm:$0xf]
        %v7587 = vld [vmem:[%s7575 + $0x2c] sm:$0xf]
        %v7588 = vld [vmem:[%s7575 + $0x30] sm:$0x3]
        %v7591 = vunpack.c.l.b16 %v7291
        %v7592 = vunpack.c.l.b16 %v7292
        %v7593 = vpack.c.b16 %v7592, %v7591
        %v7607 = vunpack.c.l.b16 %v7576
        %v7608 = vunpack.c.l.b16 %v7577
        %v7609 = vunpack.c.l.b16 %v7578
        %v7610 = vunpack.c.l.b16 %v7579
        %v7611 = vunpack.c.l.b16 %v7580
        %v7612 = vunpack.c.l.b16 %v7581
        %v7613 = vunpack.c.l.b16 %v7582
        %v7614 = vunpack.c.l.b16 %v7583
        %v7615 = vunpack.c.l.b16 %v7584
        %v7616 = vunpack.c.l.b16 %v7585
        %v7617 = vunpack.c.l.b16 %v7586
        %v7618 = vunpack.c.l.b16 %v7587
        %v7619 = vunpack.c.l.b16 %v7588
        %v7620 = vpack.c.b16 %v7608, %v7607
        %v7621 = vpack.c.b16 %v7610, %v7609
        %v7622 = vpack.c.b16 %v7612, %v7611
        %v7623 = vpack.c.b16 %v7614, %v7613
        %v7624 = vpack.c.b16 %v7616, %v7615
        %v7625 = vpack.c.b16 %v7618, %v7617
        %v7626 = vpack.c.b16 %v7619, %v7619
        %v7634 = vsel %vm7399, %v7593, 0
        %v7637 = vsel %vm3498, %v7626, 0
        %7639 = vmatpush.bf16.msra.mxu0 0
        %7640 = vmatpush.bf16.msra.mxu0 %v7637
        %7641 = vmatpush.bf16.msra.mxu0 %v7625
        %7642 = vmatpush.bf16.msra.mxu0 %v7624
        %7643 = vmatpush.bf16.msra.mxu0 %v7623
        %7644 = vmatpush.bf16.msra.mxu0 %v7622
        %7645 = vmatpush.bf16.msra.mxu0 %v7621
        %7646 = vmatpush.bf16.msra.mxu0 %v7620
        %7647 = vmatmul.bf16.gmra.mxu0 %v7404
        %v7648 = vpop.f32.mrf.mxu0
        %v7649 = vadd.f32 0.0, %v7648
        %v7650 = vpop.f32.mrf.mxu0
        %v7651 = vadd.f32 0.0, %v7650
        %7652 = vmatmul.bf16.gmra.mxu0 %v7407
        %v7653 = vpop.f32.mrf.mxu0
        %v7654 = vadd.f32 0.0, %v7653
        %v7655 = vpop.f32.mrf.mxu0
        %v7656 = vadd.f32 0.0, %v7655
        %7657 = vmatmul.bf16.gmra.mxu0 %v7410
        %v7658 = vpop.f32.mrf.mxu0
        %v7659 = vadd.f32 0.0, %v7658
        %v7660 = vpop.f32.mrf.mxu0
        %v7661 = vadd.f32 0.0, %v7660
        %7662 = vmatmul.bf16.gmra.mxu0 %v7413
        %v7663 = vpop.f32.mrf.mxu0
        %v7664 = vadd.f32 0.0, %v7663
        %v7665 = vpop.f32.mrf.mxu0
        %v7666 = vadd.f32 0.0, %v7665
        %7667 = vmatmul.bf16.gmra.mxu0 %v7416
        %v7668 = vpop.f32.mrf.mxu0
        %v7669 = vadd.f32 0.0, %v7668
        %v7670 = vpop.f32.mrf.mxu0
        %v7671 = vadd.f32 0.0, %v7670
        %7672 = vmatmul.bf16.gmra.mxu0 %v7419
        %v7673 = vpop.f32.mrf.mxu0
        %v7674 = vadd.f32 0.0, %v7673
        %v7675 = vpop.f32.mrf.mxu0
        %v7676 = vadd.f32 0.0, %v7675
        %7677 = vmatmul.bf16.gmra.mxu0 %v7422
        %v7678 = vpop.f32.mrf.mxu0
        %v7679 = vadd.f32 0.0, %v7678
        %v7680 = vpop.f32.mrf.mxu0
        %v7681 = vadd.f32 0.0, %v7680
        %7682 = vmatmul.bf16.gmra.mxu0 %v7634
        %v7683 = vpop.f32.mrf.mxu0
        %v7684 = vadd.f32 0.0, %v7683
        %v7685 = vpop.f32.mrf.mxu0
        %v7686 = vadd.f32 0.0, %v7685
        %7687 = vdwg.mxu0
        %v7688 = vadd.f32 %v7536, %v7649
        %v7689 = vadd.f32 %v7538, %v7651
        %v7690 = vadd.f32 %v7541, %v7654
        %v7691 = vadd.f32 %v7543, %v7656
        %v7692 = vadd.f32 %v7546, %v7659
        %v7693 = vadd.f32 %v7548, %v7661
        %v7694 = vadd.f32 %v7551, %v7664
        %v7695 = vadd.f32 %v7553, %v7666
        %v7696 = vadd.f32 %v7556, %v7669
        %v7697 = vadd.f32 %v7558, %v7671
        %v7698 = vadd.f32 %v7561, %v7674
        %v7699 = vadd.f32 %v7563, %v7676
        %v7700 = vadd.f32 %v7566, %v7679
        %v7701 = vadd.f32 %v7568, %v7681
        %v7702 = vadd.f32 %v7571, %v7684
        %v7703 = vadd.f32 %v7573, %v7686
        %v7704 = vperm.slane %v592, 3
        %v7705 = vadd.f32 %v7688, %v7704
        %v7706 = vadd.f32 %v7689, %v7704
        %v7707 = vadd.f32 %v7690, %v7704
        %v7708 = vadd.f32 %v7691, %v7704
        %v7709 = vadd.f32 %v7692, %v7704
        %v7710 = vadd.f32 %v7693, %v7704
        %v7711 = vadd.f32 %v7694, %v7704
        %v7712 = vadd.f32 %v7695, %v7704
        %v7713 = vadd.f32 %v7696, %v7704
        %v7714 = vadd.f32 %v7697, %v7704
        %v7715 = vadd.f32 %v7698, %v7704
        %v7716 = vadd.f32 %v7699, %v7704
        %v7717 = vadd.f32 %v7700, %v7704
        %v7718 = vadd.f32 %v7701, %v7704
        %v7719 = vadd.f32 %v7702, %v7704
        %v7720 = vadd.f32 %v7703, %v7704
        %v7721 = vmax.f32 %v7705, 0.0
        %v7722 = vmax.f32 %v7706, 0.0
        %v7723 = vmax.f32 %v7707, 0.0
        %v7724 = vmax.f32 %v7708, 0.0
        %v7725 = vmax.f32 %v7709, 0.0
        %v7726 = vmax.f32 %v7710, 0.0
        %v7727 = vmax.f32 %v7711, 0.0
        %v7728 = vmax.f32 %v7712, 0.0
        %v7729 = vmax.f32 %v7713, 0.0
        %v7730 = vmax.f32 %v7714, 0.0
        %v7731 = vmax.f32 %v7715, 0.0
        %v7732 = vmax.f32 %v7716, 0.0
        %v7733 = vmax.f32 %v7717, 0.0
        %v7734 = vmax.f32 %v7718, 0.0
        %v7735 = vmax.f32 %v7719, 0.0
        %v7736 = vmax.f32 %v7720, 0.0
        %v7737 = vpack.c.bf16 %v7721, %v7721
        %v7738 = vpack.c.bf16 %v7722, %v7722
        %v7739 = vpack.c.bf16 %v7723, %v7723
        %v7740 = vpack.c.bf16 %v7724, %v7724
        %v7741 = vpack.c.bf16 %v7725, %v7725
        %v7742 = vpack.c.bf16 %v7726, %v7726
        %v7743 = vpack.c.bf16 %v7727, %v7727
        %v7744 = vpack.c.bf16 %v7728, %v7728
        %v7745 = vpack.c.bf16 %v7729, %v7729
        %v7746 = vpack.c.bf16 %v7730, %v7730
        %v7747 = vpack.c.bf16 %v7731, %v7731
        %v7748 = vpack.c.bf16 %v7732, %v7732
        %v7749 = vpack.c.bf16 %v7733, %v7733
        %v7750 = vpack.c.bf16 %v7734, %v7734
        %v7751 = vpack.c.bf16 %v7735, %v7735
        %v7752 = vpack.c.bf16 %v7736, %v7736
        %v7753 = vld [vmem:[%s6] sm:$0xf]
        %v7754 = vld [vmem:[%s6 + $0x4] sm:$0xf]
        %v7755 = vld [vmem:[%s6 + $0x8] sm:$0xf]
        %v7756 = vld [vmem:[%s6 + $0xc] sm:$0xf]
        %v7757 = vld [vmem:[%s6 + $0x10] sm:$0xf]
        %v7758 = vld [vmem:[%s6 + $0x14] sm:$0xf]
        %v7759 = vld [vmem:[%s6 + $0x18] sm:$0xf]
        %v7760 = vld [vmem:[%s6 + $0x1c] sm:$0xf]
        %v7761 = vld [vmem:[%s6 + $0x20] sm:$0xf]
        %v7762 = vld [vmem:[%s6 + $0x24] sm:$0xf]
        %v7763 = vld [vmem:[%s6 + $0x28] sm:$0xf]
        %v7764 = vld [vmem:[%s6 + $0x2c] sm:$0xf]
        %v7765 = vld [vmem:[%s6 + $0x30] sm:$0xf]
        %v7766 = vld [vmem:[%s6 + $0x34] sm:$0xf]
        %v7767 = vld [vmem:[%s6 + $0x38] sm:$0xf]
        %v7768 = vld [vmem:[%s6 + $0x3c] sm:$0xf]
        %s7769 = scalar_lea.vmem %s6, 64
        %v7770 = vld [vmem:[%s7769] sm:$0xf]
        %v7771 = vld [vmem:[%s7769 + $0x4] sm:$0xf]
        %v7772 = vld [vmem:[%s7769 + $0x8] sm:$0xf]
        %v7773 = vld [vmem:[%s7769 + $0xc] sm:$0xf]
        %v7774 = vld [vmem:[%s7769 + $0x10] sm:$0xf]
        %v7775 = vld [vmem:[%s7769 + $0x14] sm:$0xf]
        %v7776 = vld [vmem:[%s7769 + $0x18] sm:$0xf]
        %v7777 = vld [vmem:[%s7769 + $0x1c] sm:$0xf]
        %v7778 = vld [vmem:[%s7769 + $0x20] sm:$0xf]
        %v7779 = vld [vmem:[%s7769 + $0x24] sm:$0xf]
        %v7780 = vld [vmem:[%s7769 + $0x28] sm:$0xf]
        %v7781 = vld [vmem:[%s7769 + $0x2c] sm:$0xf]
        %v7782 = vld [vmem:[%s7769 + $0x30] sm:$0xf]
        %v7783 = vld [vmem:[%s7769 + $0x34] sm:$0xf]
        %v7784 = vld [vmem:[%s7769 + $0x38] sm:$0xf]
        %v7785 = vld [vmem:[%s7769 + $0x3c] sm:$0xf]
        %v7798 = vunpack.c.l.b16 %v7739
        %v7799 = vunpack.c.l.b16 %v7740
        %v7800 = vunpack.c.l.b16 %v7741
        %v7801 = vunpack.c.l.b16 %v7742
        %v7802 = vunpack.c.l.b16 %v7743
        %v7803 = vunpack.c.l.b16 %v7744
        %v7804 = vunpack.c.l.b16 %v7745
        %v7805 = vunpack.c.l.b16 %v7746
        %v7806 = vunpack.c.l.b16 %v7747
        %v7807 = vunpack.c.l.b16 %v7748
        %v7808 = vunpack.c.l.b16 %v7749
        %v7809 = vunpack.c.l.b16 %v7750
        %v7810 = vpack.c.b16 %v7799, %v7798
        %v7811 = vpack.c.b16 %v7801, %v7800
        %v7812 = vpack.c.b16 %v7803, %v7802
        %v7813 = vpack.c.b16 %v7805, %v7804
        %v7814 = vpack.c.b16 %v7807, %v7806
        %v7815 = vpack.c.b16 %v7809, %v7808
        %v7838 = vunpack.c.l.b16 %v7770
        %v7839 = vunpack.c.l.b16 %v7771
        %v7840 = vunpack.c.l.b16 %v7772
        %v7841 = vunpack.c.l.b16 %v7773
        %v7842 = vunpack.c.l.b16 %v7774
        %v7843 = vunpack.c.l.b16 %v7775
        %v7844 = vunpack.c.l.b16 %v7776
        %v7845 = vunpack.c.l.b16 %v7777
        %v7846 = vunpack.c.l.b16 %v7778
        %v7847 = vunpack.c.l.b16 %v7779
        %v7848 = vunpack.c.l.b16 %v7780
        %v7849 = vunpack.c.l.b16 %v7781
        %v7850 = vunpack.c.l.b16 %v7782
        %v7851 = vunpack.c.l.b16 %v7783
        %v7852 = vunpack.c.l.b16 %v7784
        %v7853 = vunpack.c.l.b16 %v7785
        %v7854 = vpack.c.b16 %v7839, %v7838
        %v7855 = vpack.c.b16 %v7841, %v7840
        %v7856 = vpack.c.b16 %v7843, %v7842
        %v7857 = vpack.c.b16 %v7845, %v7844
        %v7858 = vpack.c.b16 %v7847, %v7846
        %v7859 = vpack.c.b16 %v7849, %v7848
        %v7860 = vpack.c.b16 %v7851, %v7850
        %v7861 = vpack.c.b16 %v7853, %v7852
        %7870 = vmatpush.bf16.msra.mxu0 %v7861
        %7871 = vmatpush.bf16.msra.mxu0 %v7860
        %7872 = vmatpush.bf16.msra.mxu0 %v7859
        %7873 = vmatpush.bf16.msra.mxu0 %v7858
        %7874 = vmatpush.bf16.msra.mxu0 %v7857
        %7875 = vmatpush.bf16.msra.mxu0 %v7856
        %7876 = vmatpush.bf16.msra.mxu0 %v7855
        %7877 = vmatpush.bf16.msra.mxu0 %v7854
        %7878 = vmatmul.bf16.gmra.mxu0 %v7810
        %v7879 = vpop.f32.mrf.mxu0
        %v7880 = vadd.f32 0.0, %v7879
        %v7881 = vpop.f32.mrf.mxu0
        %v7882 = vadd.f32 0.0, %v7881
        %7883 = vmatmul.bf16.gmra.mxu0 %v7811
        %v7884 = vpop.f32.mrf.mxu0
        %v7885 = vadd.f32 0.0, %v7884
        %v7886 = vpop.f32.mrf.mxu0
        %v7887 = vadd.f32 0.0, %v7886
        %7888 = vmatmul.bf16.gmra.mxu0 %v7812
        %v7889 = vpop.f32.mrf.mxu0
        %v7890 = vadd.f32 0.0, %v7889
        %v7891 = vpop.f32.mrf.mxu0
        %v7892 = vadd.f32 0.0, %v7891
        %7893 = vmatmul.bf16.gmra.mxu0 %v7813
        %v7894 = vpop.f32.mrf.mxu0
        %v7895 = vadd.f32 0.0, %v7894
        %v7896 = vpop.f32.mrf.mxu0
        %v7897 = vadd.f32 0.0, %v7896
        %7898 = vmatmul.bf16.gmra.mxu0 %v7814
        %v7899 = vpop.f32.mrf.mxu0
        %v7900 = vadd.f32 0.0, %v7899
        %v7901 = vpop.f32.mrf.mxu0
        %v7902 = vadd.f32 0.0, %v7901
        %7903 = vmatmul.bf16.gmra.mxu0 %v7815
        %v7904 = vpop.f32.mrf.mxu0
        %v7905 = vadd.f32 0.0, %v7904
        %v7906 = vpop.f32.mrf.mxu0
        %v7907 = vadd.f32 0.0, %v7906
        %7908 = vdwg.mxu0
        %v7911 = vunpack.c.l.b16 %v7737
        %v7912 = vunpack.c.l.b16 %v7738
        %v7913 = vpack.c.b16 %v7912, %v7911
        %v7931 = vunpack.c.l.b16 %v7753
        %v7932 = vunpack.c.l.b16 %v7754
        %v7933 = vunpack.c.l.b16 %v7755
        %v7934 = vunpack.c.l.b16 %v7756
        %v7935 = vunpack.c.l.b16 %v7757
        %v7936 = vunpack.c.l.b16 %v7758
        %v7937 = vunpack.c.l.b16 %v7759
        %v7938 = vunpack.c.l.b16 %v7760
        %v7939 = vunpack.c.l.b16 %v7761
        %v7940 = vunpack.c.l.b16 %v7762
        %v7941 = vunpack.c.l.b16 %v7763
        %v7942 = vunpack.c.l.b16 %v7764
        %v7943 = vunpack.c.l.b16 %v7765
        %v7944 = vunpack.c.l.b16 %v7766
        %v7945 = vunpack.c.l.b16 %v7767
        %v7946 = vunpack.c.l.b16 %v7768
        %v7947 = vpack.c.b16 %v7932, %v7931
        %v7948 = vpack.c.b16 %v7934, %v7933
        %v7949 = vpack.c.b16 %v7936, %v7935
        %v7950 = vpack.c.b16 %v7938, %v7937
        %v7951 = vpack.c.b16 %v7940, %v7939
        %v7952 = vpack.c.b16 %v7942, %v7941
        %v7953 = vpack.c.b16 %v7944, %v7943
        %v7954 = vpack.c.b16 %v7946, %v7945
        %7963 = vmatpush.bf16.msra.mxu0 %v7954
        %7964 = vmatpush.bf16.msra.mxu0 %v7953
        %7965 = vmatpush.bf16.msra.mxu0 %v7952
        %7966 = vmatpush.bf16.msra.mxu0 %v7951
        %7967 = vmatpush.bf16.msra.mxu0 %v7950
        %7968 = vmatpush.bf16.msra.mxu0 %v7949
        %7969 = vmatpush.bf16.msra.mxu0 %v7948
        %7970 = vmatpush.bf16.msra.mxu0 %v7947
        %7971 = vmatmul.bf16.gmra.mxu0 %v7913
        %v7972 = vpop.f32.mrf.mxu0
        %v7973 = vadd.f32 %v7880, %v7972
        %v7974 = vpop.f32.mrf.mxu0
        %v7975 = vadd.f32 %v7882, %v7974
        %7976 = vmatmul.bf16.gmra.mxu0 %v7810
        %v7977 = vpop.f32.mrf.mxu0
        %v7978 = vadd.f32 %v7885, %v7977
        %v7979 = vpop.f32.mrf.mxu0
        %v7980 = vadd.f32 %v7887, %v7979
        %7981 = vmatmul.bf16.gmra.mxu0 %v7811
        %v7982 = vpop.f32.mrf.mxu0
        %v7983 = vadd.f32 %v7890, %v7982
        %v7984 = vpop.f32.mrf.mxu0
        %v7985 = vadd.f32 %v7892, %v7984
        %7986 = vmatmul.bf16.gmra.mxu0 %v7812
        %v7987 = vpop.f32.mrf.mxu0
        %v7988 = vadd.f32 %v7895, %v7987
        %v7989 = vpop.f32.mrf.mxu0
        %v7990 = vadd.f32 %v7897, %v7989
        %7991 = vmatmul.bf16.gmra.mxu0 %v7813
        %v7992 = vpop.f32.mrf.mxu0
        %v7993 = vadd.f32 %v7900, %v7992
        %v7994 = vpop.f32.mrf.mxu0
        %v7995 = vadd.f32 %v7902, %v7994
        %7996 = vmatmul.bf16.gmra.mxu0 %v7814
        %v7997 = vpop.f32.mrf.mxu0
        %v7998 = vadd.f32 %v7905, %v7997
        %v7999 = vpop.f32.mrf.mxu0
        %v8000 = vadd.f32 %v7907, %v7999
        %8001 = vdwg.mxu0
        %s8002 = scalar_lea.vmem %s6, 128
        %v8003 = vld [vmem:[%s8002] sm:$0xf]
        %v8004 = vld [vmem:[%s8002 + $0x4] sm:$0xf]
        %v8005 = vld [vmem:[%s8002 + $0x8] sm:$0xf]
        %v8006 = vld [vmem:[%s8002 + $0xc] sm:$0xf]
        %v8007 = vld [vmem:[%s8002 + $0x10] sm:$0xf]
        %v8008 = vld [vmem:[%s8002 + $0x14] sm:$0xf]
        %v8009 = vld [vmem:[%s8002 + $0x18] sm:$0xf]
        %v8010 = vld [vmem:[%s8002 + $0x1c] sm:$0xf]
        %v8011 = vld [vmem:[%s8002 + $0x20] sm:$0xf]
        %v8012 = vld [vmem:[%s8002 + $0x24] sm:$0xf]
        %v8013 = vld [vmem:[%s8002 + $0x28] sm:$0xf]
        %v8014 = vld [vmem:[%s8002 + $0x2c] sm:$0xf]
        %v8015 = vld [vmem:[%s8002 + $0x30] sm:$0xf]
        %v8016 = vld [vmem:[%s8002 + $0x34] sm:$0xf]
        %v8017 = vld [vmem:[%s8002 + $0x38] sm:$0xf]
        %v8018 = vld [vmem:[%s8002 + $0x3c] sm:$0xf]
        %v8021 = vunpack.c.l.b16 %v7751
        %v8022 = vunpack.c.l.b16 %v7752
        %v8023 = vpack.c.b16 %v8022, %v8021
        %v8041 = vunpack.c.l.b16 %v8003
        %v8042 = vunpack.c.l.b16 %v8004
        %v8043 = vunpack.c.l.b16 %v8005
        %v8044 = vunpack.c.l.b16 %v8006
        %v8045 = vunpack.c.l.b16 %v8007
        %v8046 = vunpack.c.l.b16 %v8008
        %v8047 = vunpack.c.l.b16 %v8009
        %v8048 = vunpack.c.l.b16 %v8010
        %v8049 = vunpack.c.l.b16 %v8011
        %v8050 = vunpack.c.l.b16 %v8012
        %v8051 = vunpack.c.l.b16 %v8013
        %v8052 = vunpack.c.l.b16 %v8014
        %v8053 = vunpack.c.l.b16 %v8015
        %v8054 = vunpack.c.l.b16 %v8016
        %v8055 = vunpack.c.l.b16 %v8017
        %v8056 = vunpack.c.l.b16 %v8018
        %v8057 = vpack.c.b16 %v8042, %v8041
        %v8058 = vpack.c.b16 %v8044, %v8043
        %v8059 = vpack.c.b16 %v8046, %v8045
        %v8060 = vpack.c.b16 %v8048, %v8047
        %v8061 = vpack.c.b16 %v8050, %v8049
        %v8062 = vpack.c.b16 %v8052, %v8051
        %v8063 = vpack.c.b16 %v8054, %v8053
        %v8064 = vpack.c.b16 %v8056, %v8055
        %8073 = vmatpush.bf16.msra.mxu0 %v8064
        %8074 = vmatpush.bf16.msra.mxu0 %v8063
        %8075 = vmatpush.bf16.msra.mxu0 %v8062
        %8076 = vmatpush.bf16.msra.mxu0 %v8061
        %8077 = vmatpush.bf16.msra.mxu0 %v8060
        %8078 = vmatpush.bf16.msra.mxu0 %v8059
        %8079 = vmatpush.bf16.msra.mxu0 %v8058
        %8080 = vmatpush.bf16.msra.mxu0 %v8057
        %8081 = vmatmul.bf16.gmra.mxu0 %v7811
        %v8082 = vpop.f32.mrf.mxu0
        %v8083 = vadd.f32 0.0, %v8082
        %v8084 = vpop.f32.mrf.mxu0
        %v8085 = vadd.f32 0.0, %v8084
        %8086 = vmatmul.bf16.gmra.mxu0 %v7812
        %v8087 = vpop.f32.mrf.mxu0
        %v8088 = vadd.f32 0.0, %v8087
        %v8089 = vpop.f32.mrf.mxu0
        %v8090 = vadd.f32 0.0, %v8089
        %8091 = vmatmul.bf16.gmra.mxu0 %v7813
        %v8092 = vpop.f32.mrf.mxu0
        %v8093 = vadd.f32 0.0, %v8092
        %v8094 = vpop.f32.mrf.mxu0
        %v8095 = vadd.f32 0.0, %v8094
        %8096 = vmatmul.bf16.gmra.mxu0 %v7814
        %v8097 = vpop.f32.mrf.mxu0
        %v8098 = vadd.f32 0.0, %v8097
        %v8099 = vpop.f32.mrf.mxu0
        %v8100 = vadd.f32 0.0, %v8099
        %8101 = vmatmul.bf16.gmra.mxu0 %v7815
        %v8102 = vpop.f32.mrf.mxu0
        %v8103 = vadd.f32 0.0, %v8102
        %v8104 = vpop.f32.mrf.mxu0
        %v8105 = vadd.f32 0.0, %v8104
        %8106 = vmatmul.bf16.gmra.mxu0 %v8023
        %v8107 = vpop.f32.mrf.mxu0
        %v8108 = vadd.f32 0.0, %v8107
        %v8109 = vpop.f32.mrf.mxu0
        %v8110 = vadd.f32 0.0, %v8109
        %8111 = vdwg.mxu0
        %v8112 = vadd.f32 %v7973, %v8083
        %v8113 = vadd.f32 %v7975, %v8085
        %v8114 = vadd.f32 %v7978, %v8088
        %v8115 = vadd.f32 %v7980, %v8090
        %v8116 = vadd.f32 %v7983, %v8093
        %v8117 = vadd.f32 %v7985, %v8095
        %v8118 = vadd.f32 %v7988, %v8098
        %v8119 = vadd.f32 %v7990, %v8100
        %v8120 = vadd.f32 %v7993, %v8103
        %v8121 = vadd.f32 %v7995, %v8105
        %v8122 = vadd.f32 %v7998, %v8108
        %v8123 = vadd.f32 %v8000, %v8110
        %v8124 = vperm.slane %v592, 4
        %v8125 = vadd.f32 %v8112, %v8124
        %v8126 = vadd.f32 %v8113, %v8124
        %v8127 = vadd.f32 %v8114, %v8124
        %v8128 = vadd.f32 %v8115, %v8124
        %v8129 = vadd.f32 %v8116, %v8124
        %v8130 = vadd.f32 %v8117, %v8124
        %v8131 = vadd.f32 %v8118, %v8124
        %v8132 = vadd.f32 %v8119, %v8124
        %v8133 = vadd.f32 %v8120, %v8124
        %v8134 = vadd.f32 %v8121, %v8124
        %v8135 = vadd.f32 %v8122, %v8124
        %v8136 = vadd.f32 %v8123, %v8124
        %v8137 = vmax.f32 %v8125, 0.0
        %v8138 = vmax.f32 %v8126, 0.0
        %v8139 = vmax.f32 %v8127, 0.0
        %v8140 = vmax.f32 %v8128, 0.0
        %v8141 = vmax.f32 %v8129, 0.0
        %v8142 = vmax.f32 %v8130, 0.0
        %v8143 = vmax.f32 %v8131, 0.0
        %v8144 = vmax.f32 %v8132, 0.0
        %v8145 = vmax.f32 %v8133, 0.0
        %v8146 = vmax.f32 %v8134, 0.0
        %v8147 = vmax.f32 %v8135, 0.0
        %v8148 = vmax.f32 %v8136, 0.0
        %v8149 = vpack.c.bf16 %v8137, %v8137
        %v8150 = vpack.c.bf16 %v8138, %v8138
        %v8151 = vpack.c.bf16 %v8139, %v8139
        %v8152 = vpack.c.bf16 %v8140, %v8140
        %v8153 = vpack.c.bf16 %v8141, %v8141
        %v8154 = vpack.c.bf16 %v8142, %v8142
        %v8155 = vpack.c.bf16 %v8143, %v8143
        %v8156 = vpack.c.bf16 %v8144, %v8144
        %v8157 = vpack.c.bf16 %v8145, %v8145
        %v8158 = vpack.c.bf16 %v8146, %v8146
        %v8159 = vpack.c.bf16 %v8147, %v8147
        %v8160 = vpack.c.bf16 %v8148, %v8148
        %v8161 = vld [vmem:[%s7] sm:$0xf]
        %v8162 = vld [vmem:[%s7 + $0x4] sm:$0xf]
        %v8163 = vld [vmem:[%s7 + $0x8] sm:$0xf]
        %v8164 = vld [vmem:[%s7 + $0xc] sm:$0xf]
        %v8165 = vld [vmem:[%s7 + $0x10] sm:$0xf]
        %v8166 = vld [vmem:[%s7 + $0x14] sm:$0xf]
        %s8167 = scalar_lea.vmem %s7, 24
        %v8168 = vld [vmem:[%s8167] sm:$0xf]
        %v8169 = vld [vmem:[%s8167 + $0x4] sm:$0xf]
        %v8170 = vld [vmem:[%s8167 + $0x8] sm:$0xf]
        %v8171 = vld [vmem:[%s8167 + $0xc] sm:$0xf]
        %v8172 = vld [vmem:[%s8167 + $0x10] sm:$0xf]
        %v8173 = vld [vmem:[%s8167 + $0x14] sm:$0xf]
        %v8176 = vunpack.c.l.b16 %v8151
        %v8177 = vunpack.c.l.b16 %v8152
        %v8178 = vpack.c.b16 %v8177, %v8176
        %v8185 = vunpack.c.l.b16 %v8168
        %v8186 = vunpack.c.l.b16 %v8169
        %v8187 = vunpack.c.l.b16 %v8170
        %v8188 = vunpack.c.l.b16 %v8171
        %v8189 = vunpack.c.l.b16 %v8172
        %v8190 = vunpack.c.l.b16 %v8173
        %v8191 = vpack.c.b16 %v8186, %v8185
        %v8192 = vpack.c.b16 %v8188, %v8187
        %v8193 = vpack.c.b16 %v8190, %v8189
        %vm8197 = vcmask 392192
        %v8199 = vsel %vm8197, %v8178, 0
        %8201 = vmatpush.bf16.msra.mxu0 0
        %8202 = vmatpush.bf16.msra.mxu0 0
        %8203 = vmatpush.bf16.msra.mxu0 0
        %8204 = vmatpush.bf16.msra.mxu0 0
        %8205 = vmatpush.bf16.msra.mxu0 0
        %8206 = vmatpush.bf16.msra.mxu0 %v8193
        %8207 = vmatpush.bf16.msra.mxu0 %v8192
        %8208 = vmatpush.bf16.msra.mxu0 %v8191
        %8209 = vmatmul.bf16.gmra.mxu0 %v8199
        %v8210 = vpop.f32.mrf.mxu0
        %v8211 = vadd.f32 0.0, %v8210
        %v8212 = vpop.f32.mrf.mxu0
        %v8213 = vadd.f32 0.0, %v8212
        %8214 = vdwg.mxu0
        %v8217 = vunpack.c.l.b16 %v8149
        %v8218 = vunpack.c.l.b16 %v8150
        %v8219 = vpack.c.b16 %v8218, %v8217
        %v8226 = vunpack.c.l.b16 %v8161
        %v8227 = vunpack.c.l.b16 %v8162
        %v8228 = vunpack.c.l.b16 %v8163
        %v8229 = vunpack.c.l.b16 %v8164
        %v8230 = vunpack.c.l.b16 %v8165
        %v8231 = vunpack.c.l.b16 %v8166
        %v8232 = vpack.c.b16 %v8227, %v8226
        %v8233 = vpack.c.b16 %v8229, %v8228
        %v8234 = vpack.c.b16 %v8231, %v8230
        %v8239 = vsel %vm8197, %v8219, 0
        %8241 = vmatpush.bf16.msra.mxu0 0
        %8242 = vmatpush.bf16.msra.mxu0 0
        %8243 = vmatpush.bf16.msra.mxu0 0
        %8244 = vmatpush.bf16.msra.mxu0 0
        %8245 = vmatpush.bf16.msra.mxu0 0
        %8246 = vmatpush.bf16.msra.mxu0 %v8234
        %8247 = vmatpush.bf16.msra.mxu0 %v8233
        %8248 = vmatpush.bf16.msra.mxu0 %v8232
        %8249 = vmatmul.bf16.gmra.mxu0 %v8239
        %v8250 = vpop.f32.mrf.mxu0
        %v8251 = vadd.f32 %v8211, %v8250
        %v8252 = vpop.f32.mrf.mxu0
        %v8253 = vadd.f32 %v8213, %v8252
        %8254 = vdwg.mxu0
        %s8255 = scalar_lea.vmem %s7, 48
        %v8256 = vld [vmem:[%s8255] sm:$0xf]
        %v8257 = vld [vmem:[%s8255 + $0x4] sm:$0xf]
        %v8258 = vld [vmem:[%s8255 + $0x8] sm:$0xf]
        %v8259 = vld [vmem:[%s8255 + $0xc] sm:$0xf]
        %v8260 = vld [vmem:[%s8255 + $0x10] sm:$0xf]
        %v8261 = vld [vmem:[%s8255 + $0x14] sm:$0xf]
        %v8264 = vunpack.c.l.b16 %v8153
        %v8265 = vunpack.c.l.b16 %v8154
        %v8266 = vpack.c.b16 %v8265, %v8264
        %v8273 = vunpack.c.l.b16 %v8256
        %v8274 = vunpack.c.l.b16 %v8257
        %v8275 = vunpack.c.l.b16 %v8258
        %v8276 = vunpack.c.l.b16 %v8259
        %v8277 = vunpack.c.l.b16 %v8260
        %v8278 = vunpack.c.l.b16 %v8261
        %v8279 = vpack.c.b16 %v8274, %v8273
        %v8280 = vpack.c.b16 %v8276, %v8275
        %v8281 = vpack.c.b16 %v8278, %v8277
        %v8286 = vsel %vm8197, %v8266, 0
        %8288 = vmatpush.bf16.msra.mxu0 0
        %8289 = vmatpush.bf16.msra.mxu0 0
        %8290 = vmatpush.bf16.msra.mxu0 0
        %8291 = vmatpush.bf16.msra.mxu0 0
        %8292 = vmatpush.bf16.msra.mxu0 0
        %8293 = vmatpush.bf16.msra.mxu0 %v8281
        %8294 = vmatpush.bf16.msra.mxu0 %v8280
        %8295 = vmatpush.bf16.msra.mxu0 %v8279
        %8296 = vmatmul.bf16.gmra.mxu0 %v8286
        %v8297 = vpop.f32.mrf.mxu0
        %v8298 = vadd.f32 0.0, %v8297
        %v8299 = vpop.f32.mrf.mxu0
        %v8300 = vadd.f32 0.0, %v8299
        %8301 = vdwg.mxu0
        %v8302 = vadd.f32 %v8251, %v8298
        %v8303 = vadd.f32 %v8253, %v8300
        %s8304 = scalar_lea.vmem %s7, 72
        %v8305 = vld [vmem:[%s8304] sm:$0xf]
        %v8306 = vld [vmem:[%s8304 + $0x4] sm:$0xf]
        %v8307 = vld [vmem:[%s8304 + $0x8] sm:$0xf]
        %v8308 = vld [vmem:[%s8304 + $0xc] sm:$0xf]
        %v8309 = vld [vmem:[%s8304 + $0x10] sm:$0xf]
        %v8310 = vld [vmem:[%s8304 + $0x14] sm:$0xf]
        %v8313 = vunpack.c.l.b16 %v8155
        %v8314 = vunpack.c.l.b16 %v8156
        %v8315 = vpack.c.b16 %v8314, %v8313
        %v8322 = vunpack.c.l.b16 %v8305
        %v8323 = vunpack.c.l.b16 %v8306
        %v8324 = vunpack.c.l.b16 %v8307
        %v8325 = vunpack.c.l.b16 %v8308
        %v8326 = vunpack.c.l.b16 %v8309
        %v8327 = vunpack.c.l.b16 %v8310
        %v8328 = vpack.c.b16 %v8323, %v8322
        %v8329 = vpack.c.b16 %v8325, %v8324
        %v8330 = vpack.c.b16 %v8327, %v8326
        %v8335 = vsel %vm8197, %v8315, 0
        %8337 = vmatpush.bf16.msra.mxu0 0
        %8338 = vmatpush.bf16.msra.mxu0 0
        %8339 = vmatpush.bf16.msra.mxu0 0
        %8340 = vmatpush.bf16.msra.mxu0 0
        %8341 = vmatpush.bf16.msra.mxu0 0
        %8342 = vmatpush.bf16.msra.mxu0 %v8330
        %8343 = vmatpush.bf16.msra.mxu0 %v8329
        %8344 = vmatpush.bf16.msra.mxu0 %v8328
        %8345 = vmatmul.bf16.gmra.mxu0 %v8335
        %v8346 = vpop.f32.mrf.mxu0
        %v8347 = vadd.f32 0.0, %v8346
        %v8348 = vpop.f32.mrf.mxu0
        %v8349 = vadd.f32 0.0, %v8348
        %8350 = vdwg.mxu0
        %v8351 = vadd.f32 %v8302, %v8347
        %v8352 = vadd.f32 %v8303, %v8349
        %s8353 = scalar_lea.vmem %s7, 96
        %v8354 = vld [vmem:[%s8353] sm:$0xf]
        %v8355 = vld [vmem:[%s8353 + $0x4] sm:$0xf]
        %v8356 = vld [vmem:[%s8353 + $0x8] sm:$0xf]
        %v8357 = vld [vmem:[%s8353 + $0xc] sm:$0xf]
        %v8358 = vld [vmem:[%s8353 + $0x10] sm:$0xf]
        %v8359 = vld [vmem:[%s8353 + $0x14] sm:$0xf]
        %v8362 = vunpack.c.l.b16 %v8157
        %v8363 = vunpack.c.l.b16 %v8158
        %v8364 = vpack.c.b16 %v8363, %v8362
        %v8371 = vunpack.c.l.b16 %v8354
        %v8372 = vunpack.c.l.b16 %v8355
        %v8373 = vunpack.c.l.b16 %v8356
        %v8374 = vunpack.c.l.b16 %v8357
        %v8375 = vunpack.c.l.b16 %v8358
        %v8376 = vunpack.c.l.b16 %v8359
        %v8377 = vpack.c.b16 %v8372, %v8371
        %v8378 = vpack.c.b16 %v8374, %v8373
        %v8379 = vpack.c.b16 %v8376, %v8375
        %v8384 = vsel %vm8197, %v8364, 0
        %8386 = vmatpush.bf16.msra.mxu0 0
        %8387 = vmatpush.bf16.msra.mxu0 0
        %8388 = vmatpush.bf16.msra.mxu0 0
        %8389 = vmatpush.bf16.msra.mxu0 0
        %8390 = vmatpush.bf16.msra.mxu0 0
        %8391 = vmatpush.bf16.msra.mxu0 %v8379
        %8392 = vmatpush.bf16.msra.mxu0 %v8378
        %8393 = vmatpush.bf16.msra.mxu0 %v8377
        %8394 = vmatmul.bf16.gmra.mxu0 %v8384
        %v8395 = vpop.f32.mrf.mxu0
        %v8396 = vadd.f32 0.0, %v8395
        %v8397 = vpop.f32.mrf.mxu0
        %v8398 = vadd.f32 0.0, %v8397
        %8399 = vdwg.mxu0
        %v8400 = vadd.f32 %v8351, %v8396
        %v8401 = vadd.f32 %v8352, %v8398
        %s8402 = scalar_lea.vmem %s7, 120
        %v8403 = vld [vmem:[%s8402] sm:$0xf]
        %v8404 = vld [vmem:[%s8402 + $0x4] sm:$0xf]
        %v8405 = vld [vmem:[%s8402 + $0x8] sm:$0xf]
        %v8406 = vld [vmem:[%s8402 + $0xc] sm:$0xf]
        %v8407 = vld [vmem:[%s8402 + $0x10] sm:$0xf]
        %v8408 = vld [vmem:[%s8402 + $0x14] sm:$0xf]
        %v8411 = vunpack.c.l.b16 %v8159
        %v8412 = vunpack.c.l.b16 %v8160
        %v8413 = vpack.c.b16 %v8412, %v8411
        %v8420 = vunpack.c.l.b16 %v8403
        %v8421 = vunpack.c.l.b16 %v8404
        %v8422 = vunpack.c.l.b16 %v8405
        %v8423 = vunpack.c.l.b16 %v8406
        %v8424 = vunpack.c.l.b16 %v8407
        %v8425 = vunpack.c.l.b16 %v8408
        %v8426 = vpack.c.b16 %v8421, %v8420
        %v8427 = vpack.c.b16 %v8423, %v8422
        %v8428 = vpack.c.b16 %v8425, %v8424
        %v8433 = vsel %vm8197, %v8413, 0
        %8435 = vmatpush.bf16.msra.mxu0 0
        %8436 = vmatpush.bf16.msra.mxu0 0
        %8437 = vmatpush.bf16.msra.mxu0 0
        %8438 = vmatpush.bf16.msra.mxu0 0
        %8439 = vmatpush.bf16.msra.mxu0 0
        %8440 = vmatpush.bf16.msra.mxu0 %v8428
        %8441 = vmatpush.bf16.msra.mxu0 %v8427
        %8442 = vmatpush.bf16.msra.mxu0 %v8426
        %8443 = vmatmul.bf16.gmra.mxu0 %v8433
        %v8444 = vpop.f32.mrf.mxu0
        %v8445 = vadd.f32 0.0, %v8444
        %v8446 = vpop.f32.mrf.mxu0
        %v8447 = vadd.f32 0.0, %v8446
        %8448 = vdwg.mxu0
        %v8449 = vadd.f32 %v8400, %v8445
        %v8450 = vadd.f32 %v8401, %v8447
        %v8451 = vperm.slane %v592, 5
        %v8452 = vadd.f32 %v8449, %v8451
        %v8453 = vadd.f32 %v8450, %v8451
        %8454 = vmax.xlane.f32.xlu0 %v8452
        %v8455 = vpop.xlane.xlu0 %8454
        %8456 = vmax.xlane.f32.xlu0 %v8453
        %v8457 = vpop.xlane.xlu0 %8456
        %v8458 = vsub.f32 %v8452, %v8455
        %v8459 = vsub.f32 %v8453, %v8457
        %v8460 = vmul.f32 %v8458, 1.442695
        %v8461 = vpow.pop %v8460
        %v8462 = vmul.f32 %v8459, 1.442695
        %v8463 = vpow.pop %v8462
        %8464 = vadd.xlane.f32.xlu0 %v8461
        %v8465 = vpop.xlane.xlu0 %8464
        %8466 = vadd.xlane.f32.xlu0 %v8463
        %v8467 = vpop.xlane.xlu0 %8466
        %v8468 = vlog2.pop %v8465
        %v8469 = vmul.f32 %v8468, 0.6931472
        %v8470 = vlog2.pop %v8467
        %v8471 = vmul.f32 %v8470, 0.6931472
        %v8472 = vsub.f32 %v8458, %v8469
        %v8473 = vsub.f32 %v8459, %v8471
        %8474 = vst [vmem:[%s589] sm:$0xff] %v8472
        %8475 = vst [vmem:[%s589 + $0x8] sm:$0xff] %v8473
        %s8476 = smul.u32 2, %s20
        %p8477 = scmp.lt.s32.totalorder %s8476, 3
        %s8478 = scalar_select %p8477, %s8476, 3
        %s8479 = smul.addr %s8478, 8
        %s8480 = scalar_lea.vmem %s9, %s8479
        // Predicated region
        $region95: #{forward.1} parent=89 // pred_check
          %p8481 = pneg %p232
        $region96: #{forward.1} parent=89 // pred_check_branch
          %8483 = sbr.rel (%p8481) target = $region98
        $region97: #{forward.1} parent=89 // pred_region
          %s8484 = smul.u32 2, %s20
        $region98: #{forward.1} parent=89 // pred_fallthru
          _
      $region90: #{forward.1} parent=5 // pred_fallthru
        _
      %p8485 = scmp.le.s32.totalorder 2, %s15
      // Predicated region
      $region99: #{forward.1} parent=5 // pred_check
        %p8486 = pneg %p8485
      $region100: #{forward.1} parent=5 // pred_check_branch
        %8488 = sbr.rel (%p8486) target = $region102
      $region101: #{forward.1} parent=5 // pred_region
        %s8489 = ssub.s32 %s15, 2
        // Predicated region
        $region103: #{forward.1} parent=101 // pred_check
          %p8490 = pneg %p238
        $region104: #{forward.1} parent=101 // pred_check_branch
          %8492 = sbr.rel (%p8490) target = $region106
        $region105: #{forward.1} parent=101 // pred_region
          %s8493 = smul.u32 2, %s21
          %p8494 = scmp.lt.s32.totalorder %s8493, 3
          %s8495 = scalar_select %p8494, %s8493, 3
          %s8496 = smul.addr %s8495, 8
          %s8497 = scalar_lea.vmem %s9, %s8496
        $region106: #{forward.1} parent=101 // pred_fallthru
          _
      $region102: #{forward.1} parent=5 // pred_fallthru
        _
    $region6: #{forward.1} parent=1 // loop_footer
      %s19 = sadd.s32 1, %s15
    $region7: #{forward.1} parent=1 // loop_footer_branch
      %14 = sbr.rel target = $region3
    $region8: #{forward.1} parent=1 // loop_exit
      _

</llo_original>
